<compile_context>
chip_gen: v7x
topology: tpu7x:2x2x1
jax: 0.10.0
libtpu: 0.0.40
codegen_flags: <defaults>
</compile_context>

<pallas_src>
from functools import partial

import numpy as np
import jax
import jax.numpy as jnp
from jax.experimental import pallas as pl
from jax.experimental.pallas import tpu as pltpu


# ----------------------------- Pallas kernel -------------------------------

def _lenet_kernel(x_ref,
                  w1t_ref, b1_ref, s1c_ref,
                  w2t_ref, b2_ref, s2c_ref,
                  wfc1_ref, wfc23_ref, bfc_ref,
                  out_ref):
    f32 = jnp.float32
    bf16 = jnp.bfloat16
    bt = x_ref.shape[1]                       # batch tile (multiple of 8)

    # (32, BT, 96) f32 -> (32*BT, 96) bf16, rows ordered r = h*BT + b.
    a0 = x_ref[...].reshape(32 * bt, 96).astype(bf16)

    # ---- conv1 (5x5, 3->6) + relu: 5 shifted Toeplitz GEMMs, batch in M ----
    acc1 = jnp.dot(a0[0:28 * bt, :], w1t_ref[0], preferred_element_type=f32)
    for kh in range(1, 5):
        acc1 = acc1 + jnp.dot(a0[kh * bt:(kh + 28) * bt, :], w1t_ref[kh],
                              preferred_element_type=f32)
    z1 = jnp.maximum(acc1 + b1_ref[...], 0.0).astype(bf16)   # (28*BT, 168)

    # ---- 2x2 maxpool: bf16 0/1-selection GEMM (width) + sublane max (height)
    p1 = jnp.maximum(jnp.dot(z1, s1c_ref[0], preferred_element_type=f32),
                     jnp.dot(z1, s1c_ref[1], preferred_element_type=f32))  # (28*BT, 84)
    p1 = p1.reshape(14, 2 * bt, 84)
    a1 = jnp.maximum(p1[:, :bt, :], p1[:, bt:, :])            # (14, BT, 84)
    a1 = a1.reshape(14 * bt, 84).astype(bf16)

    # ---- conv2 (5x5, 6->16) + relu ----
    acc2 = jnp.dot(a1[0:10 * bt, :], w2t_ref[0], preferred_element_type=f32)
    for kh in range(1, 5):
        acc2 = acc2 + jnp.dot(a1[kh * bt:(kh + 10) * bt, :], w2t_ref[kh],
                              preferred_element_type=f32)
    z2 = jnp.maximum(acc2 + b2_ref[...], 0.0).astype(bf16)    # (10*BT, 160)

    # ---- 2x2 maxpool ----
    p2 = jnp.maximum(jnp.dot(z2, s2c_ref[0], preferred_element_type=f32),
                     jnp.dot(z2, s2c_ref[1], preferred_element_type=f32))  # (10*BT, 80)
    p2 = p2.reshape(5, 2 * bt, 80)
    a2 = jnp.maximum(p2[:, :bt, :], p2[:, bt:, :]).astype(bf16)  # (5, BT, 80)

    # ---- fc1 (NCHW flatten folded into per-row weights), batch = M ----
    h = jnp.dot(a2[0], wfc1_ref[0], preferred_element_type=f32)
    for r in range(1, 5):
        h = h + jnp.dot(a2[r], wfc1_ref[r], preferred_element_type=f32)
    h = jnp.maximum(h + bfc_ref[0:1, :], 0.0).astype(bf16)    # (BT, 128), valid [:120]

    # ---- fc2 -> relu -> fc3 (padded to 128 lanes) ----
    h = jnp.maximum(jnp.dot(h, wfc23_ref[0], preferred_element_type=f32)
                    + bfc_ref[1:2, :], 0.0).astype(bf16)
    out_ref[...] = (jnp.dot(h, wfc23_ref[1], preferred_element_type=f32)
                    + bfc_ref[2:3, :])                        # (BT, 128), logits [:10]


# ----------------------- One-time parameter packing -------------------------

_CONST_ORDER = ("w1t", "b1", "s1c", "w2t", "b2", "s2c", "wfc1", "wfc23", "bfc")


def prepare_params(params):
    """Pack PyTorch-shaped parameters into the kernel's GEMM layouts (once,
    outside jit)."""
    f32 = np.float32
    w1 = np.asarray(params["conv1_w"], f32)      # (6, 3, 5, 5)
    b1 = np.asarray(params["conv1_b"], f32)
    w2 = np.asarray(params["conv2_w"], f32)      # (16, 6, 5, 5)
    b2 = np.asarray(params["conv2_b"], f32)
    fw1 = np.asarray(params["fc1_w"], f32)       # (120, 400)
    fb1 = np.asarray(params["fc1_b"], f32)
    fw2 = np.asarray(params["fc2_w"], f32)       # (84, 120)
    fb2 = np.asarray(params["fc2_b"], f32)
    fw3 = np.asarray(params["fc3_w"], f32)       # (10, 84)
    fb3 = np.asarray(params["fc3_b"], f32)

    # Toeplitz conv weights: t[kh, ci*W_in + wo + dw, co*W_out + wo] = w[co,ci,kh,dw]
    def toeplitz(w, c_in, c_out, w_in, w_out):
        t = np.zeros((5, c_in * w_in, c_out * w_out), f32)
        wo = np.arange(w_out)
        for kh in range(5):
            for co in range(c_out):
                for ci in range(c_in):
                    for dw in range(5):
                        t[kh, ci * w_in + wo + dw, co * w_out + wo] = w[co, ci, kh, dw]
        return t

    w1t = toeplitz(w1, 3, 6, 32, 28)             # (5, 96, 168)
    w2t = toeplitz(w2, 6, 16, 14, 10)            # (5, 84, 160)

    # 0/1 lane-compaction matrices (exact in bf16): pick even/odd width per channel.
    def pool_cols(c, win):
        se = np.zeros((c * 2 * win, c * win), f32)
        so = np.zeros((c * 2 * win, c * win), f32)
        j = np.arange(win)
        for ch in range(c):
            se[ch * 2 * win + 2 * j, ch * win + j] = 1.0
            so[ch * 2 * win + 2 * j + 1, ch * win + j] = 1.0
        return se, so

    s1ce, s1co = pool_cols(6, 14)                # (168, 84)
    s2ce, s2co = pool_cols(16, 5)                # (160, 80)

    # Biases broadcast to the channel-major (co*W + wo) lane layout.
    b1row = np.repeat(b1, 28)[None, :]           # (1, 168)
    b2row = np.repeat(b2, 10)[None, :]           # (1, 160)

    # fc1 with the NCHW flatten + pool2 row split folded in: (5, 80, 128)
    wfc1 = np.zeros((5, 80, 128), f32)
    t = fw1.reshape(120, 16, 5, 5).transpose(2, 1, 3, 0)     # (h, c, w, j)
    wfc1[:, :, :120] = t.reshape(5, 80, 120)

    # fc2/fc3 padded to 128 lanes and stacked.
    wfc23 = np.zeros((2, 128, 128), f32)
    wfc23[0, :120, :84] = fw2.T
    wfc23[1, :84, :10] = fw3.T

    bfc = np.zeros((3, 128), f32)
    bfc[0, :120] = fb1
    bfc[1, :84] = fb2
    bfc[2, :10] = fb3

    bf16 = jnp.bfloat16   # MXU operand dtype for all heavy GEMMs (f32 accumulation)
    return dict(
        w1t=jnp.asarray(w1t, bf16), b1=jnp.asarray(b1row),
        s1c=jnp.asarray(np.stack([s1ce, s1co]), bf16),
        w2t=jnp.asarray(w2t, bf16), b2=jnp.asarray(b2row),
        s2c=jnp.asarray(np.stack([s2ce, s2co]), bf16),
        wfc1=jnp.asarray(wfc1, bf16),
        wfc23=jnp.asarray(wfc23, bf16),
        bfc=jnp.asarray(bfc),
    )


# ------------------------------ Forward pass --------------------------------

@partial(jax.jit, static_argnames=("bt",))
def net_forward(x_nchw, packed, *, bt=16):
    """x_nchw: (B, 3, 32, 32) f32.  bt: images per grid step (multiple of 8;
    16-32 recommended — fills the 256-row MXU on v6e/v7x)."""
    assert bt % 8 == 0
    B = x_nchw.shape[0]
    b_pad = ((B + bt - 1) // bt) * bt
    x = x_nchw
    if b_pad != B:                                           # pad batch tail
        x = jnp.pad(x, ((0, b_pad - B), (0, 0), (0, 0), (0, 0)))
    # NCHW -> (H, B, C*W) slab so batch sits on the sublane-minor axis.
    xp = jnp.transpose(x, (2, 0, 1, 3)).reshape(32, b_pad, 96)

    consts = [packed[k] for k in _CONST_ORDER]
    in_specs = [pl.BlockSpec((32, bt, 96), lambda i: (0, i, 0))]
    for c in consts:   # constants: full-array blocks, fetched once
        in_specs.append(pl.BlockSpec(c.shape, (lambda i, _nd=c.ndim: (0,) * _nd)))

    out = pl.pallas_call(
        _lenet_kernel,
        out_shape=jax.ShapeDtypeStruct((b_pad, 128), jnp.float32),
        grid=(b_pad // bt,),
        in_specs=in_specs,
        out_specs=pl.BlockSpec((bt, 128), lambda i: (i, 0)),
        compiler_params=pltpu.CompilerParams(dimension_semantics=("parallel",)),
    )(xp, *consts)
    return out[:B, :10]


# ------------------------- Init + pure-JAX reference ------------------------

def init_params(key):
    """Deterministic synthetic init at the PyTorch parameter shapes."""
    ks = jax.random.split(key, 10)

    def u(k, shape, fan_in):
        bound = 1.0 / float(fan_in) ** 0.5
        return jax.random.uniform(k, shape, jnp.float32, -bound, bound)

    return {
        "conv1_w": u(ks[0], (6, 3, 5, 5), 3 * 5 * 5),
        "conv1_b": u(ks[1], (6,), 3 * 5 * 5),
        "conv2_w": u(ks[2], (16, 6, 5, 5), 6 * 5 * 5),
        "conv2_b": u(ks[3], (16,), 6 * 5 * 5),
        "fc1_w": u(ks[4], (120, 400), 400),
        "fc1_b": u(ks[5], (120,), 400),
        "fc2_w": u(ks[6], (84, 120), 120),
        "fc2_b": u(ks[7], (84,), 120),
        "fc3_w": u(ks[8], (10, 84), 84),
        "fc3_b": u(ks[9], (10,), 84),
    }


def _pool_ref(x):
    b, c, h, w = x.shape
    return x.reshape(b, c, h // 2, 2, w // 2, 2).max(axis=(3, 5))


def _reference_forward(x, params):
    dn = ("NCHW", "OIHW", "NCHW")
    y = jax.lax.conv_general_dilated(x, params["conv1_w"], (1, 1), "VALID",
                                     dimension_numbers=dn)
    y = _pool_ref(jax.nn.relu(y + params["conv1_b"][None, :, None, None]))
    y = jax.lax.conv_general_dilated(y, params["conv2_w"], (1, 1), "VALID",
                                     dimension_numbers=dn)
    y = _pool_ref(jax.nn.relu(y + params["conv2_b"][None, :, None, None]))
    flat = y.reshape(y.shape[0], -1)
    h = jax.nn.relu(flat @ params["fc1_w"].T + params["fc1_b"])
    h = jax.nn.relu(h @ params["fc2_w"].T + params["fc2_b"])
    return h @ params["fc3_w"].T + params["fc3_b"]


if __name__ == "__main__":
    key = jax.random.PRNGKey(0)
    pkey, xkey = jax.random.split(key)
    params = init_params(pkey)
    packed = prepare_params(params)              # one-time packing, outside jit

    # B=24 with BT=16 exercises both the batch-tail padding and a 2-step grid.
    x = jax.random.normal(xkey, (24, 3, 32, 32), jnp.float32)
    out = net_forward(x, packed, bt=16)
    jax.block_until_ready(out)

    assert out.shape == (24, 10) and out.dtype == jnp.float32
    ref = _reference_forward(x, params)
    max_err = float(jnp.max(jnp.abs(out - ref)))
    assert max_err < 0.1, f"max abs error vs reference too large: {max_err}"
    print("KERNEL_OK")
</pallas_src>

<mosaic_0001>
module attributes {stable_mosaic.version = 11 : i64} {
  func.func @_lenet_kernel(%arg0: i32, %arg1: memref<32x16x96xf32, #tpu.memory_space<vmem>>, %arg2: memref<5x96x168xbf16, #tpu.memory_space<vmem>>, %arg3: memref<1x168xf32, #tpu.memory_space<vmem>>, %arg4: memref<2x168x84xbf16, #tpu.memory_space<vmem>>, %arg5: memref<5x84x160xbf16, #tpu.memory_space<vmem>>, %arg6: memref<1x160xf32, #tpu.memory_space<vmem>>, %arg7: memref<2x160x80xbf16, #tpu.memory_space<vmem>>, %arg8: memref<5x80x128xbf16, #tpu.memory_space<vmem>>, %arg9: memref<2x128x128xbf16, #tpu.memory_space<vmem>>, %arg10: memref<3x128xf32, #tpu.memory_space<vmem>>, %arg11: memref<16x128xf32, #tpu.memory_space<vmem>>) attributes {dimension_semantics = [#tpu.dimension_semantics<parallel>], iteration_bounds = array<i64: 2>, scalar_prefetch = 0 : i64, scratch_operands = 0 : i64, tpu.core_type = #tpu.core_type<tc>, window_params = [{transform_indices = @transform_0, window_bounds = array<i64: 32, 16, 96>}, {pipeline_mode = #tpu.pipeline_mode<synchronous>, transform_indices = @transform_1, window_bounds = array<i64: 5, 96, 168>}, {pipeline_mode = #tpu.pipeline_mode<synchronous>, transform_indices = @transform_2, window_bounds = array<i64: 1, 168>}, {pipeline_mode = #tpu.pipeline_mode<synchronous>, transform_indices = @transform_3, window_bounds = array<i64: 2, 168, 84>}, {pipeline_mode = #tpu.pipeline_mode<synchronous>, transform_indices = @transform_4, window_bounds = array<i64: 5, 84, 160>}, {pipeline_mode = #tpu.pipeline_mode<synchronous>, transform_indices = @transform_5, window_bounds = array<i64: 1, 160>}, {pipeline_mode = #tpu.pipeline_mode<synchronous>, transform_indices = @transform_6, window_bounds = array<i64: 2, 160, 80>}, {pipeline_mode = #tpu.pipeline_mode<synchronous>, transform_indices = @transform_7, window_bounds = array<i64: 5, 80, 128>}, {pipeline_mode = #tpu.pipeline_mode<synchronous>, transform_indices = @transform_8, window_bounds = array<i64: 2, 128, 128>}, {pipeline_mode = #tpu.pipeline_mode<synchronous>, transform_indices = @transform_9, window_bounds = array<i64: 3, 128>}, {transform_indices = @transform_10, window_bounds = array<i64: 16, 128>}]} {
    %c0 = arith.constant 0 : index
    %c0_0 = arith.constant 0 : index
    %c0_1 = arith.constant 0 : index
    %0 = vector.load %arg1[%c0, %c0_0, %c0_1] : memref<32x16x96xf32, #tpu.memory_space<vmem>>, vector<32x16x96xf32>
    %1 = vector.shape_cast %0 : vector<32x16x96xf32> to vector<512x96xf32>
    %2 = arith.truncf %1 : vector<512x96xf32> to vector<512x96xbf16>
    %3 = vector.extract_strided_slice %2 {offsets = [0, 0], sizes = [448, 96], strides = [1, 1]} : vector<512x96xbf16> to vector<448x96xbf16>
    %c0_2 = arith.constant 0 : index
    %c0_3 = arith.constant 0 : index
    %c0_4 = arith.constant 0 : index
    %4 = vector.load %arg2[%c0_2, %c0_3, %c0_4] : memref<5x96x168xbf16, #tpu.memory_space<vmem>>, vector<1x96x168xbf16>
    %5 = vector.shape_cast %4 : vector<1x96x168xbf16> to vector<96x168xbf16>
    %cst = arith.constant dense<0.000000e+00> : vector<448x168xf32>
    %6 = tpu.matmul %3, %5, %cst {dimension_numbers = #tpu.dot_dimension_numbers<[1], [0], [0], [1], [0, 0, 1, 1], [], []>} : vector<448x96xbf16>, vector<96x168xbf16>, vector<448x168xf32> -> vector<448x168xf32>
    %7 = vector.extract_strided_slice %2 {offsets = [16, 0], sizes = [448, 96], strides = [1, 1]} : vector<512x96xbf16> to vector<448x96xbf16>
    %c1 = arith.constant 1 : index
    %c0_5 = arith.constant 0 : index
    %c0_6 = arith.constant 0 : index
    %8 = vector.load %arg2[%c1, %c0_5, %c0_6] : memref<5x96x168xbf16, #tpu.memory_space<vmem>>, vector<1x96x168xbf16>
    %9 = vector.shape_cast %8 : vector<1x96x168xbf16> to vector<96x168xbf16>
    %cst_7 = arith.constant dense<0.000000e+00> : vector<448x168xf32>
    %10 = tpu.matmul %7, %9, %cst_7 {dimension_numbers = #tpu.dot_dimension_numbers<[1], [0], [0], [1], [0, 0, 1, 1], [], []>} : vector<448x96xbf16>, vector<96x168xbf16>, vector<448x168xf32> -> vector<448x168xf32>
    %11 = arith.addf %6, %10 : vector<448x168xf32>
    %12 = vector.extract_strided_slice %2 {offsets = [32, 0], sizes = [448, 96], strides = [1, 1]} : vector<512x96xbf16> to vector<448x96xbf16>
    %c2 = arith.constant 2 : index
    %c0_8 = arith.constant 0 : index
    %c0_9 = arith.constant 0 : index
    %13 = vector.load %arg2[%c2, %c0_8, %c0_9] : memref<5x96x168xbf16, #tpu.memory_space<vmem>>, vector<1x96x168xbf16>
    %14 = vector.shape_cast %13 : vector<1x96x168xbf16> to vector<96x168xbf16>
    %cst_10 = arith.constant dense<0.000000e+00> : vector<448x168xf32>
    %15 = tpu.matmul %12, %14, %cst_10 {dimension_numbers = #tpu.dot_dimension_numbers<[1], [0], [0], [1], [0, 0, 1, 1], [], []>} : vector<448x96xbf16>, vector<96x168xbf16>, vector<448x168xf32> -> vector<448x168xf32>
    %16 = arith.addf %11, %15 : vector<448x168xf32>
    %17 = vector.extract_strided_slice %2 {offsets = [48, 0], sizes = [448, 96], strides = [1, 1]} : vector<512x96xbf16> to vector<448x96xbf16>
    %c3 = arith.constant 3 : index
    %c0_11 = arith.constant 0 : index
    %c0_12 = arith.constant 0 : index
    %18 = vector.load %arg2[%c3, %c0_11, %c0_12] : memref<5x96x168xbf16, #tpu.memory_space<vmem>>, vector<1x96x168xbf16>
    %19 = vector.shape_cast %18 : vector<1x96x168xbf16> to vector<96x168xbf16>
    %cst_13 = arith.constant dense<0.000000e+00> : vector<448x168xf32>
    %20 = tpu.matmul %17, %19, %cst_13 {dimension_numbers = #tpu.dot_dimension_numbers<[1], [0], [0], [1], [0, 0, 1, 1], [], []>} : vector<448x96xbf16>, vector<96x168xbf16>, vector<448x168xf32> -> vector<448x168xf32>
    %21 = arith.addf %16, %20 : vector<448x168xf32>
    %22 = vector.extract_strided_slice %2 {offsets = [64, 0], sizes = [448, 96], strides = [1, 1]} : vector<512x96xbf16> to vector<448x96xbf16>
    %c4 = arith.constant 4 : index
    %c0_14 = arith.constant 0 : index
    %c0_15 = arith.constant 0 : index
    %23 = vector.load %arg2[%c4, %c0_14, %c0_15] : memref<5x96x168xbf16, #tpu.memory_space<vmem>>, vector<1x96x168xbf16>
    %24 = vector.shape_cast %23 : vector<1x96x168xbf16> to vector<96x168xbf16>
    %cst_16 = arith.constant dense<0.000000e+00> : vector<448x168xf32>
    %25 = tpu.matmul %22, %24, %cst_16 {dimension_numbers = #tpu.dot_dimension_numbers<[1], [0], [0], [1], [0, 0, 1, 1], [], []>} : vector<448x96xbf16>, vector<96x168xbf16>, vector<448x168xf32> -> vector<448x168xf32>
    %26 = arith.addf %21, %25 : vector<448x168xf32>
    %c0_17 = arith.constant 0 : index
    %c0_18 = arith.constant 0 : index
    %27 = vector.load %arg3[%c0_17, %c0_18] : memref<1x168xf32, #tpu.memory_space<vmem>>, vector<1x168xf32>
    %28 = vector.broadcast %27 : vector<1x168xf32> to vector<448x168xf32>
    %29 = arith.addf %26, %28 : vector<448x168xf32>
    %cst_19 = arith.constant 0.000000e+00 : f32
    %30 = vector.broadcast %cst_19 : f32 to vector<448x168xf32>
    %31 = arith.maximumf %29, %30 : vector<448x168xf32>
    %32 = arith.truncf %31 : vector<448x168xf32> to vector<448x168xbf16>
    %c0_20 = arith.constant 0 : index
    %c0_21 = arith.constant 0 : index
    %c0_22 = arith.constant 0 : index
    %33 = vector.load %arg4[%c0_20, %c0_21, %c0_22] : memref<2x168x84xbf16, #tpu.memory_space<vmem>>, vector<1x168x84xbf16>
    %34 = vector.shape_cast %33 : vector<1x168x84xbf16> to vector<168x84xbf16>
    %cst_23 = arith.constant dense<0.000000e+00> : vector<448x84xf32>
    %35 = tpu.matmul %32, %34, %cst_23 {dimension_numbers = #tpu.dot_dimension_numbers<[1], [0], [0], [1], [0, 0, 1, 1], [], []>} : vector<448x168xbf16>, vector<168x84xbf16>, vector<448x84xf32> -> vector<448x84xf32>
    %c1_24 = arith.constant 1 : index
    %c0_25 = arith.constant 0 : index
    %c0_26 = arith.constant 0 : index
    %36 = vector.load %arg4[%c1_24, %c0_25, %c0_26] : memref<2x168x84xbf16, #tpu.memory_space<vmem>>, vector<1x168x84xbf16>
    %37 = vector.shape_cast %36 : vector<1x168x84xbf16> to vector<168x84xbf16>
    %cst_27 = arith.constant dense<0.000000e+00> : vector<448x84xf32>
    %38 = tpu.matmul %32, %37, %cst_27 {dimension_numbers = #tpu.dot_dimension_numbers<[1], [0], [0], [1], [0, 0, 1, 1], [], []>} : vector<448x168xbf16>, vector<168x84xbf16>, vector<448x84xf32> -> vector<448x84xf32>
    %39 = arith.maximumf %35, %38 : vector<448x84xf32>
    %40 = vector.shape_cast %39 : vector<448x84xf32> to vector<14x32x84xf32>
    %41 = vector.extract_strided_slice %40 {offsets = [0, 0, 0], sizes = [14, 16, 84], strides = [1, 1, 1]} : vector<14x32x84xf32> to vector<14x16x84xf32>
    %42 = vector.extract_strided_slice %40 {offsets = [0, 16, 0], sizes = [14, 16, 84], strides = [1, 1, 1]} : vector<14x32x84xf32> to vector<14x16x84xf32>
    %43 = arith.maximumf %41, %42 : vector<14x16x84xf32>
    %44 = vector.shape_cast %43 : vector<14x16x84xf32> to vector<224x84xf32>
    %45 = arith.truncf %44 : vector<224x84xf32> to vector<224x84xbf16>
    %46 = vector.extract_strided_slice %45 {offsets = [0, 0], sizes = [160, 84], strides = [1, 1]} : vector<224x84xbf16> to vector<160x84xbf16>
    %c0_28 = arith.constant 0 : index
    %c0_29 = arith.constant 0 : index
    %c0_30 = arith.constant 0 : index
    %47 = vector.load %arg5[%c0_28, %c0_29, %c0_30] : memref<5x84x160xbf16, #tpu.memory_space<vmem>>, vector<1x84x160xbf16>
    %48 = vector.shape_cast %47 : vector<1x84x160xbf16> to vector<84x160xbf16>
    %cst_31 = arith.constant dense<0.000000e+00> : vector<160x160xf32>
    %49 = tpu.matmul %46, %48, %cst_31 {dimension_numbers = #tpu.dot_dimension_numbers<[1], [0], [0], [1], [0, 0, 1, 1], [], []>} : vector<160x84xbf16>, vector<84x160xbf16>, vector<160x160xf32> -> vector<160x160xf32>
    %50 = vector.extract_strided_slice %45 {offsets = [16, 0], sizes = [160, 84], strides = [1, 1]} : vector<224x84xbf16> to vector<160x84xbf16>
    %c1_32 = arith.constant 1 : index
    %c0_33 = arith.constant 0 : index
    %c0_34 = arith.constant 0 : index
    %51 = vector.load %arg5[%c1_32, %c0_33, %c0_34] : memref<5x84x160xbf16, #tpu.memory_space<vmem>>, vector<1x84x160xbf16>
    %52 = vector.shape_cast %51 : vector<1x84x160xbf16> to vector<84x160xbf16>
    %cst_35 = arith.constant dense<0.000000e+00> : vector<160x160xf32>
    %53 = tpu.matmul %50, %52, %cst_35 {dimension_numbers = #tpu.dot_dimension_numbers<[1], [0], [0], [1], [0, 0, 1, 1], [], []>} : vector<160x84xbf16>, vector<84x160xbf16>, vector<160x160xf32> -> vector<160x160xf32>
    %54 = arith.addf %49, %53 : vector<160x160xf32>
    %55 = vector.extract_strided_slice %45 {offsets = [32, 0], sizes = [160, 84], strides = [1, 1]} : vector<224x84xbf16> to vector<160x84xbf16>
    %c2_36 = arith.constant 2 : index
    %c0_37 = arith.constant 0 : index
    %c0_38 = arith.constant 0 : index
    %56 = vector.load %arg5[%c2_36, %c0_37, %c0_38] : memref<5x84x160xbf16, #tpu.memory_space<vmem>>, vector<1x84x160xbf16>
    %57 = vector.shape_cast %56 : vector<1x84x160xbf16> to vector<84x160xbf16>
    %cst_39 = arith.constant dense<0.000000e+00> : vector<160x160xf32>
    %58 = tpu.matmul %55, %57, %cst_39 {dimension_numbers = #tpu.dot_dimension_numbers<[1], [0], [0], [1], [0, 0, 1, 1], [], []>} : vector<160x84xbf16>, vector<84x160xbf16>, vector<160x160xf32> -> vector<160x160xf32>
    %59 = arith.addf %54, %58 : vector<160x160xf32>
    %60 = vector.extract_strided_slice %45 {offsets = [48, 0], sizes = [160, 84], strides = [1, 1]} : vector<224x84xbf16> to vector<160x84xbf16>
    %c3_40 = arith.constant 3 : index
    %c0_41 = arith.constant 0 : index
    %c0_42 = arith.constant 0 : index
    %61 = vector.load %arg5[%c3_40, %c0_41, %c0_42] : memref<5x84x160xbf16, #tpu.memory_space<vmem>>, vector<1x84x160xbf16>
    %62 = vector.shape_cast %61 : vector<1x84x160xbf16> to vector<84x160xbf16>
    %cst_43 = arith.constant dense<0.000000e+00> : vector<160x160xf32>
    %63 = tpu.matmul %60, %62, %cst_43 {dimension_numbers = #tpu.dot_dimension_numbers<[1], [0], [0], [1], [0, 0, 1, 1], [], []>} : vector<160x84xbf16>, vector<84x160xbf16>, vector<160x160xf32> -> vector<160x160xf32>
    %64 = arith.addf %59, %63 : vector<160x160xf32>
    %65 = vector.extract_strided_slice %45 {offsets = [64, 0], sizes = [160, 84], strides = [1, 1]} : vector<224x84xbf16> to vector<160x84xbf16>
    %c4_44 = arith.constant 4 : index
    %c0_45 = arith.constant 0 : index
    %c0_46 = arith.constant 0 : index
    %66 = vector.load %arg5[%c4_44, %c0_45, %c0_46] : memref<5x84x160xbf16, #tpu.memory_space<vmem>>, vector<1x84x160xbf16>
    %67 = vector.shape_cast %66 : vector<1x84x160xbf16> to vector<84x160xbf16>
    %cst_47 = arith.constant dense<0.000000e+00> : vector<160x160xf32>
    %68 = tpu.matmul %65, %67, %cst_47 {dimension_numbers = #tpu.dot_dimension_numbers<[1], [0], [0], [1], [0, 0, 1, 1], [], []>} : vector<160x84xbf16>, vector<84x160xbf16>, vector<160x160xf32> -> vector<160x160xf32>
    %69 = arith.addf %64, %68 : vector<160x160xf32>
    %c0_48 = arith.constant 0 : index
    %c0_49 = arith.constant 0 : index
    %70 = vector.load %arg6[%c0_48, %c0_49] : memref<1x160xf32, #tpu.memory_space<vmem>>, vector<1x160xf32>
    %71 = vector.broadcast %70 : vector<1x160xf32> to vector<160x160xf32>
    %72 = arith.addf %69, %71 : vector<160x160xf32>
    %cst_50 = arith.constant 0.000000e+00 : f32
    %73 = vector.broadcast %cst_50 : f32 to vector<160x160xf32>
    %74 = arith.maximumf %72, %73 : vector<160x160xf32>
    %75 = arith.truncf %74 : vector<160x160xf32> to vector<160x160xbf16>
    %c0_51 = arith.constant 0 : index
    %c0_52 = arith.constant 0 : index
    %c0_53 = arith.constant 0 : index
    %76 = vector.load %arg7[%c0_51, %c0_52, %c0_53] : memref<2x160x80xbf16, #tpu.memory_space<vmem>>, vector<1x160x80xbf16>
    %77 = vector.shape_cast %76 : vector<1x160x80xbf16> to vector<160x80xbf16>
    %cst_54 = arith.constant dense<0.000000e+00> : vector<160x80xf32>
    %78 = tpu.matmul %75, %77, %cst_54 {dimension_numbers = #tpu.dot_dimension_numbers<[1], [0], [0], [1], [0, 0, 1, 1], [], []>} : vector<160x160xbf16>, vector<160x80xbf16>, vector<160x80xf32> -> vector<160x80xf32>
    %c1_55 = arith.constant 1 : index
    %c0_56 = arith.constant 0 : index
    %c0_57 = arith.constant 0 : index
    %79 = vector.load %arg7[%c1_55, %c0_56, %c0_57] : memref<2x160x80xbf16, #tpu.memory_space<vmem>>, vector<1x160x80xbf16>
    %80 = vector.shape_cast %79 : vector<1x160x80xbf16> to vector<160x80xbf16>
    %cst_58 = arith.constant dense<0.000000e+00> : vector<160x80xf32>
    %81 = tpu.matmul %75, %80, %cst_58 {dimension_numbers = #tpu.dot_dimension_numbers<[1], [0], [0], [1], [0, 0, 1, 1], [], []>} : vector<160x160xbf16>, vector<160x80xbf16>, vector<160x80xf32> -> vector<160x80xf32>
    %82 = arith.maximumf %78, %81 : vector<160x80xf32>
    %83 = vector.shape_cast %82 : vector<160x80xf32> to vector<5x32x80xf32>
    %84 = vector.extract_strided_slice %83 {offsets = [0, 0, 0], sizes = [5, 16, 80], strides = [1, 1, 1]} : vector<5x32x80xf32> to vector<5x16x80xf32>
    %85 = vector.extract_strided_slice %83 {offsets = [0, 16, 0], sizes = [5, 16, 80], strides = [1, 1, 1]} : vector<5x32x80xf32> to vector<5x16x80xf32>
    %86 = arith.maximumf %84, %85 : vector<5x16x80xf32>
    %87 = arith.truncf %86 : vector<5x16x80xf32> to vector<5x16x80xbf16>
    %88 = vector.extract_strided_slice %87 {offsets = [0, 0, 0], sizes = [1, 16, 80], strides = [1, 1, 1]} : vector<5x16x80xbf16> to vector<1x16x80xbf16>
    %89 = vector.shape_cast %88 : vector<1x16x80xbf16> to vector<16x80xbf16>
    %c0_59 = arith.constant 0 : index
    %c0_60 = arith.constant 0 : index
    %c0_61 = arith.constant 0 : index
    %90 = vector.load %arg8[%c0_59, %c0_60, %c0_61] : memref<5x80x128xbf16, #tpu.memory_space<vmem>>, vector<1x80x128xbf16>
    %91 = vector.shape_cast %90 : vector<1x80x128xbf16> to vector<80x128xbf16>
    %cst_62 = arith.constant dense<0.000000e+00> : vector<16x128xf32>
    %92 = tpu.matmul %89, %91, %cst_62 {dimension_numbers = #tpu.dot_dimension_numbers<[1], [0], [0], [1], [0, 0, 1, 1], [], []>} : vector<16x80xbf16>, vector<80x128xbf16>, vector<16x128xf32> -> vector<16x128xf32>
    %93 = vector.extract_strided_slice %87 {offsets = [1, 0, 0], sizes = [1, 16, 80], strides = [1, 1, 1]} : vector<5x16x80xbf16> to vector<1x16x80xbf16>
    %94 = vector.shape_cast %93 : vector<1x16x80xbf16> to vector<16x80xbf16>
    %c1_63 = arith.constant 1 : index
    %c0_64 = arith.constant 0 : index
    %c0_65 = arith.constant 0 : index
    %95 = vector.load %arg8[%c1_63, %c0_64, %c0_65] : memref<5x80x128xbf16, #tpu.memory_space<vmem>>, vector<1x80x128xbf16>
    %96 = vector.shape_cast %95 : vector<1x80x128xbf16> to vector<80x128xbf16>
    %cst_66 = arith.constant dense<0.000000e+00> : vector<16x128xf32>
    %97 = tpu.matmul %94, %96, %cst_66 {dimension_numbers = #tpu.dot_dimension_numbers<[1], [0], [0], [1], [0, 0, 1, 1], [], []>} : vector<16x80xbf16>, vector<80x128xbf16>, vector<16x128xf32> -> vector<16x128xf32>
    %98 = arith.addf %92, %97 : vector<16x128xf32>
    %99 = vector.extract_strided_slice %87 {offsets = [2, 0, 0], sizes = [1, 16, 80], strides = [1, 1, 1]} : vector<5x16x80xbf16> to vector<1x16x80xbf16>
    %100 = vector.shape_cast %99 : vector<1x16x80xbf16> to vector<16x80xbf16>
    %c2_67 = arith.constant 2 : index
    %c0_68 = arith.constant 0 : index
    %c0_69 = arith.constant 0 : index
    %101 = vector.load %arg8[%c2_67, %c0_68, %c0_69] : memref<5x80x128xbf16, #tpu.memory_space<vmem>>, vector<1x80x128xbf16>
    %102 = vector.shape_cast %101 : vector<1x80x128xbf16> to vector<80x128xbf16>
    %cst_70 = arith.constant dense<0.000000e+00> : vector<16x128xf32>
    %103 = tpu.matmul %100, %102, %cst_70 {dimension_numbers = #tpu.dot_dimension_numbers<[1], [0], [0], [1], [0, 0, 1, 1], [], []>} : vector<16x80xbf16>, vector<80x128xbf16>, vector<16x128xf32> -> vector<16x128xf32>
    %104 = arith.addf %98, %103 : vector<16x128xf32>
    %105 = vector.extract_strided_slice %87 {offsets = [3, 0, 0], sizes = [1, 16, 80], strides = [1, 1, 1]} : vector<5x16x80xbf16> to vector<1x16x80xbf16>
    %106 = vector.shape_cast %105 : vector<1x16x80xbf16> to vector<16x80xbf16>
    %c3_71 = arith.constant 3 : index
    %c0_72 = arith.constant 0 : index
    %c0_73 = arith.constant 0 : index
    %107 = vector.load %arg8[%c3_71, %c0_72, %c0_73] : memref<5x80x128xbf16, #tpu.memory_space<vmem>>, vector<1x80x128xbf16>
    %108 = vector.shape_cast %107 : vector<1x80x128xbf16> to vector<80x128xbf16>
    %cst_74 = arith.constant dense<0.000000e+00> : vector<16x128xf32>
    %109 = tpu.matmul %106, %108, %cst_74 {dimension_numbers = #tpu.dot_dimension_numbers<[1], [0], [0], [1], [0, 0, 1, 1], [], []>} : vector<16x80xbf16>, vector<80x128xbf16>, vector<16x128xf32> -> vector<16x128xf32>
    %110 = arith.addf %104, %109 : vector<16x128xf32>
    %111 = vector.extract_strided_slice %87 {offsets = [4, 0, 0], sizes = [1, 16, 80], strides = [1, 1, 1]} : vector<5x16x80xbf16> to vector<1x16x80xbf16>
    %112 = vector.shape_cast %111 : vector<1x16x80xbf16> to vector<16x80xbf16>
    %c4_75 = arith.constant 4 : index
    %c0_76 = arith.constant 0 : index
    %c0_77 = arith.constant 0 : index
    %113 = vector.load %arg8[%c4_75, %c0_76, %c0_77] : memref<5x80x128xbf16, #tpu.memory_space<vmem>>, vector<1x80x128xbf16>
    %114 = vector.shape_cast %113 : vector<1x80x128xbf16> to vector<80x128xbf16>
    %cst_78 = arith.constant dense<0.000000e+00> : vector<16x128xf32>
    %115 = tpu.matmul %112, %114, %cst_78 {dimension_numbers = #tpu.dot_dimension_numbers<[1], [0], [0], [1], [0, 0, 1, 1], [], []>} : vector<16x80xbf16>, vector<80x128xbf16>, vector<16x128xf32> -> vector<16x128xf32>
    %116 = arith.addf %110, %115 : vector<16x128xf32>
    %c0_79 = arith.constant 0 : index
    %c0_80 = arith.constant 0 : index
    %117 = vector.load %arg10[%c0_79, %c0_80] : memref<3x128xf32, #tpu.memory_space<vmem>>, vector<1x128xf32>
    %118 = vector.broadcast %117 : vector<1x128xf32> to vector<16x128xf32>
    %119 = arith.addf %116, %118 : vector<16x128xf32>
    %cst_81 = arith.constant 0.000000e+00 : f32
    %120 = vector.broadcast %cst_81 : f32 to vector<16x128xf32>
    %121 = arith.maximumf %119, %120 : vector<16x128xf32>
    %122 = arith.truncf %121 : vector<16x128xf32> to vector<16x128xbf16>
    %c0_82 = arith.constant 0 : index
    %c0_83 = arith.constant 0 : index
    %c0_84 = arith.constant 0 : index
    %123 = vector.load %arg9[%c0_82, %c0_83, %c0_84] : memref<2x128x128xbf16, #tpu.memory_space<vmem>>, vector<1x128x128xbf16>
    %124 = vector.shape_cast %123 : vector<1x128x128xbf16> to vector<128x128xbf16>
    %cst_85 = arith.constant dense<0.000000e+00> : vector<16x128xf32>
    %125 = tpu.matmul %122, %124, %cst_85 {dimension_numbers = #tpu.dot_dimension_numbers<[1], [0], [0], [1], [0, 0, 1, 1], [], []>} : vector<16x128xbf16>, vector<128x128xbf16>, vector<16x128xf32> -> vector<16x128xf32>
    %c1_86 = arith.constant 1 : index
    %c0_87 = arith.constant 0 : index
    %126 = vector.load %arg10[%c1_86, %c0_87] : memref<3x128xf32, #tpu.memory_space<vmem>>, vector<1x128xf32>
    %127 = vector.broadcast %126 : vector<1x128xf32> to vector<16x128xf32>
    %128 = arith.addf %125, %127 : vector<16x128xf32>
    %cst_88 = arith.constant 0.000000e+00 : f32
    %129 = vector.broadcast %cst_88 : f32 to vector<16x128xf32>
    %130 = arith.maximumf %128, %129 : vector<16x128xf32>
    %131 = arith.truncf %130 : vector<16x128xf32> to vector<16x128xbf16>
    %c1_89 = arith.constant 1 : index
    %c0_90 = arith.constant 0 : index
    %c0_91 = arith.constant 0 : index
    %132 = vector.load %arg9[%c1_89, %c0_90, %c0_91] : memref<2x128x128xbf16, #tpu.memory_space<vmem>>, vector<1x128x128xbf16>
    %133 = vector.shape_cast %132 : vector<1x128x128xbf16> to vector<128x128xbf16>
    %cst_92 = arith.constant dense<0.000000e+00> : vector<16x128xf32>
    %134 = tpu.matmul %131, %133, %cst_92 {dimension_numbers = #tpu.dot_dimension_numbers<[1], [0], [0], [1], [0, 0, 1, 1], [], []>} : vector<16x128xbf16>, vector<128x128xbf16>, vector<16x128xf32> -> vector<16x128xf32>
    %c2_93 = arith.constant 2 : index
    %c0_94 = arith.constant 0 : index
    %135 = vector.load %arg10[%c2_93, %c0_94] : memref<3x128xf32, #tpu.memory_space<vmem>>, vector<1x128xf32>
    %136 = vector.broadcast %135 : vector<1x128xf32> to vector<16x128xf32>
    %137 = arith.addf %134, %136 : vector<16x128xf32>
    %c0_95 = arith.constant 0 : index
    %c0_96 = arith.constant 0 : index
    %138 = vector.load %arg11[%c0_95, %c0_96] : memref<16x128xf32, #tpu.memory_space<vmem>>, vector<16x128xf32>
    tpu.vector_store %arg11[%c0_95, %c0_96], %137 {strides = array<i32>} : memref<16x128xf32, #tpu.memory_space<vmem>>, vector<16x128xf32>,
    return
  }
  func.func @transform_0(%arg0: i32) -> (i32, i32, i32) {
    %c0_i32 = arith.constant 0 : i32
    %c0_i32_0 = arith.constant 0 : i32
    %c0_i32_1 = arith.constant 0 : i32
    return %c0_i32, %arg0, %c0_i32_0 : i32, i32, i32
  }
  func.func @transform_1(%arg0: i32) -> (i32, i32, i32) {
    %c0_i32 = arith.constant 0 : i32
    %c0_i32_0 = arith.constant 0 : i32
    %c0_i32_1 = arith.constant 0 : i32
    %c0_i32_2 = arith.constant 0 : i32
    return %c0_i32, %c0_i32_0, %c0_i32_1 : i32, i32, i32
  }
  func.func @transform_2(%arg0: i32) -> (i32, i32) {
    %c0_i32 = arith.constant 0 : i32
    %c0_i32_0 = arith.constant 0 : i32
    %c0_i32_1 = arith.constant 0 : i32
    return %c0_i32, %c0_i32_0 : i32, i32
  }
  func.func @transform_3(%arg0: i32) -> (i32, i32, i32) {
    %c0_i32 = arith.constant 0 : i32
    %c0_i32_0 = arith.constant 0 : i32
    %c0_i32_1 = arith.constant 0 : i32
    %c0_i32_2 = arith.constant 0 : i32
    return %c0_i32, %c0_i32_0, %c0_i32_1 : i32, i32, i32
  }
  func.func @transform_4(%arg0: i32) -> (i32, i32, i32) {
    %c0_i32 = arith.constant 0 : i32
    %c0_i32_0 = arith.constant 0 : i32
    %c0_i32_1 = arith.constant 0 : i32
    %c0_i32_2 = arith.constant 0 : i32
    return %c0_i32, %c0_i32_0, %c0_i32_1 : i32, i32, i32
  }
  func.func @transform_5(%arg0: i32) -> (i32, i32) {
    %c0_i32 = arith.constant 0 : i32
    %c0_i32_0 = arith.constant 0 : i32
    %c0_i32_1 = arith.constant 0 : i32
    return %c0_i32, %c0_i32_0 : i32, i32
  }
  func.func @transform_6(%arg0: i32) -> (i32, i32, i32) {
    %c0_i32 = arith.constant 0 : i32
    %c0_i32_0 = arith.constant 0 : i32
    %c0_i32_1 = arith.constant 0 : i32
    %c0_i32_2 = arith.constant 0 : i32
    return %c0_i32, %c0_i32_0, %c0_i32_1 : i32, i32, i32
  }
  func.func @transform_7(%arg0: i32) -> (i32, i32, i32) {
    %c0_i32 = arith.constant 0 : i32
    %c0_i32_0 = arith.constant 0 : i32
    %c0_i32_1 = arith.constant 0 : i32
    %c0_i32_2 = arith.constant 0 : i32
    return %c0_i32, %c0_i32_0, %c0_i32_1 : i32, i32, i32
  }
  func.func @transform_8(%arg0: i32) -> (i32, i32, i32) {
    %c0_i32 = arith.constant 0 : i32
    %c0_i32_0 = arith.constant 0 : i32
    %c0_i32_1 = arith.constant 0 : i32
    %c0_i32_2 = arith.constant 0 : i32
    return %c0_i32, %c0_i32_0, %c0_i32_1 : i32, i32, i32
  }
  func.func @transform_9(%arg0: i32) -> (i32, i32) {
    %c0_i32 = arith.constant 0 : i32
    %c0_i32_0 = arith.constant 0 : i32
    %c0_i32_1 = arith.constant 0 : i32
    return %c0_i32, %c0_i32_0 : i32, i32
  }
  func.func @transform_10(%arg0: i32) -> (i32, i32) {
    %c0_i32 = arith.constant 0 : i32
    %c0_i32_0 = arith.constant 0 : i32
    return %arg0, %c0_i32 : i32, i32
  }
}

</mosaic_0001>

<llo_original>
// kernel: net_forward.1
$region0: #{net_forward.1}
  #allocation0 [shape = 'u32[]', space=smem, size = 0x4, offset = 0x4, fixed_abs, tag = 'smem constant byte address 0x4 - core index']
  #allocation1 [shape = 'u32[144,128]{1,0:T(1,128)}', space=vmem, size = 0x12000, scoped, tag = 'internal scratch']
  %s0 = inlined_call_operand.vmem [shape: f32[32,32,96], index: 0, kind: input, shape index: {}]
  %s1 = inlined_call_operand.vmem [shape: bf16[5,96,168], index: 1, kind: input, shape index: {}]
  %s2 = inlined_call_operand.vmem [shape: f32[1,168], index: 2, kind: input, shape index: {}]
  %s3 = inlined_call_operand.vmem [shape: bf16[2,168,84], index: 3, kind: input, shape index: {}]
  %s4 = inlined_call_operand.vmem [shape: bf16[5,84,160], index: 4, kind: input, shape index: {}]
  %s5 = inlined_call_operand.vmem [shape: f32[1,160], index: 5, kind: input, shape index: {}]
  %s6 = inlined_call_operand.vmem [shape: bf16[2,160,80], index: 6, kind: input, shape index: {}]
  %s7 = inlined_call_operand.vmem [shape: bf16[5,80,128], index: 7, kind: input, shape index: {}]
  %s8 = inlined_call_operand.vmem [shape: bf16[2,128,128], index: 8, kind: input, shape index: {}]
  %s9 = inlined_call_operand.vmem [shape: f32[3,128], index: 9, kind: input, shape index: {}]
  %s10 = inlined_call_operand.vmem [shape: f32[32,128], index: 10, kind: output, shape index: {}]
  %s11 = sld [smem:[#allocation0]]
  $region111: #{net_forward.1} parent=0
    _
  %s13 = ssub.s32 1, %s11
  %s14 = scalar_select 0, %s13, %s11
  $region1: #{net_forward.1} parent=0
    #allocation2 [shape = 'u8[524288]{0}', space=vmem, size = 0x80000, scoped, tag = 'input window, operand 0']
    loop: start=0, step=1, limit=4
    $region2: #{net_forward.1} parent=1 // loop_pre_header
      _
    $region3: #{net_forward.1} parent=1 // loop_header
      %s16 = sphi 0, %s20
      %p17 = scmp.ge.s32.totalorder %s16, 4
      %s26 = sphi 0, %s28
      %s29 = sphi 0, %s26
      %s30 = sphi 0, %s29
      %s46 = sphi 0, %s30
      %s50 = sphi 0, %s50
      %s52 = sphi 0, %s50
      %s53 = sphi 0, %s52
      %s67 = sphi 0, %s53
      %s71 = sphi 0, %s71
      %s73 = sphi 0, %s71
      %s74 = sphi 0, %s73
      %s88 = sphi 0, %s74
      %s92 = sphi 0, %s92
      %s94 = sphi 0, %s92
      %s95 = sphi 0, %s94
      %s109 = sphi 0, %s95
      %s113 = sphi 0, %s113
      %s115 = sphi 0, %s113
      %s116 = sphi 0, %s115
      %s130 = sphi 0, %s116
      %s134 = sphi 0, %s134
      %s136 = sphi 0, %s134
      %s137 = sphi 0, %s136
      %s151 = sphi 0, %s137
      %s155 = sphi 0, %s155
      %s157 = sphi 0, %s155
      %s158 = sphi 0, %s157
      %s172 = sphi 0, %s158
      %s176 = sphi 0, %s176
      %s178 = sphi 0, %s176
      %s179 = sphi 0, %s178
      %s193 = sphi 0, %s179
      %s197 = sphi 0, %s197
      %s199 = sphi 0, %s197
      %s200 = sphi 0, %s199
      %s214 = sphi 0, %s200
      %s218 = sphi 0, %s218
      %s220 = sphi 0, %s218
      %s221 = sphi 0, %s220
      %s235 = sphi 0, %s221
      %s241 = sphi 0, %s243
      %s244 = sphi 0, %s241
      %s245 = sphi 0, %s244
      %s261 = sphi 0, %s245
    $region4: #{net_forward.1} parent=1 // loop_header_branch
      %19 = sbr.rel (%p17) target = $region8
    $region5: #{net_forward.1} parent=1 // loop_body
      %s21 = ssub.s32 %s16, 1
      %s22 = ssub.s32 %s16, 2
      %s23 = sadd.s32 %s16, 1
      %s24 = ssub.s32 %s16, %s23
      %p25 = scmp.eq.s32.totalorder %s24, 0
      %s27 = sadd.s32 %s26, 1
      %s28 = scalar_select %p25, %s26, %s27
      %p31 = pneg %p25
      %p32 = scmp.eq.s32.totalorder %s16, 1
      %p33 = por %p31, %p32
      %p34 = scmp.ne.s32.totalorder %s26, %s29
      %p35 = scmp.eq.s32.totalorder %s16, 0
      %p36 = por %p34, %p35
      %p37 = scmp.ne.s32.totalorder %s26, %s29
      %p38 = scmp.eq.s32.totalorder %s21, 1
      %p39 = por %p37, %p38
      %p40 = scmp.ne.s32.totalorder %s29, %s30
      %p41 = scmp.eq.s32.totalorder %s21, 0
      %p42 = por %p40, %p41
      %p43 = scmp.ne.s32.totalorder %s29, %s30
      %p44 = scmp.eq.s32.totalorder %s22, 1
      %p45 = por %p43, %p44
      %p47 = scmp.ne.s32.totalorder %s30, %s46
      %p48 = scmp.eq.s32.totalorder %s22, 0
      %p49 = por %p47, %p48
      %s51 = sadd.s32 %s50, 1
      %p54 = scmp.eq.s32.totalorder %s16, 1
      %p55 = scmp.ne.s32.totalorder %s50, %s52
      %p56 = scmp.eq.s32.totalorder %s16, 0
      %p57 = por %p55, %p56
      %p58 = scmp.ne.s32.totalorder %s50, %s52
      %p59 = scmp.eq.s32.totalorder %s21, 1
      %p60 = por %p58, %p59
      %p61 = scmp.ne.s32.totalorder %s52, %s53
      %p62 = scmp.eq.s32.totalorder %s21, 0
      %p63 = por %p61, %p62
      %p64 = scmp.ne.s32.totalorder %s52, %s53
      %p65 = scmp.eq.s32.totalorder %s22, 1
      %p66 = por %p64, %p65
      %p68 = scmp.ne.s32.totalorder %s53, %s67
      %p69 = scmp.eq.s32.totalorder %s22, 0
      %p70 = por %p68, %p69
      %s72 = sadd.s32 %s71, 1
      %p75 = scmp.eq.s32.totalorder %s16, 1
      %p76 = scmp.ne.s32.totalorder %s71, %s73
      %p77 = scmp.eq.s32.totalorder %s16, 0
      %p78 = por %p76, %p77
      %p79 = scmp.ne.s32.totalorder %s71, %s73
      %p80 = scmp.eq.s32.totalorder %s21, 1
      %p81 = por %p79, %p80
      %p82 = scmp.ne.s32.totalorder %s73, %s74
      %p83 = scmp.eq.s32.totalorder %s21, 0
      %p84 = por %p82, %p83
      %p85 = scmp.ne.s32.totalorder %s73, %s74
      %p86 = scmp.eq.s32.totalorder %s22, 1
      %p87 = por %p85, %p86
      %p89 = scmp.ne.s32.totalorder %s74, %s88
      %p90 = scmp.eq.s32.totalorder %s22, 0
      %p91 = por %p89, %p90
      %s93 = sadd.s32 %s92, 1
      %p96 = scmp.eq.s32.totalorder %s16, 1
      %p97 = scmp.ne.s32.totalorder %s92, %s94
      %p98 = scmp.eq.s32.totalorder %s16, 0
      %p99 = por %p97, %p98
      %p100 = scmp.ne.s32.totalorder %s92, %s94
      %p101 = scmp.eq.s32.totalorder %s21, 1
      %p102 = por %p100, %p101
      %p103 = scmp.ne.s32.totalorder %s94, %s95
      %p104 = scmp.eq.s32.totalorder %s21, 0
      %p105 = por %p103, %p104
      %p106 = scmp.ne.s32.totalorder %s94, %s95
      %p107 = scmp.eq.s32.totalorder %s22, 1
      %p108 = por %p106, %p107
      %p110 = scmp.ne.s32.totalorder %s95, %s109
      %p111 = scmp.eq.s32.totalorder %s22, 0
      %p112 = por %p110, %p111
      %s114 = sadd.s32 %s113, 1
      %p117 = scmp.eq.s32.totalorder %s16, 1
      %p118 = scmp.ne.s32.totalorder %s113, %s115
      %p119 = scmp.eq.s32.totalorder %s16, 0
      %p120 = por %p118, %p119
      %p121 = scmp.ne.s32.totalorder %s113, %s115
      %p122 = scmp.eq.s32.totalorder %s21, 1
      %p123 = por %p121, %p122
      %p124 = scmp.ne.s32.totalorder %s115, %s116
      %p125 = scmp.eq.s32.totalorder %s21, 0
      %p126 = por %p124, %p125
      %p127 = scmp.ne.s32.totalorder %s115, %s116
      %p128 = scmp.eq.s32.totalorder %s22, 1
      %p129 = por %p127, %p128
      %p131 = scmp.ne.s32.totalorder %s116, %s130
      %p132 = scmp.eq.s32.totalorder %s22, 0
      %p133 = por %p131, %p132
      %s135 = sadd.s32 %s134, 1
      %p138 = scmp.eq.s32.totalorder %s16, 1
      %p139 = scmp.ne.s32.totalorder %s134, %s136
      %p140 = scmp.eq.s32.totalorder %s16, 0
      %p141 = por %p139, %p140
      %p142 = scmp.ne.s32.totalorder %s134, %s136
      %p143 = scmp.eq.s32.totalorder %s21, 1
      %p144 = por %p142, %p143
      %p145 = scmp.ne.s32.totalorder %s136, %s137
      %p146 = scmp.eq.s32.totalorder %s21, 0
      %p147 = por %p145, %p146
      %p148 = scmp.ne.s32.totalorder %s136, %s137
      %p149 = scmp.eq.s32.totalorder %s22, 1
      %p150 = por %p148, %p149
      %p152 = scmp.ne.s32.totalorder %s137, %s151
      %p153 = scmp.eq.s32.totalorder %s22, 0
      %p154 = por %p152, %p153
      %s156 = sadd.s32 %s155, 1
      %p159 = scmp.eq.s32.totalorder %s16, 1
      %p160 = scmp.ne.s32.totalorder %s155, %s157
      %p161 = scmp.eq.s32.totalorder %s16, 0
      %p162 = por %p160, %p161
      %p163 = scmp.ne.s32.totalorder %s155, %s157
      %p164 = scmp.eq.s32.totalorder %s21, 1
      %p165 = por %p163, %p164
      %p166 = scmp.ne.s32.totalorder %s157, %s158
      %p167 = scmp.eq.s32.totalorder %s21, 0
      %p168 = por %p166, %p167
      %p169 = scmp.ne.s32.totalorder %s157, %s158
      %p170 = scmp.eq.s32.totalorder %s22, 1
      %p171 = por %p169, %p170
      %p173 = scmp.ne.s32.totalorder %s158, %s172
      %p174 = scmp.eq.s32.totalorder %s22, 0
      %p175 = por %p173, %p174
      %s177 = sadd.s32 %s176, 1
      %p180 = scmp.eq.s32.totalorder %s16, 1
      %p181 = scmp.ne.s32.totalorder %s176, %s178
      %p182 = scmp.eq.s32.totalorder %s16, 0
      %p183 = por %p181, %p182
      %p184 = scmp.ne.s32.totalorder %s176, %s178
      %p185 = scmp.eq.s32.totalorder %s21, 1
      %p186 = por %p184, %p185
      %p187 = scmp.ne.s32.totalorder %s178, %s179
      %p188 = scmp.eq.s32.totalorder %s21, 0
      %p189 = por %p187, %p188
      %p190 = scmp.ne.s32.totalorder %s178, %s179
      %p191 = scmp.eq.s32.totalorder %s22, 1
      %p192 = por %p190, %p191
      %p194 = scmp.ne.s32.totalorder %s179, %s193
      %p195 = scmp.eq.s32.totalorder %s22, 0
      %p196 = por %p194, %p195
      %s198 = sadd.s32 %s197, 1
      %p201 = scmp.eq.s32.totalorder %s16, 1
      %p202 = scmp.ne.s32.totalorder %s197, %s199
      %p203 = scmp.eq.s32.totalorder %s16, 0
      %p204 = por %p202, %p203
      %p205 = scmp.ne.s32.totalorder %s197, %s199
      %p206 = scmp.eq.s32.totalorder %s21, 1
      %p207 = por %p205, %p206
      %p208 = scmp.ne.s32.totalorder %s199, %s200
      %p209 = scmp.eq.s32.totalorder %s21, 0
      %p210 = por %p208, %p209
      %p211 = scmp.ne.s32.totalorder %s199, %s200
      %p212 = scmp.eq.s32.totalorder %s22, 1
      %p213 = por %p211, %p212
      %p215 = scmp.ne.s32.totalorder %s200, %s214
      %p216 = scmp.eq.s32.totalorder %s22, 0
      %p217 = por %p215, %p216
      %s219 = sadd.s32 %s218, 1
      %p222 = scmp.eq.s32.totalorder %s16, 1
      %p223 = scmp.ne.s32.totalorder %s218, %s220
      %p224 = scmp.eq.s32.totalorder %s16, 0
      %p225 = por %p223, %p224
      %p226 = scmp.ne.s32.totalorder %s218, %s220
      %p227 = scmp.eq.s32.totalorder %s21, 1
      %p228 = por %p226, %p227
      %p229 = scmp.ne.s32.totalorder %s220, %s221
      %p230 = scmp.eq.s32.totalorder %s21, 0
      %p231 = por %p229, %p230
      %p232 = scmp.ne.s32.totalorder %s220, %s221
      %p233 = scmp.eq.s32.totalorder %s22, 1
      %p234 = por %p232, %p233
      %p236 = scmp.ne.s32.totalorder %s221, %s235
      %p237 = scmp.eq.s32.totalorder %s22, 0
      %p238 = por %p236, %p237
      %s239 = ssub.s32 %s16, %s23
      %p240 = scmp.eq.s32.totalorder %s239, 0
      %s242 = sadd.s32 %s241, 1
      %s243 = scalar_select %p240, %s241, %s242
      %p246 = pneg %p240
      %p247 = scmp.eq.s32.totalorder %s16, 1
      %p248 = por %p246, %p247
      %p249 = scmp.ne.s32.totalorder %s241, %s244
      %p250 = scmp.eq.s32.totalorder %s16, 0
      %p251 = por %p249, %p250
      %p252 = scmp.ne.s32.totalorder %s241, %s244
      %p253 = scmp.eq.s32.totalorder %s21, 1
      %p254 = por %p252, %p253
      %p255 = scmp.ne.s32.totalorder %s244, %s245
      %p256 = scmp.eq.s32.totalorder %s21, 0
      %p257 = por %p255, %p256
      %p258 = scmp.ne.s32.totalorder %s244, %s245
      %p259 = scmp.eq.s32.totalorder %s22, 1
      %p260 = por %p258, %p259
      %p262 = scmp.ne.s32.totalorder %s245, %s261
      %p263 = scmp.eq.s32.totalorder %s22, 0
      %p264 = por %p262, %p263
      %p265 = scmp.le.s32.totalorder 1, %s16
      %p266 = scmp.lt.s32.totalorder %s16, 3
      %p267 = pnand %p265, %p266
      %p268 = pneg %p267
      // Predicated region
      $region9: #{net_forward.1} parent=5 // pred_check
        _
      $region10: #{net_forward.1} parent=5 // pred_check_branch
        %270 = sbr.rel (%p267) target = $region12
      $region11: #{net_forward.1} parent=5 // pred_region
        %s271 = ssub.s32 %s16, 1
        // Predicated region
        $region13: #{net_forward.1} parent=11 // pred_check
          %p272 = pneg %p63
        $region14: #{net_forward.1} parent=11 // pred_check_branch
          %274 = sbr.rel (%p272) target = $region16
        $region15: #{net_forward.1} parent=11 // pred_region
          _
        $region16: #{net_forward.1} parent=11 // pred_fallthru
          _
        // Predicated region
        $region17: #{net_forward.1} parent=11 // pred_check
          %p275 = pneg %p84
        $region18: #{net_forward.1} parent=11 // pred_check_branch
          %277 = sbr.rel (%p275) target = $region20
        $region19: #{net_forward.1} parent=11 // pred_region
          _
        $region20: #{net_forward.1} parent=11 // pred_fallthru
          _
        // Predicated region
        $region21: #{net_forward.1} parent=11 // pred_check
          %p278 = pneg %p105
        $region22: #{net_forward.1} parent=11 // pred_check_branch
          %280 = sbr.rel (%p278) target = $region24
        $region23: #{net_forward.1} parent=11 // pred_region
          _
        $region24: #{net_forward.1} parent=11 // pred_fallthru
          _
        // Predicated region
        $region25: #{net_forward.1} parent=11 // pred_check
          %p281 = pneg %p126
        $region26: #{net_forward.1} parent=11 // pred_check_branch
          %283 = sbr.rel (%p281) target = $region28
        $region27: #{net_forward.1} parent=11 // pred_region
          _
        $region28: #{net_forward.1} parent=11 // pred_fallthru
          _
        // Predicated region
        $region29: #{net_forward.1} parent=11 // pred_check
          %p284 = pneg %p147
        $region30: #{net_forward.1} parent=11 // pred_check_branch
          %286 = sbr.rel (%p284) target = $region32
        $region31: #{net_forward.1} parent=11 // pred_region
          _
        $region32: #{net_forward.1} parent=11 // pred_fallthru
          _
        // Predicated region
        $region33: #{net_forward.1} parent=11 // pred_check
          %p287 = pneg %p168
        $region34: #{net_forward.1} parent=11 // pred_check_branch
          %289 = sbr.rel (%p287) target = $region36
        $region35: #{net_forward.1} parent=11 // pred_region
          _
        $region36: #{net_forward.1} parent=11 // pred_fallthru
          _
        // Predicated region
        $region37: #{net_forward.1} parent=11 // pred_check
          %p290 = pneg %p189
        $region38: #{net_forward.1} parent=11 // pred_check_branch
          %292 = sbr.rel (%p290) target = $region40
        $region39: #{net_forward.1} parent=11 // pred_region
          _
        $region40: #{net_forward.1} parent=11 // pred_fallthru
          _
        // Predicated region
        $region41: #{net_forward.1} parent=11 // pred_check
          %p293 = pneg %p210
        $region42: #{net_forward.1} parent=11 // pred_check_branch
          %295 = sbr.rel (%p293) target = $region44
        $region43: #{net_forward.1} parent=11 // pred_region
          _
        $region44: #{net_forward.1} parent=11 // pred_fallthru
          _
        // Predicated region
        $region45: #{net_forward.1} parent=11 // pred_check
          %p296 = pneg %p231
        $region46: #{net_forward.1} parent=11 // pred_check_branch
          %298 = sbr.rel (%p296) target = $region48
        $region47: #{net_forward.1} parent=11 // pred_region
          _
        $region48: #{net_forward.1} parent=11 // pred_fallthru
          _
      $region12: #{net_forward.1} parent=5 // pred_fallthru
        _
      %p299 = scmp.lt.s32.totalorder %s16, 2
      // Predicated region
      $region49: #{net_forward.1} parent=5 // pred_check
        %p300 = pneg %p299
      $region50: #{net_forward.1} parent=5 // pred_check_branch
        %302 = sbr.rel (%p300) target = $region52
      $region51: #{net_forward.1} parent=5 // pred_region
        // Predicated region
        $region53: #{net_forward.1} parent=51 // pred_check
          %p303 = pneg %p36
        $region54: #{net_forward.1} parent=51 // pred_check_branch
          %305 = sbr.rel (%p303) target = $region56
        $region55: #{net_forward.1} parent=51 // pred_region
          %s306 = sand.u32 %s26, 1
          %s307 = sand.u32 %s26, 1
          %s308 = smul.addr %s307, 512
          %s309 = scalar_lea.vmem [#allocation2], %s308
          %s310 = smul.u32 2, %s16
          %s311 = smul.addr %s310, 8
          %s312 = scalar_lea.vmem %s0, %s311
          // Predicated region
          $region57: #{net_forward.1} parent=55 // pred_check
            _
          $region58: #{net_forward.1} parent=55 // pred_check_branch
            %314 = sbr.rel (0) target = $region60
          $region59: #{net_forward.1} parent=55 // pred_region
            // Predicated region
            $region61: #{net_forward.1} parent=59 // pred_check
              _
            $region62: #{net_forward.1} parent=59 // pred_check_branch
              %316 = sbr.rel (0) target = $region64
            $region63: #{net_forward.1} parent=59 // pred_region
              // Predicated region
              $region76: #{net_forward.1} parent=63 // pred_check
                _
              $region77: #{net_forward.1} parent=63 // pred_check_branch
                %457 = sbr.rel (0) target = $region79
              $region78: #{net_forward.1} parent=63 // pred_region
                loop: start=0, step=1, limit=1
                $region80: #{net_forward.1} parent=78 // loop_pre_header
                  _
                $region81: #{net_forward.1} parent=78 // loop_header
                  %s459 = sphi 0, %s463
                  %p460 = scmp.ge.s32.totalorder %s459, 1
                  %s464 = sphi %s312, %s312
                  %s465 = sphi %s309, %s309
                $region82: #{net_forward.1} parent=78 // loop_header_branch
                  %462 = sbr.rel (%p460) target = $region86
                $region83: #{net_forward.1} parent=78 // loop_body
                  %v466 = vld [vmem:[%s464] sm:$0xff]
                  %467 = vst [vmem:[%s465] sm:$0xff] %v466
                  %v468 = vld [vmem:[%s464 + $0x8] sm:$0xff]
                  %469 = vst [vmem:[%s465 + $0x8] sm:$0xff] %v468
                  %v470 = vld [vmem:[%s464 + $0x20] sm:$0xff]
                  %471 = vst [vmem:[%s465 + $0x10] sm:$0xff] %v470
                  %v472 = vld [vmem:[%s464 + $0x28] sm:$0xff]
                  %473 = vst [vmem:[%s465 + $0x18] sm:$0xff] %v472
                  %v474 = vld [vmem:[%s464 + $0x40] sm:$0xff]
                  %475 = vst [vmem:[%s465 + $0x20] sm:$0xff] %v474
                  %v476 = vld [vmem:[%s464 + $0x48] sm:$0xff]
                  %477 = vst [vmem:[%s465 + $0x28] sm:$0xff] %v476
                  %v478 = vld [vmem:[%s464 + $0x60] sm:$0xff]
                  %479 = vst [vmem:[%s465 + $0x30] sm:$0xff] %v478
                  %v480 = vld [vmem:[%s464 + $0x68] sm:$0xff]
                  %481 = vst [vmem:[%s465 + $0x38] sm:$0xff] %v480
                  %v482 = vld [vmem:[%s464 + $0x80] sm:$0xff]
                  %483 = vst [vmem:[%s465 + $0x40] sm:$0xff] %v482
                  %v484 = vld [vmem:[%s464 + $0x88] sm:$0xff]
                  %485 = vst [vmem:[%s465 + $0x48] sm:$0xff] %v484
                  %v486 = vld [vmem:[%s464 + $0xa0] sm:$0xff]
                  %487 = vst [vmem:[%s465 + $0x50] sm:$0xff] %v486
                  %v488 = vld [vmem:[%s464 + $0xa8] sm:$0xff]
                  %489 = vst [vmem:[%s465 + $0x58] sm:$0xff] %v488
                  %v490 = vld [vmem:[%s464 + $0xc0] sm:$0xff]
                  %491 = vst [vmem:[%s465 + $0x60] sm:$0xff] %v490
                  %v492 = vld [vmem:[%s464 + $0xc8] sm:$0xff]
                  %493 = vst [vmem:[%s465 + $0x68] sm:$0xff] %v492
                  %v494 = vld [vmem:[%s464 + $0xe0] sm:$0xff]
                  %495 = vst [vmem:[%s465 + $0x70] sm:$0xff] %v494
                  %v496 = vld [vmem:[%s464 + $0xe8] sm:$0xff]
                  %497 = vst [vmem:[%s465 + $0x78] sm:$0xff] %v496
                  %v498 = vld [vmem:[%s464 + $0x100] sm:$0xff]
                  %499 = vst [vmem:[%s465 + $0x80] sm:$0xff] %v498
                  %v500 = vld [vmem:[%s464 + $0x108] sm:$0xff]
                  %501 = vst [vmem:[%s465 + $0x88] sm:$0xff] %v500
                  %v502 = vld [vmem:[%s464 + $0x120] sm:$0xff]
                  %503 = vst [vmem:[%s465 + $0x90] sm:$0xff] %v502
                  %v504 = vld [vmem:[%s464 + $0x128] sm:$0xff]
                  %505 = vst [vmem:[%s465 + $0x98] sm:$0xff] %v504
                  %v506 = vld [vmem:[%s464 + $0x140] sm:$0xff]
                  %507 = vst [vmem:[%s465 + $0xa0] sm:$0xff] %v506
                  %v508 = vld [vmem:[%s464 + $0x148] sm:$0xff]
                  %509 = vst [vmem:[%s465 + $0xa8] sm:$0xff] %v508
                  %v510 = vld [vmem:[%s464 + $0x160] sm:$0xff]
                  %511 = vst [vmem:[%s465 + $0xb0] sm:$0xff] %v510
                  %v512 = vld [vmem:[%s464 + $0x168] sm:$0xff]
                  %513 = vst [vmem:[%s465 + $0xb8] sm:$0xff] %v512
                  %v514 = vld [vmem:[%s464 + $0x180] sm:$0xff]
                  %515 = vst [vmem:[%s465 + $0xc0] sm:$0xff] %v514
                  %v516 = vld [vmem:[%s464 + $0x188] sm:$0xff]
                  %517 = vst [vmem:[%s465 + $0xc8] sm:$0xff] %v516
                  %v518 = vld [vmem:[%s464 + $0x1a0] sm:$0xff]
                  %519 = vst [vmem:[%s465 + $0xd0] sm:$0xff] %v518
                  %v520 = vld [vmem:[%s464 + $0x1a8] sm:$0xff]
                  %521 = vst [vmem:[%s465 + $0xd8] sm:$0xff] %v520
                  %v522 = vld [vmem:[%s464 + $0x1c0] sm:$0xff]
                  %523 = vst [vmem:[%s465 + $0xe0] sm:$0xff] %v522
                  %v524 = vld [vmem:[%s464 + $0x1c8] sm:$0xff]
                  %525 = vst [vmem:[%s465 + $0xe8] sm:$0xff] %v524
                  %v526 = vld [vmem:[%s464 + $0x1e0] sm:$0xff]
                  %527 = vst [vmem:[%s465 + $0xf0] sm:$0xff] %v526
                  %v528 = vld [vmem:[%s464 + $0x1e8] sm:$0xff]
                  %529 = vst [vmem:[%s465 + $0xf8] sm:$0xff] %v528
                  %v530 = vld [vmem:[%s464 + $0x200] sm:$0xff]
                  %531 = vst [vmem:[%s465 + $0x100] sm:$0xff] %v530
                  %v532 = vld [vmem:[%s464 + $0x208] sm:$0xff]
                  %533 = vst [vmem:[%s465 + $0x108] sm:$0xff] %v532
                  %v534 = vld [vmem:[%s464 + $0x220] sm:$0xff]
                  %535 = vst [vmem:[%s465 + $0x110] sm:$0xff] %v534
                  %v536 = vld [vmem:[%s464 + $0x228] sm:$0xff]
                  %537 = vst [vmem:[%s465 + $0x118] sm:$0xff] %v536
                  %v538 = vld [vmem:[%s464 + $0x240] sm:$0xff]
                  %539 = vst [vmem:[%s465 + $0x120] sm:$0xff] %v538
                  %v540 = vld [vmem:[%s464 + $0x248] sm:$0xff]
                  %541 = vst [vmem:[%s465 + $0x128] sm:$0xff] %v540
                  %v542 = vld [vmem:[%s464 + $0x260] sm:$0xff]
                  %543 = vst [vmem:[%s465 + $0x130] sm:$0xff] %v542
                  %v544 = vld [vmem:[%s464 + $0x268] sm:$0xff]
                  %545 = vst [vmem:[%s465 + $0x138] sm:$0xff] %v544
                  %v546 = vld [vmem:[%s464 + $0x280] sm:$0xff]
                  %547 = vst [vmem:[%s465 + $0x140] sm:$0xff] %v546
                  %v548 = vld [vmem:[%s464 + $0x288] sm:$0xff]
                  %549 = vst [vmem:[%s465 + $0x148] sm:$0xff] %v548
                  %v550 = vld [vmem:[%s464 + $0x2a0] sm:$0xff]
                  %551 = vst [vmem:[%s465 + $0x150] sm:$0xff] %v550
                  %v552 = vld [vmem:[%s464 + $0x2a8] sm:$0xff]
                  %553 = vst [vmem:[%s465 + $0x158] sm:$0xff] %v552
                  %v554 = vld [vmem:[%s464 + $0x2c0] sm:$0xff]
                  %555 = vst [vmem:[%s465 + $0x160] sm:$0xff] %v554
                  %v556 = vld [vmem:[%s464 + $0x2c8] sm:$0xff]
                  %557 = vst [vmem:[%s465 + $0x168] sm:$0xff] %v556
                  %v558 = vld [vmem:[%s464 + $0x2e0] sm:$0xff]
                  %559 = vst [vmem:[%s465 + $0x170] sm:$0xff] %v558
                  %v560 = vld [vmem:[%s464 + $0x2e8] sm:$0xff]
                  %561 = vst [vmem:[%s465 + $0x178] sm:$0xff] %v560
                  %v562 = vld [vmem:[%s464 + $0x300] sm:$0xff]
                  %563 = vst [vmem:[%s465 + $0x180] sm:$0xff] %v562
                  %v564 = vld [vmem:[%s464 + $0x308] sm:$0xff]
                  %565 = vst [vmem:[%s465 + $0x188] sm:$0xff] %v564
                  %v566 = vld [vmem:[%s464 + $0x320] sm:$0xff]
                  %567 = vst [vmem:[%s465 + $0x190] sm:$0xff] %v566
                  %v568 = vld [vmem:[%s464 + $0x328] sm:$0xff]
                  %569 = vst [vmem:[%s465 + $0x198] sm:$0xff] %v568
                  %v570 = vld [vmem:[%s464 + $0x340] sm:$0xff]
                  %571 = vst [vmem:[%s465 + $0x1a0] sm:$0xff] %v570
                  %v572 = vld [vmem:[%s464 + $0x348] sm:$0xff]
                  %573 = vst [vmem:[%s465 + $0x1a8] sm:$0xff] %v572
                  %v574 = vld [vmem:[%s464 + $0x360] sm:$0xff]
                  %575 = vst [vmem:[%s465 + $0x1b0] sm:$0xff] %v574
                  %v576 = vld [vmem:[%s464 + $0x368] sm:$0xff]
                  %577 = vst [vmem:[%s465 + $0x1b8] sm:$0xff] %v576
                  %v578 = vld [vmem:[%s464 + $0x380] sm:$0xff]
                  %579 = vst [vmem:[%s465 + $0x1c0] sm:$0xff] %v578
                  %v580 = vld [vmem:[%s464 + $0x388] sm:$0xff]
                  %581 = vst [vmem:[%s465 + $0x1c8] sm:$0xff] %v580
                  %v582 = vld [vmem:[%s464 + $0x3a0] sm:$0xff]
                  %583 = vst [vmem:[%s465 + $0x1d0] sm:$0xff] %v582
                  %v584 = vld [vmem:[%s464 + $0x3a8] sm:$0xff]
                  %585 = vst [vmem:[%s465 + $0x1d8] sm:$0xff] %v584
                  %v586 = vld [vmem:[%s464 + $0x3c0] sm:$0xff]
                  %587 = vst [vmem:[%s465 + $0x1e0] sm:$0xff] %v586
                  %v588 = vld [vmem:[%s464 + $0x3c8] sm:$0xff]
                  %589 = vst [vmem:[%s465 + $0x1e8] sm:$0xff] %v588
                  %v590 = vld [vmem:[%s464 + $0x3e0] sm:$0xff]
                  %591 = vst [vmem:[%s465 + $0x1f0] sm:$0xff] %v590
                  %v592 = vld [vmem:[%s464 + $0x3e8] sm:$0xff]
                  %593 = vst [vmem:[%s465 + $0x1f8] sm:$0xff] %v592
                $region84: #{net_forward.1} parent=78 // loop_footer
                  %s463 = sadd.s32 1, %s459
                $region85: #{net_forward.1} parent=78 // loop_footer_branch
                  %458 = sbr.rel target = $region81
                $region86: #{net_forward.1} parent=78 // loop_exit
                  _
              $region79: #{net_forward.1} parent=63 // pred_fallthru
                _
              // Predicated region
              $region87: #{net_forward.1} parent=63 // pred_check
                _
              $region88: #{net_forward.1} parent=63 // pred_check_branch
                %595 = sbr.rel target = $region90
              $region89: #{net_forward.1} parent=63 // pred_region
                _
              $region90: #{net_forward.1} parent=63 // pred_fallthru
                _
            $region64: #{net_forward.1} parent=59 // pred_fallthru
              _
            // Predicated region
            $region65: #{net_forward.1} parent=59 // pred_check
              _
            $region66: #{net_forward.1} parent=59 // pred_check_branch
              %318 = sbr.rel target = $region68
            $region67: #{net_forward.1} parent=59 // pred_region
              loop: start=0, step=1, limit=1
              $region69: #{net_forward.1} parent=67 // loop_pre_header
                _
              $region70: #{net_forward.1} parent=67 // loop_header
                %s321 = sphi 0, %s325
                %p322 = scmp.ge.s32.totalorder %s321, 1
                %s326 = sphi %s312, %s312
                %s327 = sphi %s309, %s309
              $region71: #{net_forward.1} parent=67 // loop_header_branch
                %324 = sbr.rel (%p322) target = $region75
              $region72: #{net_forward.1} parent=67 // loop_body
                %v328 = vld [vmem:[%s326] sm:$0xff]
                %329 = vst [vmem:[%s327] sm:$0xff] %v328
                %v330 = vld [vmem:[%s326 + $0x8] sm:$0xff]
                %331 = vst [vmem:[%s327 + $0x8] sm:$0xff] %v330
                %v332 = vld [vmem:[%s326 + $0x20] sm:$0xff]
                %333 = vst [vmem:[%s327 + $0x10] sm:$0xff] %v332
                %v334 = vld [vmem:[%s326 + $0x28] sm:$0xff]
                %335 = vst [vmem:[%s327 + $0x18] sm:$0xff] %v334
                %v336 = vld [vmem:[%s326 + $0x40] sm:$0xff]
                %337 = vst [vmem:[%s327 + $0x20] sm:$0xff] %v336
                %v338 = vld [vmem:[%s326 + $0x48] sm:$0xff]
                %339 = vst [vmem:[%s327 + $0x28] sm:$0xff] %v338
                %v340 = vld [vmem:[%s326 + $0x60] sm:$0xff]
                %341 = vst [vmem:[%s327 + $0x30] sm:$0xff] %v340
                %v342 = vld [vmem:[%s326 + $0x68] sm:$0xff]
                %343 = vst [vmem:[%s327 + $0x38] sm:$0xff] %v342
                %v344 = vld [vmem:[%s326 + $0x80] sm:$0xff]
                %345 = vst [vmem:[%s327 + $0x40] sm:$0xff] %v344
                %v346 = vld [vmem:[%s326 + $0x88] sm:$0xff]
                %347 = vst [vmem:[%s327 + $0x48] sm:$0xff] %v346
                %v348 = vld [vmem:[%s326 + $0xa0] sm:$0xff]
                %349 = vst [vmem:[%s327 + $0x50] sm:$0xff] %v348
                %v350 = vld [vmem:[%s326 + $0xa8] sm:$0xff]
                %351 = vst [vmem:[%s327 + $0x58] sm:$0xff] %v350
                %v352 = vld [vmem:[%s326 + $0xc0] sm:$0xff]
                %353 = vst [vmem:[%s327 + $0x60] sm:$0xff] %v352
                %v354 = vld [vmem:[%s326 + $0xc8] sm:$0xff]
                %355 = vst [vmem:[%s327 + $0x68] sm:$0xff] %v354
                %v356 = vld [vmem:[%s326 + $0xe0] sm:$0xff]
                %357 = vst [vmem:[%s327 + $0x70] sm:$0xff] %v356
                %v358 = vld [vmem:[%s326 + $0xe8] sm:$0xff]
                %359 = vst [vmem:[%s327 + $0x78] sm:$0xff] %v358
                %v360 = vld [vmem:[%s326 + $0x100] sm:$0xff]
                %361 = vst [vmem:[%s327 + $0x80] sm:$0xff] %v360
                %v362 = vld [vmem:[%s326 + $0x108] sm:$0xff]
                %363 = vst [vmem:[%s327 + $0x88] sm:$0xff] %v362
                %v364 = vld [vmem:[%s326 + $0x120] sm:$0xff]
                %365 = vst [vmem:[%s327 + $0x90] sm:$0xff] %v364
                %v366 = vld [vmem:[%s326 + $0x128] sm:$0xff]
                %367 = vst [vmem:[%s327 + $0x98] sm:$0xff] %v366
                %v368 = vld [vmem:[%s326 + $0x140] sm:$0xff]
                %369 = vst [vmem:[%s327 + $0xa0] sm:$0xff] %v368
                %v370 = vld [vmem:[%s326 + $0x148] sm:$0xff]
                %371 = vst [vmem:[%s327 + $0xa8] sm:$0xff] %v370
                %v372 = vld [vmem:[%s326 + $0x160] sm:$0xff]
                %373 = vst [vmem:[%s327 + $0xb0] sm:$0xff] %v372
                %v374 = vld [vmem:[%s326 + $0x168] sm:$0xff]
                %375 = vst [vmem:[%s327 + $0xb8] sm:$0xff] %v374
                %v376 = vld [vmem:[%s326 + $0x180] sm:$0xff]
                %377 = vst [vmem:[%s327 + $0xc0] sm:$0xff] %v376
                %v378 = vld [vmem:[%s326 + $0x188] sm:$0xff]
                %379 = vst [vmem:[%s327 + $0xc8] sm:$0xff] %v378
                %v380 = vld [vmem:[%s326 + $0x1a0] sm:$0xff]
                %381 = vst [vmem:[%s327 + $0xd0] sm:$0xff] %v380
                %v382 = vld [vmem:[%s326 + $0x1a8] sm:$0xff]
                %383 = vst [vmem:[%s327 + $0xd8] sm:$0xff] %v382
                %v384 = vld [vmem:[%s326 + $0x1c0] sm:$0xff]
                %385 = vst [vmem:[%s327 + $0xe0] sm:$0xff] %v384
                %v386 = vld [vmem:[%s326 + $0x1c8] sm:$0xff]
                %387 = vst [vmem:[%s327 + $0xe8] sm:$0xff] %v386
                %v388 = vld [vmem:[%s326 + $0x1e0] sm:$0xff]
                %389 = vst [vmem:[%s327 + $0xf0] sm:$0xff] %v388
                %v390 = vld [vmem:[%s326 + $0x1e8] sm:$0xff]
                %391 = vst [vmem:[%s327 + $0xf8] sm:$0xff] %v390
                %v392 = vld [vmem:[%s326 + $0x200] sm:$0xff]
                %393 = vst [vmem:[%s327 + $0x100] sm:$0xff] %v392
                %v394 = vld [vmem:[%s326 + $0x208] sm:$0xff]
                %395 = vst [vmem:[%s327 + $0x108] sm:$0xff] %v394
                %v396 = vld [vmem:[%s326 + $0x220] sm:$0xff]
                %397 = vst [vmem:[%s327 + $0x110] sm:$0xff] %v396
                %v398 = vld [vmem:[%s326 + $0x228] sm:$0xff]
                %399 = vst [vmem:[%s327 + $0x118] sm:$0xff] %v398
                %v400 = vld [vmem:[%s326 + $0x240] sm:$0xff]
                %401 = vst [vmem:[%s327 + $0x120] sm:$0xff] %v400
                %v402 = vld [vmem:[%s326 + $0x248] sm:$0xff]
                %403 = vst [vmem:[%s327 + $0x128] sm:$0xff] %v402
                %v404 = vld [vmem:[%s326 + $0x260] sm:$0xff]
                %405 = vst [vmem:[%s327 + $0x130] sm:$0xff] %v404
                %v406 = vld [vmem:[%s326 + $0x268] sm:$0xff]
                %407 = vst [vmem:[%s327 + $0x138] sm:$0xff] %v406
                %v408 = vld [vmem:[%s326 + $0x280] sm:$0xff]
                %409 = vst [vmem:[%s327 + $0x140] sm:$0xff] %v408
                %v410 = vld [vmem:[%s326 + $0x288] sm:$0xff]
                %411 = vst [vmem:[%s327 + $0x148] sm:$0xff] %v410
                %v412 = vld [vmem:[%s326 + $0x2a0] sm:$0xff]
                %413 = vst [vmem:[%s327 + $0x150] sm:$0xff] %v412
                %v414 = vld [vmem:[%s326 + $0x2a8] sm:$0xff]
                %415 = vst [vmem:[%s327 + $0x158] sm:$0xff] %v414
                %v416 = vld [vmem:[%s326 + $0x2c0] sm:$0xff]
                %417 = vst [vmem:[%s327 + $0x160] sm:$0xff] %v416
                %v418 = vld [vmem:[%s326 + $0x2c8] sm:$0xff]
                %419 = vst [vmem:[%s327 + $0x168] sm:$0xff] %v418
                %v420 = vld [vmem:[%s326 + $0x2e0] sm:$0xff]
                %421 = vst [vmem:[%s327 + $0x170] sm:$0xff] %v420
                %v422 = vld [vmem:[%s326 + $0x2e8] sm:$0xff]
                %423 = vst [vmem:[%s327 + $0x178] sm:$0xff] %v422
                %v424 = vld [vmem:[%s326 + $0x300] sm:$0xff]
                %425 = vst [vmem:[%s327 + $0x180] sm:$0xff] %v424
                %v426 = vld [vmem:[%s326 + $0x308] sm:$0xff]
                %427 = vst [vmem:[%s327 + $0x188] sm:$0xff] %v426
                %v428 = vld [vmem:[%s326 + $0x320] sm:$0xff]
                %429 = vst [vmem:[%s327 + $0x190] sm:$0xff] %v428
                %v430 = vld [vmem:[%s326 + $0x328] sm:$0xff]
                %431 = vst [vmem:[%s327 + $0x198] sm:$0xff] %v430
                %v432 = vld [vmem:[%s326 + $0x340] sm:$0xff]
                %433 = vst [vmem:[%s327 + $0x1a0] sm:$0xff] %v432
                %v434 = vld [vmem:[%s326 + $0x348] sm:$0xff]
                %435 = vst [vmem:[%s327 + $0x1a8] sm:$0xff] %v434
                %v436 = vld [vmem:[%s326 + $0x360] sm:$0xff]
                %437 = vst [vmem:[%s327 + $0x1b0] sm:$0xff] %v436
                %v438 = vld [vmem:[%s326 + $0x368] sm:$0xff]
                %439 = vst [vmem:[%s327 + $0x1b8] sm:$0xff] %v438
                %v440 = vld [vmem:[%s326 + $0x380] sm:$0xff]
                %441 = vst [vmem:[%s327 + $0x1c0] sm:$0xff] %v440
                %v442 = vld [vmem:[%s326 + $0x388] sm:$0xff]
                %443 = vst [vmem:[%s327 + $0x1c8] sm:$0xff] %v442
                %v444 = vld [vmem:[%s326 + $0x3a0] sm:$0xff]
                %445 = vst [vmem:[%s327 + $0x1d0] sm:$0xff] %v444
                %v446 = vld [vmem:[%s326 + $0x3a8] sm:$0xff]
                %447 = vst [vmem:[%s327 + $0x1d8] sm:$0xff] %v446
                %v448 = vld [vmem:[%s326 + $0x3c0] sm:$0xff]
                %449 = vst [vmem:[%s327 + $0x1e0] sm:$0xff] %v448
                %v450 = vld [vmem:[%s326 + $0x3c8] sm:$0xff]
                %451 = vst [vmem:[%s327 + $0x1e8] sm:$0xff] %v450
                %v452 = vld [vmem:[%s326 + $0x3e0] sm:$0xff]
                %453 = vst [vmem:[%s327 + $0x1f0] sm:$0xff] %v452
                %v454 = vld [vmem:[%s326 + $0x3e8] sm:$0xff]
                %455 = vst [vmem:[%s327 + $0x1f8] sm:$0xff] %v454
              $region73: #{net_forward.1} parent=67 // loop_footer
                %s325 = sadd.s32 1, %s321
              $region74: #{net_forward.1} parent=67 // loop_footer_branch
                %320 = sbr.rel target = $region70
              $region75: #{net_forward.1} parent=67 // loop_exit
                _
            $region68: #{net_forward.1} parent=59 // pred_fallthru
              _
          $region60: #{net_forward.1} parent=55 // pred_fallthru
            _
          %596 = vnop
        $region56: #{net_forward.1} parent=51 // pred_fallthru
          _
      $region52: #{net_forward.1} parent=5 // pred_fallthru
        _
      %p597 = scmp.le.s32.totalorder 1, %s16
      %p598 = scmp.lt.s32.totalorder %s16, 3
      %p599 = pnand %p597, %p598
      %p600 = pneg %p599
      // Predicated region
      $region91: #{net_forward.1} parent=5 // pred_check
        _
      $region92: #{net_forward.1} parent=5 // pred_check_branch
        %602 = sbr.rel (%p599) target = $region94
      $region93: #{net_forward.1} parent=5 // pred_region
        %s603 = ssub.s32 %s16, 1
        %s604 = sand.u32 %s29, 1
        %s605 = sand.u32 %s29, 1
        %s606 = smul.addr %s605, 512
        %s607 = scalar_lea.vmem [#allocation2], %s606
        // Predicated region
        $region95: #{net_forward.1} parent=93 // pred_check
          %p608 = pneg %p42
        $region96: #{net_forward.1} parent=93 // pred_check_branch
          %610 = sbr.rel (%p608) target = $region98
        $region97: #{net_forward.1} parent=93 // pred_region
          _
        $region98: #{net_forward.1} parent=93 // pred_fallthru
          _
        %s611 = sand.u32 %s29, 1
        %s612 = sand.u32 %s29, 1
        %s613 = smul.addr %s612, 512
        %s614 = scalar_lea.vmem [#allocation2], %s613
        %p615 = pneg %p42
        %p616 = pneg %p39
        %p617 = pneg %p63
        %p618 = pneg %p60
        %p619 = pneg %p84
        %p620 = pneg %p81
        %p621 = pneg %p105
        %p622 = pneg %p102
        %p623 = pneg %p126
        %p624 = pneg %p123
        %p625 = pneg %p147
        %p626 = pneg %p144
        %p627 = pneg %p168
        %p628 = pneg %p165
        %p629 = pneg %p189
        %p630 = pneg %p186
        %p631 = pneg %p210
        %p632 = pneg %p207
        %p633 = pneg %p231
        %p634 = pneg %p228
        %p635 = pneg %p257
        %p636 = pneg %p254
        %s637 = smul.u32 2, %s21
        %p638 = scmp.lt.s32.totalorder %s637, 3
        %s639 = scalar_select %p638, %s637, 3
        %s640 = smul.addr %s639, 8
        %s641 = scalar_lea.vmem %s10, %s640
        %s642 = smul.u32 2, %s21
        %s643 = smul.u32 2, %s21
        %p644 = scmp.lt.s32.totalorder %s643, 3
        %s645 = scalar_select %p644, %s643, 3
        %s646 = smul.addr %s645, 8
        %s647 = scalar_lea.vmem %s10, %s646
        %s648 = smul.u32 2, %s21
        %v650 = vld [vmem:[%s607] sm:$0xff]
        %v651 = vld [vmem:[%s607 + $0x8] sm:$0xff]
        %v652 = vld [vmem:[%s607 + $0x10] sm:$0xff]
        %v653 = vld [vmem:[%s607 + $0x18] sm:$0xff]
        %v654 = vld [vmem:[%s607 + $0x20] sm:$0xff]
        %v655 = vld [vmem:[%s607 + $0x28] sm:$0xff]
        %v656 = vld [vmem:[%s607 + $0x30] sm:$0xff]
        %v657 = vld [vmem:[%s607 + $0x38] sm:$0xff]
        %v658 = vld [vmem:[%s607 + $0x40] sm:$0xff]
        %v659 = vld [vmem:[%s607 + $0x48] sm:$0xff]
        %v660 = vld [vmem:[%s607 + $0x50] sm:$0xff]
        %v661 = vld [vmem:[%s607 + $0x58] sm:$0xff]
        %v662 = vld [vmem:[%s607 + $0x60] sm:$0xff]
        %v663 = vld [vmem:[%s607 + $0x68] sm:$0xff]
        %v664 = vld [vmem:[%s607 + $0x70] sm:$0xff]
        %v665 = vld [vmem:[%s607 + $0x78] sm:$0xff]
        %v666 = vld [vmem:[%s607 + $0x80] sm:$0xff]
        %v667 = vld [vmem:[%s607 + $0x88] sm:$0xff]
        %v668 = vld [vmem:[%s607 + $0x90] sm:$0xff]
        %v669 = vld [vmem:[%s607 + $0x98] sm:$0xff]
        %v670 = vld [vmem:[%s607 + $0xa0] sm:$0xff]
        %v671 = vld [vmem:[%s607 + $0xa8] sm:$0xff]
        %v672 = vld [vmem:[%s607 + $0xb0] sm:$0xff]
        %v673 = vld [vmem:[%s607 + $0xb8] sm:$0xff]
        %v674 = vld [vmem:[%s607 + $0xc0] sm:$0xff]
        %v675 = vld [vmem:[%s607 + $0xc8] sm:$0xff]
        %v676 = vld [vmem:[%s607 + $0xd0] sm:$0xff]
        %v677 = vld [vmem:[%s607 + $0xd8] sm:$0xff]
        %v678 = vld [vmem:[%s607 + $0xe0] sm:$0xff]
        %v679 = vld [vmem:[%s607 + $0xe8] sm:$0xff]
        %v680 = vld [vmem:[%s607 + $0xf0] sm:$0xff]
        %v681 = vld [vmem:[%s607 + $0xf8] sm:$0xff]
        %v682 = vld [vmem:[%s607 + $0x100] sm:$0xff]
        %v683 = vld [vmem:[%s607 + $0x108] sm:$0xff]
        %v684 = vld [vmem:[%s607 + $0x110] sm:$0xff]
        %v685 = vld [vmem:[%s607 + $0x118] sm:$0xff]
        %v686 = vld [vmem:[%s607 + $0x120] sm:$0xff]
        %v687 = vld [vmem:[%s607 + $0x128] sm:$0xff]
        %v688 = vld [vmem:[%s607 + $0x130] sm:$0xff]
        %v689 = vld [vmem:[%s607 + $0x138] sm:$0xff]
        %v690 = vld [vmem:[%s607 + $0x140] sm:$0xff]
        %v691 = vld [vmem:[%s607 + $0x148] sm:$0xff]
        %v692 = vld [vmem:[%s607 + $0x150] sm:$0xff]
        %v693 = vld [vmem:[%s607 + $0x158] sm:$0xff]
        %v694 = vld [vmem:[%s607 + $0x160] sm:$0xff]
        %v695 = vld [vmem:[%s607 + $0x168] sm:$0xff]
        %v696 = vld [vmem:[%s607 + $0x170] sm:$0xff]
        %v697 = vld [vmem:[%s607 + $0x178] sm:$0xff]
        %v698 = vld [vmem:[%s607 + $0x180] sm:$0xff]
        %v699 = vld [vmem:[%s607 + $0x188] sm:$0xff]
        %v700 = vld [vmem:[%s607 + $0x190] sm:$0xff]
        %v701 = vld [vmem:[%s607 + $0x198] sm:$0xff]
        %v702 = vld [vmem:[%s607 + $0x1a0] sm:$0xff]
        %v703 = vld [vmem:[%s607 + $0x1a8] sm:$0xff]
        %v704 = vld [vmem:[%s607 + $0x1b0] sm:$0xff]
        %v705 = vld [vmem:[%s607 + $0x1b8] sm:$0xff]
        %v706 = vld [vmem:[%s607 + $0x1c0] sm:$0xff]
        %v707 = vld [vmem:[%s607 + $0x1c8] sm:$0xff]
        %v708 = vld [vmem:[%s607 + $0x1d0] sm:$0xff]
        %v709 = vld [vmem:[%s607 + $0x1d8] sm:$0xff]
        %v710 = vld [vmem:[%s607 + $0x1e0] sm:$0xff]
        %v711 = vld [vmem:[%s607 + $0x1e8] sm:$0xff]
        %v712 = vld [vmem:[%s607 + $0x1f0] sm:$0xff]
        %v713 = vld [vmem:[%s607 + $0x1f8] sm:$0xff]
        %v714 = vpack.c.bf16 %v651, %v650
        %v715 = vpack.c.bf16 %v653, %v652
        %v716 = vpack.c.bf16 %v655, %v654
        %v717 = vpack.c.bf16 %v657, %v656
        %v718 = vpack.c.bf16 %v659, %v658
        %v719 = vpack.c.bf16 %v661, %v660
        %v720 = vpack.c.bf16 %v663, %v662
        %v721 = vpack.c.bf16 %v665, %v664
        %v722 = vpack.c.bf16 %v667, %v666
        %v723 = vpack.c.bf16 %v669, %v668
        %v724 = vpack.c.bf16 %v671, %v670
        %v725 = vpack.c.bf16 %v673, %v672
        %v726 = vpack.c.bf16 %v675, %v674
        %v727 = vpack.c.bf16 %v677, %v676
        %v728 = vpack.c.bf16 %v679, %v678
        %v729 = vpack.c.bf16 %v681, %v680
        %v730 = vpack.c.bf16 %v683, %v682
        %v731 = vpack.c.bf16 %v685, %v684
        %v732 = vpack.c.bf16 %v687, %v686
        %v733 = vpack.c.bf16 %v689, %v688
        %v734 = vpack.c.bf16 %v691, %v690
        %v735 = vpack.c.bf16 %v693, %v692
        %v736 = vpack.c.bf16 %v695, %v694
        %v737 = vpack.c.bf16 %v697, %v696
        %v738 = vpack.c.bf16 %v699, %v698
        %v739 = vpack.c.bf16 %v701, %v700
        %v740 = vpack.c.bf16 %v703, %v702
        %v741 = vpack.c.bf16 %v705, %v704
        %v742 = vpack.c.bf16 %v707, %v706
        %v743 = vpack.c.bf16 %v709, %v708
        %v744 = vpack.c.bf16 %v711, %v710
        %v745 = vpack.c.bf16 %v713, %v712
        %v746 = vld [vmem:[%s1] sm:$0xff]
        %v747 = vld [vmem:[%s1 + $0x8] sm:$0xff]
        %v748 = vld [vmem:[%s1 + $0x10] sm:$0xff]
        %v749 = vld [vmem:[%s1 + $0x18] sm:$0xff]
        %v750 = vld [vmem:[%s1 + $0x20] sm:$0xff]
        %v751 = vld [vmem:[%s1 + $0x28] sm:$0xff]
        %v752 = vld [vmem:[%s1 + $0x30] sm:$0xff]
        %v753 = vld [vmem:[%s1 + $0x38] sm:$0xff]
        %v754 = vld [vmem:[%s1 + $0x40] sm:$0xff]
        %v755 = vld [vmem:[%s1 + $0x48] sm:$0xff]
        %v756 = vld [vmem:[%s1 + $0x50] sm:$0xff]
        %v757 = vld [vmem:[%s1 + $0x58] sm:$0xff]
        %s758 = scalar_lea.vmem %s1, 96
        %v759 = vld [vmem:[%s758] sm:$0xff]
        %v760 = vld [vmem:[%s758 + $0x8] sm:$0xff]
        %v761 = vld [vmem:[%s758 + $0x10] sm:$0xff]
        %v762 = vld [vmem:[%s758 + $0x18] sm:$0xff]
        %v763 = vld [vmem:[%s758 + $0x20] sm:$0xff]
        %v764 = vld [vmem:[%s758 + $0x28] sm:$0xff]
        %v765 = vld [vmem:[%s758 + $0x30] sm:$0xff]
        %v766 = vld [vmem:[%s758 + $0x38] sm:$0xff]
        %v767 = vld [vmem:[%s758 + $0x40] sm:$0xff]
        %v768 = vld [vmem:[%s758 + $0x48] sm:$0xff]
        %v769 = vld [vmem:[%s758 + $0x50] sm:$0xff]
        %v770 = vld [vmem:[%s758 + $0x58] sm:$0xff]
        %v783 = vunpack.c.l.b16 %v759
        %v784 = vunpack.c.h.b16 %v759
        %v785 = vunpack.c.l.b16 %v760
        %v786 = vunpack.c.h.b16 %v760
        %v787 = vunpack.c.l.b16 %v761
        %v788 = vunpack.c.h.b16 %v761
        %v789 = vunpack.c.l.b16 %v762
        %v790 = vunpack.c.h.b16 %v762
        %v791 = vunpack.c.l.b16 %v763
        %v792 = vunpack.c.h.b16 %v763
        %v793 = vunpack.c.l.b16 %v764
        %v794 = vunpack.c.h.b16 %v764
        %v795 = vunpack.c.l.b16 %v765
        %v796 = vunpack.c.h.b16 %v765
        %v797 = vunpack.c.l.b16 %v766
        %v798 = vunpack.c.h.b16 %v766
        %v799 = vunpack.c.l.b16 %v767
        %v800 = vunpack.c.h.b16 %v767
        %v801 = vunpack.c.l.b16 %v768
        %v802 = vunpack.c.h.b16 %v768
        %v803 = vunpack.c.l.b16 %v769
        %v804 = vunpack.c.h.b16 %v769
        %v805 = vunpack.c.l.b16 %v770
        %v806 = vunpack.c.h.b16 %v770
        %v807 = vpack.c.b16 %v785, %v783
        %v808 = vpack.c.b16 %v786, %v784
        %v809 = vpack.c.b16 %v789, %v787
        %v810 = vpack.c.b16 %v790, %v788
        %v811 = vpack.c.b16 %v793, %v791
        %v812 = vpack.c.b16 %v794, %v792
        %v813 = vpack.c.b16 %v797, %v795
        %v814 = vpack.c.b16 %v798, %v796
        %v815 = vpack.c.b16 %v801, %v799
        %v816 = vpack.c.b16 %v802, %v800
        %v817 = vpack.c.b16 %v805, %v803
        %v818 = vpack.c.b16 %v806, %v804
        %vm831 = vcmask 785408
        %v833 = vsel %vm831, %v715, 0
        %v836 = vsel %vm831, %v716, 0
        %v839 = vsel %vm831, %v717, 0
        %v842 = vsel %vm831, %v718, 0
        %v845 = vsel %vm831, %v719, 0
        %v848 = vsel %vm831, %v720, 0
        %v851 = vsel %vm831, %v721, 0
        %v854 = vsel %vm831, %v722, 0
        %v857 = vsel %vm831, %v723, 0
        %v860 = vsel %vm831, %v724, 0
        %v863 = vsel %vm831, %v725, 0
        %v866 = vsel %vm831, %v726, 0
        %v869 = vsel %vm831, %v727, 0
        %v872 = vsel %vm831, %v728, 0
        %v875 = vsel %vm831, %v729, 0
        %v878 = vsel %vm831, %v730, 0
        %v881 = vsel %vm831, %v731, 0
        %v884 = vsel %vm831, %v732, 0
        %v887 = vsel %vm831, %v733, 0
        %v890 = vsel %vm831, %v734, 0
        %v893 = vsel %vm831, %v735, 0
        %v896 = vsel %vm831, %v736, 0
        %v899 = vsel %vm831, %v737, 0
        %v902 = vsel %vm831, %v738, 0
        %v905 = vsel %vm831, %v739, 0
        %v908 = vsel %vm831, %v740, 0
        %v911 = vsel %vm831, %v741, 0
        %v914 = vsel %vm831, %v742, 0
        %916 = vmatprep.subr.bf16.mxu0 %v808
        %917 = vmatpush1.bf16.msra.mxu0 %v807
        %918 = vmatprep.subr.bf16.mxu0 %v810
        %919 = vmatpush1.bf16.msra.mxu0 %v809
        %920 = vmatprep.subr.bf16.mxu0 %v812
        %921 = vmatpush1.bf16.msra.mxu0 %v811
        %922 = vmatprep.subr.bf16.mxu0 %v814
        %923 = vmatpush1.bf16.msra.mxu0 %v813
        %924 = vmatprep.subr.bf16.mxu0 %v816
        %925 = vmatpush1.bf16.msra.mxu0 %v815
        %926 = vmatprep.subr.bf16.mxu0 %v818
        %927 = vmatpush1.bf16.msra.mxu0 %v817
        %928 = vmatprep.subr.bf16.mxu0 0
        %929 = vmatpush1.bf16.msra.mxu0 0
        %930 = vmatprep.subr.bf16.mxu0 0
        %931 = vmatpush1.bf16.msra.mxu0 0
        %932 = vmatprep.subr.bf16.mxu0 0
        %933 = vmatpush1.bf16.msra.mxu0 0
        %934 = vmatprep.subr.bf16.mxu0 0
        %935 = vmatpush1.bf16.msra.mxu0 0
        %936 = vmatprep.subr.bf16.mxu0 0
        %937 = vmatpush1.bf16.msra.mxu0 0
        %938 = vmatprep.subr.bf16.mxu0 0
        %939 = vmatpush1.bf16.msra.mxu0 0
        %940 = vmatprep.subr.bf16.mxu0 0
        %941 = vmatpush1.bf16.msra.mxu0 0
        %942 = vmatprep.subr.bf16.mxu0 0
        %943 = vmatpush1.bf16.msra.mxu0 0
        %944 = vmatprep.subr.bf16.mxu0 0
        %945 = vmatpush1.bf16.msra.mxu0 0
        %946 = vmatprep.subr.bf16.mxu0 0
        %947 = vmatpush1.bf16.msra.mxu0 0
        %948 = vmatprep.mubr.bf16.mxu0 0
        %949 = vmatmul.mubr.bf16.gmra.mrb[0].mxu0 %v833
        %v950 = vpop.f32.mrb[0].mxu0
        %v951 = vadd.f32 0.0, %v950
        %v952 = vpop.f32.mrb[0].mxu0
        %v953 = vadd.f32 0.0, %v952
        %v954 = vpop.f32.mrb[0].mxu0
        %v955 = vadd.f32 0.0, %v954
        %v956 = vpop.f32.mrb[0].mxu0
        %v957 = vadd.f32 0.0, %v956
        %958 = vmatprep.mubr.bf16.mxu0 0
        %959 = vmatmul.mubr.bf16.gmra.mrb[0].mxu0 %v836
        %v960 = vpop.f32.mrb[0].mxu0
        %v961 = vadd.f32 0.0, %v960
        %v962 = vpop.f32.mrb[0].mxu0
        %v963 = vadd.f32 0.0, %v962
        %v964 = vpop.f32.mrb[0].mxu0
        %v965 = vadd.f32 0.0, %v964
        %v966 = vpop.f32.mrb[0].mxu0
        %v967 = vadd.f32 0.0, %v966
        %968 = vmatprep.mubr.bf16.mxu0 0
        %969 = vmatmul.mubr.bf16.gmra.mrb[0].mxu0 %v839
        %v970 = vpop.f32.mrb[0].mxu0
        %v971 = vadd.f32 0.0, %v970
        %v972 = vpop.f32.mrb[0].mxu0
        %v973 = vadd.f32 0.0, %v972
        %v974 = vpop.f32.mrb[0].mxu0
        %v975 = vadd.f32 0.0, %v974
        %v976 = vpop.f32.mrb[0].mxu0
        %v977 = vadd.f32 0.0, %v976
        %978 = vmatprep.mubr.bf16.mxu0 0
        %979 = vmatmul.mubr.bf16.gmra.mrb[0].mxu0 %v842
        %v980 = vpop.f32.mrb[0].mxu0
        %v981 = vadd.f32 0.0, %v980
        %v982 = vpop.f32.mrb[0].mxu0
        %v983 = vadd.f32 0.0, %v982
        %v984 = vpop.f32.mrb[0].mxu0
        %v985 = vadd.f32 0.0, %v984
        %v986 = vpop.f32.mrb[0].mxu0
        %v987 = vadd.f32 0.0, %v986
        %988 = vmatprep.mubr.bf16.mxu0 0
        %989 = vmatmul.mubr.bf16.gmra.mrb[0].mxu0 %v845
        %v990 = vpop.f32.mrb[0].mxu0
        %v991 = vadd.f32 0.0, %v990
        %v992 = vpop.f32.mrb[0].mxu0
        %v993 = vadd.f32 0.0, %v992
        %v994 = vpop.f32.mrb[0].mxu0
        %v995 = vadd.f32 0.0, %v994
        %v996 = vpop.f32.mrb[0].mxu0
        %v997 = vadd.f32 0.0, %v996
        %998 = vmatprep.mubr.bf16.mxu0 0
        %999 = vmatmul.mubr.bf16.gmra.mrb[0].mxu0 %v848
        %v1000 = vpop.f32.mrb[0].mxu0
        %v1001 = vadd.f32 0.0, %v1000
        %v1002 = vpop.f32.mrb[0].mxu0
        %v1003 = vadd.f32 0.0, %v1002
        %v1004 = vpop.f32.mrb[0].mxu0
        %v1005 = vadd.f32 0.0, %v1004
        %v1006 = vpop.f32.mrb[0].mxu0
        %v1007 = vadd.f32 0.0, %v1006
        %1008 = vmatprep.mubr.bf16.mxu0 0
        %1009 = vmatmul.mubr.bf16.gmra.mrb[0].mxu0 %v851
        %v1010 = vpop.f32.mrb[0].mxu0
        %v1011 = vadd.f32 0.0, %v1010
        %v1012 = vpop.f32.mrb[0].mxu0
        %v1013 = vadd.f32 0.0, %v1012
        %v1014 = vpop.f32.mrb[0].mxu0
        %v1015 = vadd.f32 0.0, %v1014
        %v1016 = vpop.f32.mrb[0].mxu0
        %v1017 = vadd.f32 0.0, %v1016
        %1018 = vmatprep.mubr.bf16.mxu0 0
        %1019 = vmatmul.mubr.bf16.gmra.mrb[0].mxu0 %v854
        %v1020 = vpop.f32.mrb[0].mxu0
        %v1021 = vadd.f32 0.0, %v1020
        %v1022 = vpop.f32.mrb[0].mxu0
        %v1023 = vadd.f32 0.0, %v1022
        %v1024 = vpop.f32.mrb[0].mxu0
        %v1025 = vadd.f32 0.0, %v1024
        %v1026 = vpop.f32.mrb[0].mxu0
        %v1027 = vadd.f32 0.0, %v1026
        %1028 = vmatprep.mubr.bf16.mxu0 0
        %1029 = vmatmul.mubr.bf16.gmra.mrb[0].mxu0 %v857
        %v1030 = vpop.f32.mrb[0].mxu0
        %v1031 = vadd.f32 0.0, %v1030
        %v1032 = vpop.f32.mrb[0].mxu0
        %v1033 = vadd.f32 0.0, %v1032
        %v1034 = vpop.f32.mrb[0].mxu0
        %v1035 = vadd.f32 0.0, %v1034
        %v1036 = vpop.f32.mrb[0].mxu0
        %v1037 = vadd.f32 0.0, %v1036
        %1038 = vmatprep.mubr.bf16.mxu0 0
        %1039 = vmatmul.mubr.bf16.gmra.mrb[0].mxu0 %v860
        %v1040 = vpop.f32.mrb[0].mxu0
        %v1041 = vadd.f32 0.0, %v1040
        %v1042 = vpop.f32.mrb[0].mxu0
        %v1043 = vadd.f32 0.0, %v1042
        %v1044 = vpop.f32.mrb[0].mxu0
        %v1045 = vadd.f32 0.0, %v1044
        %v1046 = vpop.f32.mrb[0].mxu0
        %v1047 = vadd.f32 0.0, %v1046
        %1048 = vmatprep.mubr.bf16.mxu0 0
        %1049 = vmatmul.mubr.bf16.gmra.mrb[0].mxu0 %v863
        %v1050 = vpop.f32.mrb[0].mxu0
        %v1051 = vadd.f32 0.0, %v1050
        %v1052 = vpop.f32.mrb[0].mxu0
        %v1053 = vadd.f32 0.0, %v1052
        %v1054 = vpop.f32.mrb[0].mxu0
        %v1055 = vadd.f32 0.0, %v1054
        %v1056 = vpop.f32.mrb[0].mxu0
        %v1057 = vadd.f32 0.0, %v1056
        %1058 = vmatprep.mubr.bf16.mxu0 0
        %1059 = vmatmul.mubr.bf16.gmra.mrb[0].mxu0 %v866
        %v1060 = vpop.f32.mrb[0].mxu0
        %v1061 = vadd.f32 0.0, %v1060
        %v1062 = vpop.f32.mrb[0].mxu0
        %v1063 = vadd.f32 0.0, %v1062
        %v1064 = vpop.f32.mrb[0].mxu0
        %v1065 = vadd.f32 0.0, %v1064
        %v1066 = vpop.f32.mrb[0].mxu0
        %v1067 = vadd.f32 0.0, %v1066
        %1068 = vmatprep.mubr.bf16.mxu0 0
        %1069 = vmatmul.mubr.bf16.gmra.mrb[0].mxu0 %v869
        %v1070 = vpop.f32.mrb[0].mxu0
        %v1071 = vadd.f32 0.0, %v1070
        %v1072 = vpop.f32.mrb[0].mxu0
        %v1073 = vadd.f32 0.0, %v1072
        %v1074 = vpop.f32.mrb[0].mxu0
        %v1075 = vadd.f32 0.0, %v1074
        %v1076 = vpop.f32.mrb[0].mxu0
        %v1077 = vadd.f32 0.0, %v1076
        %1078 = vmatprep.mubr.bf16.mxu0 0
        %1079 = vmatmul.mubr.bf16.gmra.mrb[0].mxu0 %v872
        %v1080 = vpop.f32.mrb[0].mxu0
        %v1081 = vadd.f32 0.0, %v1080
        %v1082 = vpop.f32.mrb[0].mxu0
        %v1083 = vadd.f32 0.0, %v1082
        %v1084 = vpop.f32.mrb[0].mxu0
        %v1085 = vadd.f32 0.0, %v1084
        %v1086 = vpop.f32.mrb[0].mxu0
        %v1087 = vadd.f32 0.0, %v1086
        %1088 = vmatprep.mubr.bf16.mxu0 0
        %1089 = vmatmul.mubr.bf16.gmra.mrb[0].mxu0 %v875
        %v1090 = vpop.f32.mrb[0].mxu0
        %v1091 = vadd.f32 0.0, %v1090
        %v1092 = vpop.f32.mrb[0].mxu0
        %v1093 = vadd.f32 0.0, %v1092
        %v1094 = vpop.f32.mrb[0].mxu0
        %v1095 = vadd.f32 0.0, %v1094
        %v1096 = vpop.f32.mrb[0].mxu0
        %v1097 = vadd.f32 0.0, %v1096
        %1098 = vmatprep.mubr.bf16.mxu0 0
        %1099 = vmatmul.mubr.bf16.gmra.mrb[0].mxu0 %v878
        %v1100 = vpop.f32.mrb[0].mxu0
        %v1101 = vadd.f32 0.0, %v1100
        %v1102 = vpop.f32.mrb[0].mxu0
        %v1103 = vadd.f32 0.0, %v1102
        %v1104 = vpop.f32.mrb[0].mxu0
        %v1105 = vadd.f32 0.0, %v1104
        %v1106 = vpop.f32.mrb[0].mxu0
        %v1107 = vadd.f32 0.0, %v1106
        %1108 = vmatprep.mubr.bf16.mxu0 0
        %1109 = vmatmul.mubr.bf16.gmra.mrb[0].mxu0 %v881
        %v1110 = vpop.f32.mrb[0].mxu0
        %v1111 = vadd.f32 0.0, %v1110
        %v1112 = vpop.f32.mrb[0].mxu0
        %v1113 = vadd.f32 0.0, %v1112
        %v1114 = vpop.f32.mrb[0].mxu0
        %v1115 = vadd.f32 0.0, %v1114
        %v1116 = vpop.f32.mrb[0].mxu0
        %v1117 = vadd.f32 0.0, %v1116
        %1118 = vmatprep.mubr.bf16.mxu0 0
        %1119 = vmatmul.mubr.bf16.gmra.mrb[0].mxu0 %v884
        %v1120 = vpop.f32.mrb[0].mxu0
        %v1121 = vadd.f32 0.0, %v1120
        %v1122 = vpop.f32.mrb[0].mxu0
        %v1123 = vadd.f32 0.0, %v1122
        %v1124 = vpop.f32.mrb[0].mxu0
        %v1125 = vadd.f32 0.0, %v1124
        %v1126 = vpop.f32.mrb[0].mxu0
        %v1127 = vadd.f32 0.0, %v1126
        %1128 = vmatprep.mubr.bf16.mxu0 0
        %1129 = vmatmul.mubr.bf16.gmra.mrb[0].mxu0 %v887
        %v1130 = vpop.f32.mrb[0].mxu0
        %v1131 = vadd.f32 0.0, %v1130
        %v1132 = vpop.f32.mrb[0].mxu0
        %v1133 = vadd.f32 0.0, %v1132
        %v1134 = vpop.f32.mrb[0].mxu0
        %v1135 = vadd.f32 0.0, %v1134
        %v1136 = vpop.f32.mrb[0].mxu0
        %v1137 = vadd.f32 0.0, %v1136
        %1138 = vmatprep.mubr.bf16.mxu0 0
        %1139 = vmatmul.mubr.bf16.gmra.mrb[0].mxu0 %v890
        %v1140 = vpop.f32.mrb[0].mxu0
        %v1141 = vadd.f32 0.0, %v1140
        %v1142 = vpop.f32.mrb[0].mxu0
        %v1143 = vadd.f32 0.0, %v1142
        %v1144 = vpop.f32.mrb[0].mxu0
        %v1145 = vadd.f32 0.0, %v1144
        %v1146 = vpop.f32.mrb[0].mxu0
        %v1147 = vadd.f32 0.0, %v1146
        %1148 = vmatprep.mubr.bf16.mxu0 0
        %1149 = vmatmul.mubr.bf16.gmra.mrb[0].mxu0 %v893
        %v1150 = vpop.f32.mrb[0].mxu0
        %v1151 = vadd.f32 0.0, %v1150
        %v1152 = vpop.f32.mrb[0].mxu0
        %v1153 = vadd.f32 0.0, %v1152
        %v1154 = vpop.f32.mrb[0].mxu0
        %v1155 = vadd.f32 0.0, %v1154
        %v1156 = vpop.f32.mrb[0].mxu0
        %v1157 = vadd.f32 0.0, %v1156
        %1158 = vmatprep.mubr.bf16.mxu0 0
        %1159 = vmatmul.mubr.bf16.gmra.mrb[0].mxu0 %v896
        %v1160 = vpop.f32.mrb[0].mxu0
        %v1161 = vadd.f32 0.0, %v1160
        %v1162 = vpop.f32.mrb[0].mxu0
        %v1163 = vadd.f32 0.0, %v1162
        %v1164 = vpop.f32.mrb[0].mxu0
        %v1165 = vadd.f32 0.0, %v1164
        %v1166 = vpop.f32.mrb[0].mxu0
        %v1167 = vadd.f32 0.0, %v1166
        %1168 = vmatprep.mubr.bf16.mxu0 0
        %1169 = vmatmul.mubr.bf16.gmra.mrb[0].mxu0 %v899
        %v1170 = vpop.f32.mrb[0].mxu0
        %v1171 = vadd.f32 0.0, %v1170
        %v1172 = vpop.f32.mrb[0].mxu0
        %v1173 = vadd.f32 0.0, %v1172
        %v1174 = vpop.f32.mrb[0].mxu0
        %v1175 = vadd.f32 0.0, %v1174
        %v1176 = vpop.f32.mrb[0].mxu0
        %v1177 = vadd.f32 0.0, %v1176
        %1178 = vmatprep.mubr.bf16.mxu0 0
        %1179 = vmatmul.mubr.bf16.gmra.mrb[0].mxu0 %v902
        %v1180 = vpop.f32.mrb[0].mxu0
        %v1181 = vadd.f32 0.0, %v1180
        %v1182 = vpop.f32.mrb[0].mxu0
        %v1183 = vadd.f32 0.0, %v1182
        %v1184 = vpop.f32.mrb[0].mxu0
        %v1185 = vadd.f32 0.0, %v1184
        %v1186 = vpop.f32.mrb[0].mxu0
        %v1187 = vadd.f32 0.0, %v1186
        %1188 = vmatprep.mubr.bf16.mxu0 0
        %1189 = vmatmul.mubr.bf16.gmra.mrb[0].mxu0 %v905
        %v1190 = vpop.f32.mrb[0].mxu0
        %v1191 = vadd.f32 0.0, %v1190
        %v1192 = vpop.f32.mrb[0].mxu0
        %v1193 = vadd.f32 0.0, %v1192
        %v1194 = vpop.f32.mrb[0].mxu0
        %v1195 = vadd.f32 0.0, %v1194
        %v1196 = vpop.f32.mrb[0].mxu0
        %v1197 = vadd.f32 0.0, %v1196
        %1198 = vmatprep.mubr.bf16.mxu0 0
        %1199 = vmatmul.mubr.bf16.gmra.mrb[0].mxu0 %v908
        %v1200 = vpop.f32.mrb[0].mxu0
        %v1201 = vadd.f32 0.0, %v1200
        %v1202 = vpop.f32.mrb[0].mxu0
        %v1203 = vadd.f32 0.0, %v1202
        %v1204 = vpop.f32.mrb[0].mxu0
        %v1205 = vadd.f32 0.0, %v1204
        %v1206 = vpop.f32.mrb[0].mxu0
        %v1207 = vadd.f32 0.0, %v1206
        %1208 = vmatprep.mubr.bf16.mxu0 0
        %1209 = vmatmul.mubr.bf16.gmra.mrb[0].mxu0 %v911
        %v1210 = vpop.f32.mrb[0].mxu0
        %v1211 = vadd.f32 0.0, %v1210
        %v1212 = vpop.f32.mrb[0].mxu0
        %v1213 = vadd.f32 0.0, %v1212
        %v1214 = vpop.f32.mrb[0].mxu0
        %v1215 = vadd.f32 0.0, %v1214
        %v1216 = vpop.f32.mrb[0].mxu0
        %v1217 = vadd.f32 0.0, %v1216
        %1218 = vmatprep.mubr.bf16.mxu0 0
        %1219 = vmatmul.mubr.bf16.gmra.mrb[0].mxu0 %v914
        %v1220 = vpop.f32.mrb[0].mxu0
        %v1221 = vadd.f32 0.0, %v1220
        %v1222 = vpop.f32.mrb[0].mxu0
        %v1223 = vadd.f32 0.0, %v1222
        %v1224 = vpop.f32.mrb[0].mxu0
        %v1225 = vadd.f32 0.0, %v1224
        %v1226 = vpop.f32.mrb[0].mxu0
        %v1227 = vadd.f32 0.0, %v1226
        %1228 = vdwg.mxu0
        %v1241 = vunpack.c.l.b16 %v746
        %v1242 = vunpack.c.h.b16 %v746
        %v1243 = vunpack.c.l.b16 %v747
        %v1244 = vunpack.c.h.b16 %v747
        %v1245 = vunpack.c.l.b16 %v748
        %v1246 = vunpack.c.h.b16 %v748
        %v1247 = vunpack.c.l.b16 %v749
        %v1248 = vunpack.c.h.b16 %v749
        %v1249 = vunpack.c.l.b16 %v750
        %v1250 = vunpack.c.h.b16 %v750
        %v1251 = vunpack.c.l.b16 %v751
        %v1252 = vunpack.c.h.b16 %v751
        %v1253 = vunpack.c.l.b16 %v752
        %v1254 = vunpack.c.h.b16 %v752
        %v1255 = vunpack.c.l.b16 %v753
        %v1256 = vunpack.c.h.b16 %v753
        %v1257 = vunpack.c.l.b16 %v754
        %v1258 = vunpack.c.h.b16 %v754
        %v1259 = vunpack.c.l.b16 %v755
        %v1260 = vunpack.c.h.b16 %v755
        %v1261 = vunpack.c.l.b16 %v756
        %v1262 = vunpack.c.h.b16 %v756
        %v1263 = vunpack.c.l.b16 %v757
        %v1264 = vunpack.c.h.b16 %v757
        %v1265 = vpack.c.b16 %v1243, %v1241
        %v1266 = vpack.c.b16 %v1244, %v1242
        %v1267 = vpack.c.b16 %v1247, %v1245
        %v1268 = vpack.c.b16 %v1248, %v1246
        %v1269 = vpack.c.b16 %v1251, %v1249
        %v1270 = vpack.c.b16 %v1252, %v1250
        %v1271 = vpack.c.b16 %v1255, %v1253
        %v1272 = vpack.c.b16 %v1256, %v1254
        %v1273 = vpack.c.b16 %v1259, %v1257
        %v1274 = vpack.c.b16 %v1260, %v1258
        %v1275 = vpack.c.b16 %v1263, %v1261
        %v1276 = vpack.c.b16 %v1264, %v1262
        %v1290 = vsel %vm831, %v714, 0
        %1292 = vmatprep.subr.bf16.mxu0 %v1266
        %1293 = vmatpush1.bf16.msra.mxu0 %v1265
        %1294 = vmatprep.subr.bf16.mxu0 %v1268
        %1295 = vmatpush1.bf16.msra.mxu0 %v1267
        %1296 = vmatprep.subr.bf16.mxu0 %v1270
        %1297 = vmatpush1.bf16.msra.mxu0 %v1269
        %1298 = vmatprep.subr.bf16.mxu0 %v1272
        %1299 = vmatpush1.bf16.msra.mxu0 %v1271
        %1300 = vmatprep.subr.bf16.mxu0 %v1274
        %1301 = vmatpush1.bf16.msra.mxu0 %v1273
        %1302 = vmatprep.subr.bf16.mxu0 %v1276
        %1303 = vmatpush1.bf16.msra.mxu0 %v1275
        %1304 = vmatprep.subr.bf16.mxu0 0
        %1305 = vmatpush1.bf16.msra.mxu0 0
        %1306 = vmatprep.subr.bf16.mxu0 0
        %1307 = vmatpush1.bf16.msra.mxu0 0
        %1308 = vmatprep.subr.bf16.mxu0 0
        %1309 = vmatpush1.bf16.msra.mxu0 0
        %1310 = vmatprep.subr.bf16.mxu0 0
        %1311 = vmatpush1.bf16.msra.mxu0 0
        %1312 = vmatprep.subr.bf16.mxu0 0
        %1313 = vmatpush1.bf16.msra.mxu0 0
        %1314 = vmatprep.subr.bf16.mxu0 0
        %1315 = vmatpush1.bf16.msra.mxu0 0
        %1316 = vmatprep.subr.bf16.mxu0 0
        %1317 = vmatpush1.bf16.msra.mxu0 0
        %1318 = vmatprep.subr.bf16.mxu0 0
        %1319 = vmatpush1.bf16.msra.mxu0 0
        %1320 = vmatprep.subr.bf16.mxu0 0
        %1321 = vmatpush1.bf16.msra.mxu0 0
        %1322 = vmatprep.subr.bf16.mxu0 0
        %1323 = vmatpush1.bf16.msra.mxu0 0
        %1324 = vmatprep.mubr.bf16.mxu0 0
        %1325 = vmatmul.mubr.bf16.gmra.mrb[0].mxu0 %v1290
        %v1326 = vpop.f32.mrb[0].mxu0
        %v1327 = vadd.f32 %v951, %v1326
        %v1328 = vpop.f32.mrb[0].mxu0
        %v1329 = vadd.f32 %v953, %v1328
        %v1330 = vpop.f32.mrb[0].mxu0
        %v1331 = vadd.f32 %v955, %v1330
        %v1332 = vpop.f32.mrb[0].mxu0
        %v1333 = vadd.f32 %v957, %v1332
        %1334 = vmatprep.mubr.bf16.mxu0 0
        %1335 = vmatmul.mubr.bf16.gmra.mrb[0].mxu0 %v833
        %v1336 = vpop.f32.mrb[0].mxu0
        %v1337 = vadd.f32 %v961, %v1336
        %v1338 = vpop.f32.mrb[0].mxu0
        %v1339 = vadd.f32 %v963, %v1338
        %v1340 = vpop.f32.mrb[0].mxu0
        %v1341 = vadd.f32 %v965, %v1340
        %v1342 = vpop.f32.mrb[0].mxu0
        %v1343 = vadd.f32 %v967, %v1342
        %1344 = vmatprep.mubr.bf16.mxu0 0
        %1345 = vmatmul.mubr.bf16.gmra.mrb[0].mxu0 %v836
        %v1346 = vpop.f32.mrb[0].mxu0
        %v1347 = vadd.f32 %v971, %v1346
        %v1348 = vpop.f32.mrb[0].mxu0
        %v1349 = vadd.f32 %v973, %v1348
        %v1350 = vpop.f32.mrb[0].mxu0
        %v1351 = vadd.f32 %v975, %v1350
        %v1352 = vpop.f32.mrb[0].mxu0
        %v1353 = vadd.f32 %v977, %v1352
        %1354 = vmatprep.mubr.bf16.mxu0 0
        %1355 = vmatmul.mubr.bf16.gmra.mrb[0].mxu0 %v839
        %v1356 = vpop.f32.mrb[0].mxu0
        %v1357 = vadd.f32 %v981, %v1356
        %v1358 = vpop.f32.mrb[0].mxu0
        %v1359 = vadd.f32 %v983, %v1358
        %v1360 = vpop.f32.mrb[0].mxu0
        %v1361 = vadd.f32 %v985, %v1360
        %v1362 = vpop.f32.mrb[0].mxu0
        %v1363 = vadd.f32 %v987, %v1362
        %1364 = vmatprep.mubr.bf16.mxu0 0
        %1365 = vmatmul.mubr.bf16.gmra.mrb[0].mxu0 %v842
        %v1366 = vpop.f32.mrb[0].mxu0
        %v1367 = vadd.f32 %v991, %v1366
        %v1368 = vpop.f32.mrb[0].mxu0
        %v1369 = vadd.f32 %v993, %v1368
        %v1370 = vpop.f32.mrb[0].mxu0
        %v1371 = vadd.f32 %v995, %v1370
        %v1372 = vpop.f32.mrb[0].mxu0
        %v1373 = vadd.f32 %v997, %v1372
        %1374 = vmatprep.mubr.bf16.mxu0 0
        %1375 = vmatmul.mubr.bf16.gmra.mrb[0].mxu0 %v845
        %v1376 = vpop.f32.mrb[0].mxu0
        %v1377 = vadd.f32 %v1001, %v1376
        %v1378 = vpop.f32.mrb[0].mxu0
        %v1379 = vadd.f32 %v1003, %v1378
        %v1380 = vpop.f32.mrb[0].mxu0
        %v1381 = vadd.f32 %v1005, %v1380
        %v1382 = vpop.f32.mrb[0].mxu0
        %v1383 = vadd.f32 %v1007, %v1382
        %1384 = vmatprep.mubr.bf16.mxu0 0
        %1385 = vmatmul.mubr.bf16.gmra.mrb[0].mxu0 %v848
        %v1386 = vpop.f32.mrb[0].mxu0
        %v1387 = vadd.f32 %v1011, %v1386
        %v1388 = vpop.f32.mrb[0].mxu0
        %v1389 = vadd.f32 %v1013, %v1388
        %v1390 = vpop.f32.mrb[0].mxu0
        %v1391 = vadd.f32 %v1015, %v1390
        %v1392 = vpop.f32.mrb[0].mxu0
        %v1393 = vadd.f32 %v1017, %v1392
        %1394 = vmatprep.mubr.bf16.mxu0 0
        %1395 = vmatmul.mubr.bf16.gmra.mrb[0].mxu0 %v851
        %v1396 = vpop.f32.mrb[0].mxu0
        %v1397 = vadd.f32 %v1021, %v1396
        %v1398 = vpop.f32.mrb[0].mxu0
        %v1399 = vadd.f32 %v1023, %v1398
        %v1400 = vpop.f32.mrb[0].mxu0
        %v1401 = vadd.f32 %v1025, %v1400
        %v1402 = vpop.f32.mrb[0].mxu0
        %v1403 = vadd.f32 %v1027, %v1402
        %1404 = vmatprep.mubr.bf16.mxu0 0
        %1405 = vmatmul.mubr.bf16.gmra.mrb[0].mxu0 %v854
        %v1406 = vpop.f32.mrb[0].mxu0
        %v1407 = vadd.f32 %v1031, %v1406
        %v1408 = vpop.f32.mrb[0].mxu0
        %v1409 = vadd.f32 %v1033, %v1408
        %v1410 = vpop.f32.mrb[0].mxu0
        %v1411 = vadd.f32 %v1035, %v1410
        %v1412 = vpop.f32.mrb[0].mxu0
        %v1413 = vadd.f32 %v1037, %v1412
        %1414 = vmatprep.mubr.bf16.mxu0 0
        %1415 = vmatmul.mubr.bf16.gmra.mrb[0].mxu0 %v857
        %v1416 = vpop.f32.mrb[0].mxu0
        %v1417 = vadd.f32 %v1041, %v1416
        %v1418 = vpop.f32.mrb[0].mxu0
        %v1419 = vadd.f32 %v1043, %v1418
        %v1420 = vpop.f32.mrb[0].mxu0
        %v1421 = vadd.f32 %v1045, %v1420
        %v1422 = vpop.f32.mrb[0].mxu0
        %v1423 = vadd.f32 %v1047, %v1422
        %1424 = vmatprep.mubr.bf16.mxu0 0
        %1425 = vmatmul.mubr.bf16.gmra.mrb[0].mxu0 %v860
        %v1426 = vpop.f32.mrb[0].mxu0
        %v1427 = vadd.f32 %v1051, %v1426
        %v1428 = vpop.f32.mrb[0].mxu0
        %v1429 = vadd.f32 %v1053, %v1428
        %v1430 = vpop.f32.mrb[0].mxu0
        %v1431 = vadd.f32 %v1055, %v1430
        %v1432 = vpop.f32.mrb[0].mxu0
        %v1433 = vadd.f32 %v1057, %v1432
        %1434 = vmatprep.mubr.bf16.mxu0 0
        %1435 = vmatmul.mubr.bf16.gmra.mrb[0].mxu0 %v863
        %v1436 = vpop.f32.mrb[0].mxu0
        %v1437 = vadd.f32 %v1061, %v1436
        %v1438 = vpop.f32.mrb[0].mxu0
        %v1439 = vadd.f32 %v1063, %v1438
        %v1440 = vpop.f32.mrb[0].mxu0
        %v1441 = vadd.f32 %v1065, %v1440
        %v1442 = vpop.f32.mrb[0].mxu0
        %v1443 = vadd.f32 %v1067, %v1442
        %1444 = vmatprep.mubr.bf16.mxu0 0
        %1445 = vmatmul.mubr.bf16.gmra.mrb[0].mxu0 %v866
        %v1446 = vpop.f32.mrb[0].mxu0
        %v1447 = vadd.f32 %v1071, %v1446
        %v1448 = vpop.f32.mrb[0].mxu0
        %v1449 = vadd.f32 %v1073, %v1448
        %v1450 = vpop.f32.mrb[0].mxu0
        %v1451 = vadd.f32 %v1075, %v1450
        %v1452 = vpop.f32.mrb[0].mxu0
        %v1453 = vadd.f32 %v1077, %v1452
        %1454 = vmatprep.mubr.bf16.mxu0 0
        %1455 = vmatmul.mubr.bf16.gmra.mrb[0].mxu0 %v869
        %v1456 = vpop.f32.mrb[0].mxu0
        %v1457 = vadd.f32 %v1081, %v1456
        %v1458 = vpop.f32.mrb[0].mxu0
        %v1459 = vadd.f32 %v1083, %v1458
        %v1460 = vpop.f32.mrb[0].mxu0
        %v1461 = vadd.f32 %v1085, %v1460
        %v1462 = vpop.f32.mrb[0].mxu0
        %v1463 = vadd.f32 %v1087, %v1462
        %1464 = vmatprep.mubr.bf16.mxu0 0
        %1465 = vmatmul.mubr.bf16.gmra.mrb[0].mxu0 %v872
        %v1466 = vpop.f32.mrb[0].mxu0
        %v1467 = vadd.f32 %v1091, %v1466
        %v1468 = vpop.f32.mrb[0].mxu0
        %v1469 = vadd.f32 %v1093, %v1468
        %v1470 = vpop.f32.mrb[0].mxu0
        %v1471 = vadd.f32 %v1095, %v1470
        %v1472 = vpop.f32.mrb[0].mxu0
        %v1473 = vadd.f32 %v1097, %v1472
        %1474 = vmatprep.mubr.bf16.mxu0 0
        %1475 = vmatmul.mubr.bf16.gmra.mrb[0].mxu0 %v875
        %v1476 = vpop.f32.mrb[0].mxu0
        %v1477 = vadd.f32 %v1101, %v1476
        %v1478 = vpop.f32.mrb[0].mxu0
        %v1479 = vadd.f32 %v1103, %v1478
        %v1480 = vpop.f32.mrb[0].mxu0
        %v1481 = vadd.f32 %v1105, %v1480
        %v1482 = vpop.f32.mrb[0].mxu0
        %v1483 = vadd.f32 %v1107, %v1482
        %1484 = vmatprep.mubr.bf16.mxu0 0
        %1485 = vmatmul.mubr.bf16.gmra.mrb[0].mxu0 %v878
        %v1486 = vpop.f32.mrb[0].mxu0
        %v1487 = vadd.f32 %v1111, %v1486
        %v1488 = vpop.f32.mrb[0].mxu0
        %v1489 = vadd.f32 %v1113, %v1488
        %v1490 = vpop.f32.mrb[0].mxu0
        %v1491 = vadd.f32 %v1115, %v1490
        %v1492 = vpop.f32.mrb[0].mxu0
        %v1493 = vadd.f32 %v1117, %v1492
        %1494 = vmatprep.mubr.bf16.mxu0 0
        %1495 = vmatmul.mubr.bf16.gmra.mrb[0].mxu0 %v881
        %v1496 = vpop.f32.mrb[0].mxu0
        %v1497 = vadd.f32 %v1121, %v1496
        %v1498 = vpop.f32.mrb[0].mxu0
        %v1499 = vadd.f32 %v1123, %v1498
        %v1500 = vpop.f32.mrb[0].mxu0
        %v1501 = vadd.f32 %v1125, %v1500
        %v1502 = vpop.f32.mrb[0].mxu0
        %v1503 = vadd.f32 %v1127, %v1502
        %1504 = vmatprep.mubr.bf16.mxu0 0
        %1505 = vmatmul.mubr.bf16.gmra.mrb[0].mxu0 %v884
        %v1506 = vpop.f32.mrb[0].mxu0
        %v1507 = vadd.f32 %v1131, %v1506
        %v1508 = vpop.f32.mrb[0].mxu0
        %v1509 = vadd.f32 %v1133, %v1508
        %v1510 = vpop.f32.mrb[0].mxu0
        %v1511 = vadd.f32 %v1135, %v1510
        %v1512 = vpop.f32.mrb[0].mxu0
        %v1513 = vadd.f32 %v1137, %v1512
        %1514 = vmatprep.mubr.bf16.mxu0 0
        %1515 = vmatmul.mubr.bf16.gmra.mrb[0].mxu0 %v887
        %v1516 = vpop.f32.mrb[0].mxu0
        %v1517 = vadd.f32 %v1141, %v1516
        %v1518 = vpop.f32.mrb[0].mxu0
        %v1519 = vadd.f32 %v1143, %v1518
        %v1520 = vpop.f32.mrb[0].mxu0
        %v1521 = vadd.f32 %v1145, %v1520
        %v1522 = vpop.f32.mrb[0].mxu0
        %v1523 = vadd.f32 %v1147, %v1522
        %1524 = vmatprep.mubr.bf16.mxu0 0
        %1525 = vmatmul.mubr.bf16.gmra.mrb[0].mxu0 %v890
        %v1526 = vpop.f32.mrb[0].mxu0
        %v1527 = vadd.f32 %v1151, %v1526
        %v1528 = vpop.f32.mrb[0].mxu0
        %v1529 = vadd.f32 %v1153, %v1528
        %v1530 = vpop.f32.mrb[0].mxu0
        %v1531 = vadd.f32 %v1155, %v1530
        %v1532 = vpop.f32.mrb[0].mxu0
        %v1533 = vadd.f32 %v1157, %v1532
        %1534 = vmatprep.mubr.bf16.mxu0 0
        %1535 = vmatmul.mubr.bf16.gmra.mrb[0].mxu0 %v893
        %v1536 = vpop.f32.mrb[0].mxu0
        %v1537 = vadd.f32 %v1161, %v1536
        %v1538 = vpop.f32.mrb[0].mxu0
        %v1539 = vadd.f32 %v1163, %v1538
        %v1540 = vpop.f32.mrb[0].mxu0
        %v1541 = vadd.f32 %v1165, %v1540
        %v1542 = vpop.f32.mrb[0].mxu0
        %v1543 = vadd.f32 %v1167, %v1542
        %1544 = vmatprep.mubr.bf16.mxu0 0
        %1545 = vmatmul.mubr.bf16.gmra.mrb[0].mxu0 %v896
        %v1546 = vpop.f32.mrb[0].mxu0
        %v1547 = vadd.f32 %v1171, %v1546
        %v1548 = vpop.f32.mrb[0].mxu0
        %v1549 = vadd.f32 %v1173, %v1548
        %v1550 = vpop.f32.mrb[0].mxu0
        %v1551 = vadd.f32 %v1175, %v1550
        %v1552 = vpop.f32.mrb[0].mxu0
        %v1553 = vadd.f32 %v1177, %v1552
        %1554 = vmatprep.mubr.bf16.mxu0 0
        %1555 = vmatmul.mubr.bf16.gmra.mrb[0].mxu0 %v899
        %v1556 = vpop.f32.mrb[0].mxu0
        %v1557 = vadd.f32 %v1181, %v1556
        %v1558 = vpop.f32.mrb[0].mxu0
        %v1559 = vadd.f32 %v1183, %v1558
        %v1560 = vpop.f32.mrb[0].mxu0
        %v1561 = vadd.f32 %v1185, %v1560
        %v1562 = vpop.f32.mrb[0].mxu0
        %v1563 = vadd.f32 %v1187, %v1562
        %1564 = vmatprep.mubr.bf16.mxu0 0
        %1565 = vmatmul.mubr.bf16.gmra.mrb[0].mxu0 %v902
        %v1566 = vpop.f32.mrb[0].mxu0
        %v1567 = vadd.f32 %v1191, %v1566
        %v1568 = vpop.f32.mrb[0].mxu0
        %v1569 = vadd.f32 %v1193, %v1568
        %v1570 = vpop.f32.mrb[0].mxu0
        %v1571 = vadd.f32 %v1195, %v1570
        %v1572 = vpop.f32.mrb[0].mxu0
        %v1573 = vadd.f32 %v1197, %v1572
        %1574 = vmatprep.mubr.bf16.mxu0 0
        %1575 = vmatmul.mubr.bf16.gmra.mrb[0].mxu0 %v905
        %v1576 = vpop.f32.mrb[0].mxu0
        %v1577 = vadd.f32 %v1201, %v1576
        %v1578 = vpop.f32.mrb[0].mxu0
        %v1579 = vadd.f32 %v1203, %v1578
        %v1580 = vpop.f32.mrb[0].mxu0
        %v1581 = vadd.f32 %v1205, %v1580
        %v1582 = vpop.f32.mrb[0].mxu0
        %v1583 = vadd.f32 %v1207, %v1582
        %1584 = vmatprep.mubr.bf16.mxu0 0
        %1585 = vmatmul.mubr.bf16.gmra.mrb[0].mxu0 %v908
        %v1586 = vpop.f32.mrb[0].mxu0
        %v1587 = vadd.f32 %v1211, %v1586
        %v1588 = vpop.f32.mrb[0].mxu0
        %v1589 = vadd.f32 %v1213, %v1588
        %v1590 = vpop.f32.mrb[0].mxu0
        %v1591 = vadd.f32 %v1215, %v1590
        %v1592 = vpop.f32.mrb[0].mxu0
        %v1593 = vadd.f32 %v1217, %v1592
        %1594 = vmatprep.mubr.bf16.mxu0 0
        %1595 = vmatmul.mubr.bf16.gmra.mrb[0].mxu0 %v911
        %v1596 = vpop.f32.mrb[0].mxu0
        %v1597 = vadd.f32 %v1221, %v1596
        %v1598 = vpop.f32.mrb[0].mxu0
        %v1599 = vadd.f32 %v1223, %v1598
        %v1600 = vpop.f32.mrb[0].mxu0
        %v1601 = vadd.f32 %v1225, %v1600
        %v1602 = vpop.f32.mrb[0].mxu0
        %v1603 = vadd.f32 %v1227, %v1602
        %1604 = vdwg.mxu0
        %s1605 = scalar_lea.vmem %s1, 192
        %v1606 = vld [vmem:[%s1605] sm:$0xff]
        %v1607 = vld [vmem:[%s1605 + $0x8] sm:$0xff]
        %v1608 = vld [vmem:[%s1605 + $0x10] sm:$0xff]
        %v1609 = vld [vmem:[%s1605 + $0x18] sm:$0xff]
        %v1610 = vld [vmem:[%s1605 + $0x20] sm:$0xff]
        %v1611 = vld [vmem:[%s1605 + $0x28] sm:$0xff]
        %v1612 = vld [vmem:[%s1605 + $0x30] sm:$0xff]
        %v1613 = vld [vmem:[%s1605 + $0x38] sm:$0xff]
        %v1614 = vld [vmem:[%s1605 + $0x40] sm:$0xff]
        %v1615 = vld [vmem:[%s1605 + $0x48] sm:$0xff]
        %v1616 = vld [vmem:[%s1605 + $0x50] sm:$0xff]
        %v1617 = vld [vmem:[%s1605 + $0x58] sm:$0xff]
        %v1630 = vunpack.c.l.b16 %v1606
        %v1631 = vunpack.c.h.b16 %v1606
        %v1632 = vunpack.c.l.b16 %v1607
        %v1633 = vunpack.c.h.b16 %v1607
        %v1634 = vunpack.c.l.b16 %v1608
        %v1635 = vunpack.c.h.b16 %v1608
        %v1636 = vunpack.c.l.b16 %v1609
        %v1637 = vunpack.c.h.b16 %v1609
        %v1638 = vunpack.c.l.b16 %v1610
        %v1639 = vunpack.c.h.b16 %v1610
        %v1640 = vunpack.c.l.b16 %v1611
        %v1641 = vunpack.c.h.b16 %v1611
        %v1642 = vunpack.c.l.b16 %v1612
        %v1643 = vunpack.c.h.b16 %v1612
        %v1644 = vunpack.c.l.b16 %v1613
        %v1645 = vunpack.c.h.b16 %v1613
        %v1646 = vunpack.c.l.b16 %v1614
        %v1647 = vunpack.c.h.b16 %v1614
        %v1648 = vunpack.c.l.b16 %v1615
        %v1649 = vunpack.c.h.b16 %v1615
        %v1650 = vunpack.c.l.b16 %v1616
        %v1651 = vunpack.c.h.b16 %v1616
        %v1652 = vunpack.c.l.b16 %v1617
        %v1653 = vunpack.c.h.b16 %v1617
        %v1654 = vpack.c.b16 %v1632, %v1630
        %v1655 = vpack.c.b16 %v1633, %v1631
        %v1656 = vpack.c.b16 %v1636, %v1634
        %v1657 = vpack.c.b16 %v1637, %v1635
        %v1658 = vpack.c.b16 %v1640, %v1638
        %v1659 = vpack.c.b16 %v1641, %v1639
        %v1660 = vpack.c.b16 %v1644, %v1642
        %v1661 = vpack.c.b16 %v1645, %v1643
        %v1662 = vpack.c.b16 %v1648, %v1646
        %v1663 = vpack.c.b16 %v1649, %v1647
        %v1664 = vpack.c.b16 %v1652, %v1650
        %v1665 = vpack.c.b16 %v1653, %v1651
        %v1679 = vsel %vm831, %v743, 0
        %1681 = vmatprep.subr.bf16.mxu0 %v1655
        %1682 = vmatpush1.bf16.msra.mxu0 %v1654
        %1683 = vmatprep.subr.bf16.mxu0 %v1657
        %1684 = vmatpush1.bf16.msra.mxu0 %v1656
        %1685 = vmatprep.subr.bf16.mxu0 %v1659
        %1686 = vmatpush1.bf16.msra.mxu0 %v1658
        %1687 = vmatprep.subr.bf16.mxu0 %v1661
        %1688 = vmatpush1.bf16.msra.mxu0 %v1660
        %1689 = vmatprep.subr.bf16.mxu0 %v1663
        %1690 = vmatpush1.bf16.msra.mxu0 %v1662
        %1691 = vmatprep.subr.bf16.mxu0 %v1665
        %1692 = vmatpush1.bf16.msra.mxu0 %v1664
        %1693 = vmatprep.subr.bf16.mxu0 0
        %1694 = vmatpush1.bf16.msra.mxu0 0
        %1695 = vmatprep.subr.bf16.mxu0 0
        %1696 = vmatpush1.bf16.msra.mxu0 0
        %1697 = vmatprep.subr.bf16.mxu0 0
        %1698 = vmatpush1.bf16.msra.mxu0 0
        %1699 = vmatprep.subr.bf16.mxu0 0
        %1700 = vmatpush1.bf16.msra.mxu0 0
        %1701 = vmatprep.subr.bf16.mxu0 0
        %1702 = vmatpush1.bf16.msra.mxu0 0
        %1703 = vmatprep.subr.bf16.mxu0 0
        %1704 = vmatpush1.bf16.msra.mxu0 0
        %1705 = vmatprep.subr.bf16.mxu0 0
        %1706 = vmatpush1.bf16.msra.mxu0 0
        %1707 = vmatprep.subr.bf16.mxu0 0
        %1708 = vmatpush1.bf16.msra.mxu0 0
        %1709 = vmatprep.subr.bf16.mxu0 0
        %1710 = vmatpush1.bf16.msra.mxu0 0
        %1711 = vmatprep.subr.bf16.mxu0 0
        %1712 = vmatpush1.bf16.msra.mxu0 0
        %1713 = vmatprep.mubr.bf16.mxu0 0
        %1714 = vmatmul.mubr.bf16.gmra.mrb[0].mxu0 %v836
        %v1715 = vpop.f32.mrb[0].mxu0
        %v1716 = vadd.f32 0.0, %v1715
        %v1717 = vpop.f32.mrb[0].mxu0
        %v1718 = vadd.f32 0.0, %v1717
        %v1719 = vpop.f32.mrb[0].mxu0
        %v1720 = vadd.f32 0.0, %v1719
        %v1721 = vpop.f32.mrb[0].mxu0
        %v1722 = vadd.f32 0.0, %v1721
        %1723 = vmatprep.mubr.bf16.mxu0 0
        %1724 = vmatmul.mubr.bf16.gmra.mrb[0].mxu0 %v839
        %v1725 = vpop.f32.mrb[0].mxu0
        %v1726 = vadd.f32 0.0, %v1725
        %v1727 = vpop.f32.mrb[0].mxu0
        %v1728 = vadd.f32 0.0, %v1727
        %v1729 = vpop.f32.mrb[0].mxu0
        %v1730 = vadd.f32 0.0, %v1729
        %v1731 = vpop.f32.mrb[0].mxu0
        %v1732 = vadd.f32 0.0, %v1731
        %1733 = vmatprep.mubr.bf16.mxu0 0
        %1734 = vmatmul.mubr.bf16.gmra.mrb[0].mxu0 %v842
        %v1735 = vpop.f32.mrb[0].mxu0
        %v1736 = vadd.f32 0.0, %v1735
        %v1737 = vpop.f32.mrb[0].mxu0
        %v1738 = vadd.f32 0.0, %v1737
        %v1739 = vpop.f32.mrb[0].mxu0
        %v1740 = vadd.f32 0.0, %v1739
        %v1741 = vpop.f32.mrb[0].mxu0
        %v1742 = vadd.f32 0.0, %v1741
        %1743 = vmatprep.mubr.bf16.mxu0 0
        %1744 = vmatmul.mubr.bf16.gmra.mrb[0].mxu0 %v845
        %v1745 = vpop.f32.mrb[0].mxu0
        %v1746 = vadd.f32 0.0, %v1745
        %v1747 = vpop.f32.mrb[0].mxu0
        %v1748 = vadd.f32 0.0, %v1747
        %v1749 = vpop.f32.mrb[0].mxu0
        %v1750 = vadd.f32 0.0, %v1749
        %v1751 = vpop.f32.mrb[0].mxu0
        %v1752 = vadd.f32 0.0, %v1751
        %1753 = vmatprep.mubr.bf16.mxu0 0
        %1754 = vmatmul.mubr.bf16.gmra.mrb[0].mxu0 %v848
        %v1755 = vpop.f32.mrb[0].mxu0
        %v1756 = vadd.f32 0.0, %v1755
        %v1757 = vpop.f32.mrb[0].mxu0
        %v1758 = vadd.f32 0.0, %v1757
        %v1759 = vpop.f32.mrb[0].mxu0
        %v1760 = vadd.f32 0.0, %v1759
        %v1761 = vpop.f32.mrb[0].mxu0
        %v1762 = vadd.f32 0.0, %v1761
        %1763 = vmatprep.mubr.bf16.mxu0 0
        %1764 = vmatmul.mubr.bf16.gmra.mrb[0].mxu0 %v851
        %v1765 = vpop.f32.mrb[0].mxu0
        %v1766 = vadd.f32 0.0, %v1765
        %v1767 = vpop.f32.mrb[0].mxu0
        %v1768 = vadd.f32 0.0, %v1767
        %v1769 = vpop.f32.mrb[0].mxu0
        %v1770 = vadd.f32 0.0, %v1769
        %v1771 = vpop.f32.mrb[0].mxu0
        %v1772 = vadd.f32 0.0, %v1771
        %1773 = vmatprep.mubr.bf16.mxu0 0
        %1774 = vmatmul.mubr.bf16.gmra.mrb[0].mxu0 %v854
        %v1775 = vpop.f32.mrb[0].mxu0
        %v1776 = vadd.f32 0.0, %v1775
        %v1777 = vpop.f32.mrb[0].mxu0
        %v1778 = vadd.f32 0.0, %v1777
        %v1779 = vpop.f32.mrb[0].mxu0
        %v1780 = vadd.f32 0.0, %v1779
        %v1781 = vpop.f32.mrb[0].mxu0
        %v1782 = vadd.f32 0.0, %v1781
        %1783 = vmatprep.mubr.bf16.mxu0 0
        %1784 = vmatmul.mubr.bf16.gmra.mrb[0].mxu0 %v857
        %v1785 = vpop.f32.mrb[0].mxu0
        %v1786 = vadd.f32 0.0, %v1785
        %v1787 = vpop.f32.mrb[0].mxu0
        %v1788 = vadd.f32 0.0, %v1787
        %v1789 = vpop.f32.mrb[0].mxu0
        %v1790 = vadd.f32 0.0, %v1789
        %v1791 = vpop.f32.mrb[0].mxu0
        %v1792 = vadd.f32 0.0, %v1791
        %1793 = vmatprep.mubr.bf16.mxu0 0
        %1794 = vmatmul.mubr.bf16.gmra.mrb[0].mxu0 %v860
        %v1795 = vpop.f32.mrb[0].mxu0
        %v1796 = vadd.f32 0.0, %v1795
        %v1797 = vpop.f32.mrb[0].mxu0
        %v1798 = vadd.f32 0.0, %v1797
        %v1799 = vpop.f32.mrb[0].mxu0
        %v1800 = vadd.f32 0.0, %v1799
        %v1801 = vpop.f32.mrb[0].mxu0
        %v1802 = vadd.f32 0.0, %v1801
        %1803 = vmatprep.mubr.bf16.mxu0 0
        %1804 = vmatmul.mubr.bf16.gmra.mrb[0].mxu0 %v863
        %v1805 = vpop.f32.mrb[0].mxu0
        %v1806 = vadd.f32 0.0, %v1805
        %v1807 = vpop.f32.mrb[0].mxu0
        %v1808 = vadd.f32 0.0, %v1807
        %v1809 = vpop.f32.mrb[0].mxu0
        %v1810 = vadd.f32 0.0, %v1809
        %v1811 = vpop.f32.mrb[0].mxu0
        %v1812 = vadd.f32 0.0, %v1811
        %1813 = vmatprep.mubr.bf16.mxu0 0
        %1814 = vmatmul.mubr.bf16.gmra.mrb[0].mxu0 %v866
        %v1815 = vpop.f32.mrb[0].mxu0
        %v1816 = vadd.f32 0.0, %v1815
        %v1817 = vpop.f32.mrb[0].mxu0
        %v1818 = vadd.f32 0.0, %v1817
        %v1819 = vpop.f32.mrb[0].mxu0
        %v1820 = vadd.f32 0.0, %v1819
        %v1821 = vpop.f32.mrb[0].mxu0
        %v1822 = vadd.f32 0.0, %v1821
        %1823 = vmatprep.mubr.bf16.mxu0 0
        %1824 = vmatmul.mubr.bf16.gmra.mrb[0].mxu0 %v869
        %v1825 = vpop.f32.mrb[0].mxu0
        %v1826 = vadd.f32 0.0, %v1825
        %v1827 = vpop.f32.mrb[0].mxu0
        %v1828 = vadd.f32 0.0, %v1827
        %v1829 = vpop.f32.mrb[0].mxu0
        %v1830 = vadd.f32 0.0, %v1829
        %v1831 = vpop.f32.mrb[0].mxu0
        %v1832 = vadd.f32 0.0, %v1831
        %1833 = vmatprep.mubr.bf16.mxu0 0
        %1834 = vmatmul.mubr.bf16.gmra.mrb[0].mxu0 %v872
        %v1835 = vpop.f32.mrb[0].mxu0
        %v1836 = vadd.f32 0.0, %v1835
        %v1837 = vpop.f32.mrb[0].mxu0
        %v1838 = vadd.f32 0.0, %v1837
        %v1839 = vpop.f32.mrb[0].mxu0
        %v1840 = vadd.f32 0.0, %v1839
        %v1841 = vpop.f32.mrb[0].mxu0
        %v1842 = vadd.f32 0.0, %v1841
        %1843 = vmatprep.mubr.bf16.mxu0 0
        %1844 = vmatmul.mubr.bf16.gmra.mrb[0].mxu0 %v875
        %v1845 = vpop.f32.mrb[0].mxu0
        %v1846 = vadd.f32 0.0, %v1845
        %v1847 = vpop.f32.mrb[0].mxu0
        %v1848 = vadd.f32 0.0, %v1847
        %v1849 = vpop.f32.mrb[0].mxu0
        %v1850 = vadd.f32 0.0, %v1849
        %v1851 = vpop.f32.mrb[0].mxu0
        %v1852 = vadd.f32 0.0, %v1851
        %1853 = vmatprep.mubr.bf16.mxu0 0
        %1854 = vmatmul.mubr.bf16.gmra.mrb[0].mxu0 %v878
        %v1855 = vpop.f32.mrb[0].mxu0
        %v1856 = vadd.f32 0.0, %v1855
        %v1857 = vpop.f32.mrb[0].mxu0
        %v1858 = vadd.f32 0.0, %v1857
        %v1859 = vpop.f32.mrb[0].mxu0
        %v1860 = vadd.f32 0.0, %v1859
        %v1861 = vpop.f32.mrb[0].mxu0
        %v1862 = vadd.f32 0.0, %v1861
        %1863 = vmatprep.mubr.bf16.mxu0 0
        %1864 = vmatmul.mubr.bf16.gmra.mrb[0].mxu0 %v881
        %v1865 = vpop.f32.mrb[0].mxu0
        %v1866 = vadd.f32 0.0, %v1865
        %v1867 = vpop.f32.mrb[0].mxu0
        %v1868 = vadd.f32 0.0, %v1867
        %v1869 = vpop.f32.mrb[0].mxu0
        %v1870 = vadd.f32 0.0, %v1869
        %v1871 = vpop.f32.mrb[0].mxu0
        %v1872 = vadd.f32 0.0, %v1871
        %1873 = vmatprep.mubr.bf16.mxu0 0
        %1874 = vmatmul.mubr.bf16.gmra.mrb[0].mxu0 %v884
        %v1875 = vpop.f32.mrb[0].mxu0
        %v1876 = vadd.f32 0.0, %v1875
        %v1877 = vpop.f32.mrb[0].mxu0
        %v1878 = vadd.f32 0.0, %v1877
        %v1879 = vpop.f32.mrb[0].mxu0
        %v1880 = vadd.f32 0.0, %v1879
        %v1881 = vpop.f32.mrb[0].mxu0
        %v1882 = vadd.f32 0.0, %v1881
        %1883 = vmatprep.mubr.bf16.mxu0 0
        %1884 = vmatmul.mubr.bf16.gmra.mrb[0].mxu0 %v887
        %v1885 = vpop.f32.mrb[0].mxu0
        %v1886 = vadd.f32 0.0, %v1885
        %v1887 = vpop.f32.mrb[0].mxu0
        %v1888 = vadd.f32 0.0, %v1887
        %v1889 = vpop.f32.mrb[0].mxu0
        %v1890 = vadd.f32 0.0, %v1889
        %v1891 = vpop.f32.mrb[0].mxu0
        %v1892 = vadd.f32 0.0, %v1891
        %1893 = vmatprep.mubr.bf16.mxu0 0
        %1894 = vmatmul.mubr.bf16.gmra.mrb[0].mxu0 %v890
        %v1895 = vpop.f32.mrb[0].mxu0
        %v1896 = vadd.f32 0.0, %v1895
        %v1897 = vpop.f32.mrb[0].mxu0
        %v1898 = vadd.f32 0.0, %v1897
        %v1899 = vpop.f32.mrb[0].mxu0
        %v1900 = vadd.f32 0.0, %v1899
        %v1901 = vpop.f32.mrb[0].mxu0
        %v1902 = vadd.f32 0.0, %v1901
        %1903 = vmatprep.mubr.bf16.mxu0 0
        %1904 = vmatmul.mubr.bf16.gmra.mrb[0].mxu0 %v893
        %v1905 = vpop.f32.mrb[0].mxu0
        %v1906 = vadd.f32 0.0, %v1905
        %v1907 = vpop.f32.mrb[0].mxu0
        %v1908 = vadd.f32 0.0, %v1907
        %v1909 = vpop.f32.mrb[0].mxu0
        %v1910 = vadd.f32 0.0, %v1909
        %v1911 = vpop.f32.mrb[0].mxu0
        %v1912 = vadd.f32 0.0, %v1911
        %1913 = vmatprep.mubr.bf16.mxu0 0
        %1914 = vmatmul.mubr.bf16.gmra.mrb[0].mxu0 %v896
        %v1915 = vpop.f32.mrb[0].mxu0
        %v1916 = vadd.f32 0.0, %v1915
        %v1917 = vpop.f32.mrb[0].mxu0
        %v1918 = vadd.f32 0.0, %v1917
        %v1919 = vpop.f32.mrb[0].mxu0
        %v1920 = vadd.f32 0.0, %v1919
        %v1921 = vpop.f32.mrb[0].mxu0
        %v1922 = vadd.f32 0.0, %v1921
        %1923 = vmatprep.mubr.bf16.mxu0 0
        %1924 = vmatmul.mubr.bf16.gmra.mrb[0].mxu0 %v899
        %v1925 = vpop.f32.mrb[0].mxu0
        %v1926 = vadd.f32 0.0, %v1925
        %v1927 = vpop.f32.mrb[0].mxu0
        %v1928 = vadd.f32 0.0, %v1927
        %v1929 = vpop.f32.mrb[0].mxu0
        %v1930 = vadd.f32 0.0, %v1929
        %v1931 = vpop.f32.mrb[0].mxu0
        %v1932 = vadd.f32 0.0, %v1931
        %1933 = vmatprep.mubr.bf16.mxu0 0
        %1934 = vmatmul.mubr.bf16.gmra.mrb[0].mxu0 %v902
        %v1935 = vpop.f32.mrb[0].mxu0
        %v1936 = vadd.f32 0.0, %v1935
        %v1937 = vpop.f32.mrb[0].mxu0
        %v1938 = vadd.f32 0.0, %v1937
        %v1939 = vpop.f32.mrb[0].mxu0
        %v1940 = vadd.f32 0.0, %v1939
        %v1941 = vpop.f32.mrb[0].mxu0
        %v1942 = vadd.f32 0.0, %v1941
        %1943 = vmatprep.mubr.bf16.mxu0 0
        %1944 = vmatmul.mubr.bf16.gmra.mrb[0].mxu0 %v905
        %v1945 = vpop.f32.mrb[0].mxu0
        %v1946 = vadd.f32 0.0, %v1945
        %v1947 = vpop.f32.mrb[0].mxu0
        %v1948 = vadd.f32 0.0, %v1947
        %v1949 = vpop.f32.mrb[0].mxu0
        %v1950 = vadd.f32 0.0, %v1949
        %v1951 = vpop.f32.mrb[0].mxu0
        %v1952 = vadd.f32 0.0, %v1951
        %1953 = vmatprep.mubr.bf16.mxu0 0
        %1954 = vmatmul.mubr.bf16.gmra.mrb[0].mxu0 %v908
        %v1955 = vpop.f32.mrb[0].mxu0
        %v1956 = vadd.f32 0.0, %v1955
        %v1957 = vpop.f32.mrb[0].mxu0
        %v1958 = vadd.f32 0.0, %v1957
        %v1959 = vpop.f32.mrb[0].mxu0
        %v1960 = vadd.f32 0.0, %v1959
        %v1961 = vpop.f32.mrb[0].mxu0
        %v1962 = vadd.f32 0.0, %v1961
        %1963 = vmatprep.mubr.bf16.mxu0 0
        %1964 = vmatmul.mubr.bf16.gmra.mrb[0].mxu0 %v911
        %v1965 = vpop.f32.mrb[0].mxu0
        %v1966 = vadd.f32 0.0, %v1965
        %v1967 = vpop.f32.mrb[0].mxu0
        %v1968 = vadd.f32 0.0, %v1967
        %v1969 = vpop.f32.mrb[0].mxu0
        %v1970 = vadd.f32 0.0, %v1969
        %v1971 = vpop.f32.mrb[0].mxu0
        %v1972 = vadd.f32 0.0, %v1971
        %1973 = vmatprep.mubr.bf16.mxu0 0
        %1974 = vmatmul.mubr.bf16.gmra.mrb[0].mxu0 %v914
        %v1975 = vpop.f32.mrb[0].mxu0
        %v1976 = vadd.f32 0.0, %v1975
        %v1977 = vpop.f32.mrb[0].mxu0
        %v1978 = vadd.f32 0.0, %v1977
        %v1979 = vpop.f32.mrb[0].mxu0
        %v1980 = vadd.f32 0.0, %v1979
        %v1981 = vpop.f32.mrb[0].mxu0
        %v1982 = vadd.f32 0.0, %v1981
        %1983 = vmatprep.mubr.bf16.mxu0 0
        %1984 = vmatmul.mubr.bf16.gmra.mrb[0].mxu0 %v1679
        %v1985 = vpop.f32.mrb[0].mxu0
        %v1986 = vadd.f32 0.0, %v1985
        %v1987 = vpop.f32.mrb[0].mxu0
        %v1988 = vadd.f32 0.0, %v1987
        %v1989 = vpop.f32.mrb[0].mxu0
        %v1990 = vadd.f32 0.0, %v1989
        %v1991 = vpop.f32.mrb[0].mxu0
        %v1992 = vadd.f32 0.0, %v1991
        %1993 = vdwg.mxu0
        %v1994 = vadd.f32 %v1327, %v1716
        %v1995 = vadd.f32 %v1329, %v1718
        %v1996 = vadd.f32 %v1331, %v1720
        %v1997 = vadd.f32 %v1333, %v1722
        %v1998 = vadd.f32 %v1337, %v1726
        %v1999 = vadd.f32 %v1339, %v1728
        %v2000 = vadd.f32 %v1341, %v1730
        %v2001 = vadd.f32 %v1343, %v1732
        %v2002 = vadd.f32 %v1347, %v1736
        %v2003 = vadd.f32 %v1349, %v1738
        %v2004 = vadd.f32 %v1351, %v1740
        %v2005 = vadd.f32 %v1353, %v1742
        %v2006 = vadd.f32 %v1357, %v1746
        %v2007 = vadd.f32 %v1359, %v1748
        %v2008 = vadd.f32 %v1361, %v1750
        %v2009 = vadd.f32 %v1363, %v1752
        %v2010 = vadd.f32 %v1367, %v1756
        %v2011 = vadd.f32 %v1369, %v1758
        %v2012 = vadd.f32 %v1371, %v1760
        %v2013 = vadd.f32 %v1373, %v1762
        %v2014 = vadd.f32 %v1377, %v1766
        %v2015 = vadd.f32 %v1379, %v1768
        %v2016 = vadd.f32 %v1381, %v1770
        %v2017 = vadd.f32 %v1383, %v1772
        %v2018 = vadd.f32 %v1387, %v1776
        %v2019 = vadd.f32 %v1389, %v1778
        %v2020 = vadd.f32 %v1391, %v1780
        %v2021 = vadd.f32 %v1393, %v1782
        %v2022 = vadd.f32 %v1397, %v1786
        %v2023 = vadd.f32 %v1399, %v1788
        %v2024 = vadd.f32 %v1401, %v1790
        %v2025 = vadd.f32 %v1403, %v1792
        %v2026 = vadd.f32 %v1407, %v1796
        %v2027 = vadd.f32 %v1409, %v1798
        %v2028 = vadd.f32 %v1411, %v1800
        %v2029 = vadd.f32 %v1413, %v1802
        %v2030 = vadd.f32 %v1417, %v1806
        %v2031 = vadd.f32 %v1419, %v1808
        %v2032 = vadd.f32 %v1421, %v1810
        %v2033 = vadd.f32 %v1423, %v1812
        %v2034 = vadd.f32 %v1427, %v1816
        %v2035 = vadd.f32 %v1429, %v1818
        %v2036 = vadd.f32 %v1431, %v1820
        %v2037 = vadd.f32 %v1433, %v1822
        %v2038 = vadd.f32 %v1437, %v1826
        %v2039 = vadd.f32 %v1439, %v1828
        %v2040 = vadd.f32 %v1441, %v1830
        %v2041 = vadd.f32 %v1443, %v1832
        %v2042 = vadd.f32 %v1447, %v1836
        %v2043 = vadd.f32 %v1449, %v1838
        %v2044 = vadd.f32 %v1451, %v1840
        %v2045 = vadd.f32 %v1453, %v1842
        %v2046 = vadd.f32 %v1457, %v1846
        %v2047 = vadd.f32 %v1459, %v1848
        %v2048 = vadd.f32 %v1461, %v1850
        %v2049 = vadd.f32 %v1463, %v1852
        %v2050 = vadd.f32 %v1467, %v1856
        %v2051 = vadd.f32 %v1469, %v1858
        %v2052 = vadd.f32 %v1471, %v1860
        %v2053 = vadd.f32 %v1473, %v1862
        %v2054 = vadd.f32 %v1477, %v1866
        %v2055 = vadd.f32 %v1479, %v1868
        %v2056 = vadd.f32 %v1481, %v1870
        %v2057 = vadd.f32 %v1483, %v1872
        %v2058 = vadd.f32 %v1487, %v1876
        %v2059 = vadd.f32 %v1489, %v1878
        %v2060 = vadd.f32 %v1491, %v1880
        %v2061 = vadd.f32 %v1493, %v1882
        %v2062 = vadd.f32 %v1497, %v1886
        %v2063 = vadd.f32 %v1499, %v1888
        %v2064 = vadd.f32 %v1501, %v1890
        %v2065 = vadd.f32 %v1503, %v1892
        %v2066 = vadd.f32 %v1507, %v1896
        %v2067 = vadd.f32 %v1509, %v1898
        %v2068 = vadd.f32 %v1511, %v1900
        %v2069 = vadd.f32 %v1513, %v1902
        %v2070 = vadd.f32 %v1517, %v1906
        %v2071 = vadd.f32 %v1519, %v1908
        %v2072 = vadd.f32 %v1521, %v1910
        %v2073 = vadd.f32 %v1523, %v1912
        %v2074 = vadd.f32 %v1527, %v1916
        %v2075 = vadd.f32 %v1529, %v1918
        %v2076 = vadd.f32 %v1531, %v1920
        %v2077 = vadd.f32 %v1533, %v1922
        %v2078 = vadd.f32 %v1537, %v1926
        %v2079 = vadd.f32 %v1539, %v1928
        %v2080 = vadd.f32 %v1541, %v1930
        %v2081 = vadd.f32 %v1543, %v1932
        %v2082 = vadd.f32 %v1547, %v1936
        %v2083 = vadd.f32 %v1549, %v1938
        %v2084 = vadd.f32 %v1551, %v1940
        %v2085 = vadd.f32 %v1553, %v1942
        %v2086 = vadd.f32 %v1557, %v1946
        %v2087 = vadd.f32 %v1559, %v1948
        %v2088 = vadd.f32 %v1561, %v1950
        %v2089 = vadd.f32 %v1563, %v1952
        %v2090 = vadd.f32 %v1567, %v1956
        %v2091 = vadd.f32 %v1569, %v1958
        %v2092 = vadd.f32 %v1571, %v1960
        %v2093 = vadd.f32 %v1573, %v1962
        %v2094 = vadd.f32 %v1577, %v1966
        %v2095 = vadd.f32 %v1579, %v1968
        %v2096 = vadd.f32 %v1581, %v1970
        %v2097 = vadd.f32 %v1583, %v1972
        %v2098 = vadd.f32 %v1587, %v1976
        %v2099 = vadd.f32 %v1589, %v1978
        %v2100 = vadd.f32 %v1591, %v1980
        %v2101 = vadd.f32 %v1593, %v1982
        %v2102 = vadd.f32 %v1597, %v1986
        %v2103 = vadd.f32 %v1599, %v1988
        %v2104 = vadd.f32 %v1601, %v1990
        %v2105 = vadd.f32 %v1603, %v1992
        %s2106 = scalar_lea.vmem %s1, 288
        %v2107 = vld [vmem:[%s2106] sm:$0xff]
        %v2108 = vld [vmem:[%s2106 + $0x8] sm:$0xff]
        %v2109 = vld [vmem:[%s2106 + $0x10] sm:$0xff]
        %v2110 = vld [vmem:[%s2106 + $0x18] sm:$0xff]
        %v2111 = vld [vmem:[%s2106 + $0x20] sm:$0xff]
        %v2112 = vld [vmem:[%s2106 + $0x28] sm:$0xff]
        %v2113 = vld [vmem:[%s2106 + $0x30] sm:$0xff]
        %v2114 = vld [vmem:[%s2106 + $0x38] sm:$0xff]
        %v2115 = vld [vmem:[%s2106 + $0x40] sm:$0xff]
        %v2116 = vld [vmem:[%s2106 + $0x48] sm:$0xff]
        %v2117 = vld [vmem:[%s2106 + $0x50] sm:$0xff]
        %v2118 = vld [vmem:[%s2106 + $0x58] sm:$0xff]
        %v2131 = vunpack.c.l.b16 %v2107
        %v2132 = vunpack.c.h.b16 %v2107
        %v2133 = vunpack.c.l.b16 %v2108
        %v2134 = vunpack.c.h.b16 %v2108
        %v2135 = vunpack.c.l.b16 %v2109
        %v2136 = vunpack.c.h.b16 %v2109
        %v2137 = vunpack.c.l.b16 %v2110
        %v2138 = vunpack.c.h.b16 %v2110
        %v2139 = vunpack.c.l.b16 %v2111
        %v2140 = vunpack.c.h.b16 %v2111
        %v2141 = vunpack.c.l.b16 %v2112
        %v2142 = vunpack.c.h.b16 %v2112
        %v2143 = vunpack.c.l.b16 %v2113
        %v2144 = vunpack.c.h.b16 %v2113
        %v2145 = vunpack.c.l.b16 %v2114
        %v2146 = vunpack.c.h.b16 %v2114
        %v2147 = vunpack.c.l.b16 %v2115
        %v2148 = vunpack.c.h.b16 %v2115
        %v2149 = vunpack.c.l.b16 %v2116
        %v2150 = vunpack.c.h.b16 %v2116
        %v2151 = vunpack.c.l.b16 %v2117
        %v2152 = vunpack.c.h.b16 %v2117
        %v2153 = vunpack.c.l.b16 %v2118
        %v2154 = vunpack.c.h.b16 %v2118
        %v2155 = vpack.c.b16 %v2133, %v2131
        %v2156 = vpack.c.b16 %v2134, %v2132
        %v2157 = vpack.c.b16 %v2137, %v2135
        %v2158 = vpack.c.b16 %v2138, %v2136
        %v2159 = vpack.c.b16 %v2141, %v2139
        %v2160 = vpack.c.b16 %v2142, %v2140
        %v2161 = vpack.c.b16 %v2145, %v2143
        %v2162 = vpack.c.b16 %v2146, %v2144
        %v2163 = vpack.c.b16 %v2149, %v2147
        %v2164 = vpack.c.b16 %v2150, %v2148
        %v2165 = vpack.c.b16 %v2153, %v2151
        %v2166 = vpack.c.b16 %v2154, %v2152
        %v2180 = vsel %vm831, %v744, 0
        %2182 = vmatprep.subr.bf16.mxu0 %v2156
        %2183 = vmatpush1.bf16.msra.mxu0 %v2155
        %2184 = vmatprep.subr.bf16.mxu0 %v2158
        %2185 = vmatpush1.bf16.msra.mxu0 %v2157
        %2186 = vmatprep.subr.bf16.mxu0 %v2160
        %2187 = vmatpush1.bf16.msra.mxu0 %v2159
        %2188 = vmatprep.subr.bf16.mxu0 %v2162
        %2189 = vmatpush1.bf16.msra.mxu0 %v2161
        %2190 = vmatprep.subr.bf16.mxu0 %v2164
        %2191 = vmatpush1.bf16.msra.mxu0 %v2163
        %2192 = vmatprep.subr.bf16.mxu0 %v2166
        %2193 = vmatpush1.bf16.msra.mxu0 %v2165
        %2194 = vmatprep.subr.bf16.mxu0 0
        %2195 = vmatpush1.bf16.msra.mxu0 0
        %2196 = vmatprep.subr.bf16.mxu0 0
        %2197 = vmatpush1.bf16.msra.mxu0 0
        %2198 = vmatprep.subr.bf16.mxu0 0
        %2199 = vmatpush1.bf16.msra.mxu0 0
        %2200 = vmatprep.subr.bf16.mxu0 0
        %2201 = vmatpush1.bf16.msra.mxu0 0
        %2202 = vmatprep.subr.bf16.mxu0 0
        %2203 = vmatpush1.bf16.msra.mxu0 0
        %2204 = vmatprep.subr.bf16.mxu0 0
        %2205 = vmatpush1.bf16.msra.mxu0 0
        %2206 = vmatprep.subr.bf16.mxu0 0
        %2207 = vmatpush1.bf16.msra.mxu0 0
        %2208 = vmatprep.subr.bf16.mxu0 0
        %2209 = vmatpush1.bf16.msra.mxu0 0
        %2210 = vmatprep.subr.bf16.mxu0 0
        %2211 = vmatpush1.bf16.msra.mxu0 0
        %2212 = vmatprep.subr.bf16.mxu0 0
        %2213 = vmatpush1.bf16.msra.mxu0 0
        %2214 = vmatprep.mubr.bf16.mxu0 0
        %2215 = vmatmul.mubr.bf16.gmra.mrb[0].mxu0 %v839
        %v2216 = vpop.f32.mrb[0].mxu0
        %v2217 = vadd.f32 0.0, %v2216
        %v2218 = vpop.f32.mrb[0].mxu0
        %v2219 = vadd.f32 0.0, %v2218
        %v2220 = vpop.f32.mrb[0].mxu0
        %v2221 = vadd.f32 0.0, %v2220
        %v2222 = vpop.f32.mrb[0].mxu0
        %v2223 = vadd.f32 0.0, %v2222
        %2224 = vmatprep.mubr.bf16.mxu0 0
        %2225 = vmatmul.mubr.bf16.gmra.mrb[0].mxu0 %v842
        %v2226 = vpop.f32.mrb[0].mxu0
        %v2227 = vadd.f32 0.0, %v2226
        %v2228 = vpop.f32.mrb[0].mxu0
        %v2229 = vadd.f32 0.0, %v2228
        %v2230 = vpop.f32.mrb[0].mxu0
        %v2231 = vadd.f32 0.0, %v2230
        %v2232 = vpop.f32.mrb[0].mxu0
        %v2233 = vadd.f32 0.0, %v2232
        %2234 = vmatprep.mubr.bf16.mxu0 0
        %2235 = vmatmul.mubr.bf16.gmra.mrb[0].mxu0 %v845
        %v2236 = vpop.f32.mrb[0].mxu0
        %v2237 = vadd.f32 0.0, %v2236
        %v2238 = vpop.f32.mrb[0].mxu0
        %v2239 = vadd.f32 0.0, %v2238
        %v2240 = vpop.f32.mrb[0].mxu0
        %v2241 = vadd.f32 0.0, %v2240
        %v2242 = vpop.f32.mrb[0].mxu0
        %v2243 = vadd.f32 0.0, %v2242
        %2244 = vmatprep.mubr.bf16.mxu0 0
        %2245 = vmatmul.mubr.bf16.gmra.mrb[0].mxu0 %v848
        %v2246 = vpop.f32.mrb[0].mxu0
        %v2247 = vadd.f32 0.0, %v2246
        %v2248 = vpop.f32.mrb[0].mxu0
        %v2249 = vadd.f32 0.0, %v2248
        %v2250 = vpop.f32.mrb[0].mxu0
        %v2251 = vadd.f32 0.0, %v2250
        %v2252 = vpop.f32.mrb[0].mxu0
        %v2253 = vadd.f32 0.0, %v2252
        %2254 = vmatprep.mubr.bf16.mxu0 0
        %2255 = vmatmul.mubr.bf16.gmra.mrb[0].mxu0 %v851
        %v2256 = vpop.f32.mrb[0].mxu0
        %v2257 = vadd.f32 0.0, %v2256
        %v2258 = vpop.f32.mrb[0].mxu0
        %v2259 = vadd.f32 0.0, %v2258
        %v2260 = vpop.f32.mrb[0].mxu0
        %v2261 = vadd.f32 0.0, %v2260
        %v2262 = vpop.f32.mrb[0].mxu0
        %v2263 = vadd.f32 0.0, %v2262
        %2264 = vmatprep.mubr.bf16.mxu0 0
        %2265 = vmatmul.mubr.bf16.gmra.mrb[0].mxu0 %v854
        %v2266 = vpop.f32.mrb[0].mxu0
        %v2267 = vadd.f32 0.0, %v2266
        %v2268 = vpop.f32.mrb[0].mxu0
        %v2269 = vadd.f32 0.0, %v2268
        %v2270 = vpop.f32.mrb[0].mxu0
        %v2271 = vadd.f32 0.0, %v2270
        %v2272 = vpop.f32.mrb[0].mxu0
        %v2273 = vadd.f32 0.0, %v2272
        %2274 = vmatprep.mubr.bf16.mxu0 0
        %2275 = vmatmul.mubr.bf16.gmra.mrb[0].mxu0 %v857
        %v2276 = vpop.f32.mrb[0].mxu0
        %v2277 = vadd.f32 0.0, %v2276
        %v2278 = vpop.f32.mrb[0].mxu0
        %v2279 = vadd.f32 0.0, %v2278
        %v2280 = vpop.f32.mrb[0].mxu0
        %v2281 = vadd.f32 0.0, %v2280
        %v2282 = vpop.f32.mrb[0].mxu0
        %v2283 = vadd.f32 0.0, %v2282
        %2284 = vmatprep.mubr.bf16.mxu0 0
        %2285 = vmatmul.mubr.bf16.gmra.mrb[0].mxu0 %v860
        %v2286 = vpop.f32.mrb[0].mxu0
        %v2287 = vadd.f32 0.0, %v2286
        %v2288 = vpop.f32.mrb[0].mxu0
        %v2289 = vadd.f32 0.0, %v2288
        %v2290 = vpop.f32.mrb[0].mxu0
        %v2291 = vadd.f32 0.0, %v2290
        %v2292 = vpop.f32.mrb[0].mxu0
        %v2293 = vadd.f32 0.0, %v2292
        %2294 = vmatprep.mubr.bf16.mxu0 0
        %2295 = vmatmul.mubr.bf16.gmra.mrb[0].mxu0 %v863
        %v2296 = vpop.f32.mrb[0].mxu0
        %v2297 = vadd.f32 0.0, %v2296
        %v2298 = vpop.f32.mrb[0].mxu0
        %v2299 = vadd.f32 0.0, %v2298
        %v2300 = vpop.f32.mrb[0].mxu0
        %v2301 = vadd.f32 0.0, %v2300
        %v2302 = vpop.f32.mrb[0].mxu0
        %v2303 = vadd.f32 0.0, %v2302
        %2304 = vmatprep.mubr.bf16.mxu0 0
        %2305 = vmatmul.mubr.bf16.gmra.mrb[0].mxu0 %v866
        %v2306 = vpop.f32.mrb[0].mxu0
        %v2307 = vadd.f32 0.0, %v2306
        %v2308 = vpop.f32.mrb[0].mxu0
        %v2309 = vadd.f32 0.0, %v2308
        %v2310 = vpop.f32.mrb[0].mxu0
        %v2311 = vadd.f32 0.0, %v2310
        %v2312 = vpop.f32.mrb[0].mxu0
        %v2313 = vadd.f32 0.0, %v2312
        %2314 = vmatprep.mubr.bf16.mxu0 0
        %2315 = vmatmul.mubr.bf16.gmra.mrb[0].mxu0 %v869
        %v2316 = vpop.f32.mrb[0].mxu0
        %v2317 = vadd.f32 0.0, %v2316
        %v2318 = vpop.f32.mrb[0].mxu0
        %v2319 = vadd.f32 0.0, %v2318
        %v2320 = vpop.f32.mrb[0].mxu0
        %v2321 = vadd.f32 0.0, %v2320
        %v2322 = vpop.f32.mrb[0].mxu0
        %v2323 = vadd.f32 0.0, %v2322
        %2324 = vmatprep.mubr.bf16.mxu0 0
        %2325 = vmatmul.mubr.bf16.gmra.mrb[0].mxu0 %v872
        %v2326 = vpop.f32.mrb[0].mxu0
        %v2327 = vadd.f32 0.0, %v2326
        %v2328 = vpop.f32.mrb[0].mxu0
        %v2329 = vadd.f32 0.0, %v2328
        %v2330 = vpop.f32.mrb[0].mxu0
        %v2331 = vadd.f32 0.0, %v2330
        %v2332 = vpop.f32.mrb[0].mxu0
        %v2333 = vadd.f32 0.0, %v2332
        %2334 = vmatprep.mubr.bf16.mxu0 0
        %2335 = vmatmul.mubr.bf16.gmra.mrb[0].mxu0 %v875
        %v2336 = vpop.f32.mrb[0].mxu0
        %v2337 = vadd.f32 0.0, %v2336
        %v2338 = vpop.f32.mrb[0].mxu0
        %v2339 = vadd.f32 0.0, %v2338
        %v2340 = vpop.f32.mrb[0].mxu0
        %v2341 = vadd.f32 0.0, %v2340
        %v2342 = vpop.f32.mrb[0].mxu0
        %v2343 = vadd.f32 0.0, %v2342
        %2344 = vmatprep.mubr.bf16.mxu0 0
        %2345 = vmatmul.mubr.bf16.gmra.mrb[0].mxu0 %v878
        %v2346 = vpop.f32.mrb[0].mxu0
        %v2347 = vadd.f32 0.0, %v2346
        %v2348 = vpop.f32.mrb[0].mxu0
        %v2349 = vadd.f32 0.0, %v2348
        %v2350 = vpop.f32.mrb[0].mxu0
        %v2351 = vadd.f32 0.0, %v2350
        %v2352 = vpop.f32.mrb[0].mxu0
        %v2353 = vadd.f32 0.0, %v2352
        %2354 = vmatprep.mubr.bf16.mxu0 0
        %2355 = vmatmul.mubr.bf16.gmra.mrb[0].mxu0 %v881
        %v2356 = vpop.f32.mrb[0].mxu0
        %v2357 = vadd.f32 0.0, %v2356
        %v2358 = vpop.f32.mrb[0].mxu0
        %v2359 = vadd.f32 0.0, %v2358
        %v2360 = vpop.f32.mrb[0].mxu0
        %v2361 = vadd.f32 0.0, %v2360
        %v2362 = vpop.f32.mrb[0].mxu0
        %v2363 = vadd.f32 0.0, %v2362
        %2364 = vmatprep.mubr.bf16.mxu0 0
        %2365 = vmatmul.mubr.bf16.gmra.mrb[0].mxu0 %v884
        %v2366 = vpop.f32.mrb[0].mxu0
        %v2367 = vadd.f32 0.0, %v2366
        %v2368 = vpop.f32.mrb[0].mxu0
        %v2369 = vadd.f32 0.0, %v2368
        %v2370 = vpop.f32.mrb[0].mxu0
        %v2371 = vadd.f32 0.0, %v2370
        %v2372 = vpop.f32.mrb[0].mxu0
        %v2373 = vadd.f32 0.0, %v2372
        %2374 = vmatprep.mubr.bf16.mxu0 0
        %2375 = vmatmul.mubr.bf16.gmra.mrb[0].mxu0 %v887
        %v2376 = vpop.f32.mrb[0].mxu0
        %v2377 = vadd.f32 0.0, %v2376
        %v2378 = vpop.f32.mrb[0].mxu0
        %v2379 = vadd.f32 0.0, %v2378
        %v2380 = vpop.f32.mrb[0].mxu0
        %v2381 = vadd.f32 0.0, %v2380
        %v2382 = vpop.f32.mrb[0].mxu0
        %v2383 = vadd.f32 0.0, %v2382
        %2384 = vmatprep.mubr.bf16.mxu0 0
        %2385 = vmatmul.mubr.bf16.gmra.mrb[0].mxu0 %v890
        %v2386 = vpop.f32.mrb[0].mxu0
        %v2387 = vadd.f32 0.0, %v2386
        %v2388 = vpop.f32.mrb[0].mxu0
        %v2389 = vadd.f32 0.0, %v2388
        %v2390 = vpop.f32.mrb[0].mxu0
        %v2391 = vadd.f32 0.0, %v2390
        %v2392 = vpop.f32.mrb[0].mxu0
        %v2393 = vadd.f32 0.0, %v2392
        %2394 = vmatprep.mubr.bf16.mxu0 0
        %2395 = vmatmul.mubr.bf16.gmra.mrb[0].mxu0 %v893
        %v2396 = vpop.f32.mrb[0].mxu0
        %v2397 = vadd.f32 0.0, %v2396
        %v2398 = vpop.f32.mrb[0].mxu0
        %v2399 = vadd.f32 0.0, %v2398
        %v2400 = vpop.f32.mrb[0].mxu0
        %v2401 = vadd.f32 0.0, %v2400
        %v2402 = vpop.f32.mrb[0].mxu0
        %v2403 = vadd.f32 0.0, %v2402
        %2404 = vmatprep.mubr.bf16.mxu0 0
        %2405 = vmatmul.mubr.bf16.gmra.mrb[0].mxu0 %v896
        %v2406 = vpop.f32.mrb[0].mxu0
        %v2407 = vadd.f32 0.0, %v2406
        %v2408 = vpop.f32.mrb[0].mxu0
        %v2409 = vadd.f32 0.0, %v2408
        %v2410 = vpop.f32.mrb[0].mxu0
        %v2411 = vadd.f32 0.0, %v2410
        %v2412 = vpop.f32.mrb[0].mxu0
        %v2413 = vadd.f32 0.0, %v2412
        %2414 = vmatprep.mubr.bf16.mxu0 0
        %2415 = vmatmul.mubr.bf16.gmra.mrb[0].mxu0 %v899
        %v2416 = vpop.f32.mrb[0].mxu0
        %v2417 = vadd.f32 0.0, %v2416
        %v2418 = vpop.f32.mrb[0].mxu0
        %v2419 = vadd.f32 0.0, %v2418
        %v2420 = vpop.f32.mrb[0].mxu0
        %v2421 = vadd.f32 0.0, %v2420
        %v2422 = vpop.f32.mrb[0].mxu0
        %v2423 = vadd.f32 0.0, %v2422
        %2424 = vmatprep.mubr.bf16.mxu0 0
        %2425 = vmatmul.mubr.bf16.gmra.mrb[0].mxu0 %v902
        %v2426 = vpop.f32.mrb[0].mxu0
        %v2427 = vadd.f32 0.0, %v2426
        %v2428 = vpop.f32.mrb[0].mxu0
        %v2429 = vadd.f32 0.0, %v2428
        %v2430 = vpop.f32.mrb[0].mxu0
        %v2431 = vadd.f32 0.0, %v2430
        %v2432 = vpop.f32.mrb[0].mxu0
        %v2433 = vadd.f32 0.0, %v2432
        %2434 = vmatprep.mubr.bf16.mxu0 0
        %2435 = vmatmul.mubr.bf16.gmra.mrb[0].mxu0 %v905
        %v2436 = vpop.f32.mrb[0].mxu0
        %v2437 = vadd.f32 0.0, %v2436
        %v2438 = vpop.f32.mrb[0].mxu0
        %v2439 = vadd.f32 0.0, %v2438
        %v2440 = vpop.f32.mrb[0].mxu0
        %v2441 = vadd.f32 0.0, %v2440
        %v2442 = vpop.f32.mrb[0].mxu0
        %v2443 = vadd.f32 0.0, %v2442
        %2444 = vmatprep.mubr.bf16.mxu0 0
        %2445 = vmatmul.mubr.bf16.gmra.mrb[0].mxu0 %v908
        %v2446 = vpop.f32.mrb[0].mxu0
        %v2447 = vadd.f32 0.0, %v2446
        %v2448 = vpop.f32.mrb[0].mxu0
        %v2449 = vadd.f32 0.0, %v2448
        %v2450 = vpop.f32.mrb[0].mxu0
        %v2451 = vadd.f32 0.0, %v2450
        %v2452 = vpop.f32.mrb[0].mxu0
        %v2453 = vadd.f32 0.0, %v2452
        %2454 = vmatprep.mubr.bf16.mxu0 0
        %2455 = vmatmul.mubr.bf16.gmra.mrb[0].mxu0 %v911
        %v2456 = vpop.f32.mrb[0].mxu0
        %v2457 = vadd.f32 0.0, %v2456
        %v2458 = vpop.f32.mrb[0].mxu0
        %v2459 = vadd.f32 0.0, %v2458
        %v2460 = vpop.f32.mrb[0].mxu0
        %v2461 = vadd.f32 0.0, %v2460
        %v2462 = vpop.f32.mrb[0].mxu0
        %v2463 = vadd.f32 0.0, %v2462
        %2464 = vmatprep.mubr.bf16.mxu0 0
        %2465 = vmatmul.mubr.bf16.gmra.mrb[0].mxu0 %v914
        %v2466 = vpop.f32.mrb[0].mxu0
        %v2467 = vadd.f32 0.0, %v2466
        %v2468 = vpop.f32.mrb[0].mxu0
        %v2469 = vadd.f32 0.0, %v2468
        %v2470 = vpop.f32.mrb[0].mxu0
        %v2471 = vadd.f32 0.0, %v2470
        %v2472 = vpop.f32.mrb[0].mxu0
        %v2473 = vadd.f32 0.0, %v2472
        %2474 = vmatprep.mubr.bf16.mxu0 0
        %2475 = vmatmul.mubr.bf16.gmra.mrb[0].mxu0 %v1679
        %v2476 = vpop.f32.mrb[0].mxu0
        %v2477 = vadd.f32 0.0, %v2476
        %v2478 = vpop.f32.mrb[0].mxu0
        %v2479 = vadd.f32 0.0, %v2478
        %v2480 = vpop.f32.mrb[0].mxu0
        %v2481 = vadd.f32 0.0, %v2480
        %v2482 = vpop.f32.mrb[0].mxu0
        %v2483 = vadd.f32 0.0, %v2482
        %2484 = vmatprep.mubr.bf16.mxu0 0
        %2485 = vmatmul.mubr.bf16.gmra.mrb[0].mxu0 %v2180
        %v2486 = vpop.f32.mrb[0].mxu0
        %v2487 = vadd.f32 0.0, %v2486
        %v2488 = vpop.f32.mrb[0].mxu0
        %v2489 = vadd.f32 0.0, %v2488
        %v2490 = vpop.f32.mrb[0].mxu0
        %v2491 = vadd.f32 0.0, %v2490
        %v2492 = vpop.f32.mrb[0].mxu0
        %v2493 = vadd.f32 0.0, %v2492
        %2494 = vdwg.mxu0
        %v2495 = vadd.f32 %v1994, %v2217
        %v2496 = vadd.f32 %v1995, %v2219
        %v2497 = vadd.f32 %v1996, %v2221
        %v2498 = vadd.f32 %v1997, %v2223
        %v2499 = vadd.f32 %v1998, %v2227
        %v2500 = vadd.f32 %v1999, %v2229
        %v2501 = vadd.f32 %v2000, %v2231
        %v2502 = vadd.f32 %v2001, %v2233
        %v2503 = vadd.f32 %v2002, %v2237
        %v2504 = vadd.f32 %v2003, %v2239
        %v2505 = vadd.f32 %v2004, %v2241
        %v2506 = vadd.f32 %v2005, %v2243
        %v2507 = vadd.f32 %v2006, %v2247
        %v2508 = vadd.f32 %v2007, %v2249
        %v2509 = vadd.f32 %v2008, %v2251
        %v2510 = vadd.f32 %v2009, %v2253
        %v2511 = vadd.f32 %v2010, %v2257
        %v2512 = vadd.f32 %v2011, %v2259
        %v2513 = vadd.f32 %v2012, %v2261
        %v2514 = vadd.f32 %v2013, %v2263
        %v2515 = vadd.f32 %v2014, %v2267
        %v2516 = vadd.f32 %v2015, %v2269
        %v2517 = vadd.f32 %v2016, %v2271
        %v2518 = vadd.f32 %v2017, %v2273
        %v2519 = vadd.f32 %v2018, %v2277
        %v2520 = vadd.f32 %v2019, %v2279
        %v2521 = vadd.f32 %v2020, %v2281
        %v2522 = vadd.f32 %v2021, %v2283
        %v2523 = vadd.f32 %v2022, %v2287
        %v2524 = vadd.f32 %v2023, %v2289
        %v2525 = vadd.f32 %v2024, %v2291
        %v2526 = vadd.f32 %v2025, %v2293
        %v2527 = vadd.f32 %v2026, %v2297
        %v2528 = vadd.f32 %v2027, %v2299
        %v2529 = vadd.f32 %v2028, %v2301
        %v2530 = vadd.f32 %v2029, %v2303
        %v2531 = vadd.f32 %v2030, %v2307
        %v2532 = vadd.f32 %v2031, %v2309
        %v2533 = vadd.f32 %v2032, %v2311
        %v2534 = vadd.f32 %v2033, %v2313
        %v2535 = vadd.f32 %v2034, %v2317
        %v2536 = vadd.f32 %v2035, %v2319
        %v2537 = vadd.f32 %v2036, %v2321
        %v2538 = vadd.f32 %v2037, %v2323
        %v2539 = vadd.f32 %v2038, %v2327
        %v2540 = vadd.f32 %v2039, %v2329
        %v2541 = vadd.f32 %v2040, %v2331
        %v2542 = vadd.f32 %v2041, %v2333
        %v2543 = vadd.f32 %v2042, %v2337
        %v2544 = vadd.f32 %v2043, %v2339
        %v2545 = vadd.f32 %v2044, %v2341
        %v2546 = vadd.f32 %v2045, %v2343
        %v2547 = vadd.f32 %v2046, %v2347
        %v2548 = vadd.f32 %v2047, %v2349
        %v2549 = vadd.f32 %v2048, %v2351
        %v2550 = vadd.f32 %v2049, %v2353
        %v2551 = vadd.f32 %v2050, %v2357
        %v2552 = vadd.f32 %v2051, %v2359
        %v2553 = vadd.f32 %v2052, %v2361
        %v2554 = vadd.f32 %v2053, %v2363
        %v2555 = vadd.f32 %v2054, %v2367
        %v2556 = vadd.f32 %v2055, %v2369
        %v2557 = vadd.f32 %v2056, %v2371
        %v2558 = vadd.f32 %v2057, %v2373
        %v2559 = vadd.f32 %v2058, %v2377
        %v2560 = vadd.f32 %v2059, %v2379
        %v2561 = vadd.f32 %v2060, %v2381
        %v2562 = vadd.f32 %v2061, %v2383
        %v2563 = vadd.f32 %v2062, %v2387
        %v2564 = vadd.f32 %v2063, %v2389
        %v2565 = vadd.f32 %v2064, %v2391
        %v2566 = vadd.f32 %v2065, %v2393
        %v2567 = vadd.f32 %v2066, %v2397
        %v2568 = vadd.f32 %v2067, %v2399
        %v2569 = vadd.f32 %v2068, %v2401
        %v2570 = vadd.f32 %v2069, %v2403
        %v2571 = vadd.f32 %v2070, %v2407
        %v2572 = vadd.f32 %v2071, %v2409
        %v2573 = vadd.f32 %v2072, %v2411
        %v2574 = vadd.f32 %v2073, %v2413
        %v2575 = vadd.f32 %v2074, %v2417
        %v2576 = vadd.f32 %v2075, %v2419
        %v2577 = vadd.f32 %v2076, %v2421
        %v2578 = vadd.f32 %v2077, %v2423
        %v2579 = vadd.f32 %v2078, %v2427
        %v2580 = vadd.f32 %v2079, %v2429
        %v2581 = vadd.f32 %v2080, %v2431
        %v2582 = vadd.f32 %v2081, %v2433
        %v2583 = vadd.f32 %v2082, %v2437
        %v2584 = vadd.f32 %v2083, %v2439
        %v2585 = vadd.f32 %v2084, %v2441
        %v2586 = vadd.f32 %v2085, %v2443
        %v2587 = vadd.f32 %v2086, %v2447
        %v2588 = vadd.f32 %v2087, %v2449
        %v2589 = vadd.f32 %v2088, %v2451
        %v2590 = vadd.f32 %v2089, %v2453
        %v2591 = vadd.f32 %v2090, %v2457
        %v2592 = vadd.f32 %v2091, %v2459
        %v2593 = vadd.f32 %v2092, %v2461
        %v2594 = vadd.f32 %v2093, %v2463
        %v2595 = vadd.f32 %v2094, %v2467
        %v2596 = vadd.f32 %v2095, %v2469
        %v2597 = vadd.f32 %v2096, %v2471
        %v2598 = vadd.f32 %v2097, %v2473
        %v2599 = vadd.f32 %v2098, %v2477
        %v2600 = vadd.f32 %v2099, %v2479
        %v2601 = vadd.f32 %v2100, %v2481
        %v2602 = vadd.f32 %v2101, %v2483
        %v2603 = vadd.f32 %v2102, %v2487
        %v2604 = vadd.f32 %v2103, %v2489
        %v2605 = vadd.f32 %v2104, %v2491
        %v2606 = vadd.f32 %v2105, %v2493
        %s2607 = scalar_lea.vmem %s1, 384
        %v2608 = vld [vmem:[%s2607] sm:$0xff]
        %v2609 = vld [vmem:[%s2607 + $0x8] sm:$0xff]
        %v2610 = vld [vmem:[%s2607 + $0x10] sm:$0xff]
        %v2611 = vld [vmem:[%s2607 + $0x18] sm:$0xff]
        %v2612 = vld [vmem:[%s2607 + $0x20] sm:$0xff]
        %v2613 = vld [vmem:[%s2607 + $0x28] sm:$0xff]
        %v2614 = vld [vmem:[%s2607 + $0x30] sm:$0xff]
        %v2615 = vld [vmem:[%s2607 + $0x38] sm:$0xff]
        %v2616 = vld [vmem:[%s2607 + $0x40] sm:$0xff]
        %v2617 = vld [vmem:[%s2607 + $0x48] sm:$0xff]
        %v2618 = vld [vmem:[%s2607 + $0x50] sm:$0xff]
        %v2619 = vld [vmem:[%s2607 + $0x58] sm:$0xff]
        %v2632 = vunpack.c.l.b16 %v2608
        %v2633 = vunpack.c.h.b16 %v2608
        %v2634 = vunpack.c.l.b16 %v2609
        %v2635 = vunpack.c.h.b16 %v2609
        %v2636 = vunpack.c.l.b16 %v2610
        %v2637 = vunpack.c.h.b16 %v2610
        %v2638 = vunpack.c.l.b16 %v2611
        %v2639 = vunpack.c.h.b16 %v2611
        %v2640 = vunpack.c.l.b16 %v2612
        %v2641 = vunpack.c.h.b16 %v2612
        %v2642 = vunpack.c.l.b16 %v2613
        %v2643 = vunpack.c.h.b16 %v2613
        %v2644 = vunpack.c.l.b16 %v2614
        %v2645 = vunpack.c.h.b16 %v2614
        %v2646 = vunpack.c.l.b16 %v2615
        %v2647 = vunpack.c.h.b16 %v2615
        %v2648 = vunpack.c.l.b16 %v2616
        %v2649 = vunpack.c.h.b16 %v2616
        %v2650 = vunpack.c.l.b16 %v2617
        %v2651 = vunpack.c.h.b16 %v2617
        %v2652 = vunpack.c.l.b16 %v2618
        %v2653 = vunpack.c.h.b16 %v2618
        %v2654 = vunpack.c.l.b16 %v2619
        %v2655 = vunpack.c.h.b16 %v2619
        %v2656 = vpack.c.b16 %v2634, %v2632
        %v2657 = vpack.c.b16 %v2635, %v2633
        %v2658 = vpack.c.b16 %v2638, %v2636
        %v2659 = vpack.c.b16 %v2639, %v2637
        %v2660 = vpack.c.b16 %v2642, %v2640
        %v2661 = vpack.c.b16 %v2643, %v2641
        %v2662 = vpack.c.b16 %v2646, %v2644
        %v2663 = vpack.c.b16 %v2647, %v2645
        %v2664 = vpack.c.b16 %v2650, %v2648
        %v2665 = vpack.c.b16 %v2651, %v2649
        %v2666 = vpack.c.b16 %v2654, %v2652
        %v2667 = vpack.c.b16 %v2655, %v2653
        %v2681 = vsel %vm831, %v745, 0
        %2683 = vmatprep.subr.bf16.mxu0 %v2657
        %2684 = vmatpush1.bf16.msra.mxu0 %v2656
        %2685 = vmatprep.subr.bf16.mxu0 %v2659
        %2686 = vmatpush1.bf16.msra.mxu0 %v2658
        %2687 = vmatprep.subr.bf16.mxu0 %v2661
        %2688 = vmatpush1.bf16.msra.mxu0 %v2660
        %2689 = vmatprep.subr.bf16.mxu0 %v2663
        %2690 = vmatpush1.bf16.msra.mxu0 %v2662
        %2691 = vmatprep.subr.bf16.mxu0 %v2665
        %2692 = vmatpush1.bf16.msra.mxu0 %v2664
        %2693 = vmatprep.subr.bf16.mxu0 %v2667
        %2694 = vmatpush1.bf16.msra.mxu0 %v2666
        %2695 = vmatprep.subr.bf16.mxu0 0
        %2696 = vmatpush1.bf16.msra.mxu0 0
        %2697 = vmatprep.subr.bf16.mxu0 0
        %2698 = vmatpush1.bf16.msra.mxu0 0
        %2699 = vmatprep.subr.bf16.mxu0 0
        %2700 = vmatpush1.bf16.msra.mxu0 0
        %2701 = vmatprep.subr.bf16.mxu0 0
        %2702 = vmatpush1.bf16.msra.mxu0 0
        %2703 = vmatprep.subr.bf16.mxu0 0
        %2704 = vmatpush1.bf16.msra.mxu0 0
        %2705 = vmatprep.subr.bf16.mxu0 0
        %2706 = vmatpush1.bf16.msra.mxu0 0
        %2707 = vmatprep.subr.bf16.mxu0 0
        %2708 = vmatpush1.bf16.msra.mxu0 0
        %2709 = vmatprep.subr.bf16.mxu0 0
        %2710 = vmatpush1.bf16.msra.mxu0 0
        %2711 = vmatprep.subr.bf16.mxu0 0
        %2712 = vmatpush1.bf16.msra.mxu0 0
        %2713 = vmatprep.subr.bf16.mxu0 0
        %2714 = vmatpush1.bf16.msra.mxu0 0
        %2715 = vmatprep.mubr.bf16.mxu0 0
        %2716 = vmatmul.mubr.bf16.gmra.mrb[0].mxu0 %v842
        %v2717 = vpop.f32.mrb[0].mxu0
        %v2718 = vadd.f32 0.0, %v2717
        %v2719 = vpop.f32.mrb[0].mxu0
        %v2720 = vadd.f32 0.0, %v2719
        %v2721 = vpop.f32.mrb[0].mxu0
        %v2722 = vadd.f32 0.0, %v2721
        %v2723 = vpop.f32.mrb[0].mxu0
        %v2724 = vadd.f32 0.0, %v2723
        %2725 = vmatprep.mubr.bf16.mxu0 0
        %2726 = vmatmul.mubr.bf16.gmra.mrb[0].mxu0 %v845
        %v2727 = vpop.f32.mrb[0].mxu0
        %v2728 = vadd.f32 0.0, %v2727
        %v2729 = vpop.f32.mrb[0].mxu0
        %v2730 = vadd.f32 0.0, %v2729
        %v2731 = vpop.f32.mrb[0].mxu0
        %v2732 = vadd.f32 0.0, %v2731
        %v2733 = vpop.f32.mrb[0].mxu0
        %v2734 = vadd.f32 0.0, %v2733
        %2735 = vmatprep.mubr.bf16.mxu0 0
        %2736 = vmatmul.mubr.bf16.gmra.mrb[0].mxu0 %v848
        %v2737 = vpop.f32.mrb[0].mxu0
        %v2738 = vadd.f32 0.0, %v2737
        %v2739 = vpop.f32.mrb[0].mxu0
        %v2740 = vadd.f32 0.0, %v2739
        %v2741 = vpop.f32.mrb[0].mxu0
        %v2742 = vadd.f32 0.0, %v2741
        %v2743 = vpop.f32.mrb[0].mxu0
        %v2744 = vadd.f32 0.0, %v2743
        %2745 = vmatprep.mubr.bf16.mxu0 0
        %2746 = vmatmul.mubr.bf16.gmra.mrb[0].mxu0 %v851
        %v2747 = vpop.f32.mrb[0].mxu0
        %v2748 = vadd.f32 0.0, %v2747
        %v2749 = vpop.f32.mrb[0].mxu0
        %v2750 = vadd.f32 0.0, %v2749
        %v2751 = vpop.f32.mrb[0].mxu0
        %v2752 = vadd.f32 0.0, %v2751
        %v2753 = vpop.f32.mrb[0].mxu0
        %v2754 = vadd.f32 0.0, %v2753
        %2755 = vmatprep.mubr.bf16.mxu0 0
        %2756 = vmatmul.mubr.bf16.gmra.mrb[0].mxu0 %v854
        %v2757 = vpop.f32.mrb[0].mxu0
        %v2758 = vadd.f32 0.0, %v2757
        %v2759 = vpop.f32.mrb[0].mxu0
        %v2760 = vadd.f32 0.0, %v2759
        %v2761 = vpop.f32.mrb[0].mxu0
        %v2762 = vadd.f32 0.0, %v2761
        %v2763 = vpop.f32.mrb[0].mxu0
        %v2764 = vadd.f32 0.0, %v2763
        %2765 = vmatprep.mubr.bf16.mxu0 0
        %2766 = vmatmul.mubr.bf16.gmra.mrb[0].mxu0 %v857
        %v2767 = vpop.f32.mrb[0].mxu0
        %v2768 = vadd.f32 0.0, %v2767
        %v2769 = vpop.f32.mrb[0].mxu0
        %v2770 = vadd.f32 0.0, %v2769
        %v2771 = vpop.f32.mrb[0].mxu0
        %v2772 = vadd.f32 0.0, %v2771
        %v2773 = vpop.f32.mrb[0].mxu0
        %v2774 = vadd.f32 0.0, %v2773
        %2775 = vmatprep.mubr.bf16.mxu0 0
        %2776 = vmatmul.mubr.bf16.gmra.mrb[0].mxu0 %v860
        %v2777 = vpop.f32.mrb[0].mxu0
        %v2778 = vadd.f32 0.0, %v2777
        %v2779 = vpop.f32.mrb[0].mxu0
        %v2780 = vadd.f32 0.0, %v2779
        %v2781 = vpop.f32.mrb[0].mxu0
        %v2782 = vadd.f32 0.0, %v2781
        %v2783 = vpop.f32.mrb[0].mxu0
        %v2784 = vadd.f32 0.0, %v2783
        %2785 = vmatprep.mubr.bf16.mxu0 0
        %2786 = vmatmul.mubr.bf16.gmra.mrb[0].mxu0 %v863
        %v2787 = vpop.f32.mrb[0].mxu0
        %v2788 = vadd.f32 0.0, %v2787
        %v2789 = vpop.f32.mrb[0].mxu0
        %v2790 = vadd.f32 0.0, %v2789
        %v2791 = vpop.f32.mrb[0].mxu0
        %v2792 = vadd.f32 0.0, %v2791
        %v2793 = vpop.f32.mrb[0].mxu0
        %v2794 = vadd.f32 0.0, %v2793
        %2795 = vmatprep.mubr.bf16.mxu0 0
        %2796 = vmatmul.mubr.bf16.gmra.mrb[0].mxu0 %v866
        %v2797 = vpop.f32.mrb[0].mxu0
        %v2798 = vadd.f32 0.0, %v2797
        %v2799 = vpop.f32.mrb[0].mxu0
        %v2800 = vadd.f32 0.0, %v2799
        %v2801 = vpop.f32.mrb[0].mxu0
        %v2802 = vadd.f32 0.0, %v2801
        %v2803 = vpop.f32.mrb[0].mxu0
        %v2804 = vadd.f32 0.0, %v2803
        %2805 = vmatprep.mubr.bf16.mxu0 0
        %2806 = vmatmul.mubr.bf16.gmra.mrb[0].mxu0 %v869
        %v2807 = vpop.f32.mrb[0].mxu0
        %v2808 = vadd.f32 0.0, %v2807
        %v2809 = vpop.f32.mrb[0].mxu0
        %v2810 = vadd.f32 0.0, %v2809
        %v2811 = vpop.f32.mrb[0].mxu0
        %v2812 = vadd.f32 0.0, %v2811
        %v2813 = vpop.f32.mrb[0].mxu0
        %v2814 = vadd.f32 0.0, %v2813
        %2815 = vmatprep.mubr.bf16.mxu0 0
        %2816 = vmatmul.mubr.bf16.gmra.mrb[0].mxu0 %v872
        %v2817 = vpop.f32.mrb[0].mxu0
        %v2818 = vadd.f32 0.0, %v2817
        %v2819 = vpop.f32.mrb[0].mxu0
        %v2820 = vadd.f32 0.0, %v2819
        %v2821 = vpop.f32.mrb[0].mxu0
        %v2822 = vadd.f32 0.0, %v2821
        %v2823 = vpop.f32.mrb[0].mxu0
        %v2824 = vadd.f32 0.0, %v2823
        %2825 = vmatprep.mubr.bf16.mxu0 0
        %2826 = vmatmul.mubr.bf16.gmra.mrb[0].mxu0 %v875
        %v2827 = vpop.f32.mrb[0].mxu0
        %v2828 = vadd.f32 0.0, %v2827
        %v2829 = vpop.f32.mrb[0].mxu0
        %v2830 = vadd.f32 0.0, %v2829
        %v2831 = vpop.f32.mrb[0].mxu0
        %v2832 = vadd.f32 0.0, %v2831
        %v2833 = vpop.f32.mrb[0].mxu0
        %v2834 = vadd.f32 0.0, %v2833
        %2835 = vmatprep.mubr.bf16.mxu0 0
        %2836 = vmatmul.mubr.bf16.gmra.mrb[0].mxu0 %v878
        %v2837 = vpop.f32.mrb[0].mxu0
        %v2838 = vadd.f32 0.0, %v2837
        %v2839 = vpop.f32.mrb[0].mxu0
        %v2840 = vadd.f32 0.0, %v2839
        %v2841 = vpop.f32.mrb[0].mxu0
        %v2842 = vadd.f32 0.0, %v2841
        %v2843 = vpop.f32.mrb[0].mxu0
        %v2844 = vadd.f32 0.0, %v2843
        %2845 = vmatprep.mubr.bf16.mxu0 0
        %2846 = vmatmul.mubr.bf16.gmra.mrb[0].mxu0 %v881
        %v2847 = vpop.f32.mrb[0].mxu0
        %v2848 = vadd.f32 0.0, %v2847
        %v2849 = vpop.f32.mrb[0].mxu0
        %v2850 = vadd.f32 0.0, %v2849
        %v2851 = vpop.f32.mrb[0].mxu0
        %v2852 = vadd.f32 0.0, %v2851
        %v2853 = vpop.f32.mrb[0].mxu0
        %v2854 = vadd.f32 0.0, %v2853
        %2855 = vmatprep.mubr.bf16.mxu0 0
        %2856 = vmatmul.mubr.bf16.gmra.mrb[0].mxu0 %v884
        %v2857 = vpop.f32.mrb[0].mxu0
        %v2858 = vadd.f32 0.0, %v2857
        %v2859 = vpop.f32.mrb[0].mxu0
        %v2860 = vadd.f32 0.0, %v2859
        %v2861 = vpop.f32.mrb[0].mxu0
        %v2862 = vadd.f32 0.0, %v2861
        %v2863 = vpop.f32.mrb[0].mxu0
        %v2864 = vadd.f32 0.0, %v2863
        %2865 = vmatprep.mubr.bf16.mxu0 0
        %2866 = vmatmul.mubr.bf16.gmra.mrb[0].mxu0 %v887
        %v2867 = vpop.f32.mrb[0].mxu0
        %v2868 = vadd.f32 0.0, %v2867
        %v2869 = vpop.f32.mrb[0].mxu0
        %v2870 = vadd.f32 0.0, %v2869
        %v2871 = vpop.f32.mrb[0].mxu0
        %v2872 = vadd.f32 0.0, %v2871
        %v2873 = vpop.f32.mrb[0].mxu0
        %v2874 = vadd.f32 0.0, %v2873
        %2875 = vmatprep.mubr.bf16.mxu0 0
        %2876 = vmatmul.mubr.bf16.gmra.mrb[0].mxu0 %v890
        %v2877 = vpop.f32.mrb[0].mxu0
        %v2878 = vadd.f32 0.0, %v2877
        %v2879 = vpop.f32.mrb[0].mxu0
        %v2880 = vadd.f32 0.0, %v2879
        %v2881 = vpop.f32.mrb[0].mxu0
        %v2882 = vadd.f32 0.0, %v2881
        %v2883 = vpop.f32.mrb[0].mxu0
        %v2884 = vadd.f32 0.0, %v2883
        %2885 = vmatprep.mubr.bf16.mxu0 0
        %2886 = vmatmul.mubr.bf16.gmra.mrb[0].mxu0 %v893
        %v2887 = vpop.f32.mrb[0].mxu0
        %v2888 = vadd.f32 0.0, %v2887
        %v2889 = vpop.f32.mrb[0].mxu0
        %v2890 = vadd.f32 0.0, %v2889
        %v2891 = vpop.f32.mrb[0].mxu0
        %v2892 = vadd.f32 0.0, %v2891
        %v2893 = vpop.f32.mrb[0].mxu0
        %v2894 = vadd.f32 0.0, %v2893
        %2895 = vmatprep.mubr.bf16.mxu0 0
        %2896 = vmatmul.mubr.bf16.gmra.mrb[0].mxu0 %v896
        %v2897 = vpop.f32.mrb[0].mxu0
        %v2898 = vadd.f32 0.0, %v2897
        %v2899 = vpop.f32.mrb[0].mxu0
        %v2900 = vadd.f32 0.0, %v2899
        %v2901 = vpop.f32.mrb[0].mxu0
        %v2902 = vadd.f32 0.0, %v2901
        %v2903 = vpop.f32.mrb[0].mxu0
        %v2904 = vadd.f32 0.0, %v2903
        %2905 = vmatprep.mubr.bf16.mxu0 0
        %2906 = vmatmul.mubr.bf16.gmra.mrb[0].mxu0 %v899
        %v2907 = vpop.f32.mrb[0].mxu0
        %v2908 = vadd.f32 0.0, %v2907
        %v2909 = vpop.f32.mrb[0].mxu0
        %v2910 = vadd.f32 0.0, %v2909
        %v2911 = vpop.f32.mrb[0].mxu0
        %v2912 = vadd.f32 0.0, %v2911
        %v2913 = vpop.f32.mrb[0].mxu0
        %v2914 = vadd.f32 0.0, %v2913
        %2915 = vmatprep.mubr.bf16.mxu0 0
        %2916 = vmatmul.mubr.bf16.gmra.mrb[0].mxu0 %v902
        %v2917 = vpop.f32.mrb[0].mxu0
        %v2918 = vadd.f32 0.0, %v2917
        %v2919 = vpop.f32.mrb[0].mxu0
        %v2920 = vadd.f32 0.0, %v2919
        %v2921 = vpop.f32.mrb[0].mxu0
        %v2922 = vadd.f32 0.0, %v2921
        %v2923 = vpop.f32.mrb[0].mxu0
        %v2924 = vadd.f32 0.0, %v2923
        %2925 = vmatprep.mubr.bf16.mxu0 0
        %2926 = vmatmul.mubr.bf16.gmra.mrb[0].mxu0 %v905
        %v2927 = vpop.f32.mrb[0].mxu0
        %v2928 = vadd.f32 0.0, %v2927
        %v2929 = vpop.f32.mrb[0].mxu0
        %v2930 = vadd.f32 0.0, %v2929
        %v2931 = vpop.f32.mrb[0].mxu0
        %v2932 = vadd.f32 0.0, %v2931
        %v2933 = vpop.f32.mrb[0].mxu0
        %v2934 = vadd.f32 0.0, %v2933
        %2935 = vmatprep.mubr.bf16.mxu0 0
        %2936 = vmatmul.mubr.bf16.gmra.mrb[0].mxu0 %v908
        %v2937 = vpop.f32.mrb[0].mxu0
        %v2938 = vadd.f32 0.0, %v2937
        %v2939 = vpop.f32.mrb[0].mxu0
        %v2940 = vadd.f32 0.0, %v2939
        %v2941 = vpop.f32.mrb[0].mxu0
        %v2942 = vadd.f32 0.0, %v2941
        %v2943 = vpop.f32.mrb[0].mxu0
        %v2944 = vadd.f32 0.0, %v2943
        %2945 = vmatprep.mubr.bf16.mxu0 0
        %2946 = vmatmul.mubr.bf16.gmra.mrb[0].mxu0 %v911
        %v2947 = vpop.f32.mrb[0].mxu0
        %v2948 = vadd.f32 0.0, %v2947
        %v2949 = vpop.f32.mrb[0].mxu0
        %v2950 = vadd.f32 0.0, %v2949
        %v2951 = vpop.f32.mrb[0].mxu0
        %v2952 = vadd.f32 0.0, %v2951
        %v2953 = vpop.f32.mrb[0].mxu0
        %v2954 = vadd.f32 0.0, %v2953
        %2955 = vmatprep.mubr.bf16.mxu0 0
        %2956 = vmatmul.mubr.bf16.gmra.mrb[0].mxu0 %v914
        %v2957 = vpop.f32.mrb[0].mxu0
        %v2958 = vadd.f32 0.0, %v2957
        %v2959 = vpop.f32.mrb[0].mxu0
        %v2960 = vadd.f32 0.0, %v2959
        %v2961 = vpop.f32.mrb[0].mxu0
        %v2962 = vadd.f32 0.0, %v2961
        %v2963 = vpop.f32.mrb[0].mxu0
        %v2964 = vadd.f32 0.0, %v2963
        %2965 = vmatprep.mubr.bf16.mxu0 0
        %2966 = vmatmul.mubr.bf16.gmra.mrb[0].mxu0 %v1679
        %v2967 = vpop.f32.mrb[0].mxu0
        %v2968 = vadd.f32 0.0, %v2967
        %v2969 = vpop.f32.mrb[0].mxu0
        %v2970 = vadd.f32 0.0, %v2969
        %v2971 = vpop.f32.mrb[0].mxu0
        %v2972 = vadd.f32 0.0, %v2971
        %v2973 = vpop.f32.mrb[0].mxu0
        %v2974 = vadd.f32 0.0, %v2973
        %2975 = vmatprep.mubr.bf16.mxu0 0
        %2976 = vmatmul.mubr.bf16.gmra.mrb[0].mxu0 %v2180
        %v2977 = vpop.f32.mrb[0].mxu0
        %v2978 = vadd.f32 0.0, %v2977
        %v2979 = vpop.f32.mrb[0].mxu0
        %v2980 = vadd.f32 0.0, %v2979
        %v2981 = vpop.f32.mrb[0].mxu0
        %v2982 = vadd.f32 0.0, %v2981
        %v2983 = vpop.f32.mrb[0].mxu0
        %v2984 = vadd.f32 0.0, %v2983
        %2985 = vmatprep.mubr.bf16.mxu0 0
        %2986 = vmatmul.mubr.bf16.gmra.mrb[0].mxu0 %v2681
        %v2987 = vpop.f32.mrb[0].mxu0
        %v2988 = vadd.f32 0.0, %v2987
        %v2989 = vpop.f32.mrb[0].mxu0
        %v2990 = vadd.f32 0.0, %v2989
        %v2991 = vpop.f32.mrb[0].mxu0
        %v2992 = vadd.f32 0.0, %v2991
        %v2993 = vpop.f32.mrb[0].mxu0
        %v2994 = vadd.f32 0.0, %v2993
        %2995 = vdwg.mxu0
        %v2996 = vadd.f32 %v2495, %v2718
        %v2997 = vadd.f32 %v2496, %v2720
        %v2998 = vadd.f32 %v2497, %v2722
        %v2999 = vadd.f32 %v2498, %v2724
        %v3000 = vadd.f32 %v2499, %v2728
        %v3001 = vadd.f32 %v2500, %v2730
        %v3002 = vadd.f32 %v2501, %v2732
        %v3003 = vadd.f32 %v2502, %v2734
        %v3004 = vadd.f32 %v2503, %v2738
        %v3005 = vadd.f32 %v2504, %v2740
        %v3006 = vadd.f32 %v2505, %v2742
        %v3007 = vadd.f32 %v2506, %v2744
        %v3008 = vadd.f32 %v2507, %v2748
        %v3009 = vadd.f32 %v2508, %v2750
        %v3010 = vadd.f32 %v2509, %v2752
        %v3011 = vadd.f32 %v2510, %v2754
        %v3012 = vadd.f32 %v2511, %v2758
        %v3013 = vadd.f32 %v2512, %v2760
        %v3014 = vadd.f32 %v2513, %v2762
        %v3015 = vadd.f32 %v2514, %v2764
        %v3016 = vadd.f32 %v2515, %v2768
        %v3017 = vadd.f32 %v2516, %v2770
        %v3018 = vadd.f32 %v2517, %v2772
        %v3019 = vadd.f32 %v2518, %v2774
        %v3020 = vadd.f32 %v2519, %v2778
        %v3021 = vadd.f32 %v2520, %v2780
        %v3022 = vadd.f32 %v2521, %v2782
        %v3023 = vadd.f32 %v2522, %v2784
        %v3024 = vadd.f32 %v2523, %v2788
        %v3025 = vadd.f32 %v2524, %v2790
        %v3026 = vadd.f32 %v2525, %v2792
        %v3027 = vadd.f32 %v2526, %v2794
        %v3028 = vadd.f32 %v2527, %v2798
        %v3029 = vadd.f32 %v2528, %v2800
        %v3030 = vadd.f32 %v2529, %v2802
        %v3031 = vadd.f32 %v2530, %v2804
        %v3032 = vadd.f32 %v2531, %v2808
        %v3033 = vadd.f32 %v2532, %v2810
        %v3034 = vadd.f32 %v2533, %v2812
        %v3035 = vadd.f32 %v2534, %v2814
        %v3036 = vadd.f32 %v2535, %v2818
        %v3037 = vadd.f32 %v2536, %v2820
        %v3038 = vadd.f32 %v2537, %v2822
        %v3039 = vadd.f32 %v2538, %v2824
        %v3040 = vadd.f32 %v2539, %v2828
        %v3041 = vadd.f32 %v2540, %v2830
        %v3042 = vadd.f32 %v2541, %v2832
        %v3043 = vadd.f32 %v2542, %v2834
        %v3044 = vadd.f32 %v2543, %v2838
        %v3045 = vadd.f32 %v2544, %v2840
        %v3046 = vadd.f32 %v2545, %v2842
        %v3047 = vadd.f32 %v2546, %v2844
        %v3048 = vadd.f32 %v2547, %v2848
        %v3049 = vadd.f32 %v2548, %v2850
        %v3050 = vadd.f32 %v2549, %v2852
        %v3051 = vadd.f32 %v2550, %v2854
        %v3052 = vadd.f32 %v2551, %v2858
        %v3053 = vadd.f32 %v2552, %v2860
        %v3054 = vadd.f32 %v2553, %v2862
        %v3055 = vadd.f32 %v2554, %v2864
        %v3056 = vadd.f32 %v2555, %v2868
        %v3057 = vadd.f32 %v2556, %v2870
        %v3058 = vadd.f32 %v2557, %v2872
        %v3059 = vadd.f32 %v2558, %v2874
        %v3060 = vadd.f32 %v2559, %v2878
        %v3061 = vadd.f32 %v2560, %v2880
        %v3062 = vadd.f32 %v2561, %v2882
        %v3063 = vadd.f32 %v2562, %v2884
        %v3064 = vadd.f32 %v2563, %v2888
        %v3065 = vadd.f32 %v2564, %v2890
        %v3066 = vadd.f32 %v2565, %v2892
        %v3067 = vadd.f32 %v2566, %v2894
        %v3068 = vadd.f32 %v2567, %v2898
        %v3069 = vadd.f32 %v2568, %v2900
        %v3070 = vadd.f32 %v2569, %v2902
        %v3071 = vadd.f32 %v2570, %v2904
        %v3072 = vadd.f32 %v2571, %v2908
        %v3073 = vadd.f32 %v2572, %v2910
        %v3074 = vadd.f32 %v2573, %v2912
        %v3075 = vadd.f32 %v2574, %v2914
        %v3076 = vadd.f32 %v2575, %v2918
        %v3077 = vadd.f32 %v2576, %v2920
        %v3078 = vadd.f32 %v2577, %v2922
        %v3079 = vadd.f32 %v2578, %v2924
        %v3080 = vadd.f32 %v2579, %v2928
        %v3081 = vadd.f32 %v2580, %v2930
        %v3082 = vadd.f32 %v2581, %v2932
        %v3083 = vadd.f32 %v2582, %v2934
        %v3084 = vadd.f32 %v2583, %v2938
        %v3085 = vadd.f32 %v2584, %v2940
        %v3086 = vadd.f32 %v2585, %v2942
        %v3087 = vadd.f32 %v2586, %v2944
        %v3088 = vadd.f32 %v2587, %v2948
        %v3089 = vadd.f32 %v2588, %v2950
        %v3090 = vadd.f32 %v2589, %v2952
        %v3091 = vadd.f32 %v2590, %v2954
        %v3092 = vadd.f32 %v2591, %v2958
        %v3093 = vadd.f32 %v2592, %v2960
        %v3094 = vadd.f32 %v2593, %v2962
        %v3095 = vadd.f32 %v2594, %v2964
        %v3096 = vadd.f32 %v2595, %v2968
        %v3097 = vadd.f32 %v2596, %v2970
        %v3098 = vadd.f32 %v2597, %v2972
        %v3099 = vadd.f32 %v2598, %v2974
        %v3100 = vadd.f32 %v2599, %v2978
        %v3101 = vadd.f32 %v2600, %v2980
        %v3102 = vadd.f32 %v2601, %v2982
        %v3103 = vadd.f32 %v2602, %v2984
        %v3104 = vadd.f32 %v2603, %v2988
        %v3105 = vadd.f32 %v2604, %v2990
        %v3106 = vadd.f32 %v2605, %v2992
        %v3107 = vadd.f32 %v2606, %v2994
        %v3108 = vld [vmem:[%s2] sm:$0x3]
        %v3110 = vlaneseq
        %v3111 = vshrl.u32 %v3110, 7
        %v3112 = vsub.s32 0, %v3111
        %v3113 = vrot.slane %v3108, %v3112
        %v3114 = vlaneseq
        %v3115 = vshrl.u32 %v3114, 7
        %v3116 = vsub.s32 1, %v3115
        %v3117 = vrot.slane %v3108, %v3116
        %v3120 = vadd.f32 %v2996, %v3113
        %v3121 = vadd.f32 %v2997, %v3117
        %v3122 = vadd.f32 %v2998, %v3113
        %v3123 = vadd.f32 %v2999, %v3117
        %v3124 = vadd.f32 %v3000, %v3113
        %v3125 = vadd.f32 %v3001, %v3117
        %v3126 = vadd.f32 %v3002, %v3113
        %v3127 = vadd.f32 %v3003, %v3117
        %v3128 = vadd.f32 %v3004, %v3113
        %v3129 = vadd.f32 %v3005, %v3117
        %v3130 = vadd.f32 %v3006, %v3113
        %v3131 = vadd.f32 %v3007, %v3117
        %v3132 = vadd.f32 %v3008, %v3113
        %v3133 = vadd.f32 %v3009, %v3117
        %v3134 = vadd.f32 %v3010, %v3113
        %v3135 = vadd.f32 %v3011, %v3117
        %v3136 = vadd.f32 %v3012, %v3113
        %v3137 = vadd.f32 %v3013, %v3117
        %v3138 = vadd.f32 %v3014, %v3113
        %v3139 = vadd.f32 %v3015, %v3117
        %v3140 = vadd.f32 %v3016, %v3113
        %v3141 = vadd.f32 %v3017, %v3117
        %v3142 = vadd.f32 %v3018, %v3113
        %v3143 = vadd.f32 %v3019, %v3117
        %v3144 = vadd.f32 %v3020, %v3113
        %v3145 = vadd.f32 %v3021, %v3117
        %v3146 = vadd.f32 %v3022, %v3113
        %v3147 = vadd.f32 %v3023, %v3117
        %v3148 = vadd.f32 %v3024, %v3113
        %v3149 = vadd.f32 %v3025, %v3117
        %v3150 = vadd.f32 %v3026, %v3113
        %v3151 = vadd.f32 %v3027, %v3117
        %v3152 = vadd.f32 %v3028, %v3113
        %v3153 = vadd.f32 %v3029, %v3117
        %v3154 = vadd.f32 %v3030, %v3113
        %v3155 = vadd.f32 %v3031, %v3117
        %v3156 = vadd.f32 %v3032, %v3113
        %v3157 = vadd.f32 %v3033, %v3117
        %v3158 = vadd.f32 %v3034, %v3113
        %v3159 = vadd.f32 %v3035, %v3117
        %v3160 = vadd.f32 %v3036, %v3113
        %v3161 = vadd.f32 %v3037, %v3117
        %v3162 = vadd.f32 %v3038, %v3113
        %v3163 = vadd.f32 %v3039, %v3117
        %v3164 = vadd.f32 %v3040, %v3113
        %v3165 = vadd.f32 %v3041, %v3117
        %v3166 = vadd.f32 %v3042, %v3113
        %v3167 = vadd.f32 %v3043, %v3117
        %v3168 = vadd.f32 %v3044, %v3113
        %v3169 = vadd.f32 %v3045, %v3117
        %v3170 = vadd.f32 %v3046, %v3113
        %v3171 = vadd.f32 %v3047, %v3117
        %v3172 = vadd.f32 %v3048, %v3113
        %v3173 = vadd.f32 %v3049, %v3117
        %v3174 = vadd.f32 %v3050, %v3113
        %v3175 = vadd.f32 %v3051, %v3117
        %v3176 = vadd.f32 %v3052, %v3113
        %v3177 = vadd.f32 %v3053, %v3117
        %v3178 = vadd.f32 %v3054, %v3113
        %v3179 = vadd.f32 %v3055, %v3117
        %v3180 = vadd.f32 %v3056, %v3113
        %v3181 = vadd.f32 %v3057, %v3117
        %v3182 = vadd.f32 %v3058, %v3113
        %v3183 = vadd.f32 %v3059, %v3117
        %v3184 = vadd.f32 %v3060, %v3113
        %v3185 = vadd.f32 %v3061, %v3117
        %v3186 = vadd.f32 %v3062, %v3113
        %v3187 = vadd.f32 %v3063, %v3117
        %v3188 = vadd.f32 %v3064, %v3113
        %v3189 = vadd.f32 %v3065, %v3117
        %v3190 = vadd.f32 %v3066, %v3113
        %v3191 = vadd.f32 %v3067, %v3117
        %v3192 = vadd.f32 %v3068, %v3113
        %v3193 = vadd.f32 %v3069, %v3117
        %v3194 = vadd.f32 %v3070, %v3113
        %v3195 = vadd.f32 %v3071, %v3117
        %v3196 = vadd.f32 %v3072, %v3113
        %v3197 = vadd.f32 %v3073, %v3117
        %v3198 = vadd.f32 %v3074, %v3113
        %v3199 = vadd.f32 %v3075, %v3117
        %v3200 = vadd.f32 %v3076, %v3113
        %v3201 = vadd.f32 %v3077, %v3117
        %v3202 = vadd.f32 %v3078, %v3113
        %v3203 = vadd.f32 %v3079, %v3117
        %v3204 = vadd.f32 %v3080, %v3113
        %v3205 = vadd.f32 %v3081, %v3117
        %v3206 = vadd.f32 %v3082, %v3113
        %v3207 = vadd.f32 %v3083, %v3117
        %v3208 = vadd.f32 %v3084, %v3113
        %v3209 = vadd.f32 %v3085, %v3117
        %v3210 = vadd.f32 %v3086, %v3113
        %v3211 = vadd.f32 %v3087, %v3117
        %v3212 = vadd.f32 %v3088, %v3113
        %v3213 = vadd.f32 %v3089, %v3117
        %v3214 = vadd.f32 %v3090, %v3113
        %v3215 = vadd.f32 %v3091, %v3117
        %v3216 = vadd.f32 %v3092, %v3113
        %v3217 = vadd.f32 %v3093, %v3117
        %v3218 = vadd.f32 %v3094, %v3113
        %v3219 = vadd.f32 %v3095, %v3117
        %v3220 = vadd.f32 %v3096, %v3113
        %v3221 = vadd.f32 %v3097, %v3117
        %v3222 = vadd.f32 %v3098, %v3113
        %v3223 = vadd.f32 %v3099, %v3117
        %v3224 = vadd.f32 %v3100, %v3113
        %v3225 = vadd.f32 %v3101, %v3117
        %v3226 = vadd.f32 %v3102, %v3113
        %v3227 = vadd.f32 %v3103, %v3117
        %v3228 = vadd.f32 %v3104, %v3113
        %v3229 = vadd.f32 %v3105, %v3117
        %v3230 = vadd.f32 %v3106, %v3113
        %v3231 = vadd.f32 %v3107, %v3117
        %v3232 = vmax.f32 %v3120, 0.0
        %v3233 = vmax.f32 %v3121, 0.0
        %v3234 = vmax.f32 %v3122, 0.0
        %v3235 = vmax.f32 %v3123, 0.0
        %v3236 = vmax.f32 %v3124, 0.0
        %v3237 = vmax.f32 %v3125, 0.0
        %v3238 = vmax.f32 %v3126, 0.0
        %v3239 = vmax.f32 %v3127, 0.0
        %v3240 = vmax.f32 %v3128, 0.0
        %v3241 = vmax.f32 %v3129, 0.0
        %v3242 = vmax.f32 %v3130, 0.0
        %v3243 = vmax.f32 %v3131, 0.0
        %v3244 = vmax.f32 %v3132, 0.0
        %v3245 = vmax.f32 %v3133, 0.0
        %v3246 = vmax.f32 %v3134, 0.0
        %v3247 = vmax.f32 %v3135, 0.0
        %v3248 = vmax.f32 %v3136, 0.0
        %v3249 = vmax.f32 %v3137, 0.0
        %v3250 = vmax.f32 %v3138, 0.0
        %v3251 = vmax.f32 %v3139, 0.0
        %v3252 = vmax.f32 %v3140, 0.0
        %v3253 = vmax.f32 %v3141, 0.0
        %v3254 = vmax.f32 %v3142, 0.0
        %v3255 = vmax.f32 %v3143, 0.0
        %v3256 = vmax.f32 %v3144, 0.0
        %v3257 = vmax.f32 %v3145, 0.0
        %v3258 = vmax.f32 %v3146, 0.0
        %v3259 = vmax.f32 %v3147, 0.0
        %v3260 = vmax.f32 %v3148, 0.0
        %v3261 = vmax.f32 %v3149, 0.0
        %v3262 = vmax.f32 %v3150, 0.0
        %v3263 = vmax.f32 %v3151, 0.0
        %v3264 = vmax.f32 %v3152, 0.0
        %v3265 = vmax.f32 %v3153, 0.0
        %v3266 = vmax.f32 %v3154, 0.0
        %v3267 = vmax.f32 %v3155, 0.0
        %v3268 = vmax.f32 %v3156, 0.0
        %v3269 = vmax.f32 %v3157, 0.0
        %v3270 = vmax.f32 %v3158, 0.0
        %v3271 = vmax.f32 %v3159, 0.0
        %v3272 = vmax.f32 %v3160, 0.0
        %v3273 = vmax.f32 %v3161, 0.0
        %v3274 = vmax.f32 %v3162, 0.0
        %v3275 = vmax.f32 %v3163, 0.0
        %v3276 = vmax.f32 %v3164, 0.0
        %v3277 = vmax.f32 %v3165, 0.0
        %v3278 = vmax.f32 %v3166, 0.0
        %v3279 = vmax.f32 %v3167, 0.0
        %v3280 = vmax.f32 %v3168, 0.0
        %v3281 = vmax.f32 %v3169, 0.0
        %v3282 = vmax.f32 %v3170, 0.0
        %v3283 = vmax.f32 %v3171, 0.0
        %v3284 = vmax.f32 %v3172, 0.0
        %v3285 = vmax.f32 %v3173, 0.0
        %v3286 = vmax.f32 %v3174, 0.0
        %v3287 = vmax.f32 %v3175, 0.0
        %v3288 = vmax.f32 %v3176, 0.0
        %v3289 = vmax.f32 %v3177, 0.0
        %v3290 = vmax.f32 %v3178, 0.0
        %v3291 = vmax.f32 %v3179, 0.0
        %v3292 = vmax.f32 %v3180, 0.0
        %v3293 = vmax.f32 %v3181, 0.0
        %v3294 = vmax.f32 %v3182, 0.0
        %v3295 = vmax.f32 %v3183, 0.0
        %v3296 = vmax.f32 %v3184, 0.0
        %v3297 = vmax.f32 %v3185, 0.0
        %v3298 = vmax.f32 %v3186, 0.0
        %v3299 = vmax.f32 %v3187, 0.0
        %v3300 = vmax.f32 %v3188, 0.0
        %v3301 = vmax.f32 %v3189, 0.0
        %v3302 = vmax.f32 %v3190, 0.0
        %v3303 = vmax.f32 %v3191, 0.0
        %v3304 = vmax.f32 %v3192, 0.0
        %v3305 = vmax.f32 %v3193, 0.0
        %v3306 = vmax.f32 %v3194, 0.0
        %v3307 = vmax.f32 %v3195, 0.0
        %v3308 = vmax.f32 %v3196, 0.0
        %v3309 = vmax.f32 %v3197, 0.0
        %v3310 = vmax.f32 %v3198, 0.0
        %v3311 = vmax.f32 %v3199, 0.0
        %v3312 = vmax.f32 %v3200, 0.0
        %v3313 = vmax.f32 %v3201, 0.0
        %v3314 = vmax.f32 %v3202, 0.0
        %v3315 = vmax.f32 %v3203, 0.0
        %v3316 = vmax.f32 %v3204, 0.0
        %v3317 = vmax.f32 %v3205, 0.0
        %v3318 = vmax.f32 %v3206, 0.0
        %v3319 = vmax.f32 %v3207, 0.0
        %v3320 = vmax.f32 %v3208, 0.0
        %v3321 = vmax.f32 %v3209, 0.0
        %v3322 = vmax.f32 %v3210, 0.0
        %v3323 = vmax.f32 %v3211, 0.0
        %v3324 = vmax.f32 %v3212, 0.0
        %v3325 = vmax.f32 %v3213, 0.0
        %v3326 = vmax.f32 %v3214, 0.0
        %v3327 = vmax.f32 %v3215, 0.0
        %v3328 = vmax.f32 %v3216, 0.0
        %v3329 = vmax.f32 %v3217, 0.0
        %v3330 = vmax.f32 %v3218, 0.0
        %v3331 = vmax.f32 %v3219, 0.0
        %v3332 = vmax.f32 %v3220, 0.0
        %v3333 = vmax.f32 %v3221, 0.0
        %v3334 = vmax.f32 %v3222, 0.0
        %v3335 = vmax.f32 %v3223, 0.0
        %v3336 = vmax.f32 %v3224, 0.0
        %v3337 = vmax.f32 %v3225, 0.0
        %v3338 = vmax.f32 %v3226, 0.0
        %v3339 = vmax.f32 %v3227, 0.0
        %v3340 = vmax.f32 %v3228, 0.0
        %v3341 = vmax.f32 %v3229, 0.0
        %v3342 = vmax.f32 %v3230, 0.0
        %v3343 = vmax.f32 %v3231, 0.0
        %v3344 = vpack.c.bf16 %v3234, %v3232
        %v3345 = vpack.c.bf16 %v3235, %v3233
        %v3346 = vpack.c.bf16 %v3238, %v3236
        %v3347 = vpack.c.bf16 %v3239, %v3237
        %v3348 = vpack.c.bf16 %v3242, %v3240
        %v3349 = vpack.c.bf16 %v3243, %v3241
        %v3350 = vpack.c.bf16 %v3246, %v3244
        %v3351 = vpack.c.bf16 %v3247, %v3245
        %v3352 = vpack.c.bf16 %v3250, %v3248
        %v3353 = vpack.c.bf16 %v3251, %v3249
        %v3354 = vpack.c.bf16 %v3254, %v3252
        %v3355 = vpack.c.bf16 %v3255, %v3253
        %v3356 = vpack.c.bf16 %v3258, %v3256
        %v3357 = vpack.c.bf16 %v3259, %v3257
        %v3358 = vpack.c.bf16 %v3262, %v3260
        %v3359 = vpack.c.bf16 %v3263, %v3261
        %v3360 = vpack.c.bf16 %v3266, %v3264
        %v3361 = vpack.c.bf16 %v3267, %v3265
        %v3362 = vpack.c.bf16 %v3270, %v3268
        %v3363 = vpack.c.bf16 %v3271, %v3269
        %v3364 = vpack.c.bf16 %v3274, %v3272
        %v3365 = vpack.c.bf16 %v3275, %v3273
        %v3366 = vpack.c.bf16 %v3278, %v3276
        %v3367 = vpack.c.bf16 %v3279, %v3277
        %v3368 = vpack.c.bf16 %v3282, %v3280
        %v3369 = vpack.c.bf16 %v3283, %v3281
        %v3370 = vpack.c.bf16 %v3286, %v3284
        %v3371 = vpack.c.bf16 %v3287, %v3285
        %v3372 = vpack.c.bf16 %v3290, %v3288
        %v3373 = vpack.c.bf16 %v3291, %v3289
        %v3374 = vpack.c.bf16 %v3294, %v3292
        %v3375 = vpack.c.bf16 %v3295, %v3293
        %v3376 = vpack.c.bf16 %v3298, %v3296
        %v3377 = vpack.c.bf16 %v3299, %v3297
        %v3378 = vpack.c.bf16 %v3302, %v3300
        %v3379 = vpack.c.bf16 %v3303, %v3301
        %v3380 = vpack.c.bf16 %v3306, %v3304
        %v3381 = vpack.c.bf16 %v3307, %v3305
        %v3382 = vpack.c.bf16 %v3310, %v3308
        %v3383 = vpack.c.bf16 %v3311, %v3309
        %v3384 = vpack.c.bf16 %v3314, %v3312
        %v3385 = vpack.c.bf16 %v3315, %v3313
        %v3386 = vpack.c.bf16 %v3318, %v3316
        %v3387 = vpack.c.bf16 %v3319, %v3317
        %v3388 = vpack.c.bf16 %v3322, %v3320
        %v3389 = vpack.c.bf16 %v3323, %v3321
        %v3390 = vpack.c.bf16 %v3326, %v3324
        %v3391 = vpack.c.bf16 %v3327, %v3325
        %v3392 = vpack.c.bf16 %v3330, %v3328
        %v3393 = vpack.c.bf16 %v3331, %v3329
        %v3394 = vpack.c.bf16 %v3334, %v3332
        %v3395 = vpack.c.bf16 %v3335, %v3333
        %v3396 = vpack.c.bf16 %v3338, %v3336
        %v3397 = vpack.c.bf16 %v3339, %v3337
        %v3398 = vpack.c.bf16 %v3342, %v3340
        %v3399 = vpack.c.bf16 %v3343, %v3341
        %v3400 = vld [vmem:[%s3] sm:$0xf]
        %v3401 = vld [vmem:[%s3 + $0x4] sm:$0xf]
        %v3402 = vld [vmem:[%s3 + $0x8] sm:$0xf]
        %v3403 = vld [vmem:[%s3 + $0xc] sm:$0xf]
        %v3404 = vld [vmem:[%s3 + $0x10] sm:$0xf]
        %v3405 = vld [vmem:[%s3 + $0x14] sm:$0xf]
        %v3406 = vld [vmem:[%s3 + $0x18] sm:$0xf]
        %v3407 = vld [vmem:[%s3 + $0x1c] sm:$0xf]
        %v3408 = vld [vmem:[%s3 + $0x20] sm:$0xf]
        %v3409 = vld [vmem:[%s3 + $0x24] sm:$0xf]
        %v3410 = vld [vmem:[%s3 + $0x28] sm:$0xf]
        %v3411 = vld [vmem:[%s3 + $0x2c] sm:$0xf]
        %v3412 = vld [vmem:[%s3 + $0x30] sm:$0xf]
        %v3413 = vld [vmem:[%s3 + $0x34] sm:$0xf]
        %v3414 = vld [vmem:[%s3 + $0x38] sm:$0xf]
        %v3415 = vld [vmem:[%s3 + $0x3c] sm:$0xf]
        %v3416 = vld [vmem:[%s3 + $0x40] sm:$0xf]
        %v3417 = vld [vmem:[%s3 + $0x44] sm:$0xf]
        %v3418 = vld [vmem:[%s3 + $0x48] sm:$0xf]
        %v3419 = vld [vmem:[%s3 + $0x4c] sm:$0xf]
        %v3420 = vld [vmem:[%s3 + $0x50] sm:$0xf]
        %v3442 = vunpack.c.l.b16 %v3400
        %v3443 = vunpack.c.l.b16 %v3401
        %v3444 = vunpack.c.l.b16 %v3402
        %v3445 = vunpack.c.l.b16 %v3403
        %v3446 = vunpack.c.l.b16 %v3404
        %v3447 = vunpack.c.l.b16 %v3405
        %v3448 = vunpack.c.l.b16 %v3406
        %v3449 = vunpack.c.l.b16 %v3407
        %v3450 = vunpack.c.l.b16 %v3408
        %v3451 = vunpack.c.l.b16 %v3409
        %v3452 = vunpack.c.l.b16 %v3410
        %v3453 = vunpack.c.l.b16 %v3411
        %v3454 = vunpack.c.l.b16 %v3412
        %v3455 = vunpack.c.l.b16 %v3413
        %v3456 = vunpack.c.l.b16 %v3414
        %v3457 = vunpack.c.l.b16 %v3415
        %v3458 = vunpack.c.l.b16 %v3416
        %v3459 = vunpack.c.l.b16 %v3417
        %v3460 = vunpack.c.l.b16 %v3418
        %v3461 = vunpack.c.l.b16 %v3419
        %v3462 = vunpack.c.l.b16 %v3420
        %v3463 = vpack.c.b16 %v3443, %v3442
        %v3464 = vpack.c.b16 %v3445, %v3444
        %v3465 = vpack.c.b16 %v3447, %v3446
        %v3466 = vpack.c.b16 %v3449, %v3448
        %v3467 = vpack.c.b16 %v3451, %v3450
        %v3468 = vpack.c.b16 %v3453, %v3452
        %v3469 = vpack.c.b16 %v3455, %v3454
        %v3470 = vpack.c.b16 %v3457, %v3456
        %v3471 = vpack.c.b16 %v3459, %v3458
        %v3472 = vpack.c.b16 %v3461, %v3460
        %v3473 = vpack.c.b16 %v3462, %v3462
        %vm3484 = vcmask 326656
        %v3486 = vsel %vm3484, %v3345, 0
        %v3489 = vsel %vm3484, %v3347, 0
        %v3492 = vsel %vm3484, %v3349, 0
        %v3495 = vsel %vm3484, %v3351, 0
        %v3498 = vsel %vm3484, %v3353, 0
        %v3501 = vsel %vm3484, %v3355, 0
        %v3504 = vsel %vm3484, %v3357, 0
        %v3507 = vsel %vm3484, %v3359, 0
        %v3510 = vsel %vm3484, %v3361, 0
        %v3513 = vsel %vm3484, %v3363, 0
        %v3516 = vsel %vm3484, %v3365, 0
        %v3519 = vsel %vm3484, %v3367, 0
        %v3522 = vsel %vm3484, %v3369, 0
        %v3525 = vsel %vm3484, %v3371, 0
        %v3528 = vsel %vm3484, %v3373, 0
        %v3531 = vsel %vm3484, %v3375, 0
        %v3534 = vsel %vm3484, %v3377, 0
        %v3537 = vsel %vm3484, %v3379, 0
        %v3540 = vsel %vm3484, %v3381, 0
        %v3543 = vsel %vm3484, %v3383, 0
        %v3546 = vsel %vm3484, %v3385, 0
        %v3549 = vsel %vm3484, %v3387, 0
        %v3552 = vsel %vm3484, %v3389, 0
        %v3555 = vsel %vm3484, %v3391, 0
        %v3558 = vsel %vm3484, %v3393, 0
        %v3561 = vsel %vm3484, %v3395, 0
        %v3564 = vsel %vm3484, %v3397, 0
        %v3567 = vsel %vm3484, %v3399, 0
        %vm3569 = vcmask 1043456
        %v3571 = vsel %vm3569, %v3473, 0
        %3573 = vmatprep.subr.bf16.mxu0 0
        %3574 = vmatpush1.bf16.msra.mxu0 %v3463
        %3575 = vmatprep.subr.bf16.mxu0 0
        %3576 = vmatpush1.bf16.msra.mxu0 %v3464
        %3577 = vmatprep.subr.bf16.mxu0 0
        %3578 = vmatpush1.bf16.msra.mxu0 %v3465
        %3579 = vmatprep.subr.bf16.mxu0 0
        %3580 = vmatpush1.bf16.msra.mxu0 %v3466
        %3581 = vmatprep.subr.bf16.mxu0 0
        %3582 = vmatpush1.bf16.msra.mxu0 %v3467
        %3583 = vmatprep.subr.bf16.mxu0 0
        %3584 = vmatpush1.bf16.msra.mxu0 %v3468
        %3585 = vmatprep.subr.bf16.mxu0 0
        %3586 = vmatpush1.bf16.msra.mxu0 %v3469
        %3587 = vmatprep.subr.bf16.mxu0 0
        %3588 = vmatpush1.bf16.msra.mxu0 %v3470
        %3589 = vmatprep.subr.bf16.mxu0 0
        %3590 = vmatpush1.bf16.msra.mxu0 %v3471
        %3591 = vmatprep.subr.bf16.mxu0 0
        %3592 = vmatpush1.bf16.msra.mxu0 %v3472
        %3593 = vmatprep.subr.bf16.mxu0 0
        %3594 = vmatpush1.bf16.msra.mxu0 %v3571
        %3595 = vmatprep.subr.bf16.mxu0 0
        %3596 = vmatpush1.bf16.msra.mxu0 0
        %3597 = vmatprep.subr.bf16.mxu0 0
        %3598 = vmatpush1.bf16.msra.mxu0 0
        %3599 = vmatprep.subr.bf16.mxu0 0
        %3600 = vmatpush1.bf16.msra.mxu0 0
        %3601 = vmatprep.subr.bf16.mxu0 0
        %3602 = vmatpush1.bf16.msra.mxu0 0
        %3603 = vmatprep.subr.bf16.mxu0 0
        %3604 = vmatpush1.bf16.msra.mxu0 0
        %3605 = vmatprep.mubr.bf16.mxu0 %v3486
        %3606 = vmatmul.mubr.bf16.gmra.mrb[0].mxu0 %v3344
        %v3607 = vpop.f32.mrb[0].mxu0
        %v3608 = vadd.f32 0.0, %v3607
        %v3609 = vpop.f32.mrb[0].mxu0
        %v3610 = vpop.f32.mrb[0].mxu0
        %v3611 = vadd.f32 0.0, %v3610
        %v3612 = vpop.f32.mrb[0].mxu0
        %3613 = vmatprep.mubr.bf16.mxu0 %v3489
        %3614 = vmatmul.mubr.bf16.gmra.mrb[0].mxu0 %v3346
        %v3615 = vpop.f32.mrb[0].mxu0
        %v3616 = vadd.f32 0.0, %v3615
        %v3617 = vpop.f32.mrb[0].mxu0
        %v3618 = vpop.f32.mrb[0].mxu0
        %v3619 = vadd.f32 0.0, %v3618
        %v3620 = vpop.f32.mrb[0].mxu0
        %3621 = vmatprep.mubr.bf16.mxu0 %v3492
        %3622 = vmatmul.mubr.bf16.gmra.mrb[0].mxu0 %v3348
        %v3623 = vpop.f32.mrb[0].mxu0
        %v3624 = vadd.f32 0.0, %v3623
        %v3625 = vpop.f32.mrb[0].mxu0
        %v3626 = vpop.f32.mrb[0].mxu0
        %v3627 = vadd.f32 0.0, %v3626
        %v3628 = vpop.f32.mrb[0].mxu0
        %3629 = vmatprep.mubr.bf16.mxu0 %v3495
        %3630 = vmatmul.mubr.bf16.gmra.mrb[0].mxu0 %v3350
        %v3631 = vpop.f32.mrb[0].mxu0
        %v3632 = vadd.f32 0.0, %v3631
        %v3633 = vpop.f32.mrb[0].mxu0
        %v3634 = vpop.f32.mrb[0].mxu0
        %v3635 = vadd.f32 0.0, %v3634
        %v3636 = vpop.f32.mrb[0].mxu0
        %3637 = vmatprep.mubr.bf16.mxu0 %v3498
        %3638 = vmatmul.mubr.bf16.gmra.mrb[0].mxu0 %v3352
        %v3639 = vpop.f32.mrb[0].mxu0
        %v3640 = vadd.f32 0.0, %v3639
        %v3641 = vpop.f32.mrb[0].mxu0
        %v3642 = vpop.f32.mrb[0].mxu0
        %v3643 = vadd.f32 0.0, %v3642
        %v3644 = vpop.f32.mrb[0].mxu0
        %3645 = vmatprep.mubr.bf16.mxu0 %v3501
        %3646 = vmatmul.mubr.bf16.gmra.mrb[0].mxu0 %v3354
        %v3647 = vpop.f32.mrb[0].mxu0
        %v3648 = vadd.f32 0.0, %v3647
        %v3649 = vpop.f32.mrb[0].mxu0
        %v3650 = vpop.f32.mrb[0].mxu0
        %v3651 = vadd.f32 0.0, %v3650
        %v3652 = vpop.f32.mrb[0].mxu0
        %3653 = vmatprep.mubr.bf16.mxu0 %v3504
        %3654 = vmatmul.mubr.bf16.gmra.mrb[0].mxu0 %v3356
        %v3655 = vpop.f32.mrb[0].mxu0
        %v3656 = vadd.f32 0.0, %v3655
        %v3657 = vpop.f32.mrb[0].mxu0
        %v3658 = vpop.f32.mrb[0].mxu0
        %v3659 = vadd.f32 0.0, %v3658
        %v3660 = vpop.f32.mrb[0].mxu0
        %3661 = vmatprep.mubr.bf16.mxu0 %v3507
        %3662 = vmatmul.mubr.bf16.gmra.mrb[0].mxu0 %v3358
        %v3663 = vpop.f32.mrb[0].mxu0
        %v3664 = vadd.f32 0.0, %v3663
        %v3665 = vpop.f32.mrb[0].mxu0
        %v3666 = vpop.f32.mrb[0].mxu0
        %v3667 = vadd.f32 0.0, %v3666
        %v3668 = vpop.f32.mrb[0].mxu0
        %3669 = vmatprep.mubr.bf16.mxu0 %v3510
        %3670 = vmatmul.mubr.bf16.gmra.mrb[0].mxu0 %v3360
        %v3671 = vpop.f32.mrb[0].mxu0
        %v3672 = vadd.f32 0.0, %v3671
        %v3673 = vpop.f32.mrb[0].mxu0
        %v3674 = vpop.f32.mrb[0].mxu0
        %v3675 = vadd.f32 0.0, %v3674
        %v3676 = vpop.f32.mrb[0].mxu0
        %3677 = vmatprep.mubr.bf16.mxu0 %v3513
        %3678 = vmatmul.mubr.bf16.gmra.mrb[0].mxu0 %v3362
        %v3679 = vpop.f32.mrb[0].mxu0
        %v3680 = vadd.f32 0.0, %v3679
        %v3681 = vpop.f32.mrb[0].mxu0
        %v3682 = vpop.f32.mrb[0].mxu0
        %v3683 = vadd.f32 0.0, %v3682
        %v3684 = vpop.f32.mrb[0].mxu0
        %3685 = vmatprep.mubr.bf16.mxu0 %v3516
        %3686 = vmatmul.mubr.bf16.gmra.mrb[0].mxu0 %v3364
        %v3687 = vpop.f32.mrb[0].mxu0
        %v3688 = vadd.f32 0.0, %v3687
        %v3689 = vpop.f32.mrb[0].mxu0
        %v3690 = vpop.f32.mrb[0].mxu0
        %v3691 = vadd.f32 0.0, %v3690
        %v3692 = vpop.f32.mrb[0].mxu0
        %3693 = vmatprep.mubr.bf16.mxu0 %v3519
        %3694 = vmatmul.mubr.bf16.gmra.mrb[0].mxu0 %v3366
        %v3695 = vpop.f32.mrb[0].mxu0
        %v3696 = vadd.f32 0.0, %v3695
        %v3697 = vpop.f32.mrb[0].mxu0
        %v3698 = vpop.f32.mrb[0].mxu0
        %v3699 = vadd.f32 0.0, %v3698
        %v3700 = vpop.f32.mrb[0].mxu0
        %3701 = vmatprep.mubr.bf16.mxu0 %v3522
        %3702 = vmatmul.mubr.bf16.gmra.mrb[0].mxu0 %v3368
        %v3703 = vpop.f32.mrb[0].mxu0
        %v3704 = vadd.f32 0.0, %v3703
        %v3705 = vpop.f32.mrb[0].mxu0
        %v3706 = vpop.f32.mrb[0].mxu0
        %v3707 = vadd.f32 0.0, %v3706
        %v3708 = vpop.f32.mrb[0].mxu0
        %3709 = vmatprep.mubr.bf16.mxu0 %v3525
        %3710 = vmatmul.mubr.bf16.gmra.mrb[0].mxu0 %v3370
        %v3711 = vpop.f32.mrb[0].mxu0
        %v3712 = vadd.f32 0.0, %v3711
        %v3713 = vpop.f32.mrb[0].mxu0
        %v3714 = vpop.f32.mrb[0].mxu0
        %v3715 = vadd.f32 0.0, %v3714
        %v3716 = vpop.f32.mrb[0].mxu0
        %3717 = vmatprep.mubr.bf16.mxu0 %v3528
        %3718 = vmatmul.mubr.bf16.gmra.mrb[0].mxu0 %v3372
        %v3719 = vpop.f32.mrb[0].mxu0
        %v3720 = vadd.f32 0.0, %v3719
        %v3721 = vpop.f32.mrb[0].mxu0
        %v3722 = vpop.f32.mrb[0].mxu0
        %v3723 = vadd.f32 0.0, %v3722
        %v3724 = vpop.f32.mrb[0].mxu0
        %3725 = vmatprep.mubr.bf16.mxu0 %v3531
        %3726 = vmatmul.mubr.bf16.gmra.mrb[0].mxu0 %v3374
        %v3727 = vpop.f32.mrb[0].mxu0
        %v3728 = vadd.f32 0.0, %v3727
        %v3729 = vpop.f32.mrb[0].mxu0
        %v3730 = vpop.f32.mrb[0].mxu0
        %v3731 = vadd.f32 0.0, %v3730
        %v3732 = vpop.f32.mrb[0].mxu0
        %3733 = vmatprep.mubr.bf16.mxu0 %v3534
        %3734 = vmatmul.mubr.bf16.gmra.mrb[0].mxu0 %v3376
        %v3735 = vpop.f32.mrb[0].mxu0
        %v3736 = vadd.f32 0.0, %v3735
        %v3737 = vpop.f32.mrb[0].mxu0
        %v3738 = vpop.f32.mrb[0].mxu0
        %v3739 = vadd.f32 0.0, %v3738
        %v3740 = vpop.f32.mrb[0].mxu0
        %3741 = vmatprep.mubr.bf16.mxu0 %v3537
        %3742 = vmatmul.mubr.bf16.gmra.mrb[0].mxu0 %v3378
        %v3743 = vpop.f32.mrb[0].mxu0
        %v3744 = vadd.f32 0.0, %v3743
        %v3745 = vpop.f32.mrb[0].mxu0
        %v3746 = vpop.f32.mrb[0].mxu0
        %v3747 = vadd.f32 0.0, %v3746
        %v3748 = vpop.f32.mrb[0].mxu0
        %3749 = vmatprep.mubr.bf16.mxu0 %v3540
        %3750 = vmatmul.mubr.bf16.gmra.mrb[0].mxu0 %v3380
        %v3751 = vpop.f32.mrb[0].mxu0
        %v3752 = vadd.f32 0.0, %v3751
        %v3753 = vpop.f32.mrb[0].mxu0
        %v3754 = vpop.f32.mrb[0].mxu0
        %v3755 = vadd.f32 0.0, %v3754
        %v3756 = vpop.f32.mrb[0].mxu0
        %3757 = vmatprep.mubr.bf16.mxu0 %v3543
        %3758 = vmatmul.mubr.bf16.gmra.mrb[0].mxu0 %v3382
        %v3759 = vpop.f32.mrb[0].mxu0
        %v3760 = vadd.f32 0.0, %v3759
        %v3761 = vpop.f32.mrb[0].mxu0
        %v3762 = vpop.f32.mrb[0].mxu0
        %v3763 = vadd.f32 0.0, %v3762
        %v3764 = vpop.f32.mrb[0].mxu0
        %3765 = vmatprep.mubr.bf16.mxu0 %v3546
        %3766 = vmatmul.mubr.bf16.gmra.mrb[0].mxu0 %v3384
        %v3767 = vpop.f32.mrb[0].mxu0
        %v3768 = vadd.f32 0.0, %v3767
        %v3769 = vpop.f32.mrb[0].mxu0
        %v3770 = vpop.f32.mrb[0].mxu0
        %v3771 = vadd.f32 0.0, %v3770
        %v3772 = vpop.f32.mrb[0].mxu0
        %3773 = vmatprep.mubr.bf16.mxu0 %v3549
        %3774 = vmatmul.mubr.bf16.gmra.mrb[0].mxu0 %v3386
        %v3775 = vpop.f32.mrb[0].mxu0
        %v3776 = vadd.f32 0.0, %v3775
        %v3777 = vpop.f32.mrb[0].mxu0
        %v3778 = vpop.f32.mrb[0].mxu0
        %v3779 = vadd.f32 0.0, %v3778
        %v3780 = vpop.f32.mrb[0].mxu0
        %3781 = vmatprep.mubr.bf16.mxu0 %v3552
        %3782 = vmatmul.mubr.bf16.gmra.mrb[0].mxu0 %v3388
        %v3783 = vpop.f32.mrb[0].mxu0
        %v3784 = vadd.f32 0.0, %v3783
        %v3785 = vpop.f32.mrb[0].mxu0
        %v3786 = vpop.f32.mrb[0].mxu0
        %v3787 = vadd.f32 0.0, %v3786
        %v3788 = vpop.f32.mrb[0].mxu0
        %3789 = vmatprep.mubr.bf16.mxu0 %v3555
        %3790 = vmatmul.mubr.bf16.gmra.mrb[0].mxu0 %v3390
        %v3791 = vpop.f32.mrb[0].mxu0
        %v3792 = vadd.f32 0.0, %v3791
        %v3793 = vpop.f32.mrb[0].mxu0
        %v3794 = vpop.f32.mrb[0].mxu0
        %v3795 = vadd.f32 0.0, %v3794
        %v3796 = vpop.f32.mrb[0].mxu0
        %3797 = vmatprep.mubr.bf16.mxu0 %v3558
        %3798 = vmatmul.mubr.bf16.gmra.mrb[0].mxu0 %v3392
        %v3799 = vpop.f32.mrb[0].mxu0
        %v3800 = vadd.f32 0.0, %v3799
        %v3801 = vpop.f32.mrb[0].mxu0
        %v3802 = vpop.f32.mrb[0].mxu0
        %v3803 = vadd.f32 0.0, %v3802
        %v3804 = vpop.f32.mrb[0].mxu0
        %3805 = vmatprep.mubr.bf16.mxu0 %v3561
        %3806 = vmatmul.mubr.bf16.gmra.mrb[0].mxu0 %v3394
        %v3807 = vpop.f32.mrb[0].mxu0
        %v3808 = vadd.f32 0.0, %v3807
        %v3809 = vpop.f32.mrb[0].mxu0
        %v3810 = vpop.f32.mrb[0].mxu0
        %v3811 = vadd.f32 0.0, %v3810
        %v3812 = vpop.f32.mrb[0].mxu0
        %3813 = vmatprep.mubr.bf16.mxu0 %v3564
        %3814 = vmatmul.mubr.bf16.gmra.mrb[0].mxu0 %v3396
        %v3815 = vpop.f32.mrb[0].mxu0
        %v3816 = vadd.f32 0.0, %v3815
        %v3817 = vpop.f32.mrb[0].mxu0
        %v3818 = vpop.f32.mrb[0].mxu0
        %v3819 = vadd.f32 0.0, %v3818
        %v3820 = vpop.f32.mrb[0].mxu0
        %3821 = vmatprep.mubr.bf16.mxu0 %v3567
        %3822 = vmatmul.mubr.bf16.gmra.mrb[0].mxu0 %v3398
        %v3823 = vpop.f32.mrb[0].mxu0
        %v3824 = vadd.f32 0.0, %v3823
        %v3825 = vpop.f32.mrb[0].mxu0
        %v3826 = vpop.f32.mrb[0].mxu0
        %v3827 = vadd.f32 0.0, %v3826
        %v3828 = vpop.f32.mrb[0].mxu0
        %3829 = vdwg.mxu0
        %s3830 = scalar_lea.vmem %s3, 84
        %v3831 = vld [vmem:[%s3830] sm:$0xf]
        %v3832 = vld [vmem:[%s3830 + $0x4] sm:$0xf]
        %v3833 = vld [vmem:[%s3830 + $0x8] sm:$0xf]
        %v3834 = vld [vmem:[%s3830 + $0xc] sm:$0xf]
        %v3835 = vld [vmem:[%s3830 + $0x10] sm:$0xf]
        %v3836 = vld [vmem:[%s3830 + $0x14] sm:$0xf]
        %v3837 = vld [vmem:[%s3830 + $0x18] sm:$0xf]
        %v3838 = vld [vmem:[%s3830 + $0x1c] sm:$0xf]
        %v3839 = vld [vmem:[%s3830 + $0x20] sm:$0xf]
        %v3840 = vld [vmem:[%s3830 + $0x24] sm:$0xf]
        %v3841 = vld [vmem:[%s3830 + $0x28] sm:$0xf]
        %v3842 = vld [vmem:[%s3830 + $0x2c] sm:$0xf]
        %v3843 = vld [vmem:[%s3830 + $0x30] sm:$0xf]
        %v3844 = vld [vmem:[%s3830 + $0x34] sm:$0xf]
        %v3845 = vld [vmem:[%s3830 + $0x38] sm:$0xf]
        %v3846 = vld [vmem:[%s3830 + $0x3c] sm:$0xf]
        %v3847 = vld [vmem:[%s3830 + $0x40] sm:$0xf]
        %v3848 = vld [vmem:[%s3830 + $0x44] sm:$0xf]
        %v3849 = vld [vmem:[%s3830 + $0x48] sm:$0xf]
        %v3850 = vld [vmem:[%s3830 + $0x4c] sm:$0xf]
        %v3851 = vld [vmem:[%s3830 + $0x50] sm:$0xf]
        %v3873 = vunpack.c.l.b16 %v3831
        %v3874 = vunpack.c.l.b16 %v3832
        %v3875 = vunpack.c.l.b16 %v3833
        %v3876 = vunpack.c.l.b16 %v3834
        %v3877 = vunpack.c.l.b16 %v3835
        %v3878 = vunpack.c.l.b16 %v3836
        %v3879 = vunpack.c.l.b16 %v3837
        %v3880 = vunpack.c.l.b16 %v3838
        %v3881 = vunpack.c.l.b16 %v3839
        %v3882 = vunpack.c.l.b16 %v3840
        %v3883 = vunpack.c.l.b16 %v3841
        %v3884 = vunpack.c.l.b16 %v3842
        %v3885 = vunpack.c.l.b16 %v3843
        %v3886 = vunpack.c.l.b16 %v3844
        %v3887 = vunpack.c.l.b16 %v3845
        %v3888 = vunpack.c.l.b16 %v3846
        %v3889 = vunpack.c.l.b16 %v3847
        %v3890 = vunpack.c.l.b16 %v3848
        %v3891 = vunpack.c.l.b16 %v3849
        %v3892 = vunpack.c.l.b16 %v3850
        %v3893 = vunpack.c.l.b16 %v3851
        %v3894 = vpack.c.b16 %v3874, %v3873
        %v3895 = vpack.c.b16 %v3876, %v3875
        %v3896 = vpack.c.b16 %v3878, %v3877
        %v3897 = vpack.c.b16 %v3880, %v3879
        %v3898 = vpack.c.b16 %v3882, %v3881
        %v3899 = vpack.c.b16 %v3884, %v3883
        %v3900 = vpack.c.b16 %v3886, %v3885
        %v3901 = vpack.c.b16 %v3888, %v3887
        %v3902 = vpack.c.b16 %v3890, %v3889
        %v3903 = vpack.c.b16 %v3892, %v3891
        %v3904 = vpack.c.b16 %v3893, %v3893
        %v3916 = vsel %vm3569, %v3904, 0
        %3918 = vmatprep.subr.bf16.mxu0 0
        %3919 = vmatpush1.bf16.msra.mxu0 %v3894
        %3920 = vmatprep.subr.bf16.mxu0 0
        %3921 = vmatpush1.bf16.msra.mxu0 %v3895
        %3922 = vmatprep.subr.bf16.mxu0 0
        %3923 = vmatpush1.bf16.msra.mxu0 %v3896
        %3924 = vmatprep.subr.bf16.mxu0 0
        %3925 = vmatpush1.bf16.msra.mxu0 %v3897
        %3926 = vmatprep.subr.bf16.mxu0 0
        %3927 = vmatpush1.bf16.msra.mxu0 %v3898
        %3928 = vmatprep.subr.bf16.mxu0 0
        %3929 = vmatpush1.bf16.msra.mxu0 %v3899
        %3930 = vmatprep.subr.bf16.mxu0 0
        %3931 = vmatpush1.bf16.msra.mxu0 %v3900
        %3932 = vmatprep.subr.bf16.mxu0 0
        %3933 = vmatpush1.bf16.msra.mxu0 %v3901
        %3934 = vmatprep.subr.bf16.mxu0 0
        %3935 = vmatpush1.bf16.msra.mxu0 %v3902
        %3936 = vmatprep.subr.bf16.mxu0 0
        %3937 = vmatpush1.bf16.msra.mxu0 %v3903
        %3938 = vmatprep.subr.bf16.mxu0 0
        %3939 = vmatpush1.bf16.msra.mxu0 %v3916
        %3940 = vmatprep.subr.bf16.mxu0 0
        %3941 = vmatpush1.bf16.msra.mxu0 0
        %3942 = vmatprep.subr.bf16.mxu0 0
        %3943 = vmatpush1.bf16.msra.mxu0 0
        %3944 = vmatprep.subr.bf16.mxu0 0
        %3945 = vmatpush1.bf16.msra.mxu0 0
        %3946 = vmatprep.subr.bf16.mxu0 0
        %3947 = vmatpush1.bf16.msra.mxu0 0
        %3948 = vmatprep.subr.bf16.mxu0 0
        %3949 = vmatpush1.bf16.msra.mxu0 0
        %3950 = vmatprep.mubr.bf16.mxu0 %v3486
        %3951 = vmatmul.mubr.bf16.gmra.mrb[0].mxu0 %v3344
        %v3952 = vpop.f32.mrb[0].mxu0
        %v3953 = vadd.f32 0.0, %v3952
        %v3954 = vpop.f32.mrb[0].mxu0
        %v3955 = vpop.f32.mrb[0].mxu0
        %v3956 = vadd.f32 0.0, %v3955
        %v3957 = vpop.f32.mrb[0].mxu0
        %3958 = vmatprep.mubr.bf16.mxu0 %v3489
        %3959 = vmatmul.mubr.bf16.gmra.mrb[0].mxu0 %v3346
        %v3960 = vpop.f32.mrb[0].mxu0
        %v3961 = vadd.f32 0.0, %v3960
        %v3962 = vpop.f32.mrb[0].mxu0
        %v3963 = vpop.f32.mrb[0].mxu0
        %v3964 = vadd.f32 0.0, %v3963
        %v3965 = vpop.f32.mrb[0].mxu0
        %3966 = vmatprep.mubr.bf16.mxu0 %v3492
        %3967 = vmatmul.mubr.bf16.gmra.mrb[0].mxu0 %v3348
        %v3968 = vpop.f32.mrb[0].mxu0
        %v3969 = vadd.f32 0.0, %v3968
        %v3970 = vpop.f32.mrb[0].mxu0
        %v3971 = vpop.f32.mrb[0].mxu0
        %v3972 = vadd.f32 0.0, %v3971
        %v3973 = vpop.f32.mrb[0].mxu0
        %3974 = vmatprep.mubr.bf16.mxu0 %v3495
        %3975 = vmatmul.mubr.bf16.gmra.mrb[0].mxu0 %v3350
        %v3976 = vpop.f32.mrb[0].mxu0
        %v3977 = vadd.f32 0.0, %v3976
        %v3978 = vpop.f32.mrb[0].mxu0
        %v3979 = vpop.f32.mrb[0].mxu0
        %v3980 = vadd.f32 0.0, %v3979
        %v3981 = vpop.f32.mrb[0].mxu0
        %3982 = vmatprep.mubr.bf16.mxu0 %v3498
        %3983 = vmatmul.mubr.bf16.gmra.mrb[0].mxu0 %v3352
        %v3984 = vpop.f32.mrb[0].mxu0
        %v3985 = vadd.f32 0.0, %v3984
        %v3986 = vpop.f32.mrb[0].mxu0
        %v3987 = vpop.f32.mrb[0].mxu0
        %v3988 = vadd.f32 0.0, %v3987
        %v3989 = vpop.f32.mrb[0].mxu0
        %3990 = vmatprep.mubr.bf16.mxu0 %v3501
        %3991 = vmatmul.mubr.bf16.gmra.mrb[0].mxu0 %v3354
        %v3992 = vpop.f32.mrb[0].mxu0
        %v3993 = vadd.f32 0.0, %v3992
        %v3994 = vpop.f32.mrb[0].mxu0
        %v3995 = vpop.f32.mrb[0].mxu0
        %v3996 = vadd.f32 0.0, %v3995
        %v3997 = vpop.f32.mrb[0].mxu0
        %3998 = vmatprep.mubr.bf16.mxu0 %v3504
        %3999 = vmatmul.mubr.bf16.gmra.mrb[0].mxu0 %v3356
        %v4000 = vpop.f32.mrb[0].mxu0
        %v4001 = vadd.f32 0.0, %v4000
        %v4002 = vpop.f32.mrb[0].mxu0
        %v4003 = vpop.f32.mrb[0].mxu0
        %v4004 = vadd.f32 0.0, %v4003
        %v4005 = vpop.f32.mrb[0].mxu0
        %4006 = vmatprep.mubr.bf16.mxu0 %v3507
        %4007 = vmatmul.mubr.bf16.gmra.mrb[0].mxu0 %v3358
        %v4008 = vpop.f32.mrb[0].mxu0
        %v4009 = vadd.f32 0.0, %v4008
        %v4010 = vpop.f32.mrb[0].mxu0
        %v4011 = vpop.f32.mrb[0].mxu0
        %v4012 = vadd.f32 0.0, %v4011
        %v4013 = vpop.f32.mrb[0].mxu0
        %4014 = vmatprep.mubr.bf16.mxu0 %v3510
        %4015 = vmatmul.mubr.bf16.gmra.mrb[0].mxu0 %v3360
        %v4016 = vpop.f32.mrb[0].mxu0
        %v4017 = vadd.f32 0.0, %v4016
        %v4018 = vpop.f32.mrb[0].mxu0
        %v4019 = vpop.f32.mrb[0].mxu0
        %v4020 = vadd.f32 0.0, %v4019
        %v4021 = vpop.f32.mrb[0].mxu0
        %4022 = vmatprep.mubr.bf16.mxu0 %v3513
        %4023 = vmatmul.mubr.bf16.gmra.mrb[0].mxu0 %v3362
        %v4024 = vpop.f32.mrb[0].mxu0
        %v4025 = vadd.f32 0.0, %v4024
        %v4026 = vpop.f32.mrb[0].mxu0
        %v4027 = vpop.f32.mrb[0].mxu0
        %v4028 = vadd.f32 0.0, %v4027
        %v4029 = vpop.f32.mrb[0].mxu0
        %4030 = vmatprep.mubr.bf16.mxu0 %v3516
        %4031 = vmatmul.mubr.bf16.gmra.mrb[0].mxu0 %v3364
        %v4032 = vpop.f32.mrb[0].mxu0
        %v4033 = vadd.f32 0.0, %v4032
        %v4034 = vpop.f32.mrb[0].mxu0
        %v4035 = vpop.f32.mrb[0].mxu0
        %v4036 = vadd.f32 0.0, %v4035
        %v4037 = vpop.f32.mrb[0].mxu0
        %4038 = vmatprep.mubr.bf16.mxu0 %v3519
        %4039 = vmatmul.mubr.bf16.gmra.mrb[0].mxu0 %v3366
        %v4040 = vpop.f32.mrb[0].mxu0
        %v4041 = vadd.f32 0.0, %v4040
        %v4042 = vpop.f32.mrb[0].mxu0
        %v4043 = vpop.f32.mrb[0].mxu0
        %v4044 = vadd.f32 0.0, %v4043
        %v4045 = vpop.f32.mrb[0].mxu0
        %4046 = vmatprep.mubr.bf16.mxu0 %v3522
        %4047 = vmatmul.mubr.bf16.gmra.mrb[0].mxu0 %v3368
        %v4048 = vpop.f32.mrb[0].mxu0
        %v4049 = vadd.f32 0.0, %v4048
        %v4050 = vpop.f32.mrb[0].mxu0
        %v4051 = vpop.f32.mrb[0].mxu0
        %v4052 = vadd.f32 0.0, %v4051
        %v4053 = vpop.f32.mrb[0].mxu0
        %4054 = vmatprep.mubr.bf16.mxu0 %v3525
        %4055 = vmatmul.mubr.bf16.gmra.mrb[0].mxu0 %v3370
        %v4056 = vpop.f32.mrb[0].mxu0
        %v4057 = vadd.f32 0.0, %v4056
        %v4058 = vpop.f32.mrb[0].mxu0
        %v4059 = vpop.f32.mrb[0].mxu0
        %v4060 = vadd.f32 0.0, %v4059
        %v4061 = vpop.f32.mrb[0].mxu0
        %4062 = vmatprep.mubr.bf16.mxu0 %v3528
        %4063 = vmatmul.mubr.bf16.gmra.mrb[0].mxu0 %v3372
        %v4064 = vpop.f32.mrb[0].mxu0
        %v4065 = vadd.f32 0.0, %v4064
        %v4066 = vpop.f32.mrb[0].mxu0
        %v4067 = vpop.f32.mrb[0].mxu0
        %v4068 = vadd.f32 0.0, %v4067
        %v4069 = vpop.f32.mrb[0].mxu0
        %4070 = vmatprep.mubr.bf16.mxu0 %v3531
        %4071 = vmatmul.mubr.bf16.gmra.mrb[0].mxu0 %v3374
        %v4072 = vpop.f32.mrb[0].mxu0
        %v4073 = vadd.f32 0.0, %v4072
        %v4074 = vpop.f32.mrb[0].mxu0
        %v4075 = vpop.f32.mrb[0].mxu0
        %v4076 = vadd.f32 0.0, %v4075
        %v4077 = vpop.f32.mrb[0].mxu0
        %4078 = vmatprep.mubr.bf16.mxu0 %v3534
        %4079 = vmatmul.mubr.bf16.gmra.mrb[0].mxu0 %v3376
        %v4080 = vpop.f32.mrb[0].mxu0
        %v4081 = vadd.f32 0.0, %v4080
        %v4082 = vpop.f32.mrb[0].mxu0
        %v4083 = vpop.f32.mrb[0].mxu0
        %v4084 = vadd.f32 0.0, %v4083
        %v4085 = vpop.f32.mrb[0].mxu0
        %4086 = vmatprep.mubr.bf16.mxu0 %v3537
        %4087 = vmatmul.mubr.bf16.gmra.mrb[0].mxu0 %v3378
        %v4088 = vpop.f32.mrb[0].mxu0
        %v4089 = vadd.f32 0.0, %v4088
        %v4090 = vpop.f32.mrb[0].mxu0
        %v4091 = vpop.f32.mrb[0].mxu0
        %v4092 = vadd.f32 0.0, %v4091
        %v4093 = vpop.f32.mrb[0].mxu0
        %4094 = vmatprep.mubr.bf16.mxu0 %v3540
        %4095 = vmatmul.mubr.bf16.gmra.mrb[0].mxu0 %v3380
        %v4096 = vpop.f32.mrb[0].mxu0
        %v4097 = vadd.f32 0.0, %v4096
        %v4098 = vpop.f32.mrb[0].mxu0
        %v4099 = vpop.f32.mrb[0].mxu0
        %v4100 = vadd.f32 0.0, %v4099
        %v4101 = vpop.f32.mrb[0].mxu0
        %4102 = vmatprep.mubr.bf16.mxu0 %v3543
        %4103 = vmatmul.mubr.bf16.gmra.mrb[0].mxu0 %v3382
        %v4104 = vpop.f32.mrb[0].mxu0
        %v4105 = vadd.f32 0.0, %v4104
        %v4106 = vpop.f32.mrb[0].mxu0
        %v4107 = vpop.f32.mrb[0].mxu0
        %v4108 = vadd.f32 0.0, %v4107
        %v4109 = vpop.f32.mrb[0].mxu0
        %4110 = vmatprep.mubr.bf16.mxu0 %v3546
        %4111 = vmatmul.mubr.bf16.gmra.mrb[0].mxu0 %v3384
        %v4112 = vpop.f32.mrb[0].mxu0
        %v4113 = vadd.f32 0.0, %v4112
        %v4114 = vpop.f32.mrb[0].mxu0
        %v4115 = vpop.f32.mrb[0].mxu0
        %v4116 = vadd.f32 0.0, %v4115
        %v4117 = vpop.f32.mrb[0].mxu0
        %4118 = vmatprep.mubr.bf16.mxu0 %v3549
        %4119 = vmatmul.mubr.bf16.gmra.mrb[0].mxu0 %v3386
        %v4120 = vpop.f32.mrb[0].mxu0
        %v4121 = vadd.f32 0.0, %v4120
        %v4122 = vpop.f32.mrb[0].mxu0
        %v4123 = vpop.f32.mrb[0].mxu0
        %v4124 = vadd.f32 0.0, %v4123
        %v4125 = vpop.f32.mrb[0].mxu0
        %4126 = vmatprep.mubr.bf16.mxu0 %v3552
        %4127 = vmatmul.mubr.bf16.gmra.mrb[0].mxu0 %v3388
        %v4128 = vpop.f32.mrb[0].mxu0
        %v4129 = vadd.f32 0.0, %v4128
        %v4130 = vpop.f32.mrb[0].mxu0
        %v4131 = vpop.f32.mrb[0].mxu0
        %v4132 = vadd.f32 0.0, %v4131
        %v4133 = vpop.f32.mrb[0].mxu0
        %4134 = vmatprep.mubr.bf16.mxu0 %v3555
        %4135 = vmatmul.mubr.bf16.gmra.mrb[0].mxu0 %v3390
        %v4136 = vpop.f32.mrb[0].mxu0
        %v4137 = vadd.f32 0.0, %v4136
        %v4138 = vpop.f32.mrb[0].mxu0
        %v4139 = vpop.f32.mrb[0].mxu0
        %v4140 = vadd.f32 0.0, %v4139
        %v4141 = vpop.f32.mrb[0].mxu0
        %4142 = vmatprep.mubr.bf16.mxu0 %v3558
        %4143 = vmatmul.mubr.bf16.gmra.mrb[0].mxu0 %v3392
        %v4144 = vpop.f32.mrb[0].mxu0
        %v4145 = vadd.f32 0.0, %v4144
        %v4146 = vpop.f32.mrb[0].mxu0
        %v4147 = vpop.f32.mrb[0].mxu0
        %v4148 = vadd.f32 0.0, %v4147
        %v4149 = vpop.f32.mrb[0].mxu0
        %4150 = vmatprep.mubr.bf16.mxu0 %v3561
        %4151 = vmatmul.mubr.bf16.gmra.mrb[0].mxu0 %v3394
        %v4152 = vpop.f32.mrb[0].mxu0
        %v4153 = vadd.f32 0.0, %v4152
        %v4154 = vpop.f32.mrb[0].mxu0
        %v4155 = vpop.f32.mrb[0].mxu0
        %v4156 = vadd.f32 0.0, %v4155
        %v4157 = vpop.f32.mrb[0].mxu0
        %4158 = vmatprep.mubr.bf16.mxu0 %v3564
        %4159 = vmatmul.mubr.bf16.gmra.mrb[0].mxu0 %v3396
        %v4160 = vpop.f32.mrb[0].mxu0
        %v4161 = vadd.f32 0.0, %v4160
        %v4162 = vpop.f32.mrb[0].mxu0
        %v4163 = vpop.f32.mrb[0].mxu0
        %v4164 = vadd.f32 0.0, %v4163
        %v4165 = vpop.f32.mrb[0].mxu0
        %4166 = vmatprep.mubr.bf16.mxu0 %v3567
        %4167 = vmatmul.mubr.bf16.gmra.mrb[0].mxu0 %v3398
        %v4168 = vpop.f32.mrb[0].mxu0
        %v4169 = vadd.f32 0.0, %v4168
        %v4170 = vpop.f32.mrb[0].mxu0
        %v4171 = vpop.f32.mrb[0].mxu0
        %v4172 = vadd.f32 0.0, %v4171
        %v4173 = vpop.f32.mrb[0].mxu0
        %4174 = vdwg.mxu0
        %v4175 = vmax.f32 %v3608, %v3953
        %v4176 = vmax.f32 %v3611, %v3956
        %v4177 = vmax.f32 %v3616, %v3961
        %v4178 = vmax.f32 %v3619, %v3964
        %v4179 = vmax.f32 %v3624, %v3969
        %v4180 = vmax.f32 %v3627, %v3972
        %v4181 = vmax.f32 %v3632, %v3977
        %v4182 = vmax.f32 %v3635, %v3980
        %v4183 = vmax.f32 %v3640, %v3985
        %v4184 = vmax.f32 %v3643, %v3988
        %v4185 = vmax.f32 %v3648, %v3993
        %v4186 = vmax.f32 %v3651, %v3996
        %v4187 = vmax.f32 %v3656, %v4001
        %v4188 = vmax.f32 %v3659, %v4004
        %v4189 = vmax.f32 %v3664, %v4009
        %v4190 = vmax.f32 %v3667, %v4012
        %v4191 = vmax.f32 %v3672, %v4017
        %v4192 = vmax.f32 %v3675, %v4020
        %v4193 = vmax.f32 %v3680, %v4025
        %v4194 = vmax.f32 %v3683, %v4028
        %v4195 = vmax.f32 %v3688, %v4033
        %v4196 = vmax.f32 %v3691, %v4036
        %v4197 = vmax.f32 %v3696, %v4041
        %v4198 = vmax.f32 %v3699, %v4044
        %v4199 = vmax.f32 %v3704, %v4049
        %v4200 = vmax.f32 %v3707, %v4052
        %v4201 = vmax.f32 %v3712, %v4057
        %v4202 = vmax.f32 %v3715, %v4060
        %v4203 = vmax.f32 %v3720, %v4065
        %v4204 = vmax.f32 %v3723, %v4068
        %v4205 = vmax.f32 %v3728, %v4073
        %v4206 = vmax.f32 %v3731, %v4076
        %v4207 = vmax.f32 %v3736, %v4081
        %v4208 = vmax.f32 %v3739, %v4084
        %v4209 = vmax.f32 %v3744, %v4089
        %v4210 = vmax.f32 %v3747, %v4092
        %v4211 = vmax.f32 %v3752, %v4097
        %v4212 = vmax.f32 %v3755, %v4100
        %v4213 = vmax.f32 %v3760, %v4105
        %v4214 = vmax.f32 %v3763, %v4108
        %v4215 = vmax.f32 %v3768, %v4113
        %v4216 = vmax.f32 %v3771, %v4116
        %v4217 = vmax.f32 %v3776, %v4121
        %v4218 = vmax.f32 %v3779, %v4124
        %v4219 = vmax.f32 %v3784, %v4129
        %v4220 = vmax.f32 %v3787, %v4132
        %v4221 = vmax.f32 %v3792, %v4137
        %v4222 = vmax.f32 %v3795, %v4140
        %v4223 = vmax.f32 %v3800, %v4145
        %v4224 = vmax.f32 %v3803, %v4148
        %v4225 = vmax.f32 %v3808, %v4153
        %v4226 = vmax.f32 %v3811, %v4156
        %v4227 = vmax.f32 %v3816, %v4161
        %v4228 = vmax.f32 %v3819, %v4164
        %v4229 = vmax.f32 %v3824, %v4169
        %v4230 = vmax.f32 %v3827, %v4172
        %v4231 = vmax.f32 %v4175, %v4177
        %v4232 = vmax.f32 %v4176, %v4178
        %v4233 = vmax.f32 %v4179, %v4181
        %v4234 = vmax.f32 %v4180, %v4182
        %v4235 = vmax.f32 %v4183, %v4185
        %v4236 = vmax.f32 %v4184, %v4186
        %v4237 = vmax.f32 %v4187, %v4189
        %v4238 = vmax.f32 %v4188, %v4190
        %v4239 = vmax.f32 %v4191, %v4193
        %v4240 = vmax.f32 %v4192, %v4194
        %v4241 = vmax.f32 %v4195, %v4197
        %v4242 = vmax.f32 %v4196, %v4198
        %v4243 = vmax.f32 %v4199, %v4201
        %v4244 = vmax.f32 %v4200, %v4202
        %v4245 = vmax.f32 %v4203, %v4205
        %v4246 = vmax.f32 %v4204, %v4206
        %v4247 = vmax.f32 %v4207, %v4209
        %v4248 = vmax.f32 %v4208, %v4210
        %v4249 = vmax.f32 %v4211, %v4213
        %v4250 = vmax.f32 %v4212, %v4214
        %v4251 = vmax.f32 %v4215, %v4217
        %v4252 = vmax.f32 %v4216, %v4218
        %v4253 = vmax.f32 %v4219, %v4221
        %v4254 = vmax.f32 %v4220, %v4222
        %v4255 = vmax.f32 %v4223, %v4225
        %v4256 = vmax.f32 %v4224, %v4226
        %v4257 = vmax.f32 %v4227, %v4229
        %v4258 = vmax.f32 %v4228, %v4230
        %v4259 = vpack.c.bf16 %v4232, %v4231
        %v4260 = vpack.c.bf16 %v4234, %v4233
        %v4261 = vpack.c.bf16 %v4236, %v4235
        %v4262 = vpack.c.bf16 %v4238, %v4237
        %v4263 = vpack.c.bf16 %v4240, %v4239
        %v4264 = vpack.c.bf16 %v4242, %v4241
        %v4265 = vpack.c.bf16 %v4244, %v4243
        %v4266 = vpack.c.bf16 %v4246, %v4245
        %v4267 = vpack.c.bf16 %v4248, %v4247
        %v4268 = vpack.c.bf16 %v4250, %v4249
        %v4269 = vpack.c.bf16 %v4252, %v4251
        %v4270 = vpack.c.bf16 %v4254, %v4253
        %v4271 = vpack.c.bf16 %v4256, %v4255
        %v4272 = vpack.c.bf16 %v4258, %v4257
        %v4273 = vld [vmem:[%s4] sm:$0xff]
        %v4274 = vld [vmem:[%s4 + $0x8] sm:$0xff]
        %v4275 = vld [vmem:[%s4 + $0x10] sm:$0xff]
        %v4276 = vld [vmem:[%s4 + $0x18] sm:$0xff]
        %v4277 = vld [vmem:[%s4 + $0x20] sm:$0xff]
        %v4278 = vld [vmem:[%s4 + $0x28] sm:$0xff]
        %v4279 = vld [vmem:[%s4 + $0x30] sm:$0xff]
        %v4280 = vld [vmem:[%s4 + $0x38] sm:$0xff]
        %v4281 = vld [vmem:[%s4 + $0x40] sm:$0xff]
        %v4282 = vld [vmem:[%s4 + $0x48] sm:$0xff]
        %v4283 = vld [vmem:[%s4 + $0x50] sm:$0x33]
        %s4284 = scalar_lea.vmem %s4, 88
        %v4285 = vld [vmem:[%s4284] sm:$0xff]
        %v4286 = vld [vmem:[%s4284 + $0x8] sm:$0xff]
        %v4287 = vld [vmem:[%s4284 + $0x10] sm:$0xff]
        %v4288 = vld [vmem:[%s4284 + $0x18] sm:$0xff]
        %v4289 = vld [vmem:[%s4284 + $0x20] sm:$0xff]
        %v4290 = vld [vmem:[%s4284 + $0x28] sm:$0xff]
        %v4291 = vld [vmem:[%s4284 + $0x30] sm:$0xff]
        %v4292 = vld [vmem:[%s4284 + $0x38] sm:$0xff]
        %v4293 = vld [vmem:[%s4284 + $0x40] sm:$0xff]
        %v4294 = vld [vmem:[%s4284 + $0x48] sm:$0xff]
        %v4295 = vld [vmem:[%s4284 + $0x50] sm:$0x33]
        %v4307 = vunpack.c.l.b16 %v4285
        %v4308 = vunpack.c.h.b16 %v4285
        %v4309 = vunpack.c.l.b16 %v4286
        %v4310 = vunpack.c.h.b16 %v4286
        %v4311 = vunpack.c.l.b16 %v4287
        %v4312 = vunpack.c.h.b16 %v4287
        %v4313 = vunpack.c.l.b16 %v4288
        %v4314 = vunpack.c.h.b16 %v4288
        %v4315 = vunpack.c.l.b16 %v4289
        %v4316 = vunpack.c.h.b16 %v4289
        %v4317 = vunpack.c.l.b16 %v4290
        %v4318 = vunpack.c.h.b16 %v4290
        %v4319 = vunpack.c.l.b16 %v4291
        %v4320 = vunpack.c.h.b16 %v4291
        %v4321 = vunpack.c.l.b16 %v4292
        %v4322 = vunpack.c.h.b16 %v4292
        %v4323 = vunpack.c.l.b16 %v4293
        %v4324 = vunpack.c.h.b16 %v4293
        %v4325 = vunpack.c.l.b16 %v4294
        %v4326 = vunpack.c.h.b16 %v4294
        %v4327 = vunpack.c.l.b16 %v4295
        %v4328 = vunpack.c.h.b16 %v4295
        %v4329 = vpack.c.b16 %v4309, %v4307
        %v4330 = vpack.c.b16 %v4310, %v4308
        %v4331 = vpack.c.b16 %v4313, %v4311
        %v4332 = vpack.c.b16 %v4314, %v4312
        %v4333 = vpack.c.b16 %v4317, %v4315
        %v4334 = vpack.c.b16 %v4318, %v4316
        %v4335 = vpack.c.b16 %v4321, %v4319
        %v4336 = vpack.c.b16 %v4322, %v4320
        %v4337 = vpack.c.b16 %v4325, %v4323
        %v4338 = vpack.c.b16 %v4326, %v4324
        %v4339 = vpack.c.b16 %v4327, %v4327
        %v4340 = vpack.c.b16 %v4328, %v4328
        %vm4351 = vcmask 687104
        %v4353 = vsel %vm4351, %v4260, 0
        %v4356 = vsel %vm4351, %v4261, 0
        %v4359 = vsel %vm4351, %v4262, 0
        %v4362 = vsel %vm4351, %v4263, 0
        %v4365 = vsel %vm4351, %v4264, 0
        %v4368 = vsel %vm4351, %v4265, 0
        %v4371 = vsel %vm4351, %v4266, 0
        %v4374 = vsel %vm4351, %v4267, 0
        %v4377 = vsel %vm4351, %v4268, 0
        %v4380 = vsel %vm4351, %v4269, 0
        %vm4382 = vcmask 1041408
        %v4384 = vsel %vm4382, %v4339, 0
        %v4387 = vsel %vm4382, %v4340, 0
        %4389 = vmatprep.subr.bf16.mxu0 %v4330
        %4390 = vmatpush1.bf16.msra.mxu0 %v4329
        %4391 = vmatprep.subr.bf16.mxu0 %v4332
        %4392 = vmatpush1.bf16.msra.mxu0 %v4331
        %4393 = vmatprep.subr.bf16.mxu0 %v4334
        %4394 = vmatpush1.bf16.msra.mxu0 %v4333
        %4395 = vmatprep.subr.bf16.mxu0 %v4336
        %4396 = vmatpush1.bf16.msra.mxu0 %v4335
        %4397 = vmatprep.subr.bf16.mxu0 %v4338
        %4398 = vmatpush1.bf16.msra.mxu0 %v4337
        %4399 = vmatprep.subr.bf16.mxu0 %v4387
        %4400 = vmatpush1.bf16.msra.mxu0 %v4384
        %4401 = vmatprep.subr.bf16.mxu0 0
        %4402 = vmatpush1.bf16.msra.mxu0 0
        %4403 = vmatprep.subr.bf16.mxu0 0
        %4404 = vmatpush1.bf16.msra.mxu0 0
        %4405 = vmatprep.subr.bf16.mxu0 0
        %4406 = vmatpush1.bf16.msra.mxu0 0
        %4407 = vmatprep.subr.bf16.mxu0 0
        %4408 = vmatpush1.bf16.msra.mxu0 0
        %4409 = vmatprep.subr.bf16.mxu0 0
        %4410 = vmatpush1.bf16.msra.mxu0 0
        %4411 = vmatprep.subr.bf16.mxu0 0
        %4412 = vmatpush1.bf16.msra.mxu0 0
        %4413 = vmatprep.subr.bf16.mxu0 0
        %4414 = vmatpush1.bf16.msra.mxu0 0
        %4415 = vmatprep.subr.bf16.mxu0 0
        %4416 = vmatpush1.bf16.msra.mxu0 0
        %4417 = vmatprep.subr.bf16.mxu0 0
        %4418 = vmatpush1.bf16.msra.mxu0 0
        %4419 = vmatprep.subr.bf16.mxu0 0
        %4420 = vmatpush1.bf16.msra.mxu0 0
        %4421 = vmatprep.mubr.bf16.mxu0 0
        %4422 = vmatmul.mubr.bf16.gmra.mrb[0].mxu0 %v4353
        %v4423 = vpop.f32.mrb[0].mxu0
        %v4424 = vadd.f32 0.0, %v4423
        %v4425 = vpop.f32.mrb[0].mxu0
        %v4426 = vadd.f32 0.0, %v4425
        %v4427 = vpop.f32.mrb[0].mxu0
        %v4428 = vadd.f32 0.0, %v4427
        %v4429 = vpop.f32.mrb[0].mxu0
        %v4430 = vadd.f32 0.0, %v4429
        %4431 = vmatprep.mubr.bf16.mxu0 0
        %4432 = vmatmul.mubr.bf16.gmra.mrb[0].mxu0 %v4356
        %v4433 = vpop.f32.mrb[0].mxu0
        %v4434 = vadd.f32 0.0, %v4433
        %v4435 = vpop.f32.mrb[0].mxu0
        %v4436 = vadd.f32 0.0, %v4435
        %v4437 = vpop.f32.mrb[0].mxu0
        %v4438 = vadd.f32 0.0, %v4437
        %v4439 = vpop.f32.mrb[0].mxu0
        %v4440 = vadd.f32 0.0, %v4439
        %4441 = vmatprep.mubr.bf16.mxu0 0
        %4442 = vmatmul.mubr.bf16.gmra.mrb[0].mxu0 %v4359
        %v4443 = vpop.f32.mrb[0].mxu0
        %v4444 = vadd.f32 0.0, %v4443
        %v4445 = vpop.f32.mrb[0].mxu0
        %v4446 = vadd.f32 0.0, %v4445
        %v4447 = vpop.f32.mrb[0].mxu0
        %v4448 = vadd.f32 0.0, %v4447
        %v4449 = vpop.f32.mrb[0].mxu0
        %v4450 = vadd.f32 0.0, %v4449
        %4451 = vmatprep.mubr.bf16.mxu0 0
        %4452 = vmatmul.mubr.bf16.gmra.mrb[0].mxu0 %v4362
        %v4453 = vpop.f32.mrb[0].mxu0
        %v4454 = vadd.f32 0.0, %v4453
        %v4455 = vpop.f32.mrb[0].mxu0
        %v4456 = vadd.f32 0.0, %v4455
        %v4457 = vpop.f32.mrb[0].mxu0
        %v4458 = vadd.f32 0.0, %v4457
        %v4459 = vpop.f32.mrb[0].mxu0
        %v4460 = vadd.f32 0.0, %v4459
        %4461 = vmatprep.mubr.bf16.mxu0 0
        %4462 = vmatmul.mubr.bf16.gmra.mrb[0].mxu0 %v4365
        %v4463 = vpop.f32.mrb[0].mxu0
        %v4464 = vadd.f32 0.0, %v4463
        %v4465 = vpop.f32.mrb[0].mxu0
        %v4466 = vadd.f32 0.0, %v4465
        %v4467 = vpop.f32.mrb[0].mxu0
        %v4468 = vadd.f32 0.0, %v4467
        %v4469 = vpop.f32.mrb[0].mxu0
        %v4470 = vadd.f32 0.0, %v4469
        %4471 = vmatprep.mubr.bf16.mxu0 0
        %4472 = vmatmul.mubr.bf16.gmra.mrb[0].mxu0 %v4368
        %v4473 = vpop.f32.mrb[0].mxu0
        %v4474 = vadd.f32 0.0, %v4473
        %v4475 = vpop.f32.mrb[0].mxu0
        %v4476 = vadd.f32 0.0, %v4475
        %v4477 = vpop.f32.mrb[0].mxu0
        %v4478 = vadd.f32 0.0, %v4477
        %v4479 = vpop.f32.mrb[0].mxu0
        %v4480 = vadd.f32 0.0, %v4479
        %4481 = vmatprep.mubr.bf16.mxu0 0
        %4482 = vmatmul.mubr.bf16.gmra.mrb[0].mxu0 %v4371
        %v4483 = vpop.f32.mrb[0].mxu0
        %v4484 = vadd.f32 0.0, %v4483
        %v4485 = vpop.f32.mrb[0].mxu0
        %v4486 = vadd.f32 0.0, %v4485
        %v4487 = vpop.f32.mrb[0].mxu0
        %v4488 = vadd.f32 0.0, %v4487
        %v4489 = vpop.f32.mrb[0].mxu0
        %v4490 = vadd.f32 0.0, %v4489
        %4491 = vmatprep.mubr.bf16.mxu0 0
        %4492 = vmatmul.mubr.bf16.gmra.mrb[0].mxu0 %v4374
        %v4493 = vpop.f32.mrb[0].mxu0
        %v4494 = vadd.f32 0.0, %v4493
        %v4495 = vpop.f32.mrb[0].mxu0
        %v4496 = vadd.f32 0.0, %v4495
        %v4497 = vpop.f32.mrb[0].mxu0
        %v4498 = vadd.f32 0.0, %v4497
        %v4499 = vpop.f32.mrb[0].mxu0
        %v4500 = vadd.f32 0.0, %v4499
        %4501 = vmatprep.mubr.bf16.mxu0 0
        %4502 = vmatmul.mubr.bf16.gmra.mrb[0].mxu0 %v4377
        %v4503 = vpop.f32.mrb[0].mxu0
        %v4504 = vadd.f32 0.0, %v4503
        %v4505 = vpop.f32.mrb[0].mxu0
        %v4506 = vadd.f32 0.0, %v4505
        %v4507 = vpop.f32.mrb[0].mxu0
        %v4508 = vadd.f32 0.0, %v4507
        %v4509 = vpop.f32.mrb[0].mxu0
        %v4510 = vadd.f32 0.0, %v4509
        %4511 = vmatprep.mubr.bf16.mxu0 0
        %4512 = vmatmul.mubr.bf16.gmra.mrb[0].mxu0 %v4380
        %v4513 = vpop.f32.mrb[0].mxu0
        %v4514 = vadd.f32 0.0, %v4513
        %v4515 = vpop.f32.mrb[0].mxu0
        %v4516 = vadd.f32 0.0, %v4515
        %v4517 = vpop.f32.mrb[0].mxu0
        %v4518 = vadd.f32 0.0, %v4517
        %v4519 = vpop.f32.mrb[0].mxu0
        %v4520 = vadd.f32 0.0, %v4519
        %4521 = vdwg.mxu0
        %v4533 = vunpack.c.l.b16 %v4273
        %v4534 = vunpack.c.h.b16 %v4273
        %v4535 = vunpack.c.l.b16 %v4274
        %v4536 = vunpack.c.h.b16 %v4274
        %v4537 = vunpack.c.l.b16 %v4275
        %v4538 = vunpack.c.h.b16 %v4275
        %v4539 = vunpack.c.l.b16 %v4276
        %v4540 = vunpack.c.h.b16 %v4276
        %v4541 = vunpack.c.l.b16 %v4277
        %v4542 = vunpack.c.h.b16 %v4277
        %v4543 = vunpack.c.l.b16 %v4278
        %v4544 = vunpack.c.h.b16 %v4278
        %v4545 = vunpack.c.l.b16 %v4279
        %v4546 = vunpack.c.h.b16 %v4279
        %v4547 = vunpack.c.l.b16 %v4280
        %v4548 = vunpack.c.h.b16 %v4280
        %v4549 = vunpack.c.l.b16 %v4281
        %v4550 = vunpack.c.h.b16 %v4281
        %v4551 = vunpack.c.l.b16 %v4282
        %v4552 = vunpack.c.h.b16 %v4282
        %v4553 = vunpack.c.l.b16 %v4283
        %v4554 = vunpack.c.h.b16 %v4283
        %v4555 = vpack.c.b16 %v4535, %v4533
        %v4556 = vpack.c.b16 %v4536, %v4534
        %v4557 = vpack.c.b16 %v4539, %v4537
        %v4558 = vpack.c.b16 %v4540, %v4538
        %v4559 = vpack.c.b16 %v4543, %v4541
        %v4560 = vpack.c.b16 %v4544, %v4542
        %v4561 = vpack.c.b16 %v4547, %v4545
        %v4562 = vpack.c.b16 %v4548, %v4546
        %v4563 = vpack.c.b16 %v4551, %v4549
        %v4564 = vpack.c.b16 %v4552, %v4550
        %v4565 = vpack.c.b16 %v4553, %v4553
        %v4566 = vpack.c.b16 %v4554, %v4554
        %v4578 = vsel %vm4351, %v4259, 0
        %v4581 = vsel %vm4382, %v4565, 0
        %v4584 = vsel %vm4382, %v4566, 0
        %4586 = vmatprep.subr.bf16.mxu0 %v4556
        %4587 = vmatpush1.bf16.msra.mxu0 %v4555
        %4588 = vmatprep.subr.bf16.mxu0 %v4558
        %4589 = vmatpush1.bf16.msra.mxu0 %v4557
        %4590 = vmatprep.subr.bf16.mxu0 %v4560
        %4591 = vmatpush1.bf16.msra.mxu0 %v4559
        %4592 = vmatprep.subr.bf16.mxu0 %v4562
        %4593 = vmatpush1.bf16.msra.mxu0 %v4561
        %4594 = vmatprep.subr.bf16.mxu0 %v4564
        %4595 = vmatpush1.bf16.msra.mxu0 %v4563
        %4596 = vmatprep.subr.bf16.mxu0 %v4584
        %4597 = vmatpush1.bf16.msra.mxu0 %v4581
        %4598 = vmatprep.subr.bf16.mxu0 0
        %4599 = vmatpush1.bf16.msra.mxu0 0
        %4600 = vmatprep.subr.bf16.mxu0 0
        %4601 = vmatpush1.bf16.msra.mxu0 0
        %4602 = vmatprep.subr.bf16.mxu0 0
        %4603 = vmatpush1.bf16.msra.mxu0 0
        %4604 = vmatprep.subr.bf16.mxu0 0
        %4605 = vmatpush1.bf16.msra.mxu0 0
        %4606 = vmatprep.subr.bf16.mxu0 0
        %4607 = vmatpush1.bf16.msra.mxu0 0
        %4608 = vmatprep.subr.bf16.mxu0 0
        %4609 = vmatpush1.bf16.msra.mxu0 0
        %4610 = vmatprep.subr.bf16.mxu0 0
        %4611 = vmatpush1.bf16.msra.mxu0 0
        %4612 = vmatprep.subr.bf16.mxu0 0
        %4613 = vmatpush1.bf16.msra.mxu0 0
        %4614 = vmatprep.subr.bf16.mxu0 0
        %4615 = vmatpush1.bf16.msra.mxu0 0
        %4616 = vmatprep.subr.bf16.mxu0 0
        %4617 = vmatpush1.bf16.msra.mxu0 0
        %4618 = vmatprep.mubr.bf16.mxu0 0
        %4619 = vmatmul.mubr.bf16.gmra.mrb[0].mxu0 %v4578
        %v4620 = vpop.f32.mrb[0].mxu0
        %v4621 = vadd.f32 %v4424, %v4620
        %v4622 = vpop.f32.mrb[0].mxu0
        %v4623 = vadd.f32 %v4426, %v4622
        %v4624 = vpop.f32.mrb[0].mxu0
        %v4625 = vadd.f32 %v4428, %v4624
        %v4626 = vpop.f32.mrb[0].mxu0
        %v4627 = vadd.f32 %v4430, %v4626
        %4628 = vmatprep.mubr.bf16.mxu0 0
        %4629 = vmatmul.mubr.bf16.gmra.mrb[0].mxu0 %v4353
        %v4630 = vpop.f32.mrb[0].mxu0
        %v4631 = vadd.f32 %v4434, %v4630
        %v4632 = vpop.f32.mrb[0].mxu0
        %v4633 = vadd.f32 %v4436, %v4632
        %v4634 = vpop.f32.mrb[0].mxu0
        %v4635 = vadd.f32 %v4438, %v4634
        %v4636 = vpop.f32.mrb[0].mxu0
        %v4637 = vadd.f32 %v4440, %v4636
        %4638 = vmatprep.mubr.bf16.mxu0 0
        %4639 = vmatmul.mubr.bf16.gmra.mrb[0].mxu0 %v4356
        %v4640 = vpop.f32.mrb[0].mxu0
        %v4641 = vadd.f32 %v4444, %v4640
        %v4642 = vpop.f32.mrb[0].mxu0
        %v4643 = vadd.f32 %v4446, %v4642
        %v4644 = vpop.f32.mrb[0].mxu0
        %v4645 = vadd.f32 %v4448, %v4644
        %v4646 = vpop.f32.mrb[0].mxu0
        %v4647 = vadd.f32 %v4450, %v4646
        %4648 = vmatprep.mubr.bf16.mxu0 0
        %4649 = vmatmul.mubr.bf16.gmra.mrb[0].mxu0 %v4359
        %v4650 = vpop.f32.mrb[0].mxu0
        %v4651 = vadd.f32 %v4454, %v4650
        %v4652 = vpop.f32.mrb[0].mxu0
        %v4653 = vadd.f32 %v4456, %v4652
        %v4654 = vpop.f32.mrb[0].mxu0
        %v4655 = vadd.f32 %v4458, %v4654
        %v4656 = vpop.f32.mrb[0].mxu0
        %v4657 = vadd.f32 %v4460, %v4656
        %4658 = vmatprep.mubr.bf16.mxu0 0
        %4659 = vmatmul.mubr.bf16.gmra.mrb[0].mxu0 %v4362
        %v4660 = vpop.f32.mrb[0].mxu0
        %v4661 = vadd.f32 %v4464, %v4660
        %v4662 = vpop.f32.mrb[0].mxu0
        %v4663 = vadd.f32 %v4466, %v4662
        %v4664 = vpop.f32.mrb[0].mxu0
        %v4665 = vadd.f32 %v4468, %v4664
        %v4666 = vpop.f32.mrb[0].mxu0
        %v4667 = vadd.f32 %v4470, %v4666
        %4668 = vmatprep.mubr.bf16.mxu0 0
        %4669 = vmatmul.mubr.bf16.gmra.mrb[0].mxu0 %v4365
        %v4670 = vpop.f32.mrb[0].mxu0
        %v4671 = vadd.f32 %v4474, %v4670
        %v4672 = vpop.f32.mrb[0].mxu0
        %v4673 = vadd.f32 %v4476, %v4672
        %v4674 = vpop.f32.mrb[0].mxu0
        %v4675 = vadd.f32 %v4478, %v4674
        %v4676 = vpop.f32.mrb[0].mxu0
        %v4677 = vadd.f32 %v4480, %v4676
        %4678 = vmatprep.mubr.bf16.mxu0 0
        %4679 = vmatmul.mubr.bf16.gmra.mrb[0].mxu0 %v4368
        %v4680 = vpop.f32.mrb[0].mxu0
        %v4681 = vadd.f32 %v4484, %v4680
        %v4682 = vpop.f32.mrb[0].mxu0
        %v4683 = vadd.f32 %v4486, %v4682
        %v4684 = vpop.f32.mrb[0].mxu0
        %v4685 = vadd.f32 %v4488, %v4684
        %v4686 = vpop.f32.mrb[0].mxu0
        %v4687 = vadd.f32 %v4490, %v4686
        %4688 = vmatprep.mubr.bf16.mxu0 0
        %4689 = vmatmul.mubr.bf16.gmra.mrb[0].mxu0 %v4371
        %v4690 = vpop.f32.mrb[0].mxu0
        %v4691 = vadd.f32 %v4494, %v4690
        %v4692 = vpop.f32.mrb[0].mxu0
        %v4693 = vadd.f32 %v4496, %v4692
        %v4694 = vpop.f32.mrb[0].mxu0
        %v4695 = vadd.f32 %v4498, %v4694
        %v4696 = vpop.f32.mrb[0].mxu0
        %v4697 = vadd.f32 %v4500, %v4696
        %4698 = vmatprep.mubr.bf16.mxu0 0
        %4699 = vmatmul.mubr.bf16.gmra.mrb[0].mxu0 %v4374
        %v4700 = vpop.f32.mrb[0].mxu0
        %v4701 = vadd.f32 %v4504, %v4700
        %v4702 = vpop.f32.mrb[0].mxu0
        %v4703 = vadd.f32 %v4506, %v4702
        %v4704 = vpop.f32.mrb[0].mxu0
        %v4705 = vadd.f32 %v4508, %v4704
        %v4706 = vpop.f32.mrb[0].mxu0
        %v4707 = vadd.f32 %v4510, %v4706
        %4708 = vmatprep.mubr.bf16.mxu0 0
        %4709 = vmatmul.mubr.bf16.gmra.mrb[0].mxu0 %v4377
        %v4710 = vpop.f32.mrb[0].mxu0
        %v4711 = vadd.f32 %v4514, %v4710
        %v4712 = vpop.f32.mrb[0].mxu0
        %v4713 = vadd.f32 %v4516, %v4712
        %v4714 = vpop.f32.mrb[0].mxu0
        %v4715 = vadd.f32 %v4518, %v4714
        %v4716 = vpop.f32.mrb[0].mxu0
        %v4717 = vadd.f32 %v4520, %v4716
        %4718 = vdwg.mxu0
        %s4719 = scalar_lea.vmem %s4, 176
        %v4720 = vld [vmem:[%s4719] sm:$0xff]
        %v4721 = vld [vmem:[%s4719 + $0x8] sm:$0xff]
        %v4722 = vld [vmem:[%s4719 + $0x10] sm:$0xff]
        %v4723 = vld [vmem:[%s4719 + $0x18] sm:$0xff]
        %v4724 = vld [vmem:[%s4719 + $0x20] sm:$0xff]
        %v4725 = vld [vmem:[%s4719 + $0x28] sm:$0xff]
        %v4726 = vld [vmem:[%s4719 + $0x30] sm:$0xff]
        %v4727 = vld [vmem:[%s4719 + $0x38] sm:$0xff]
        %v4728 = vld [vmem:[%s4719 + $0x40] sm:$0xff]
        %v4729 = vld [vmem:[%s4719 + $0x48] sm:$0xff]
        %v4730 = vld [vmem:[%s4719 + $0x50] sm:$0x33]
        %v4742 = vunpack.c.l.b16 %v4720
        %v4743 = vunpack.c.h.b16 %v4720
        %v4744 = vunpack.c.l.b16 %v4721
        %v4745 = vunpack.c.h.b16 %v4721
        %v4746 = vunpack.c.l.b16 %v4722
        %v4747 = vunpack.c.h.b16 %v4722
        %v4748 = vunpack.c.l.b16 %v4723
        %v4749 = vunpack.c.h.b16 %v4723
        %v4750 = vunpack.c.l.b16 %v4724
        %v4751 = vunpack.c.h.b16 %v4724
        %v4752 = vunpack.c.l.b16 %v4725
        %v4753 = vunpack.c.h.b16 %v4725
        %v4754 = vunpack.c.l.b16 %v4726
        %v4755 = vunpack.c.h.b16 %v4726
        %v4756 = vunpack.c.l.b16 %v4727
        %v4757 = vunpack.c.h.b16 %v4727
        %v4758 = vunpack.c.l.b16 %v4728
        %v4759 = vunpack.c.h.b16 %v4728
        %v4760 = vunpack.c.l.b16 %v4729
        %v4761 = vunpack.c.h.b16 %v4729
        %v4762 = vunpack.c.l.b16 %v4730
        %v4763 = vunpack.c.h.b16 %v4730
        %v4764 = vpack.c.b16 %v4744, %v4742
        %v4765 = vpack.c.b16 %v4745, %v4743
        %v4766 = vpack.c.b16 %v4748, %v4746
        %v4767 = vpack.c.b16 %v4749, %v4747
        %v4768 = vpack.c.b16 %v4752, %v4750
        %v4769 = vpack.c.b16 %v4753, %v4751
        %v4770 = vpack.c.b16 %v4756, %v4754
        %v4771 = vpack.c.b16 %v4757, %v4755
        %v4772 = vpack.c.b16 %v4760, %v4758
        %v4773 = vpack.c.b16 %v4761, %v4759
        %v4774 = vpack.c.b16 %v4762, %v4762
        %v4775 = vpack.c.b16 %v4763, %v4763
        %v4787 = vsel %vm4351, %v4270, 0
        %v4790 = vsel %vm4382, %v4774, 0
        %v4793 = vsel %vm4382, %v4775, 0
        %4795 = vmatprep.subr.bf16.mxu0 %v4765
        %4796 = vmatpush1.bf16.msra.mxu0 %v4764
        %4797 = vmatprep.subr.bf16.mxu0 %v4767
        %4798 = vmatpush1.bf16.msra.mxu0 %v4766
        %4799 = vmatprep.subr.bf16.mxu0 %v4769
        %4800 = vmatpush1.bf16.msra.mxu0 %v4768
        %4801 = vmatprep.subr.bf16.mxu0 %v4771
        %4802 = vmatpush1.bf16.msra.mxu0 %v4770
        %4803 = vmatprep.subr.bf16.mxu0 %v4773
        %4804 = vmatpush1.bf16.msra.mxu0 %v4772
        %4805 = vmatprep.subr.bf16.mxu0 %v4793
        %4806 = vmatpush1.bf16.msra.mxu0 %v4790
        %4807 = vmatprep.subr.bf16.mxu0 0
        %4808 = vmatpush1.bf16.msra.mxu0 0
        %4809 = vmatprep.subr.bf16.mxu0 0
        %4810 = vmatpush1.bf16.msra.mxu0 0
        %4811 = vmatprep.subr.bf16.mxu0 0
        %4812 = vmatpush1.bf16.msra.mxu0 0
        %4813 = vmatprep.subr.bf16.mxu0 0
        %4814 = vmatpush1.bf16.msra.mxu0 0
        %4815 = vmatprep.subr.bf16.mxu0 0
        %4816 = vmatpush1.bf16.msra.mxu0 0
        %4817 = vmatprep.subr.bf16.mxu0 0
        %4818 = vmatpush1.bf16.msra.mxu0 0
        %4819 = vmatprep.subr.bf16.mxu0 0
        %4820 = vmatpush1.bf16.msra.mxu0 0
        %4821 = vmatprep.subr.bf16.mxu0 0
        %4822 = vmatpush1.bf16.msra.mxu0 0
        %4823 = vmatprep.subr.bf16.mxu0 0
        %4824 = vmatpush1.bf16.msra.mxu0 0
        %4825 = vmatprep.subr.bf16.mxu0 0
        %4826 = vmatpush1.bf16.msra.mxu0 0
        %4827 = vmatprep.mubr.bf16.mxu0 0
        %4828 = vmatmul.mubr.bf16.gmra.mrb[0].mxu0 %v4356
        %v4829 = vpop.f32.mrb[0].mxu0
        %v4830 = vadd.f32 0.0, %v4829
        %v4831 = vpop.f32.mrb[0].mxu0
        %v4832 = vadd.f32 0.0, %v4831
        %v4833 = vpop.f32.mrb[0].mxu0
        %v4834 = vadd.f32 0.0, %v4833
        %v4835 = vpop.f32.mrb[0].mxu0
        %v4836 = vadd.f32 0.0, %v4835
        %4837 = vmatprep.mubr.bf16.mxu0 0
        %4838 = vmatmul.mubr.bf16.gmra.mrb[0].mxu0 %v4359
        %v4839 = vpop.f32.mrb[0].mxu0
        %v4840 = vadd.f32 0.0, %v4839
        %v4841 = vpop.f32.mrb[0].mxu0
        %v4842 = vadd.f32 0.0, %v4841
        %v4843 = vpop.f32.mrb[0].mxu0
        %v4844 = vadd.f32 0.0, %v4843
        %v4845 = vpop.f32.mrb[0].mxu0
        %v4846 = vadd.f32 0.0, %v4845
        %4847 = vmatprep.mubr.bf16.mxu0 0
        %4848 = vmatmul.mubr.bf16.gmra.mrb[0].mxu0 %v4362
        %v4849 = vpop.f32.mrb[0].mxu0
        %v4850 = vadd.f32 0.0, %v4849
        %v4851 = vpop.f32.mrb[0].mxu0
        %v4852 = vadd.f32 0.0, %v4851
        %v4853 = vpop.f32.mrb[0].mxu0
        %v4854 = vadd.f32 0.0, %v4853
        %v4855 = vpop.f32.mrb[0].mxu0
        %v4856 = vadd.f32 0.0, %v4855
        %4857 = vmatprep.mubr.bf16.mxu0 0
        %4858 = vmatmul.mubr.bf16.gmra.mrb[0].mxu0 %v4365
        %v4859 = vpop.f32.mrb[0].mxu0
        %v4860 = vadd.f32 0.0, %v4859
        %v4861 = vpop.f32.mrb[0].mxu0
        %v4862 = vadd.f32 0.0, %v4861
        %v4863 = vpop.f32.mrb[0].mxu0
        %v4864 = vadd.f32 0.0, %v4863
        %v4865 = vpop.f32.mrb[0].mxu0
        %v4866 = vadd.f32 0.0, %v4865
        %4867 = vmatprep.mubr.bf16.mxu0 0
        %4868 = vmatmul.mubr.bf16.gmra.mrb[0].mxu0 %v4368
        %v4869 = vpop.f32.mrb[0].mxu0
        %v4870 = vadd.f32 0.0, %v4869
        %v4871 = vpop.f32.mrb[0].mxu0
        %v4872 = vadd.f32 0.0, %v4871
        %v4873 = vpop.f32.mrb[0].mxu0
        %v4874 = vadd.f32 0.0, %v4873
        %v4875 = vpop.f32.mrb[0].mxu0
        %v4876 = vadd.f32 0.0, %v4875
        %4877 = vmatprep.mubr.bf16.mxu0 0
        %4878 = vmatmul.mubr.bf16.gmra.mrb[0].mxu0 %v4371
        %v4879 = vpop.f32.mrb[0].mxu0
        %v4880 = vadd.f32 0.0, %v4879
        %v4881 = vpop.f32.mrb[0].mxu0
        %v4882 = vadd.f32 0.0, %v4881
        %v4883 = vpop.f32.mrb[0].mxu0
        %v4884 = vadd.f32 0.0, %v4883
        %v4885 = vpop.f32.mrb[0].mxu0
        %v4886 = vadd.f32 0.0, %v4885
        %4887 = vmatprep.mubr.bf16.mxu0 0
        %4888 = vmatmul.mubr.bf16.gmra.mrb[0].mxu0 %v4374
        %v4889 = vpop.f32.mrb[0].mxu0
        %v4890 = vadd.f32 0.0, %v4889
        %v4891 = vpop.f32.mrb[0].mxu0
        %v4892 = vadd.f32 0.0, %v4891
        %v4893 = vpop.f32.mrb[0].mxu0
        %v4894 = vadd.f32 0.0, %v4893
        %v4895 = vpop.f32.mrb[0].mxu0
        %v4896 = vadd.f32 0.0, %v4895
        %4897 = vmatprep.mubr.bf16.mxu0 0
        %4898 = vmatmul.mubr.bf16.gmra.mrb[0].mxu0 %v4377
        %v4899 = vpop.f32.mrb[0].mxu0
        %v4900 = vadd.f32 0.0, %v4899
        %v4901 = vpop.f32.mrb[0].mxu0
        %v4902 = vadd.f32 0.0, %v4901
        %v4903 = vpop.f32.mrb[0].mxu0
        %v4904 = vadd.f32 0.0, %v4903
        %v4905 = vpop.f32.mrb[0].mxu0
        %v4906 = vadd.f32 0.0, %v4905
        %4907 = vmatprep.mubr.bf16.mxu0 0
        %4908 = vmatmul.mubr.bf16.gmra.mrb[0].mxu0 %v4380
        %v4909 = vpop.f32.mrb[0].mxu0
        %v4910 = vadd.f32 0.0, %v4909
        %v4911 = vpop.f32.mrb[0].mxu0
        %v4912 = vadd.f32 0.0, %v4911
        %v4913 = vpop.f32.mrb[0].mxu0
        %v4914 = vadd.f32 0.0, %v4913
        %v4915 = vpop.f32.mrb[0].mxu0
        %v4916 = vadd.f32 0.0, %v4915
        %4917 = vmatprep.mubr.bf16.mxu0 0
        %4918 = vmatmul.mubr.bf16.gmra.mrb[0].mxu0 %v4787
        %v4919 = vpop.f32.mrb[0].mxu0
        %v4920 = vadd.f32 0.0, %v4919
        %v4921 = vpop.f32.mrb[0].mxu0
        %v4922 = vadd.f32 0.0, %v4921
        %v4923 = vpop.f32.mrb[0].mxu0
        %v4924 = vadd.f32 0.0, %v4923
        %v4925 = vpop.f32.mrb[0].mxu0
        %v4926 = vadd.f32 0.0, %v4925
        %4927 = vdwg.mxu0
        %v4928 = vadd.f32 %v4621, %v4830
        %v4929 = vadd.f32 %v4623, %v4832
        %v4930 = vadd.f32 %v4625, %v4834
        %v4931 = vadd.f32 %v4627, %v4836
        %v4932 = vadd.f32 %v4631, %v4840
        %v4933 = vadd.f32 %v4633, %v4842
        %v4934 = vadd.f32 %v4635, %v4844
        %v4935 = vadd.f32 %v4637, %v4846
        %v4936 = vadd.f32 %v4641, %v4850
        %v4937 = vadd.f32 %v4643, %v4852
        %v4938 = vadd.f32 %v4645, %v4854
        %v4939 = vadd.f32 %v4647, %v4856
        %v4940 = vadd.f32 %v4651, %v4860
        %v4941 = vadd.f32 %v4653, %v4862
        %v4942 = vadd.f32 %v4655, %v4864
        %v4943 = vadd.f32 %v4657, %v4866
        %v4944 = vadd.f32 %v4661, %v4870
        %v4945 = vadd.f32 %v4663, %v4872
        %v4946 = vadd.f32 %v4665, %v4874
        %v4947 = vadd.f32 %v4667, %v4876
        %v4948 = vadd.f32 %v4671, %v4880
        %v4949 = vadd.f32 %v4673, %v4882
        %v4950 = vadd.f32 %v4675, %v4884
        %v4951 = vadd.f32 %v4677, %v4886
        %v4952 = vadd.f32 %v4681, %v4890
        %v4953 = vadd.f32 %v4683, %v4892
        %v4954 = vadd.f32 %v4685, %v4894
        %v4955 = vadd.f32 %v4687, %v4896
        %v4956 = vadd.f32 %v4691, %v4900
        %v4957 = vadd.f32 %v4693, %v4902
        %v4958 = vadd.f32 %v4695, %v4904
        %v4959 = vadd.f32 %v4697, %v4906
        %v4960 = vadd.f32 %v4701, %v4910
        %v4961 = vadd.f32 %v4703, %v4912
        %v4962 = vadd.f32 %v4705, %v4914
        %v4963 = vadd.f32 %v4707, %v4916
        %v4964 = vadd.f32 %v4711, %v4920
        %v4965 = vadd.f32 %v4713, %v4922
        %v4966 = vadd.f32 %v4715, %v4924
        %v4967 = vadd.f32 %v4717, %v4926
        %s4968 = scalar_lea.vmem %s4, 264
        %v4969 = vld [vmem:[%s4968] sm:$0xff]
        %v4970 = vld [vmem:[%s4968 + $0x8] sm:$0xff]
        %v4971 = vld [vmem:[%s4968 + $0x10] sm:$0xff]
        %v4972 = vld [vmem:[%s4968 + $0x18] sm:$0xff]
        %v4973 = vld [vmem:[%s4968 + $0x20] sm:$0xff]
        %v4974 = vld [vmem:[%s4968 + $0x28] sm:$0xff]
        %v4975 = vld [vmem:[%s4968 + $0x30] sm:$0xff]
        %v4976 = vld [vmem:[%s4968 + $0x38] sm:$0xff]
        %v4977 = vld [vmem:[%s4968 + $0x40] sm:$0xff]
        %v4978 = vld [vmem:[%s4968 + $0x48] sm:$0xff]
        %v4979 = vld [vmem:[%s4968 + $0x50] sm:$0x33]
        %v4991 = vunpack.c.l.b16 %v4969
        %v4992 = vunpack.c.h.b16 %v4969
        %v4993 = vunpack.c.l.b16 %v4970
        %v4994 = vunpack.c.h.b16 %v4970
        %v4995 = vunpack.c.l.b16 %v4971
        %v4996 = vunpack.c.h.b16 %v4971
        %v4997 = vunpack.c.l.b16 %v4972
        %v4998 = vunpack.c.h.b16 %v4972
        %v4999 = vunpack.c.l.b16 %v4973
        %v5000 = vunpack.c.h.b16 %v4973
        %v5001 = vunpack.c.l.b16 %v4974
        %v5002 = vunpack.c.h.b16 %v4974
        %v5003 = vunpack.c.l.b16 %v4975
        %v5004 = vunpack.c.h.b16 %v4975
        %v5005 = vunpack.c.l.b16 %v4976
        %v5006 = vunpack.c.h.b16 %v4976
        %v5007 = vunpack.c.l.b16 %v4977
        %v5008 = vunpack.c.h.b16 %v4977
        %v5009 = vunpack.c.l.b16 %v4978
        %v5010 = vunpack.c.h.b16 %v4978
        %v5011 = vunpack.c.l.b16 %v4979
        %v5012 = vunpack.c.h.b16 %v4979
        %v5013 = vpack.c.b16 %v4993, %v4991
        %v5014 = vpack.c.b16 %v4994, %v4992
        %v5015 = vpack.c.b16 %v4997, %v4995
        %v5016 = vpack.c.b16 %v4998, %v4996
        %v5017 = vpack.c.b16 %v5001, %v4999
        %v5018 = vpack.c.b16 %v5002, %v5000
        %v5019 = vpack.c.b16 %v5005, %v5003
        %v5020 = vpack.c.b16 %v5006, %v5004
        %v5021 = vpack.c.b16 %v5009, %v5007
        %v5022 = vpack.c.b16 %v5010, %v5008
        %v5023 = vpack.c.b16 %v5011, %v5011
        %v5024 = vpack.c.b16 %v5012, %v5012
        %v5036 = vsel %vm4351, %v4271, 0
        %v5039 = vsel %vm4382, %v5023, 0
        %v5042 = vsel %vm4382, %v5024, 0
        %5044 = vmatprep.subr.bf16.mxu0 %v5014
        %5045 = vmatpush1.bf16.msra.mxu0 %v5013
        %5046 = vmatprep.subr.bf16.mxu0 %v5016
        %5047 = vmatpush1.bf16.msra.mxu0 %v5015
        %5048 = vmatprep.subr.bf16.mxu0 %v5018
        %5049 = vmatpush1.bf16.msra.mxu0 %v5017
        %5050 = vmatprep.subr.bf16.mxu0 %v5020
        %5051 = vmatpush1.bf16.msra.mxu0 %v5019
        %5052 = vmatprep.subr.bf16.mxu0 %v5022
        %5053 = vmatpush1.bf16.msra.mxu0 %v5021
        %5054 = vmatprep.subr.bf16.mxu0 %v5042
        %5055 = vmatpush1.bf16.msra.mxu0 %v5039
        %5056 = vmatprep.subr.bf16.mxu0 0
        %5057 = vmatpush1.bf16.msra.mxu0 0
        %5058 = vmatprep.subr.bf16.mxu0 0
        %5059 = vmatpush1.bf16.msra.mxu0 0
        %5060 = vmatprep.subr.bf16.mxu0 0
        %5061 = vmatpush1.bf16.msra.mxu0 0
        %5062 = vmatprep.subr.bf16.mxu0 0
        %5063 = vmatpush1.bf16.msra.mxu0 0
        %5064 = vmatprep.subr.bf16.mxu0 0
        %5065 = vmatpush1.bf16.msra.mxu0 0
        %5066 = vmatprep.subr.bf16.mxu0 0
        %5067 = vmatpush1.bf16.msra.mxu0 0
        %5068 = vmatprep.subr.bf16.mxu0 0
        %5069 = vmatpush1.bf16.msra.mxu0 0
        %5070 = vmatprep.subr.bf16.mxu0 0
        %5071 = vmatpush1.bf16.msra.mxu0 0
        %5072 = vmatprep.subr.bf16.mxu0 0
        %5073 = vmatpush1.bf16.msra.mxu0 0
        %5074 = vmatprep.subr.bf16.mxu0 0
        %5075 = vmatpush1.bf16.msra.mxu0 0
        %5076 = vmatprep.mubr.bf16.mxu0 0
        %5077 = vmatmul.mubr.bf16.gmra.mrb[0].mxu0 %v4359
        %v5078 = vpop.f32.mrb[0].mxu0
        %v5079 = vadd.f32 0.0, %v5078
        %v5080 = vpop.f32.mrb[0].mxu0
        %v5081 = vadd.f32 0.0, %v5080
        %v5082 = vpop.f32.mrb[0].mxu0
        %v5083 = vadd.f32 0.0, %v5082
        %v5084 = vpop.f32.mrb[0].mxu0
        %v5085 = vadd.f32 0.0, %v5084
        %5086 = vmatprep.mubr.bf16.mxu0 0
        %5087 = vmatmul.mubr.bf16.gmra.mrb[0].mxu0 %v4362
        %v5088 = vpop.f32.mrb[0].mxu0
        %v5089 = vadd.f32 0.0, %v5088
        %v5090 = vpop.f32.mrb[0].mxu0
        %v5091 = vadd.f32 0.0, %v5090
        %v5092 = vpop.f32.mrb[0].mxu0
        %v5093 = vadd.f32 0.0, %v5092
        %v5094 = vpop.f32.mrb[0].mxu0
        %v5095 = vadd.f32 0.0, %v5094
        %5096 = vmatprep.mubr.bf16.mxu0 0
        %5097 = vmatmul.mubr.bf16.gmra.mrb[0].mxu0 %v4365
        %v5098 = vpop.f32.mrb[0].mxu0
        %v5099 = vadd.f32 0.0, %v5098
        %v5100 = vpop.f32.mrb[0].mxu0
        %v5101 = vadd.f32 0.0, %v5100
        %v5102 = vpop.f32.mrb[0].mxu0
        %v5103 = vadd.f32 0.0, %v5102
        %v5104 = vpop.f32.mrb[0].mxu0
        %v5105 = vadd.f32 0.0, %v5104
        %5106 = vmatprep.mubr.bf16.mxu0 0
        %5107 = vmatmul.mubr.bf16.gmra.mrb[0].mxu0 %v4368
        %v5108 = vpop.f32.mrb[0].mxu0
        %v5109 = vadd.f32 0.0, %v5108
        %v5110 = vpop.f32.mrb[0].mxu0
        %v5111 = vadd.f32 0.0, %v5110
        %v5112 = vpop.f32.mrb[0].mxu0
        %v5113 = vadd.f32 0.0, %v5112
        %v5114 = vpop.f32.mrb[0].mxu0
        %v5115 = vadd.f32 0.0, %v5114
        %5116 = vmatprep.mubr.bf16.mxu0 0
        %5117 = vmatmul.mubr.bf16.gmra.mrb[0].mxu0 %v4371
        %v5118 = vpop.f32.mrb[0].mxu0
        %v5119 = vadd.f32 0.0, %v5118
        %v5120 = vpop.f32.mrb[0].mxu0
        %v5121 = vadd.f32 0.0, %v5120
        %v5122 = vpop.f32.mrb[0].mxu0
        %v5123 = vadd.f32 0.0, %v5122
        %v5124 = vpop.f32.mrb[0].mxu0
        %v5125 = vadd.f32 0.0, %v5124
        %5126 = vmatprep.mubr.bf16.mxu0 0
        %5127 = vmatmul.mubr.bf16.gmra.mrb[0].mxu0 %v4374
        %v5128 = vpop.f32.mrb[0].mxu0
        %v5129 = vadd.f32 0.0, %v5128
        %v5130 = vpop.f32.mrb[0].mxu0
        %v5131 = vadd.f32 0.0, %v5130
        %v5132 = vpop.f32.mrb[0].mxu0
        %v5133 = vadd.f32 0.0, %v5132
        %v5134 = vpop.f32.mrb[0].mxu0
        %v5135 = vadd.f32 0.0, %v5134
        %5136 = vmatprep.mubr.bf16.mxu0 0
        %5137 = vmatmul.mubr.bf16.gmra.mrb[0].mxu0 %v4377
        %v5138 = vpop.f32.mrb[0].mxu0
        %v5139 = vadd.f32 0.0, %v5138
        %v5140 = vpop.f32.mrb[0].mxu0
        %v5141 = vadd.f32 0.0, %v5140
        %v5142 = vpop.f32.mrb[0].mxu0
        %v5143 = vadd.f32 0.0, %v5142
        %v5144 = vpop.f32.mrb[0].mxu0
        %v5145 = vadd.f32 0.0, %v5144
        %5146 = vmatprep.mubr.bf16.mxu0 0
        %5147 = vmatmul.mubr.bf16.gmra.mrb[0].mxu0 %v4380
        %v5148 = vpop.f32.mrb[0].mxu0
        %v5149 = vadd.f32 0.0, %v5148
        %v5150 = vpop.f32.mrb[0].mxu0
        %v5151 = vadd.f32 0.0, %v5150
        %v5152 = vpop.f32.mrb[0].mxu0
        %v5153 = vadd.f32 0.0, %v5152
        %v5154 = vpop.f32.mrb[0].mxu0
        %v5155 = vadd.f32 0.0, %v5154
        %5156 = vmatprep.mubr.bf16.mxu0 0
        %5157 = vmatmul.mubr.bf16.gmra.mrb[0].mxu0 %v4787
        %v5158 = vpop.f32.mrb[0].mxu0
        %v5159 = vadd.f32 0.0, %v5158
        %v5160 = vpop.f32.mrb[0].mxu0
        %v5161 = vadd.f32 0.0, %v5160
        %v5162 = vpop.f32.mrb[0].mxu0
        %v5163 = vadd.f32 0.0, %v5162
        %v5164 = vpop.f32.mrb[0].mxu0
        %v5165 = vadd.f32 0.0, %v5164
        %5166 = vmatprep.mubr.bf16.mxu0 0
        %5167 = vmatmul.mubr.bf16.gmra.mrb[0].mxu0 %v5036
        %v5168 = vpop.f32.mrb[0].mxu0
        %v5169 = vadd.f32 0.0, %v5168
        %v5170 = vpop.f32.mrb[0].mxu0
        %v5171 = vadd.f32 0.0, %v5170
        %v5172 = vpop.f32.mrb[0].mxu0
        %v5173 = vadd.f32 0.0, %v5172
        %v5174 = vpop.f32.mrb[0].mxu0
        %v5175 = vadd.f32 0.0, %v5174
        %5176 = vdwg.mxu0
        %v5177 = vadd.f32 %v4928, %v5079
        %v5178 = vadd.f32 %v4929, %v5081
        %v5179 = vadd.f32 %v4930, %v5083
        %v5180 = vadd.f32 %v4931, %v5085
        %v5181 = vadd.f32 %v4932, %v5089
        %v5182 = vadd.f32 %v4933, %v5091
        %v5183 = vadd.f32 %v4934, %v5093
        %v5184 = vadd.f32 %v4935, %v5095
        %v5185 = vadd.f32 %v4936, %v5099
        %v5186 = vadd.f32 %v4937, %v5101
        %v5187 = vadd.f32 %v4938, %v5103
        %v5188 = vadd.f32 %v4939, %v5105
        %v5189 = vadd.f32 %v4940, %v5109
        %v5190 = vadd.f32 %v4941, %v5111
        %v5191 = vadd.f32 %v4942, %v5113
        %v5192 = vadd.f32 %v4943, %v5115
        %v5193 = vadd.f32 %v4944, %v5119
        %v5194 = vadd.f32 %v4945, %v5121
        %v5195 = vadd.f32 %v4946, %v5123
        %v5196 = vadd.f32 %v4947, %v5125
        %v5197 = vadd.f32 %v4948, %v5129
        %v5198 = vadd.f32 %v4949, %v5131
        %v5199 = vadd.f32 %v4950, %v5133
        %v5200 = vadd.f32 %v4951, %v5135
        %v5201 = vadd.f32 %v4952, %v5139
        %v5202 = vadd.f32 %v4953, %v5141
        %v5203 = vadd.f32 %v4954, %v5143
        %v5204 = vadd.f32 %v4955, %v5145
        %v5205 = vadd.f32 %v4956, %v5149
        %v5206 = vadd.f32 %v4957, %v5151
        %v5207 = vadd.f32 %v4958, %v5153
        %v5208 = vadd.f32 %v4959, %v5155
        %v5209 = vadd.f32 %v4960, %v5159
        %v5210 = vadd.f32 %v4961, %v5161
        %v5211 = vadd.f32 %v4962, %v5163
        %v5212 = vadd.f32 %v4963, %v5165
        %v5213 = vadd.f32 %v4964, %v5169
        %v5214 = vadd.f32 %v4965, %v5171
        %v5215 = vadd.f32 %v4966, %v5173
        %v5216 = vadd.f32 %v4967, %v5175
        %s5217 = scalar_lea.vmem %s4, 352
        %v5218 = vld [vmem:[%s5217] sm:$0xff]
        %v5219 = vld [vmem:[%s5217 + $0x8] sm:$0xff]
        %v5220 = vld [vmem:[%s5217 + $0x10] sm:$0xff]
        %v5221 = vld [vmem:[%s5217 + $0x18] sm:$0xff]
        %v5222 = vld [vmem:[%s5217 + $0x20] sm:$0xff]
        %v5223 = vld [vmem:[%s5217 + $0x28] sm:$0xff]
        %v5224 = vld [vmem:[%s5217 + $0x30] sm:$0xff]
        %v5225 = vld [vmem:[%s5217 + $0x38] sm:$0xff]
        %v5226 = vld [vmem:[%s5217 + $0x40] sm:$0xff]
        %v5227 = vld [vmem:[%s5217 + $0x48] sm:$0xff]
        %v5228 = vld [vmem:[%s5217 + $0x50] sm:$0x33]
        %v5240 = vunpack.c.l.b16 %v5218
        %v5241 = vunpack.c.h.b16 %v5218
        %v5242 = vunpack.c.l.b16 %v5219
        %v5243 = vunpack.c.h.b16 %v5219
        %v5244 = vunpack.c.l.b16 %v5220
        %v5245 = vunpack.c.h.b16 %v5220
        %v5246 = vunpack.c.l.b16 %v5221
        %v5247 = vunpack.c.h.b16 %v5221
        %v5248 = vunpack.c.l.b16 %v5222
        %v5249 = vunpack.c.h.b16 %v5222
        %v5250 = vunpack.c.l.b16 %v5223
        %v5251 = vunpack.c.h.b16 %v5223
        %v5252 = vunpack.c.l.b16 %v5224
        %v5253 = vunpack.c.h.b16 %v5224
        %v5254 = vunpack.c.l.b16 %v5225
        %v5255 = vunpack.c.h.b16 %v5225
        %v5256 = vunpack.c.l.b16 %v5226
        %v5257 = vunpack.c.h.b16 %v5226
        %v5258 = vunpack.c.l.b16 %v5227
        %v5259 = vunpack.c.h.b16 %v5227
        %v5260 = vunpack.c.l.b16 %v5228
        %v5261 = vunpack.c.h.b16 %v5228
        %v5262 = vpack.c.b16 %v5242, %v5240
        %v5263 = vpack.c.b16 %v5243, %v5241
        %v5264 = vpack.c.b16 %v5246, %v5244
        %v5265 = vpack.c.b16 %v5247, %v5245
        %v5266 = vpack.c.b16 %v5250, %v5248
        %v5267 = vpack.c.b16 %v5251, %v5249
        %v5268 = vpack.c.b16 %v5254, %v5252
        %v5269 = vpack.c.b16 %v5255, %v5253
        %v5270 = vpack.c.b16 %v5258, %v5256
        %v5271 = vpack.c.b16 %v5259, %v5257
        %v5272 = vpack.c.b16 %v5260, %v5260
        %v5273 = vpack.c.b16 %v5261, %v5261
        %v5285 = vsel %vm4351, %v4272, 0
        %v5288 = vsel %vm4382, %v5272, 0
        %v5291 = vsel %vm4382, %v5273, 0
        %5293 = vmatprep.subr.bf16.mxu0 %v5263
        %5294 = vmatpush1.bf16.msra.mxu0 %v5262
        %5295 = vmatprep.subr.bf16.mxu0 %v5265
        %5296 = vmatpush1.bf16.msra.mxu0 %v5264
        %5297 = vmatprep.subr.bf16.mxu0 %v5267
        %5298 = vmatpush1.bf16.msra.mxu0 %v5266
        %5299 = vmatprep.subr.bf16.mxu0 %v5269
        %5300 = vmatpush1.bf16.msra.mxu0 %v5268
        %5301 = vmatprep.subr.bf16.mxu0 %v5271
        %5302 = vmatpush1.bf16.msra.mxu0 %v5270
        %5303 = vmatprep.subr.bf16.mxu0 %v5291
        %5304 = vmatpush1.bf16.msra.mxu0 %v5288
        %5305 = vmatprep.subr.bf16.mxu0 0
        %5306 = vmatpush1.bf16.msra.mxu0 0
        %5307 = vmatprep.subr.bf16.mxu0 0
        %5308 = vmatpush1.bf16.msra.mxu0 0
        %5309 = vmatprep.subr.bf16.mxu0 0
        %5310 = vmatpush1.bf16.msra.mxu0 0
        %5311 = vmatprep.subr.bf16.mxu0 0
        %5312 = vmatpush1.bf16.msra.mxu0 0
        %5313 = vmatprep.subr.bf16.mxu0 0
        %5314 = vmatpush1.bf16.msra.mxu0 0
        %5315 = vmatprep.subr.bf16.mxu0 0
        %5316 = vmatpush1.bf16.msra.mxu0 0
        %5317 = vmatprep.subr.bf16.mxu0 0
        %5318 = vmatpush1.bf16.msra.mxu0 0
        %5319 = vmatprep.subr.bf16.mxu0 0
        %5320 = vmatpush1.bf16.msra.mxu0 0
        %5321 = vmatprep.subr.bf16.mxu0 0
        %5322 = vmatpush1.bf16.msra.mxu0 0
        %5323 = vmatprep.subr.bf16.mxu0 0
        %5324 = vmatpush1.bf16.msra.mxu0 0
        %5325 = vmatprep.mubr.bf16.mxu0 0
        %5326 = vmatmul.mubr.bf16.gmra.mrb[0].mxu0 %v4362
        %v5327 = vpop.f32.mrb[0].mxu0
        %v5328 = vadd.f32 0.0, %v5327
        %v5329 = vpop.f32.mrb[0].mxu0
        %v5330 = vadd.f32 0.0, %v5329
        %v5331 = vpop.f32.mrb[0].mxu0
        %v5332 = vadd.f32 0.0, %v5331
        %v5333 = vpop.f32.mrb[0].mxu0
        %v5334 = vadd.f32 0.0, %v5333
        %5335 = vmatprep.mubr.bf16.mxu0 0
        %5336 = vmatmul.mubr.bf16.gmra.mrb[0].mxu0 %v4365
        %v5337 = vpop.f32.mrb[0].mxu0
        %v5338 = vadd.f32 0.0, %v5337
        %v5339 = vpop.f32.mrb[0].mxu0
        %v5340 = vadd.f32 0.0, %v5339
        %v5341 = vpop.f32.mrb[0].mxu0
        %v5342 = vadd.f32 0.0, %v5341
        %v5343 = vpop.f32.mrb[0].mxu0
        %v5344 = vadd.f32 0.0, %v5343
        %5345 = vmatprep.mubr.bf16.mxu0 0
        %5346 = vmatmul.mubr.bf16.gmra.mrb[0].mxu0 %v4368
        %v5347 = vpop.f32.mrb[0].mxu0
        %v5348 = vadd.f32 0.0, %v5347
        %v5349 = vpop.f32.mrb[0].mxu0
        %v5350 = vadd.f32 0.0, %v5349
        %v5351 = vpop.f32.mrb[0].mxu0
        %v5352 = vadd.f32 0.0, %v5351
        %v5353 = vpop.f32.mrb[0].mxu0
        %v5354 = vadd.f32 0.0, %v5353
        %5355 = vmatprep.mubr.bf16.mxu0 0
        %5356 = vmatmul.mubr.bf16.gmra.mrb[0].mxu0 %v4371
        %v5357 = vpop.f32.mrb[0].mxu0
        %v5358 = vadd.f32 0.0, %v5357
        %v5359 = vpop.f32.mrb[0].mxu0
        %v5360 = vadd.f32 0.0, %v5359
        %v5361 = vpop.f32.mrb[0].mxu0
        %v5362 = vadd.f32 0.0, %v5361
        %v5363 = vpop.f32.mrb[0].mxu0
        %v5364 = vadd.f32 0.0, %v5363
        %5365 = vmatprep.mubr.bf16.mxu0 0
        %5366 = vmatmul.mubr.bf16.gmra.mrb[0].mxu0 %v4374
        %v5367 = vpop.f32.mrb[0].mxu0
        %v5368 = vadd.f32 0.0, %v5367
        %v5369 = vpop.f32.mrb[0].mxu0
        %v5370 = vadd.f32 0.0, %v5369
        %v5371 = vpop.f32.mrb[0].mxu0
        %v5372 = vadd.f32 0.0, %v5371
        %v5373 = vpop.f32.mrb[0].mxu0
        %v5374 = vadd.f32 0.0, %v5373
        %5375 = vmatprep.mubr.bf16.mxu0 0
        %5376 = vmatmul.mubr.bf16.gmra.mrb[0].mxu0 %v4377
        %v5377 = vpop.f32.mrb[0].mxu0
        %v5378 = vadd.f32 0.0, %v5377
        %v5379 = vpop.f32.mrb[0].mxu0
        %v5380 = vadd.f32 0.0, %v5379
        %v5381 = vpop.f32.mrb[0].mxu0
        %v5382 = vadd.f32 0.0, %v5381
        %v5383 = vpop.f32.mrb[0].mxu0
        %v5384 = vadd.f32 0.0, %v5383
        %5385 = vmatprep.mubr.bf16.mxu0 0
        %5386 = vmatmul.mubr.bf16.gmra.mrb[0].mxu0 %v4380
        %v5387 = vpop.f32.mrb[0].mxu0
        %v5388 = vadd.f32 0.0, %v5387
        %v5389 = vpop.f32.mrb[0].mxu0
        %v5390 = vadd.f32 0.0, %v5389
        %v5391 = vpop.f32.mrb[0].mxu0
        %v5392 = vadd.f32 0.0, %v5391
        %v5393 = vpop.f32.mrb[0].mxu0
        %v5394 = vadd.f32 0.0, %v5393
        %5395 = vmatprep.mubr.bf16.mxu0 0
        %5396 = vmatmul.mubr.bf16.gmra.mrb[0].mxu0 %v4787
        %v5397 = vpop.f32.mrb[0].mxu0
        %v5398 = vadd.f32 0.0, %v5397
        %v5399 = vpop.f32.mrb[0].mxu0
        %v5400 = vadd.f32 0.0, %v5399
        %v5401 = vpop.f32.mrb[0].mxu0
        %v5402 = vadd.f32 0.0, %v5401
        %v5403 = vpop.f32.mrb[0].mxu0
        %v5404 = vadd.f32 0.0, %v5403
        %5405 = vmatprep.mubr.bf16.mxu0 0
        %5406 = vmatmul.mubr.bf16.gmra.mrb[0].mxu0 %v5036
        %v5407 = vpop.f32.mrb[0].mxu0
        %v5408 = vadd.f32 0.0, %v5407
        %v5409 = vpop.f32.mrb[0].mxu0
        %v5410 = vadd.f32 0.0, %v5409
        %v5411 = vpop.f32.mrb[0].mxu0
        %v5412 = vadd.f32 0.0, %v5411
        %v5413 = vpop.f32.mrb[0].mxu0
        %v5414 = vadd.f32 0.0, %v5413
        %5415 = vmatprep.mubr.bf16.mxu0 0
        %5416 = vmatmul.mubr.bf16.gmra.mrb[0].mxu0 %v5285
        %v5417 = vpop.f32.mrb[0].mxu0
        %v5418 = vadd.f32 0.0, %v5417
        %v5419 = vpop.f32.mrb[0].mxu0
        %v5420 = vadd.f32 0.0, %v5419
        %v5421 = vpop.f32.mrb[0].mxu0
        %v5422 = vadd.f32 0.0, %v5421
        %v5423 = vpop.f32.mrb[0].mxu0
        %v5424 = vadd.f32 0.0, %v5423
        %5425 = vdwg.mxu0
        %v5426 = vadd.f32 %v5177, %v5328
        %v5427 = vadd.f32 %v5178, %v5330
        %v5428 = vadd.f32 %v5179, %v5332
        %v5429 = vadd.f32 %v5180, %v5334
        %v5430 = vadd.f32 %v5181, %v5338
        %v5431 = vadd.f32 %v5182, %v5340
        %v5432 = vadd.f32 %v5183, %v5342
        %v5433 = vadd.f32 %v5184, %v5344
        %v5434 = vadd.f32 %v5185, %v5348
        %v5435 = vadd.f32 %v5186, %v5350
        %v5436 = vadd.f32 %v5187, %v5352
        %v5437 = vadd.f32 %v5188, %v5354
        %v5438 = vadd.f32 %v5189, %v5358
        %v5439 = vadd.f32 %v5190, %v5360
        %v5440 = vadd.f32 %v5191, %v5362
        %v5441 = vadd.f32 %v5192, %v5364
        %v5442 = vadd.f32 %v5193, %v5368
        %v5443 = vadd.f32 %v5194, %v5370
        %v5444 = vadd.f32 %v5195, %v5372
        %v5445 = vadd.f32 %v5196, %v5374
        %v5446 = vadd.f32 %v5197, %v5378
        %v5447 = vadd.f32 %v5198, %v5380
        %v5448 = vadd.f32 %v5199, %v5382
        %v5449 = vadd.f32 %v5200, %v5384
        %v5450 = vadd.f32 %v5201, %v5388
        %v5451 = vadd.f32 %v5202, %v5390
        %v5452 = vadd.f32 %v5203, %v5392
        %v5453 = vadd.f32 %v5204, %v5394
        %v5454 = vadd.f32 %v5205, %v5398
        %v5455 = vadd.f32 %v5206, %v5400
        %v5456 = vadd.f32 %v5207, %v5402
        %v5457 = vadd.f32 %v5208, %v5404
        %v5458 = vadd.f32 %v5209, %v5408
        %v5459 = vadd.f32 %v5210, %v5410
        %v5460 = vadd.f32 %v5211, %v5412
        %v5461 = vadd.f32 %v5212, %v5414
        %v5462 = vadd.f32 %v5213, %v5418
        %v5463 = vadd.f32 %v5214, %v5420
        %v5464 = vadd.f32 %v5215, %v5422
        %v5465 = vadd.f32 %v5216, %v5424
        %v5466 = vld [vmem:[%s5] sm:$0x3]
        %v5468 = vlaneseq
        %v5469 = vshrl.u32 %v5468, 7
        %v5470 = vsub.s32 0, %v5469
        %v5471 = vrot.slane %v5466, %v5470
        %v5472 = vlaneseq
        %v5473 = vshrl.u32 %v5472, 7
        %v5474 = vsub.s32 1, %v5473
        %v5475 = vrot.slane %v5466, %v5474
        %v5478 = vadd.f32 %v5426, %v5471
        %v5479 = vadd.f32 %v5427, %v5475
        %v5480 = vadd.f32 %v5428, %v5471
        %v5481 = vadd.f32 %v5429, %v5475
        %v5482 = vadd.f32 %v5430, %v5471
        %v5483 = vadd.f32 %v5431, %v5475
        %v5484 = vadd.f32 %v5432, %v5471
        %v5485 = vadd.f32 %v5433, %v5475
        %v5486 = vadd.f32 %v5434, %v5471
        %v5487 = vadd.f32 %v5435, %v5475
        %v5488 = vadd.f32 %v5436, %v5471
        %v5489 = vadd.f32 %v5437, %v5475
        %v5490 = vadd.f32 %v5438, %v5471
        %v5491 = vadd.f32 %v5439, %v5475
        %v5492 = vadd.f32 %v5440, %v5471
        %v5493 = vadd.f32 %v5441, %v5475
        %v5494 = vadd.f32 %v5442, %v5471
        %v5495 = vadd.f32 %v5443, %v5475
        %v5496 = vadd.f32 %v5444, %v5471
        %v5497 = vadd.f32 %v5445, %v5475
        %v5498 = vadd.f32 %v5446, %v5471
        %v5499 = vadd.f32 %v5447, %v5475
        %v5500 = vadd.f32 %v5448, %v5471
        %v5501 = vadd.f32 %v5449, %v5475
        %v5502 = vadd.f32 %v5450, %v5471
        %v5503 = vadd.f32 %v5451, %v5475
        %v5504 = vadd.f32 %v5452, %v5471
        %v5505 = vadd.f32 %v5453, %v5475
        %v5506 = vadd.f32 %v5454, %v5471
        %v5507 = vadd.f32 %v5455, %v5475
        %v5508 = vadd.f32 %v5456, %v5471
        %v5509 = vadd.f32 %v5457, %v5475
        %v5510 = vadd.f32 %v5458, %v5471
        %v5511 = vadd.f32 %v5459, %v5475
        %v5512 = vadd.f32 %v5460, %v5471
        %v5513 = vadd.f32 %v5461, %v5475
        %v5514 = vadd.f32 %v5462, %v5471
        %v5515 = vadd.f32 %v5463, %v5475
        %v5516 = vadd.f32 %v5464, %v5471
        %v5517 = vadd.f32 %v5465, %v5475
        %v5518 = vmax.f32 %v5478, 0.0
        %v5519 = vmax.f32 %v5479, 0.0
        %v5520 = vmax.f32 %v5480, 0.0
        %v5521 = vmax.f32 %v5481, 0.0
        %v5522 = vmax.f32 %v5482, 0.0
        %v5523 = vmax.f32 %v5483, 0.0
        %v5524 = vmax.f32 %v5484, 0.0
        %v5525 = vmax.f32 %v5485, 0.0
        %v5526 = vmax.f32 %v5486, 0.0
        %v5527 = vmax.f32 %v5487, 0.0
        %v5528 = vmax.f32 %v5488, 0.0
        %v5529 = vmax.f32 %v5489, 0.0
        %v5530 = vmax.f32 %v5490, 0.0
        %v5531 = vmax.f32 %v5491, 0.0
        %v5532 = vmax.f32 %v5492, 0.0
        %v5533 = vmax.f32 %v5493, 0.0
        %v5534 = vmax.f32 %v5494, 0.0
        %v5535 = vmax.f32 %v5495, 0.0
        %v5536 = vmax.f32 %v5496, 0.0
        %v5537 = vmax.f32 %v5497, 0.0
        %v5538 = vmax.f32 %v5498, 0.0
        %v5539 = vmax.f32 %v5499, 0.0
        %v5540 = vmax.f32 %v5500, 0.0
        %v5541 = vmax.f32 %v5501, 0.0
        %v5542 = vmax.f32 %v5502, 0.0
        %v5543 = vmax.f32 %v5503, 0.0
        %v5544 = vmax.f32 %v5504, 0.0
        %v5545 = vmax.f32 %v5505, 0.0
        %v5546 = vmax.f32 %v5506, 0.0
        %v5547 = vmax.f32 %v5507, 0.0
        %v5548 = vmax.f32 %v5508, 0.0
        %v5549 = vmax.f32 %v5509, 0.0
        %v5550 = vmax.f32 %v5510, 0.0
        %v5551 = vmax.f32 %v5511, 0.0
        %v5552 = vmax.f32 %v5512, 0.0
        %v5553 = vmax.f32 %v5513, 0.0
        %v5554 = vmax.f32 %v5514, 0.0
        %v5555 = vmax.f32 %v5515, 0.0
        %v5556 = vmax.f32 %v5516, 0.0
        %v5557 = vmax.f32 %v5517, 0.0
        %v5558 = vpack.c.bf16 %v5520, %v5518
        %v5559 = vpack.c.bf16 %v5521, %v5519
        %v5560 = vpack.c.bf16 %v5524, %v5522
        %v5561 = vpack.c.bf16 %v5525, %v5523
        %v5562 = vpack.c.bf16 %v5528, %v5526
        %v5563 = vpack.c.bf16 %v5529, %v5527
        %v5564 = vpack.c.bf16 %v5532, %v5530
        %v5565 = vpack.c.bf16 %v5533, %v5531
        %v5566 = vpack.c.bf16 %v5536, %v5534
        %v5567 = vpack.c.bf16 %v5537, %v5535
        %v5568 = vpack.c.bf16 %v5540, %v5538
        %v5569 = vpack.c.bf16 %v5541, %v5539
        %v5570 = vpack.c.bf16 %v5544, %v5542
        %v5571 = vpack.c.bf16 %v5545, %v5543
        %v5572 = vpack.c.bf16 %v5548, %v5546
        %v5573 = vpack.c.bf16 %v5549, %v5547
        %v5574 = vpack.c.bf16 %v5552, %v5550
        %v5575 = vpack.c.bf16 %v5553, %v5551
        %v5576 = vpack.c.bf16 %v5556, %v5554
        %v5577 = vpack.c.bf16 %v5557, %v5555
        %v5578 = vld [vmem:[%s6] sm:$0xf]
        %v5579 = vld [vmem:[%s6 + $0x4] sm:$0xf]
        %v5580 = vld [vmem:[%s6 + $0x8] sm:$0xf]
        %v5581 = vld [vmem:[%s6 + $0xc] sm:$0xf]
        %v5582 = vld [vmem:[%s6 + $0x10] sm:$0xf]
        %v5583 = vld [vmem:[%s6 + $0x14] sm:$0xf]
        %v5584 = vld [vmem:[%s6 + $0x18] sm:$0xf]
        %v5585 = vld [vmem:[%s6 + $0x1c] sm:$0xf]
        %v5586 = vld [vmem:[%s6 + $0x20] sm:$0xf]
        %v5587 = vld [vmem:[%s6 + $0x24] sm:$0xf]
        %v5588 = vld [vmem:[%s6 + $0x28] sm:$0xf]
        %v5589 = vld [vmem:[%s6 + $0x2c] sm:$0xf]
        %v5590 = vld [vmem:[%s6 + $0x30] sm:$0xf]
        %v5591 = vld [vmem:[%s6 + $0x34] sm:$0xf]
        %v5592 = vld [vmem:[%s6 + $0x38] sm:$0xf]
        %v5593 = vld [vmem:[%s6 + $0x3c] sm:$0xf]
        %v5594 = vld [vmem:[%s6 + $0x40] sm:$0xf]
        %v5595 = vld [vmem:[%s6 + $0x44] sm:$0xf]
        %v5596 = vld [vmem:[%s6 + $0x48] sm:$0xf]
        %v5597 = vld [vmem:[%s6 + $0x4c] sm:$0xf]
        %v5618 = vunpack.c.l.b16 %v5578
        %v5619 = vunpack.c.l.b16 %v5579
        %v5620 = vunpack.c.l.b16 %v5580
        %v5621 = vunpack.c.l.b16 %v5581
        %v5622 = vunpack.c.l.b16 %v5582
        %v5623 = vunpack.c.l.b16 %v5583
        %v5624 = vunpack.c.l.b16 %v5584
        %v5625 = vunpack.c.l.b16 %v5585
        %v5626 = vunpack.c.l.b16 %v5586
        %v5627 = vunpack.c.l.b16 %v5587
        %v5628 = vunpack.c.l.b16 %v5588
        %v5629 = vunpack.c.l.b16 %v5589
        %v5630 = vunpack.c.l.b16 %v5590
        %v5631 = vunpack.c.l.b16 %v5591
        %v5632 = vunpack.c.l.b16 %v5592
        %v5633 = vunpack.c.l.b16 %v5593
        %v5634 = vunpack.c.l.b16 %v5594
        %v5635 = vunpack.c.l.b16 %v5595
        %v5636 = vunpack.c.l.b16 %v5596
        %v5637 = vunpack.c.l.b16 %v5597
        %v5638 = vpack.c.b16 %v5619, %v5618
        %v5639 = vpack.c.b16 %v5621, %v5620
        %v5640 = vpack.c.b16 %v5623, %v5622
        %v5641 = vpack.c.b16 %v5625, %v5624
        %v5642 = vpack.c.b16 %v5627, %v5626
        %v5643 = vpack.c.b16 %v5629, %v5628
        %v5644 = vpack.c.b16 %v5631, %v5630
        %v5645 = vpack.c.b16 %v5633, %v5632
        %v5646 = vpack.c.b16 %v5635, %v5634
        %v5647 = vpack.c.b16 %v5637, %v5636
        %vm5658 = vcmask 261120
        %v5660 = vsel %vm5658, %v5559, 0
        %v5663 = vsel %vm5658, %v5561, 0
        %v5666 = vsel %vm5658, %v5563, 0
        %v5669 = vsel %vm5658, %v5565, 0
        %v5672 = vsel %vm5658, %v5567, 0
        %v5675 = vsel %vm5658, %v5569, 0
        %v5678 = vsel %vm5658, %v5571, 0
        %v5681 = vsel %vm5658, %v5573, 0
        %v5684 = vsel %vm5658, %v5575, 0
        %v5687 = vsel %vm5658, %v5577, 0
        %5689 = vmatprep.subr.bf16.mxu0 0
        %5690 = vmatpush1.bf16.msra.mxu0 %v5638
        %5691 = vmatprep.subr.bf16.mxu0 0
        %5692 = vmatpush1.bf16.msra.mxu0 %v5639
        %5693 = vmatprep.subr.bf16.mxu0 0
        %5694 = vmatpush1.bf16.msra.mxu0 %v5640
        %5695 = vmatprep.subr.bf16.mxu0 0
        %5696 = vmatpush1.bf16.msra.mxu0 %v5641
        %5697 = vmatprep.subr.bf16.mxu0 0
        %5698 = vmatpush1.bf16.msra.mxu0 %v5642
        %5699 = vmatprep.subr.bf16.mxu0 0
        %5700 = vmatpush1.bf16.msra.mxu0 %v5643
        %5701 = vmatprep.subr.bf16.mxu0 0
        %5702 = vmatpush1.bf16.msra.mxu0 %v5644
        %5703 = vmatprep.subr.bf16.mxu0 0
        %5704 = vmatpush1.bf16.msra.mxu0 %v5645
        %5705 = vmatprep.subr.bf16.mxu0 0
        %5706 = vmatpush1.bf16.msra.mxu0 %v5646
        %5707 = vmatprep.subr.bf16.mxu0 0
        %5708 = vmatpush1.bf16.msra.mxu0 %v5647
        %5709 = vmatprep.subr.bf16.mxu0 0
        %5710 = vmatpush1.bf16.msra.mxu0 0
        %5711 = vmatprep.subr.bf16.mxu0 0
        %5712 = vmatpush1.bf16.msra.mxu0 0
        %5713 = vmatprep.subr.bf16.mxu0 0
        %5714 = vmatpush1.bf16.msra.mxu0 0
        %5715 = vmatprep.subr.bf16.mxu0 0
        %5716 = vmatpush1.bf16.msra.mxu0 0
        %5717 = vmatprep.subr.bf16.mxu0 0
        %5718 = vmatpush1.bf16.msra.mxu0 0
        %5719 = vmatprep.subr.bf16.mxu0 0
        %5720 = vmatpush1.bf16.msra.mxu0 0
        %5721 = vmatprep.mubr.bf16.mxu0 %v5660
        %5722 = vmatmul.mubr.bf16.gmra.mrb[0].mxu0 %v5558
        %v5723 = vpop.f32.mrb[0].mxu0
        %v5724 = vadd.f32 0.0, %v5723
        %v5725 = vpop.f32.mrb[0].mxu0
        %v5726 = vpop.f32.mrb[0].mxu0
        %v5727 = vadd.f32 0.0, %v5726
        %v5728 = vpop.f32.mrb[0].mxu0
        %5729 = vmatprep.mubr.bf16.mxu0 %v5663
        %5730 = vmatmul.mubr.bf16.gmra.mrb[0].mxu0 %v5560
        %v5731 = vpop.f32.mrb[0].mxu0
        %v5732 = vadd.f32 0.0, %v5731
        %v5733 = vpop.f32.mrb[0].mxu0
        %v5734 = vpop.f32.mrb[0].mxu0
        %v5735 = vadd.f32 0.0, %v5734
        %v5736 = vpop.f32.mrb[0].mxu0
        %5737 = vmatprep.mubr.bf16.mxu0 %v5666
        %5738 = vmatmul.mubr.bf16.gmra.mrb[0].mxu0 %v5562
        %v5739 = vpop.f32.mrb[0].mxu0
        %v5740 = vadd.f32 0.0, %v5739
        %v5741 = vpop.f32.mrb[0].mxu0
        %v5742 = vpop.f32.mrb[0].mxu0
        %v5743 = vadd.f32 0.0, %v5742
        %v5744 = vpop.f32.mrb[0].mxu0
        %5745 = vmatprep.mubr.bf16.mxu0 %v5669
        %5746 = vmatmul.mubr.bf16.gmra.mrb[0].mxu0 %v5564
        %v5747 = vpop.f32.mrb[0].mxu0
        %v5748 = vadd.f32 0.0, %v5747
        %v5749 = vpop.f32.mrb[0].mxu0
        %v5750 = vpop.f32.mrb[0].mxu0
        %v5751 = vadd.f32 0.0, %v5750
        %v5752 = vpop.f32.mrb[0].mxu0
        %5753 = vmatprep.mubr.bf16.mxu0 %v5672
        %5754 = vmatmul.mubr.bf16.gmra.mrb[0].mxu0 %v5566
        %v5755 = vpop.f32.mrb[0].mxu0
        %v5756 = vadd.f32 0.0, %v5755
        %v5757 = vpop.f32.mrb[0].mxu0
        %v5758 = vpop.f32.mrb[0].mxu0
        %v5759 = vadd.f32 0.0, %v5758
        %v5760 = vpop.f32.mrb[0].mxu0
        %5761 = vmatprep.mubr.bf16.mxu0 %v5675
        %5762 = vmatmul.mubr.bf16.gmra.mrb[0].mxu0 %v5568
        %v5763 = vpop.f32.mrb[0].mxu0
        %v5764 = vadd.f32 0.0, %v5763
        %v5765 = vpop.f32.mrb[0].mxu0
        %v5766 = vpop.f32.mrb[0].mxu0
        %v5767 = vadd.f32 0.0, %v5766
        %v5768 = vpop.f32.mrb[0].mxu0
        %5769 = vmatprep.mubr.bf16.mxu0 %v5678
        %5770 = vmatmul.mubr.bf16.gmra.mrb[0].mxu0 %v5570
        %v5771 = vpop.f32.mrb[0].mxu0
        %v5772 = vadd.f32 0.0, %v5771
        %v5773 = vpop.f32.mrb[0].mxu0
        %v5774 = vpop.f32.mrb[0].mxu0
        %v5775 = vadd.f32 0.0, %v5774
        %v5776 = vpop.f32.mrb[0].mxu0
        %5777 = vmatprep.mubr.bf16.mxu0 %v5681
        %5778 = vmatmul.mubr.bf16.gmra.mrb[0].mxu0 %v5572
        %v5779 = vpop.f32.mrb[0].mxu0
        %v5780 = vadd.f32 0.0, %v5779
        %v5781 = vpop.f32.mrb[0].mxu0
        %v5782 = vpop.f32.mrb[0].mxu0
        %v5783 = vadd.f32 0.0, %v5782
        %v5784 = vpop.f32.mrb[0].mxu0
        %5785 = vmatprep.mubr.bf16.mxu0 %v5684
        %5786 = vmatmul.mubr.bf16.gmra.mrb[0].mxu0 %v5574
        %v5787 = vpop.f32.mrb[0].mxu0
        %v5788 = vadd.f32 0.0, %v5787
        %v5789 = vpop.f32.mrb[0].mxu0
        %v5790 = vpop.f32.mrb[0].mxu0
        %v5791 = vadd.f32 0.0, %v5790
        %v5792 = vpop.f32.mrb[0].mxu0
        %5793 = vmatprep.mubr.bf16.mxu0 %v5687
        %5794 = vmatmul.mubr.bf16.gmra.mrb[0].mxu0 %v5576
        %v5795 = vpop.f32.mrb[0].mxu0
        %v5796 = vadd.f32 0.0, %v5795
        %v5797 = vpop.f32.mrb[0].mxu0
        %v5798 = vpop.f32.mrb[0].mxu0
        %v5799 = vadd.f32 0.0, %v5798
        %v5800 = vpop.f32.mrb[0].mxu0
        %5801 = vdwg.mxu0
        %s5802 = scalar_lea.vmem %s6, 80
        %v5803 = vld [vmem:[%s5802] sm:$0xf]
        %v5804 = vld [vmem:[%s5802 + $0x4] sm:$0xf]
        %v5805 = vld [vmem:[%s5802 + $0x8] sm:$0xf]
        %v5806 = vld [vmem:[%s5802 + $0xc] sm:$0xf]
        %v5807 = vld [vmem:[%s5802 + $0x10] sm:$0xf]
        %v5808 = vld [vmem:[%s5802 + $0x14] sm:$0xf]
        %v5809 = vld [vmem:[%s5802 + $0x18] sm:$0xf]
        %v5810 = vld [vmem:[%s5802 + $0x1c] sm:$0xf]
        %v5811 = vld [vmem:[%s5802 + $0x20] sm:$0xf]
        %v5812 = vld [vmem:[%s5802 + $0x24] sm:$0xf]
        %v5813 = vld [vmem:[%s5802 + $0x28] sm:$0xf]
        %v5814 = vld [vmem:[%s5802 + $0x2c] sm:$0xf]
        %v5815 = vld [vmem:[%s5802 + $0x30] sm:$0xf]
        %v5816 = vld [vmem:[%s5802 + $0x34] sm:$0xf]
        %v5817 = vld [vmem:[%s5802 + $0x38] sm:$0xf]
        %v5818 = vld [vmem:[%s5802 + $0x3c] sm:$0xf]
        %v5819 = vld [vmem:[%s5802 + $0x40] sm:$0xf]
        %v5820 = vld [vmem:[%s5802 + $0x44] sm:$0xf]
        %v5821 = vld [vmem:[%s5802 + $0x48] sm:$0xf]
        %v5822 = vld [vmem:[%s5802 + $0x4c] sm:$0xf]
        %v5843 = vunpack.c.l.b16 %v5803
        %v5844 = vunpack.c.l.b16 %v5804
        %v5845 = vunpack.c.l.b16 %v5805
        %v5846 = vunpack.c.l.b16 %v5806
        %v5847 = vunpack.c.l.b16 %v5807
        %v5848 = vunpack.c.l.b16 %v5808
        %v5849 = vunpack.c.l.b16 %v5809
        %v5850 = vunpack.c.l.b16 %v5810
        %v5851 = vunpack.c.l.b16 %v5811
        %v5852 = vunpack.c.l.b16 %v5812
        %v5853 = vunpack.c.l.b16 %v5813
        %v5854 = vunpack.c.l.b16 %v5814
        %v5855 = vunpack.c.l.b16 %v5815
        %v5856 = vunpack.c.l.b16 %v5816
        %v5857 = vunpack.c.l.b16 %v5817
        %v5858 = vunpack.c.l.b16 %v5818
        %v5859 = vunpack.c.l.b16 %v5819
        %v5860 = vunpack.c.l.b16 %v5820
        %v5861 = vunpack.c.l.b16 %v5821
        %v5862 = vunpack.c.l.b16 %v5822
        %v5863 = vpack.c.b16 %v5844, %v5843
        %v5864 = vpack.c.b16 %v5846, %v5845
        %v5865 = vpack.c.b16 %v5848, %v5847
        %v5866 = vpack.c.b16 %v5850, %v5849
        %v5867 = vpack.c.b16 %v5852, %v5851
        %v5868 = vpack.c.b16 %v5854, %v5853
        %v5869 = vpack.c.b16 %v5856, %v5855
        %v5870 = vpack.c.b16 %v5858, %v5857
        %v5871 = vpack.c.b16 %v5860, %v5859
        %v5872 = vpack.c.b16 %v5862, %v5861
        %5883 = vmatprep.subr.bf16.mxu0 0
        %5884 = vmatpush1.bf16.msra.mxu0 %v5863
        %5885 = vmatprep.subr.bf16.mxu0 0
        %5886 = vmatpush1.bf16.msra.mxu0 %v5864
        %5887 = vmatprep.subr.bf16.mxu0 0
        %5888 = vmatpush1.bf16.msra.mxu0 %v5865
        %5889 = vmatprep.subr.bf16.mxu0 0
        %5890 = vmatpush1.bf16.msra.mxu0 %v5866
        %5891 = vmatprep.subr.bf16.mxu0 0
        %5892 = vmatpush1.bf16.msra.mxu0 %v5867
        %5893 = vmatprep.subr.bf16.mxu0 0
        %5894 = vmatpush1.bf16.msra.mxu0 %v5868
        %5895 = vmatprep.subr.bf16.mxu0 0
        %5896 = vmatpush1.bf16.msra.mxu0 %v5869
        %5897 = vmatprep.subr.bf16.mxu0 0
        %5898 = vmatpush1.bf16.msra.mxu0 %v5870
        %5899 = vmatprep.subr.bf16.mxu0 0
        %5900 = vmatpush1.bf16.msra.mxu0 %v5871
        %5901 = vmatprep.subr.bf16.mxu0 0
        %5902 = vmatpush1.bf16.msra.mxu0 %v5872
        %5903 = vmatprep.subr.bf16.mxu0 0
        %5904 = vmatpush1.bf16.msra.mxu0 0
        %5905 = vmatprep.subr.bf16.mxu0 0
        %5906 = vmatpush1.bf16.msra.mxu0 0
        %5907 = vmatprep.subr.bf16.mxu0 0
        %5908 = vmatpush1.bf16.msra.mxu0 0
        %5909 = vmatprep.subr.bf16.mxu0 0
        %5910 = vmatpush1.bf16.msra.mxu0 0
        %5911 = vmatprep.subr.bf16.mxu0 0
        %5912 = vmatpush1.bf16.msra.mxu0 0
        %5913 = vmatprep.subr.bf16.mxu0 0
        %5914 = vmatpush1.bf16.msra.mxu0 0
        %5915 = vmatprep.mubr.bf16.mxu0 %v5660
        %5916 = vmatmul.mubr.bf16.gmra.mrb[0].mxu0 %v5558
        %v5917 = vpop.f32.mrb[0].mxu0
        %v5918 = vadd.f32 0.0, %v5917
        %v5919 = vpop.f32.mrb[0].mxu0
        %v5920 = vpop.f32.mrb[0].mxu0
        %v5921 = vadd.f32 0.0, %v5920
        %v5922 = vpop.f32.mrb[0].mxu0
        %5923 = vmatprep.mubr.bf16.mxu0 %v5663
        %5924 = vmatmul.mubr.bf16.gmra.mrb[0].mxu0 %v5560
        %v5925 = vpop.f32.mrb[0].mxu0
        %v5926 = vadd.f32 0.0, %v5925
        %v5927 = vpop.f32.mrb[0].mxu0
        %v5928 = vpop.f32.mrb[0].mxu0
        %v5929 = vadd.f32 0.0, %v5928
        %v5930 = vpop.f32.mrb[0].mxu0
        %5931 = vmatprep.mubr.bf16.mxu0 %v5666
        %5932 = vmatmul.mubr.bf16.gmra.mrb[0].mxu0 %v5562
        %v5933 = vpop.f32.mrb[0].mxu0
        %v5934 = vadd.f32 0.0, %v5933
        %v5935 = vpop.f32.mrb[0].mxu0
        %v5936 = vpop.f32.mrb[0].mxu0
        %v5937 = vadd.f32 0.0, %v5936
        %v5938 = vpop.f32.mrb[0].mxu0
        %5939 = vmatprep.mubr.bf16.mxu0 %v5669
        %5940 = vmatmul.mubr.bf16.gmra.mrb[0].mxu0 %v5564
        %v5941 = vpop.f32.mrb[0].mxu0
        %v5942 = vadd.f32 0.0, %v5941
        %v5943 = vpop.f32.mrb[0].mxu0
        %v5944 = vpop.f32.mrb[0].mxu0
        %v5945 = vadd.f32 0.0, %v5944
        %v5946 = vpop.f32.mrb[0].mxu0
        %5947 = vmatprep.mubr.bf16.mxu0 %v5672
        %5948 = vmatmul.mubr.bf16.gmra.mrb[0].mxu0 %v5566
        %v5949 = vpop.f32.mrb[0].mxu0
        %v5950 = vadd.f32 0.0, %v5949
        %v5951 = vpop.f32.mrb[0].mxu0
        %v5952 = vpop.f32.mrb[0].mxu0
        %v5953 = vadd.f32 0.0, %v5952
        %v5954 = vpop.f32.mrb[0].mxu0
        %5955 = vmatprep.mubr.bf16.mxu0 %v5675
        %5956 = vmatmul.mubr.bf16.gmra.mrb[0].mxu0 %v5568
        %v5957 = vpop.f32.mrb[0].mxu0
        %v5958 = vadd.f32 0.0, %v5957
        %v5959 = vpop.f32.mrb[0].mxu0
        %v5960 = vpop.f32.mrb[0].mxu0
        %v5961 = vadd.f32 0.0, %v5960
        %v5962 = vpop.f32.mrb[0].mxu0
        %5963 = vmatprep.mubr.bf16.mxu0 %v5678
        %5964 = vmatmul.mubr.bf16.gmra.mrb[0].mxu0 %v5570
        %v5965 = vpop.f32.mrb[0].mxu0
        %v5966 = vadd.f32 0.0, %v5965
        %v5967 = vpop.f32.mrb[0].mxu0
        %v5968 = vpop.f32.mrb[0].mxu0
        %v5969 = vadd.f32 0.0, %v5968
        %v5970 = vpop.f32.mrb[0].mxu0
        %5971 = vmatprep.mubr.bf16.mxu0 %v5681
        %5972 = vmatmul.mubr.bf16.gmra.mrb[0].mxu0 %v5572
        %v5973 = vpop.f32.mrb[0].mxu0
        %v5974 = vadd.f32 0.0, %v5973
        %v5975 = vpop.f32.mrb[0].mxu0
        %v5976 = vpop.f32.mrb[0].mxu0
        %v5977 = vadd.f32 0.0, %v5976
        %v5978 = vpop.f32.mrb[0].mxu0
        %5979 = vmatprep.mubr.bf16.mxu0 %v5684
        %5980 = vmatmul.mubr.bf16.gmra.mrb[0].mxu0 %v5574
        %v5981 = vpop.f32.mrb[0].mxu0
        %v5982 = vadd.f32 0.0, %v5981
        %v5983 = vpop.f32.mrb[0].mxu0
        %v5984 = vpop.f32.mrb[0].mxu0
        %v5985 = vadd.f32 0.0, %v5984
        %v5986 = vpop.f32.mrb[0].mxu0
        %5987 = vmatprep.mubr.bf16.mxu0 %v5687
        %5988 = vmatmul.mubr.bf16.gmra.mrb[0].mxu0 %v5576
        %v5989 = vpop.f32.mrb[0].mxu0
        %v5990 = vadd.f32 0.0, %v5989
        %v5991 = vpop.f32.mrb[0].mxu0
        %v5992 = vpop.f32.mrb[0].mxu0
        %v5993 = vadd.f32 0.0, %v5992
        %v5994 = vpop.f32.mrb[0].mxu0
        %5995 = vdwg.mxu0
        %v5996 = vmax.f32 %v5724, %v5918
        %v5997 = vmax.f32 %v5727, %v5921
        %v5998 = vmax.f32 %v5732, %v5926
        %v5999 = vmax.f32 %v5735, %v5929
        %v6000 = vmax.f32 %v5740, %v5934
        %v6001 = vmax.f32 %v5743, %v5937
        %v6002 = vmax.f32 %v5748, %v5942
        %v6003 = vmax.f32 %v5751, %v5945
        %v6004 = vmax.f32 %v5756, %v5950
        %v6005 = vmax.f32 %v5759, %v5953
        %v6006 = vmax.f32 %v5764, %v5958
        %v6007 = vmax.f32 %v5767, %v5961
        %v6008 = vmax.f32 %v5772, %v5966
        %v6009 = vmax.f32 %v5775, %v5969
        %v6010 = vmax.f32 %v5780, %v5974
        %v6011 = vmax.f32 %v5783, %v5977
        %v6012 = vmax.f32 %v5788, %v5982
        %v6013 = vmax.f32 %v5791, %v5985
        %v6014 = vmax.f32 %v5796, %v5990
        %v6015 = vmax.f32 %v5799, %v5993
        %v6016 = vmax.f32 %v5996, %v5998
        %v6017 = vmax.f32 %v5997, %v5999
        %v6018 = vmax.f32 %v6000, %v6002
        %v6019 = vmax.f32 %v6001, %v6003
        %v6020 = vmax.f32 %v6004, %v6006
        %v6021 = vmax.f32 %v6005, %v6007
        %v6022 = vmax.f32 %v6008, %v6010
        %v6023 = vmax.f32 %v6009, %v6011
        %v6024 = vmax.f32 %v6012, %v6014
        %v6025 = vmax.f32 %v6013, %v6015
        %v6026 = vpack.c.bf16 %v6017, %v6016
        %v6027 = vpack.c.bf16 %v6019, %v6018
        %v6028 = vpack.c.bf16 %v6021, %v6020
        %v6029 = vpack.c.bf16 %v6023, %v6022
        %v6030 = vpack.c.bf16 %v6025, %v6024
        %v6031 = vld [vmem:[%s7] sm:$0xf]
        %v6032 = vld [vmem:[%s7 + $0x4] sm:$0xf]
        %v6033 = vld [vmem:[%s7 + $0x8] sm:$0xf]
        %v6034 = vld [vmem:[%s7 + $0xc] sm:$0xf]
        %v6035 = vld [vmem:[%s7 + $0x10] sm:$0xf]
        %v6036 = vld [vmem:[%s7 + $0x14] sm:$0xf]
        %v6037 = vld [vmem:[%s7 + $0x18] sm:$0xf]
        %v6038 = vld [vmem:[%s7 + $0x1c] sm:$0xf]
        %v6039 = vld [vmem:[%s7 + $0x20] sm:$0xf]
        %v6040 = vld [vmem:[%s7 + $0x24] sm:$0xf]
        %s6041 = scalar_lea.vmem %s7, 40
        %v6042 = vld [vmem:[%s6041] sm:$0xf]
        %v6043 = vld [vmem:[%s6041 + $0x4] sm:$0xf]
        %v6044 = vld [vmem:[%s6041 + $0x8] sm:$0xf]
        %v6045 = vld [vmem:[%s6041 + $0xc] sm:$0xf]
        %v6046 = vld [vmem:[%s6041 + $0x10] sm:$0xf]
        %v6047 = vld [vmem:[%s6041 + $0x14] sm:$0xf]
        %v6048 = vld [vmem:[%s6041 + $0x18] sm:$0xf]
        %v6049 = vld [vmem:[%s6041 + $0x1c] sm:$0xf]
        %v6050 = vld [vmem:[%s6041 + $0x20] sm:$0xf]
        %v6051 = vld [vmem:[%s6041 + $0x24] sm:$0xf]
        %v6062 = vunpack.c.l.b16 %v6042
        %v6063 = vunpack.c.l.b16 %v6043
        %v6064 = vunpack.c.l.b16 %v6044
        %v6065 = vunpack.c.l.b16 %v6045
        %v6066 = vunpack.c.l.b16 %v6046
        %v6067 = vunpack.c.l.b16 %v6047
        %v6068 = vunpack.c.l.b16 %v6048
        %v6069 = vunpack.c.l.b16 %v6049
        %v6070 = vunpack.c.l.b16 %v6050
        %v6071 = vunpack.c.l.b16 %v6051
        %v6072 = vpack.c.b16 %v6063, %v6062
        %v6073 = vpack.c.b16 %v6065, %v6064
        %v6074 = vpack.c.b16 %v6067, %v6066
        %v6075 = vpack.c.b16 %v6069, %v6068
        %v6076 = vpack.c.b16 %v6071, %v6070
        %vm6082 = vcmask 654336
        %v6084 = vsel %vm6082, %v6027, 0
        %6086 = vmatprep.subr.bf16.mxu0 0
        %6087 = vmatpush1.bf16.msra.mxu0 %v6072
        %6088 = vmatprep.subr.bf16.mxu0 0
        %6089 = vmatpush1.bf16.msra.mxu0 %v6073
        %6090 = vmatprep.subr.bf16.mxu0 0
        %6091 = vmatpush1.bf16.msra.mxu0 %v6074
        %6092 = vmatprep.subr.bf16.mxu0 0
        %6093 = vmatpush1.bf16.msra.mxu0 %v6075
        %6094 = vmatprep.subr.bf16.mxu0 0
        %6095 = vmatpush1.bf16.msra.mxu0 %v6076
        %6096 = vmatprep.subr.bf16.mxu0 0
        %6097 = vmatpush1.bf16.msra.mxu0 0
        %6098 = vmatprep.subr.bf16.mxu0 0
        %6099 = vmatpush1.bf16.msra.mxu0 0
        %6100 = vmatprep.subr.bf16.mxu0 0
        %6101 = vmatpush1.bf16.msra.mxu0 0
        %6102 = vmatprep.subr.bf16.mxu0 0
        %6103 = vmatpush1.bf16.msra.mxu0 0
        %6104 = vmatprep.subr.bf16.mxu0 0
        %6105 = vmatpush1.bf16.msra.mxu0 0
        %6106 = vmatprep.subr.bf16.mxu0 0
        %6107 = vmatpush1.bf16.msra.mxu0 0
        %6108 = vmatprep.subr.bf16.mxu0 0
        %6109 = vmatpush1.bf16.msra.mxu0 0
        %6110 = vmatprep.subr.bf16.mxu0 0
        %6111 = vmatpush1.bf16.msra.mxu0 0
        %6112 = vmatprep.subr.bf16.mxu0 0
        %6113 = vmatpush1.bf16.msra.mxu0 0
        %6114 = vmatprep.subr.bf16.mxu0 0
        %6115 = vmatpush1.bf16.msra.mxu0 0
        %6116 = vmatprep.subr.bf16.mxu0 0
        %6117 = vmatpush1.bf16.msra.mxu0 0
        %6118 = vmatprep.mubr.bf16.mxu0 0
        %6119 = vmatmul.mubr.bf16.gmra.mrb[0].mxu0 %v6084
        %v6120 = vpop.f32.mrb[0].mxu0
        %v6121 = vadd.f32 0.0, %v6120
        %v6122 = vpop.f32.mrb[0].mxu0
        %v6123 = vpop.f32.mrb[0].mxu0
        %v6124 = vadd.f32 0.0, %v6123
        %v6125 = vpop.f32.mrb[0].mxu0
        %6126 = vdwg.mxu0
        %v6137 = vunpack.c.l.b16 %v6031
        %v6138 = vunpack.c.l.b16 %v6032
        %v6139 = vunpack.c.l.b16 %v6033
        %v6140 = vunpack.c.l.b16 %v6034
        %v6141 = vunpack.c.l.b16 %v6035
        %v6142 = vunpack.c.l.b16 %v6036
        %v6143 = vunpack.c.l.b16 %v6037
        %v6144 = vunpack.c.l.b16 %v6038
        %v6145 = vunpack.c.l.b16 %v6039
        %v6146 = vunpack.c.l.b16 %v6040
        %v6147 = vpack.c.b16 %v6138, %v6137
        %v6148 = vpack.c.b16 %v6140, %v6139
        %v6149 = vpack.c.b16 %v6142, %v6141
        %v6150 = vpack.c.b16 %v6144, %v6143
        %v6151 = vpack.c.b16 %v6146, %v6145
        %v6158 = vsel %vm6082, %v6026, 0
        %6160 = vmatprep.subr.bf16.mxu0 0
        %6161 = vmatpush1.bf16.msra.mxu0 %v6147
        %6162 = vmatprep.subr.bf16.mxu0 0
        %6163 = vmatpush1.bf16.msra.mxu0 %v6148
        %6164 = vmatprep.subr.bf16.mxu0 0
        %6165 = vmatpush1.bf16.msra.mxu0 %v6149
        %6166 = vmatprep.subr.bf16.mxu0 0
        %6167 = vmatpush1.bf16.msra.mxu0 %v6150
        %6168 = vmatprep.subr.bf16.mxu0 0
        %6169 = vmatpush1.bf16.msra.mxu0 %v6151
        %6170 = vmatprep.subr.bf16.mxu0 0
        %6171 = vmatpush1.bf16.msra.mxu0 0
        %6172 = vmatprep.subr.bf16.mxu0 0
        %6173 = vmatpush1.bf16.msra.mxu0 0
        %6174 = vmatprep.subr.bf16.mxu0 0
        %6175 = vmatpush1.bf16.msra.mxu0 0
        %6176 = vmatprep.subr.bf16.mxu0 0
        %6177 = vmatpush1.bf16.msra.mxu0 0
        %6178 = vmatprep.subr.bf16.mxu0 0
        %6179 = vmatpush1.bf16.msra.mxu0 0
        %6180 = vmatprep.subr.bf16.mxu0 0
        %6181 = vmatpush1.bf16.msra.mxu0 0
        %6182 = vmatprep.subr.bf16.mxu0 0
        %6183 = vmatpush1.bf16.msra.mxu0 0
        %6184 = vmatprep.subr.bf16.mxu0 0
        %6185 = vmatpush1.bf16.msra.mxu0 0
        %6186 = vmatprep.subr.bf16.mxu0 0
        %6187 = vmatpush1.bf16.msra.mxu0 0
        %6188 = vmatprep.subr.bf16.mxu0 0
        %6189 = vmatpush1.bf16.msra.mxu0 0
        %6190 = vmatprep.subr.bf16.mxu0 0
        %6191 = vmatpush1.bf16.msra.mxu0 0
        %6192 = vmatprep.mubr.bf16.mxu0 0
        %6193 = vmatmul.mubr.bf16.gmra.mrb[0].mxu0 %v6158
        %v6194 = vpop.f32.mrb[0].mxu0
        %v6195 = vadd.f32 %v6121, %v6194
        %v6196 = vpop.f32.mrb[0].mxu0
        %v6197 = vpop.f32.mrb[0].mxu0
        %v6198 = vadd.f32 %v6124, %v6197
        %v6199 = vpop.f32.mrb[0].mxu0
        %6200 = vdwg.mxu0
        %s6201 = scalar_lea.vmem %s7, 80
        %v6202 = vld [vmem:[%s6201] sm:$0xf]
        %v6203 = vld [vmem:[%s6201 + $0x4] sm:$0xf]
        %v6204 = vld [vmem:[%s6201 + $0x8] sm:$0xf]
        %v6205 = vld [vmem:[%s6201 + $0xc] sm:$0xf]
        %v6206 = vld [vmem:[%s6201 + $0x10] sm:$0xf]
        %v6207 = vld [vmem:[%s6201 + $0x14] sm:$0xf]
        %v6208 = vld [vmem:[%s6201 + $0x18] sm:$0xf]
        %v6209 = vld [vmem:[%s6201 + $0x1c] sm:$0xf]
        %v6210 = vld [vmem:[%s6201 + $0x20] sm:$0xf]
        %v6211 = vld [vmem:[%s6201 + $0x24] sm:$0xf]
        %v6222 = vunpack.c.l.b16 %v6202
        %v6223 = vunpack.c.l.b16 %v6203
        %v6224 = vunpack.c.l.b16 %v6204
        %v6225 = vunpack.c.l.b16 %v6205
        %v6226 = vunpack.c.l.b16 %v6206
        %v6227 = vunpack.c.l.b16 %v6207
        %v6228 = vunpack.c.l.b16 %v6208
        %v6229 = vunpack.c.l.b16 %v6209
        %v6230 = vunpack.c.l.b16 %v6210
        %v6231 = vunpack.c.l.b16 %v6211
        %v6232 = vpack.c.b16 %v6223, %v6222
        %v6233 = vpack.c.b16 %v6225, %v6224
        %v6234 = vpack.c.b16 %v6227, %v6226
        %v6235 = vpack.c.b16 %v6229, %v6228
        %v6236 = vpack.c.b16 %v6231, %v6230
        %v6243 = vsel %vm6082, %v6028, 0
        %6245 = vmatprep.subr.bf16.mxu0 0
        %6246 = vmatpush1.bf16.msra.mxu0 %v6232
        %6247 = vmatprep.subr.bf16.mxu0 0
        %6248 = vmatpush1.bf16.msra.mxu0 %v6233
        %6249 = vmatprep.subr.bf16.mxu0 0
        %6250 = vmatpush1.bf16.msra.mxu0 %v6234
        %6251 = vmatprep.subr.bf16.mxu0 0
        %6252 = vmatpush1.bf16.msra.mxu0 %v6235
        %6253 = vmatprep.subr.bf16.mxu0 0
        %6254 = vmatpush1.bf16.msra.mxu0 %v6236
        %6255 = vmatprep.subr.bf16.mxu0 0
        %6256 = vmatpush1.bf16.msra.mxu0 0
        %6257 = vmatprep.subr.bf16.mxu0 0
        %6258 = vmatpush1.bf16.msra.mxu0 0
        %6259 = vmatprep.subr.bf16.mxu0 0
        %6260 = vmatpush1.bf16.msra.mxu0 0
        %6261 = vmatprep.subr.bf16.mxu0 0
        %6262 = vmatpush1.bf16.msra.mxu0 0
        %6263 = vmatprep.subr.bf16.mxu0 0
        %6264 = vmatpush1.bf16.msra.mxu0 0
        %6265 = vmatprep.subr.bf16.mxu0 0
        %6266 = vmatpush1.bf16.msra.mxu0 0
        %6267 = vmatprep.subr.bf16.mxu0 0
        %6268 = vmatpush1.bf16.msra.mxu0 0
        %6269 = vmatprep.subr.bf16.mxu0 0
        %6270 = vmatpush1.bf16.msra.mxu0 0
        %6271 = vmatprep.subr.bf16.mxu0 0
        %6272 = vmatpush1.bf16.msra.mxu0 0
        %6273 = vmatprep.subr.bf16.mxu0 0
        %6274 = vmatpush1.bf16.msra.mxu0 0
        %6275 = vmatprep.subr.bf16.mxu0 0
        %6276 = vmatpush1.bf16.msra.mxu0 0
        %6277 = vmatprep.mubr.bf16.mxu0 0
        %6278 = vmatmul.mubr.bf16.gmra.mrb[0].mxu0 %v6243
        %v6279 = vpop.f32.mrb[0].mxu0
        %v6280 = vadd.f32 0.0, %v6279
        %v6281 = vpop.f32.mrb[0].mxu0
        %v6282 = vpop.f32.mrb[0].mxu0
        %v6283 = vadd.f32 0.0, %v6282
        %v6284 = vpop.f32.mrb[0].mxu0
        %6285 = vdwg.mxu0
        %v6286 = vadd.f32 %v6195, %v6280
        %v6287 = vadd.f32 %v6198, %v6283
        %s6288 = scalar_lea.vmem %s7, 120
        %v6289 = vld [vmem:[%s6288] sm:$0xf]
        %v6290 = vld [vmem:[%s6288 + $0x4] sm:$0xf]
        %v6291 = vld [vmem:[%s6288 + $0x8] sm:$0xf]
        %v6292 = vld [vmem:[%s6288 + $0xc] sm:$0xf]
        %v6293 = vld [vmem:[%s6288 + $0x10] sm:$0xf]
        %v6294 = vld [vmem:[%s6288 + $0x14] sm:$0xf]
        %v6295 = vld [vmem:[%s6288 + $0x18] sm:$0xf]
        %v6296 = vld [vmem:[%s6288 + $0x1c] sm:$0xf]
        %v6297 = vld [vmem:[%s6288 + $0x20] sm:$0xf]
        %v6298 = vld [vmem:[%s6288 + $0x24] sm:$0xf]
        %v6309 = vunpack.c.l.b16 %v6289
        %v6310 = vunpack.c.l.b16 %v6290
        %v6311 = vunpack.c.l.b16 %v6291
        %v6312 = vunpack.c.l.b16 %v6292
        %v6313 = vunpack.c.l.b16 %v6293
        %v6314 = vunpack.c.l.b16 %v6294
        %v6315 = vunpack.c.l.b16 %v6295
        %v6316 = vunpack.c.l.b16 %v6296
        %v6317 = vunpack.c.l.b16 %v6297
        %v6318 = vunpack.c.l.b16 %v6298
        %v6319 = vpack.c.b16 %v6310, %v6309
        %v6320 = vpack.c.b16 %v6312, %v6311
        %v6321 = vpack.c.b16 %v6314, %v6313
        %v6322 = vpack.c.b16 %v6316, %v6315
        %v6323 = vpack.c.b16 %v6318, %v6317
        %v6330 = vsel %vm6082, %v6029, 0
        %6332 = vmatprep.subr.bf16.mxu0 0
        %6333 = vmatpush1.bf16.msra.mxu0 %v6319
        %6334 = vmatprep.subr.bf16.mxu0 0
        %6335 = vmatpush1.bf16.msra.mxu0 %v6320
        %6336 = vmatprep.subr.bf16.mxu0 0
        %6337 = vmatpush1.bf16.msra.mxu0 %v6321
        %6338 = vmatprep.subr.bf16.mxu0 0
        %6339 = vmatpush1.bf16.msra.mxu0 %v6322
        %6340 = vmatprep.subr.bf16.mxu0 0
        %6341 = vmatpush1.bf16.msra.mxu0 %v6323
        %6342 = vmatprep.subr.bf16.mxu0 0
        %6343 = vmatpush1.bf16.msra.mxu0 0
        %6344 = vmatprep.subr.bf16.mxu0 0
        %6345 = vmatpush1.bf16.msra.mxu0 0
        %6346 = vmatprep.subr.bf16.mxu0 0
        %6347 = vmatpush1.bf16.msra.mxu0 0
        %6348 = vmatprep.subr.bf16.mxu0 0
        %6349 = vmatpush1.bf16.msra.mxu0 0
        %6350 = vmatprep.subr.bf16.mxu0 0
        %6351 = vmatpush1.bf16.msra.mxu0 0
        %6352 = vmatprep.subr.bf16.mxu0 0
        %6353 = vmatpush1.bf16.msra.mxu0 0
        %6354 = vmatprep.subr.bf16.mxu0 0
        %6355 = vmatpush1.bf16.msra.mxu0 0
        %6356 = vmatprep.subr.bf16.mxu0 0
        %6357 = vmatpush1.bf16.msra.mxu0 0
        %6358 = vmatprep.subr.bf16.mxu0 0
        %6359 = vmatpush1.bf16.msra.mxu0 0
        %6360 = vmatprep.subr.bf16.mxu0 0
        %6361 = vmatpush1.bf16.msra.mxu0 0
        %6362 = vmatprep.subr.bf16.mxu0 0
        %6363 = vmatpush1.bf16.msra.mxu0 0
        %6364 = vmatprep.mubr.bf16.mxu0 0
        %6365 = vmatmul.mubr.bf16.gmra.mrb[0].mxu0 %v6330
        %v6366 = vpop.f32.mrb[0].mxu0
        %v6367 = vadd.f32 0.0, %v6366
        %v6368 = vpop.f32.mrb[0].mxu0
        %v6369 = vpop.f32.mrb[0].mxu0
        %v6370 = vadd.f32 0.0, %v6369
        %v6371 = vpop.f32.mrb[0].mxu0
        %6372 = vdwg.mxu0
        %v6373 = vadd.f32 %v6286, %v6367
        %v6374 = vadd.f32 %v6287, %v6370
        %s6375 = scalar_lea.vmem %s7, 160
        %v6376 = vld [vmem:[%s6375] sm:$0xf]
        %v6377 = vld [vmem:[%s6375 + $0x4] sm:$0xf]
        %v6378 = vld [vmem:[%s6375 + $0x8] sm:$0xf]
        %v6379 = vld [vmem:[%s6375 + $0xc] sm:$0xf]
        %v6380 = vld [vmem:[%s6375 + $0x10] sm:$0xf]
        %v6381 = vld [vmem:[%s6375 + $0x14] sm:$0xf]
        %v6382 = vld [vmem:[%s6375 + $0x18] sm:$0xf]
        %v6383 = vld [vmem:[%s6375 + $0x1c] sm:$0xf]
        %v6384 = vld [vmem:[%s6375 + $0x20] sm:$0xf]
        %v6385 = vld [vmem:[%s6375 + $0x24] sm:$0xf]
        %v6396 = vunpack.c.l.b16 %v6376
        %v6397 = vunpack.c.l.b16 %v6377
        %v6398 = vunpack.c.l.b16 %v6378
        %v6399 = vunpack.c.l.b16 %v6379
        %v6400 = vunpack.c.l.b16 %v6380
        %v6401 = vunpack.c.l.b16 %v6381
        %v6402 = vunpack.c.l.b16 %v6382
        %v6403 = vunpack.c.l.b16 %v6383
        %v6404 = vunpack.c.l.b16 %v6384
        %v6405 = vunpack.c.l.b16 %v6385
        %v6406 = vpack.c.b16 %v6397, %v6396
        %v6407 = vpack.c.b16 %v6399, %v6398
        %v6408 = vpack.c.b16 %v6401, %v6400
        %v6409 = vpack.c.b16 %v6403, %v6402
        %v6410 = vpack.c.b16 %v6405, %v6404
        %v6417 = vsel %vm6082, %v6030, 0
        %6419 = vmatprep.subr.bf16.mxu0 0
        %6420 = vmatpush1.bf16.msra.mxu0 %v6406
        %6421 = vmatprep.subr.bf16.mxu0 0
        %6422 = vmatpush1.bf16.msra.mxu0 %v6407
        %6423 = vmatprep.subr.bf16.mxu0 0
        %6424 = vmatpush1.bf16.msra.mxu0 %v6408
        %6425 = vmatprep.subr.bf16.mxu0 0
        %6426 = vmatpush1.bf16.msra.mxu0 %v6409
        %6427 = vmatprep.subr.bf16.mxu0 0
        %6428 = vmatpush1.bf16.msra.mxu0 %v6410
        %6429 = vmatprep.subr.bf16.mxu0 0
        %6430 = vmatpush1.bf16.msra.mxu0 0
        %6431 = vmatprep.subr.bf16.mxu0 0
        %6432 = vmatpush1.bf16.msra.mxu0 0
        %6433 = vmatprep.subr.bf16.mxu0 0
        %6434 = vmatpush1.bf16.msra.mxu0 0
        %6435 = vmatprep.subr.bf16.mxu0 0
        %6436 = vmatpush1.bf16.msra.mxu0 0
        %6437 = vmatprep.subr.bf16.mxu0 0
        %6438 = vmatpush1.bf16.msra.mxu0 0
        %6439 = vmatprep.subr.bf16.mxu0 0
        %6440 = vmatpush1.bf16.msra.mxu0 0
        %6441 = vmatprep.subr.bf16.mxu0 0
        %6442 = vmatpush1.bf16.msra.mxu0 0
        %6443 = vmatprep.subr.bf16.mxu0 0
        %6444 = vmatpush1.bf16.msra.mxu0 0
        %6445 = vmatprep.subr.bf16.mxu0 0
        %6446 = vmatpush1.bf16.msra.mxu0 0
        %6447 = vmatprep.subr.bf16.mxu0 0
        %6448 = vmatpush1.bf16.msra.mxu0 0
        %6449 = vmatprep.subr.bf16.mxu0 0
        %6450 = vmatpush1.bf16.msra.mxu0 0
        %6451 = vmatprep.mubr.bf16.mxu0 0
        %6452 = vmatmul.mubr.bf16.gmra.mrb[0].mxu0 %v6417
        %v6453 = vpop.f32.mrb[0].mxu0
        %v6454 = vadd.f32 0.0, %v6453
        %v6455 = vpop.f32.mrb[0].mxu0
        %v6456 = vpop.f32.mrb[0].mxu0
        %v6457 = vadd.f32 0.0, %v6456
        %v6458 = vpop.f32.mrb[0].mxu0
        %6459 = vdwg.mxu0
        %v6460 = vadd.f32 %v6373, %v6454
        %v6461 = vadd.f32 %v6374, %v6457
        %v6462 = vld [vmem:[%s9] sm:$0x1]
        %v6463 = vlaneseq
        %v6464 = vshrl.u32 %v6463, 7
        %v6465 = vsub.s32 0, %v6464
        %v6466 = vrot.slane %v6462, %v6465
        %v6467 = vadd.f32 %v6460, %v6466
        %v6468 = vadd.f32 %v6461, %v6466
        %v6469 = vmax.f32 %v6467, 0.0
        %v6470 = vmax.f32 %v6468, 0.0
        %v6471 = vpack.c.bf16 %v6470, %v6469
        %v6472 = vld [vmem:[%s8] sm:$0xf]
        %v6473 = vld [vmem:[%s8 + $0x4] sm:$0xf]
        %v6474 = vld [vmem:[%s8 + $0x8] sm:$0xf]
        %v6475 = vld [vmem:[%s8 + $0xc] sm:$0xf]
        %v6476 = vld [vmem:[%s8 + $0x10] sm:$0xf]
        %v6477 = vld [vmem:[%s8 + $0x14] sm:$0xf]
        %v6478 = vld [vmem:[%s8 + $0x18] sm:$0xf]
        %v6479 = vld [vmem:[%s8 + $0x1c] sm:$0xf]
        %v6480 = vld [vmem:[%s8 + $0x20] sm:$0xf]
        %v6481 = vld [vmem:[%s8 + $0x24] sm:$0xf]
        %v6482 = vld [vmem:[%s8 + $0x28] sm:$0xf]
        %v6483 = vld [vmem:[%s8 + $0x2c] sm:$0xf]
        %v6484 = vld [vmem:[%s8 + $0x30] sm:$0xf]
        %v6485 = vld [vmem:[%s8 + $0x34] sm:$0xf]
        %v6486 = vld [vmem:[%s8 + $0x38] sm:$0xf]
        %v6487 = vld [vmem:[%s8 + $0x3c] sm:$0xf]
        %v6488 = vld [vmem:[%s9 + $0x1] sm:$0x1]
        %v6489 = vlaneseq
        %v6490 = vshrl.u32 %v6489, 7
        %v6491 = vsub.s32 0, %v6490
        %v6492 = vrot.slane %v6488, %v6491
        %v6509 = vunpack.c.l.b16 %v6472
        %v6510 = vunpack.c.l.b16 %v6473
        %v6511 = vunpack.c.l.b16 %v6474
        %v6512 = vunpack.c.l.b16 %v6475
        %v6513 = vunpack.c.l.b16 %v6476
        %v6514 = vunpack.c.l.b16 %v6477
        %v6515 = vunpack.c.l.b16 %v6478
        %v6516 = vunpack.c.l.b16 %v6479
        %v6517 = vunpack.c.l.b16 %v6480
        %v6518 = vunpack.c.l.b16 %v6481
        %v6519 = vunpack.c.l.b16 %v6482
        %v6520 = vunpack.c.l.b16 %v6483
        %v6521 = vunpack.c.l.b16 %v6484
        %v6522 = vunpack.c.l.b16 %v6485
        %v6523 = vunpack.c.l.b16 %v6486
        %v6524 = vunpack.c.l.b16 %v6487
        %v6525 = vpack.c.b16 %v6510, %v6509
        %v6526 = vpack.c.b16 %v6512, %v6511
        %v6527 = vpack.c.b16 %v6514, %v6513
        %v6528 = vpack.c.b16 %v6516, %v6515
        %v6529 = vpack.c.b16 %v6518, %v6517
        %v6530 = vpack.c.b16 %v6520, %v6519
        %v6531 = vpack.c.b16 %v6522, %v6521
        %v6532 = vpack.c.b16 %v6524, %v6523
        %6541 = vmatprep.subr.bf16.mxu0 0
        %6542 = vmatpush1.bf16.msra.mxu0 %v6525
        %6543 = vmatprep.subr.bf16.mxu0 0
        %6544 = vmatpush1.bf16.msra.mxu0 %v6526
        %6545 = vmatprep.subr.bf16.mxu0 0
        %6546 = vmatpush1.bf16.msra.mxu0 %v6527
        %6547 = vmatprep.subr.bf16.mxu0 0
        %6548 = vmatpush1.bf16.msra.mxu0 %v6528
        %6549 = vmatprep.subr.bf16.mxu0 0
        %6550 = vmatpush1.bf16.msra.mxu0 %v6529
        %6551 = vmatprep.subr.bf16.mxu0 0
        %6552 = vmatpush1.bf16.msra.mxu0 %v6530
        %6553 = vmatprep.subr.bf16.mxu0 0
        %6554 = vmatpush1.bf16.msra.mxu0 %v6531
        %6555 = vmatprep.subr.bf16.mxu0 0
        %6556 = vmatpush1.bf16.msra.mxu0 %v6532
        %6557 = vmatprep.subr.bf16.mxu0 0
        %6558 = vmatpush1.bf16.msra.mxu0 0
        %6559 = vmatprep.subr.bf16.mxu0 0
        %6560 = vmatpush1.bf16.msra.mxu0 0
        %6561 = vmatprep.subr.bf16.mxu0 0
        %6562 = vmatpush1.bf16.msra.mxu0 0
        %6563 = vmatprep.subr.bf16.mxu0 0
        %6564 = vmatpush1.bf16.msra.mxu0 0
        %6565 = vmatprep.subr.bf16.mxu0 0
        %6566 = vmatpush1.bf16.msra.mxu0 0
        %6567 = vmatprep.subr.bf16.mxu0 0
        %6568 = vmatpush1.bf16.msra.mxu0 0
        %6569 = vmatprep.subr.bf16.mxu0 0
        %6570 = vmatpush1.bf16.msra.mxu0 0
        %6571 = vmatprep.subr.bf16.mxu0 0
        %6572 = vmatpush1.bf16.msra.mxu0 0
        %6573 = vmatprep.mubr.bf16.mxu0 0
        %6574 = vmatmul.mubr.bf16.gmra.mrb[0].mxu0 %v6471
        %v6575 = vpop.f32.mrb[0].mxu0
        %v6576 = vadd.f32 %v6492, %v6575
        %v6577 = vpop.f32.mrb[0].mxu0
        %v6578 = vpop.f32.mrb[0].mxu0
        %v6579 = vadd.f32 %v6492, %v6578
        %v6580 = vpop.f32.mrb[0].mxu0
        %6581 = vdwg.mxu0
        %v6582 = vmax.f32 %v6576, 0.0
        %v6583 = vmax.f32 %v6579, 0.0
        %v6584 = vpack.c.bf16 %v6583, %v6582
        %s6585 = scalar_lea.vmem %s8, 64
        %v6586 = vld [vmem:[%s6585] sm:$0xf]
        %v6587 = vld [vmem:[%s6585 + $0x4] sm:$0xf]
        %v6588 = vld [vmem:[%s6585 + $0x8] sm:$0xf]
        %v6589 = vld [vmem:[%s6585 + $0xc] sm:$0xf]
        %v6590 = vld [vmem:[%s6585 + $0x10] sm:$0xf]
        %v6591 = vld [vmem:[%s6585 + $0x14] sm:$0xf]
        %v6592 = vld [vmem:[%s6585 + $0x18] sm:$0xf]
        %v6593 = vld [vmem:[%s6585 + $0x1c] sm:$0xf]
        %v6594 = vld [vmem:[%s6585 + $0x20] sm:$0xf]
        %v6595 = vld [vmem:[%s6585 + $0x24] sm:$0xf]
        %v6596 = vld [vmem:[%s6585 + $0x28] sm:$0xf]
        %v6597 = vld [vmem:[%s6585 + $0x2c] sm:$0xf]
        %v6598 = vld [vmem:[%s6585 + $0x30] sm:$0xf]
        %v6599 = vld [vmem:[%s6585 + $0x34] sm:$0xf]
        %v6600 = vld [vmem:[%s6585 + $0x38] sm:$0xf]
        %v6601 = vld [vmem:[%s6585 + $0x3c] sm:$0xf]
        %v6602 = vld [vmem:[%s9 + $0x2] sm:$0x1]
        %v6603 = vlaneseq
        %v6604 = vshrl.u32 %v6603, 7
        %v6605 = vsub.s32 0, %v6604
        %v6606 = vrot.slane %v6602, %v6605
        %v6623 = vunpack.c.l.b16 %v6586
        %v6624 = vunpack.c.l.b16 %v6587
        %v6625 = vunpack.c.l.b16 %v6588
        %v6626 = vunpack.c.l.b16 %v6589
        %v6627 = vunpack.c.l.b16 %v6590
        %v6628 = vunpack.c.l.b16 %v6591
        %v6629 = vunpack.c.l.b16 %v6592
        %v6630 = vunpack.c.l.b16 %v6593
        %v6631 = vunpack.c.l.b16 %v6594
        %v6632 = vunpack.c.l.b16 %v6595
        %v6633 = vunpack.c.l.b16 %v6596
        %v6634 = vunpack.c.l.b16 %v6597
        %v6635 = vunpack.c.l.b16 %v6598
        %v6636 = vunpack.c.l.b16 %v6599
        %v6637 = vunpack.c.l.b16 %v6600
        %v6638 = vunpack.c.l.b16 %v6601
        %v6639 = vpack.c.b16 %v6624, %v6623
        %v6640 = vpack.c.b16 %v6626, %v6625
        %v6641 = vpack.c.b16 %v6628, %v6627
        %v6642 = vpack.c.b16 %v6630, %v6629
        %v6643 = vpack.c.b16 %v6632, %v6631
        %v6644 = vpack.c.b16 %v6634, %v6633
        %v6645 = vpack.c.b16 %v6636, %v6635
        %v6646 = vpack.c.b16 %v6638, %v6637
        %6655 = vmatprep.subr.bf16.mxu0 0
        %6656 = vmatpush1.bf16.msra.mxu0 %v6639
        %6657 = vmatprep.subr.bf16.mxu0 0
        %6658 = vmatpush1.bf16.msra.mxu0 %v6640
        %6659 = vmatprep.subr.bf16.mxu0 0
        %6660 = vmatpush1.bf16.msra.mxu0 %v6641
        %6661 = vmatprep.subr.bf16.mxu0 0
        %6662 = vmatpush1.bf16.msra.mxu0 %v6642
        %6663 = vmatprep.subr.bf16.mxu0 0
        %6664 = vmatpush1.bf16.msra.mxu0 %v6643
        %6665 = vmatprep.subr.bf16.mxu0 0
        %6666 = vmatpush1.bf16.msra.mxu0 %v6644
        %6667 = vmatprep.subr.bf16.mxu0 0
        %6668 = vmatpush1.bf16.msra.mxu0 %v6645
        %6669 = vmatprep.subr.bf16.mxu0 0
        %6670 = vmatpush1.bf16.msra.mxu0 %v6646
        %6671 = vmatprep.subr.bf16.mxu0 0
        %6672 = vmatpush1.bf16.msra.mxu0 0
        %6673 = vmatprep.subr.bf16.mxu0 0
        %6674 = vmatpush1.bf16.msra.mxu0 0
        %6675 = vmatprep.subr.bf16.mxu0 0
        %6676 = vmatpush1.bf16.msra.mxu0 0
        %6677 = vmatprep.subr.bf16.mxu0 0
        %6678 = vmatpush1.bf16.msra.mxu0 0
        %6679 = vmatprep.subr.bf16.mxu0 0
        %6680 = vmatpush1.bf16.msra.mxu0 0
        %6681 = vmatprep.subr.bf16.mxu0 0
        %6682 = vmatpush1.bf16.msra.mxu0 0
        %6683 = vmatprep.subr.bf16.mxu0 0
        %6684 = vmatpush1.bf16.msra.mxu0 0
        %6685 = vmatprep.subr.bf16.mxu0 0
        %6686 = vmatpush1.bf16.msra.mxu0 0
        %6687 = vmatprep.mubr.bf16.mxu0 0
        %6688 = vmatmul.mubr.bf16.gmra.mrb[0].mxu0 %v6584
        %v6689 = vpop.f32.mrb[0].mxu0
        %v6690 = vadd.f32 %v6606, %v6689
        %v6691 = vpop.f32.mrb[0].mxu0
        %v6692 = vpop.f32.mrb[0].mxu0
        %v6693 = vadd.f32 %v6606, %v6692
        %v6694 = vpop.f32.mrb[0].mxu0
        %6695 = vdwg.mxu0
        %6696 = vst [vmem:[%s647] sm:$0xff] %v6690
        %6697 = vst [vmem:[%s647 + $0x8] sm:$0xff] %v6693
        %s6698 = smul.u32 2, %s21
        %p6699 = scmp.lt.s32.totalorder %s6698, 3
        %s6700 = scalar_select %p6699, %s6698, 3
        %s6701 = smul.addr %s6700, 8
        %s6702 = scalar_lea.vmem %s10, %s6701
        // Predicated region
        $region99: #{net_forward.1} parent=93 // pred_check
          %p6703 = pneg %p254
        $region100: #{net_forward.1} parent=93 // pred_check_branch
          %6705 = sbr.rel (%p6703) target = $region102
        $region101: #{net_forward.1} parent=93 // pred_region
          %s6706 = smul.u32 2, %s21
        $region102: #{net_forward.1} parent=93 // pred_fallthru
          _
      $region94: #{net_forward.1} parent=5 // pred_fallthru
        _
      %p6707 = scmp.le.s32.totalorder 2, %s16
      // Predicated region
      $region103: #{net_forward.1} parent=5 // pred_check
        %p6708 = pneg %p6707
      $region104: #{net_forward.1} parent=5 // pred_check_branch
        %6710 = sbr.rel (%p6708) target = $region106
      $region105: #{net_forward.1} parent=5 // pred_region
        %s6711 = ssub.s32 %s16, 2
        // Predicated region
        $region107: #{net_forward.1} parent=105 // pred_check
          %p6712 = pneg %p260
        $region108: #{net_forward.1} parent=105 // pred_check_branch
          %6714 = sbr.rel (%p6712) target = $region110
        $region109: #{net_forward.1} parent=105 // pred_region
          %s6715 = smul.u32 2, %s22
          %p6716 = scmp.lt.s32.totalorder %s6715, 3
          %s6717 = scalar_select %p6716, %s6715, 3
          %s6718 = smul.addr %s6717, 8
          %s6719 = scalar_lea.vmem %s10, %s6718
        $region110: #{net_forward.1} parent=105 // pred_fallthru
          _
      $region106: #{net_forward.1} parent=5 // pred_fallthru
        _
    $region6: #{net_forward.1} parent=1 // loop_footer
      %s20 = sadd.s32 1, %s16
    $region7: #{net_forward.1} parent=1 // loop_footer_branch
      %15 = sbr.rel target = $region3
    $region8: #{net_forward.1} parent=1 // loop_exit
      _

</llo_original>
